<compile_context>
chip_gen: v6e
topology: v6e:2x2x1
jax: 0.10.0
libtpu: 0.0.40
codegen_flags: <defaults>
</compile_context>

<pallas_src>
import functools

import jax
import jax.numpy as jnp
from jax.experimental import pallas as pl
from jax.experimental.pallas import tpu as pltpu


# ------------------------------- helpers ----------------------------------- #

def _round_up(x, m):
    return (x + m - 1) // m * m


def _select_tiles(M, K, OCp):
    """Pick (tm, Mp, tn, tk) so that blocks are (8,128)-friendly and tile K."""
    # M tile: multiple of 8; 256 rows for large M.
    if M <= 256:
        tm = _round_up(M, 8)
    else:
        tm = 256
    Mp = _round_up(M, tm)
    # OC tile: OCp is always a multiple of 128.
    tn = min(256, OCp)
    if OCp % tn != 0:
        tn = 128
    # K tile: largest multiple of 128 that divides K and is <= 1024; else full K.
    if K <= 1024:
        tk = K
    else:
        tk = K
        for cand in range(1024, 127, -128):
            if K % cand == 0:
                tk = cand
                break
    return tm, Mp, tn, tk


def _vmem_limit_bytes(tm, tn, tk):
    needed = (
        2 * tm * tk * 2      # x tiles, double-buffered, bf16
        + 2 * tk * tn * 2    # w tiles, double-buffered, bf16
        + 2 * tm * tn * 2    # out tiles, double-buffered, bf16
        + 2 * tn * 4         # bias tiles, f32
        + tm * tn * 4        # f32 accumulator scratch
    )
    return int(min(48 * 1024 * 1024, max(4 * 1024 * 1024, 4 * needed)))


# ----------------------------- Pallas kernels ------------------------------ #

def _gemm_bias_act_kernel(x_ref, w_ref, b_ref, o_ref, acc_ref, *, apply_relu):
    """out[tm, tn] = sum_k x[tm, tk] @ w[tk, tn] + b, optional ReLU (f32 acc)."""
    k = pl.program_id(2)

    @pl.when(k == 0)
    def _init():
        acc_ref[...] = jnp.zeros_like(acc_ref)

    acc_ref[...] += jnp.dot(x_ref[...], w_ref[...],
                            preferred_element_type=jnp.float32)

    @pl.when(k == pl.num_programs(2) - 1)
    def _finalize():
        out = acc_ref[...] + b_ref[...]
        if apply_relu:
            out = jnp.maximum(out, 0.0)
        o_ref[...] = out.astype(o_ref.dtype)


def _maxpool_kernel(*refs):
    """Chained elementwise max over the KH*KW window views (pure VPU)."""
    x_refs, o_ref = refs[:-1], refs[-1]
    r = x_refs[0][...]
    for xr in x_refs[1:]:
        r = jnp.maximum(r, xr[...])
    o_ref[...] = r


# --------------------------- Pallas call wrappers --------------------------- #

def conv_gemm(patches, w_mat, bias, apply_relu):
    """(M, K) bf16 @ (K, OCp) bf16 + bias f32 -> (M, OCp) bf16, tiled grid."""
    M, K = patches.shape
    Kw, OCp = w_mat.shape
    assert K == Kw, (K, Kw)

    tm, Mp, tn, tk = _select_tiles(M, K, OCp)
    if Mp != M:
        patches = jnp.pad(patches, ((0, Mp - M), (0, 0)))
    nk = K // tk if K % tk == 0 else 1
    if K % tk != 0:  # fall back to a single full-K block
        tk = K
        nk = 1
    grid = (Mp // tm, OCp // tn, nk)

    cost = pl.CostEstimate(
        flops=2 * Mp * K * OCp,
        transcendentals=0,
        bytes_accessed=Mp * K * 2 + K * OCp * 2 + Mp * OCp * 2,
    )

    out = pl.pallas_call(
        functools.partial(_gemm_bias_act_kernel, apply_relu=apply_relu),
        out_shape=jax.ShapeDtypeStruct((Mp, OCp), jnp.bfloat16),
        grid_spec=pltpu.PrefetchScalarGridSpec(
            num_scalar_prefetch=0,
            grid=grid,
            in_specs=[
                pl.BlockSpec((tm, tk), lambda i, j, k: (i, k)),
                pl.BlockSpec((tk, tn), lambda i, j, k: (k, j)),
                pl.BlockSpec((1, tn), lambda i, j, k: (0, j)),
            ],
            out_specs=pl.BlockSpec((tm, tn), lambda i, j, k: (i, j)),
            scratch_shapes=[pltpu.VMEM((tm, tn), jnp.float32)],
        ),
        compiler_params=pltpu.CompilerParams(
            dimension_semantics=("parallel", "parallel", "arbitrary"),
            vmem_limit_bytes=_vmem_limit_bytes(tm, tn, tk),
        ),
        cost_estimate=cost,
    )(patches, w_mat, bias)

    return out[:M] if Mp != M else out


def maxpool2d(x_nhwc, k=3, s=2):
    """3x3/stride-2 max pool; 9 window views -> tiled VPU elementwise max."""
    N, H, W, C = x_nhwc.shape
    OH = (H - k) // s + 1
    OW = (W - k) // s + 1
    L = OH * OW
    views = []
    for i in range(k):
        for j in range(k):
            v = x_nhwc[:, i:i + s * (OH - 1) + 1:s,
                       j:j + s * (OW - 1) + 1:s, :]
            views.append(v.reshape(N, L, C))

    out = pl.pallas_call(
        _maxpool_kernel,
        out_shape=jax.ShapeDtypeStruct((N, L, C), x_nhwc.dtype),
        grid=(N,),
        in_specs=[pl.BlockSpec((1, L, C), lambda n: (n, 0, 0))
                  for _ in range(k * k)],
        out_specs=pl.BlockSpec((1, L, C), lambda n: (n, 0, 0)),
        compiler_params=pltpu.CompilerParams(
            dimension_semantics=("parallel",)),
    )(*views)
    return out.reshape(N, OH, OW, C)


# ------------------------------ JAX glue ----------------------------------- #

def _im2col(x_nhwc, kh, kw, stride, pad):
    N, H, W, C = x_nhwc.shape
    if pad > 0:
        x_nhwc = jnp.pad(x_nhwc, ((0, 0), (pad, pad), (pad, pad), (0, 0)))
    Hp, Wp = H + 2 * pad, W + 2 * pad
    OH = (Hp - kh) // stride + 1
    OW = (Wp - kw) // stride + 1
    cols = []
    for i in range(kh):
        for j in range(kw):
            cols.append(
                x_nhwc[:, i:i + stride * (OH - 1) + 1:stride,
                       j:j + stride * (OW - 1) + 1:stride, :]
            )
    patches = jnp.concatenate(cols, axis=-1)          # (N, OH, OW, KH*KW*C)
    return patches.reshape(N * OH * OW, kh * kw * C), OH, OW


def conv2d(x_nhwc, w_mat, bias, kh, kw, stride, pad, relu):
    """x NHWC (C possibly 128-padded), w_mat (KH*KW*ICp, OCp) bf16, bias (1,OCp) f32."""
    N, H, W, C = x_nhwc.shape
    OCp = w_mat.shape[1]
    if kh == 1 and kw == 1 and stride == 1 and pad == 0:
        OH, OW = H, W
        patches = x_nhwc.reshape(N * H * W, C)        # no im2col for 1x1 convs
    else:
        patches, OH, OW = _im2col(x_nhwc, kh, kw, stride, pad)
    out = conv_gemm(patches, w_mat, bias, relu)       # (M, OCp) bf16
    return out.reshape(N, OH, OW, OCp)


# --------------------------- model definition ------------------------------ #

_CONV_DEFS = {
    # name: (OC, IC, KH, KW, stride, pad, relu)
    "c1":  (64, 3, 11, 11, 4, 2, True),
    "c2":  (192, 64, 5, 5, 1, 2, True),
    "c3":  (384, 192, 3, 3, 1, 1, True),
    "c4":  (256, 384, 3, 3, 1, 1, True),
    "c5":  (256, 256, 3, 3, 1, 1, True),
    "cl1": (256, 256, 3, 3, 1, 0, True),
    "cl2": (256, 256, 1, 1, 1, 0, True),
    "cl3": (20, 256, 1, 1, 1, 0, False),
}

NUM_CLASSES = 20


def init_params(key):
    """PyTorch-layout parameters: (OC, IC, KH, KW) weights + (OC,) biases."""
    params = {}
    keys = jax.random.split(key, len(_CONV_DEFS))
    for k_rng, (name, (oc, ic, kh, kw, _, _, _)) in zip(keys, _CONV_DEFS.items()):
        params[name + "_w"] = 0.01 * jax.random.normal(
            k_rng, (oc, ic, kh, kw), jnp.float32)
        params[name + "_b"] = jnp.zeros((oc,), jnp.float32)
    return params


def prepare_params(params):
    """One-time weight prep (outside jit): transpose, 128-pad channels, flatten, bf16."""
    prepared = {}
    for name, (oc, ic, kh, kw, _, _, _) in _CONV_DEFS.items():
        icp = ic if name == "c1" else _round_up(ic, 128)   # c1 eats the raw 3-ch image
        ocp = _round_up(oc, 128)
        w = params[name + "_w"]                            # (OC, IC, KH, KW)
        wt = jnp.transpose(w, (2, 3, 1, 0))                # (KH, KW, IC, OC)
        wt = jnp.pad(wt, ((0, 0), (0, 0), (0, icp - ic), (0, ocp - oc)))
        prepared[name + "_w"] = wt.reshape(kh * kw * icp, ocp).astype(jnp.bfloat16)
        b = jnp.pad(params[name + "_b"], (0, ocp - oc))
        prepared[name + "_b"] = b.astype(jnp.float32).reshape(1, ocp)
    return prepared


def localizer_alexnet_forward(x_nchw, params):
    x = jnp.transpose(x_nchw, (0, 2, 3, 1)).astype(jnp.bfloat16)   # NCHW -> NHWC, bf16

    def conv(x, name):
        _, _, kh, kw, stride, pad, relu = _CONV_DEFS[name]
        return conv2d(x, params[name + "_w"], params[name + "_b"],
                      kh, kw, stride, pad, relu)

    # features
    x = conv(x, "c1")
    x = maxpool2d(x, 3, 2)
    x = conv(x, "c2")
    x = maxpool2d(x, 3, 2)
    x = conv(x, "c3")
    x = conv(x, "c4")
    x = conv(x, "c5")
    # classifier
    x = conv(x, "cl1")
    x = conv(x, "cl2")
    x = conv(x, "cl3")

    x = x[..., :NUM_CLASSES].astype(jnp.float32)   # drop channel padding (128 -> 20)
    return jnp.transpose(x, (0, 3, 1, 2))          # NHWC -> NCHW


if __name__ == "__main__":
    key = jax.random.PRNGKey(0)
    k_param, k_input = jax.random.split(key)

    params = prepare_params(init_params(k_param))

    # Input must have 3 channels (conv1 is 3->64).  64x64 spatial keeps shapes
    # valid through the stack: 64 -> 15 -> 7 -> 7 -> 3 -> 3 -> 1 -> 1.
    x = jax.random.normal(k_input, (2, 3, 64, 64), jnp.float32)

    fwd = jax.jit(localizer_alexnet_forward)
    out = fwd(x, params)
    out = jax.block_until_ready(out)

    assert out.shape == (2, 20, 1, 1), out.shape
    assert out.dtype == jnp.float32
    print("KERNEL_OK")
</pallas_src>

<mosaic_0001>
module attributes {stable_mosaic.version = 11 : i64} {
  func.func @_gemm_bias_act_kernel(%arg0: i32, %arg1: i32, %arg2: i32, %arg3: memref<256x363xbf16, #tpu.memory_space<vmem>>, %arg4: memref<363x128xbf16, #tpu.memory_space<vmem>>, %arg5: memref<1x128xf32, #tpu.memory_space<vmem>>, %arg6: memref<256x128xbf16, #tpu.memory_space<vmem>>, %arg7: memref<256x128xf32, #tpu.memory_space<vmem>>) attributes {dimension_semantics = [#tpu.dimension_semantics<parallel>, #tpu.dimension_semantics<parallel>, #tpu.dimension_semantics<arbitrary>], iteration_bounds = array<i64: 2, 1, 1>, scalar_prefetch = 0 : i64, scratch_operands = 1 : i64, tpu.core_type = #tpu.core_type<tc>, window_params = [{transform_indices = @transform_0, window_bounds = array<i64: 256, 363>}, {transform_indices = @transform_1, window_bounds = array<i64: 363, 128>}, {transform_indices = @transform_2, window_bounds = array<i64: 1, 128>}, {transform_indices = @transform_3, window_bounds = array<i64: 256, 128>}]} {
    %c0_i32 = arith.constant 0 : i32
    %0 = arith.cmpi eq, %arg2, %c0_i32 : i32
    %1 = arith.extui %0 : i1 to i32
    %c0_i32_0 = arith.constant 0 : i32
    %2 = arith.cmpi ne, %1, %c0_i32_0 : i32
    scf.if %2 {
      %cst_10 = arith.constant 0.000000e+00 : f32
      %12 = vector.broadcast %cst_10 : f32 to vector<256x128xf32>
      %c0_11 = arith.constant 0 : index
      %c0_12 = arith.constant 0 : index
      %13 = vector.load %arg7[%c0_11, %c0_12] : memref<256x128xf32, #tpu.memory_space<vmem>>, vector<256x128xf32>
      tpu.vector_store %arg7[%c0_11, %c0_12], %12 {strides = array<i32>} : memref<256x128xf32, #tpu.memory_space<vmem>>, vector<256x128xf32>,
    } else {
    }
    %c0 = arith.constant 0 : index
    %c0_1 = arith.constant 0 : index
    %3 = vector.load %arg7[%c0, %c0_1] : memref<256x128xf32, #tpu.memory_space<vmem>>, vector<256x128xf32>
    %c0_2 = arith.constant 0 : index
    %c0_3 = arith.constant 0 : index
    %4 = vector.load %arg3[%c0_2, %c0_3] : memref<256x363xbf16, #tpu.memory_space<vmem>>, vector<256x363xbf16>
    %c0_4 = arith.constant 0 : index
    %c0_5 = arith.constant 0 : index
    %5 = vector.load %arg4[%c0_4, %c0_5] : memref<363x128xbf16, #tpu.memory_space<vmem>>, vector<363x128xbf16>
    %cst = arith.constant dense<0.000000e+00> : vector<256x128xf32>
    %6 = tpu.matmul %4, %5, %cst {dimension_numbers = #tpu.dot_dimension_numbers<[1], [0], [0], [1], [0, 0, 1, 1], [], []>} : vector<256x363xbf16>, vector<363x128xbf16>, vector<256x128xf32> -> vector<256x128xf32>
    %7 = arith.addf %3, %6 : vector<256x128xf32>
    %c0_6 = arith.constant 0 : index
    %c0_7 = arith.constant 0 : index
    %8 = vector.load %arg7[%c0_6, %c0_7] : memref<256x128xf32, #tpu.memory_space<vmem>>, vector<256x128xf32>
    tpu.vector_store %arg7[%c0_6, %c0_7], %7 {strides = array<i32>} : memref<256x128xf32, #tpu.memory_space<vmem>>, vector<256x128xf32>,
    %c0_i32_8 = arith.constant 0 : i32
    %9 = arith.cmpi eq, %arg2, %c0_i32_8 : i32
    %10 = arith.extui %9 : i1 to i32
    %c0_i32_9 = arith.constant 0 : i32
    %11 = arith.cmpi ne, %10, %c0_i32_9 : i32
    scf.if %11 {
      %c0_10 = arith.constant 0 : index
      %c0_11 = arith.constant 0 : index
      %12 = vector.load %arg7[%c0_10, %c0_11] : memref<256x128xf32, #tpu.memory_space<vmem>>, vector<256x128xf32>
      %c0_12 = arith.constant 0 : index
      %c0_13 = arith.constant 0 : index
      %13 = vector.load %arg5[%c0_12, %c0_13] : memref<1x128xf32, #tpu.memory_space<vmem>>, vector<1x128xf32>
      %14 = vector.broadcast %13 : vector<1x128xf32> to vector<256x128xf32>
      %15 = arith.addf %12, %14 : vector<256x128xf32>
      %cst_14 = arith.constant 0.000000e+00 : f32
      %16 = vector.broadcast %cst_14 : f32 to vector<256x128xf32>
      %17 = arith.maximumf %15, %16 : vector<256x128xf32>
      %18 = arith.truncf %17 : vector<256x128xf32> to vector<256x128xbf16>
      %c0_15 = arith.constant 0 : index
      %c0_16 = arith.constant 0 : index
      %19 = vector.load %arg6[%c0_15, %c0_16] : memref<256x128xbf16, #tpu.memory_space<vmem>>, vector<256x128xbf16>
      tpu.vector_store %arg6[%c0_15, %c0_16], %18 {strides = array<i32>} : memref<256x128xbf16, #tpu.memory_space<vmem>>, vector<256x128xbf16>,
    } else {
    }
    return
  }
  func.func @transform_0(%arg0: i32, %arg1: i32, %arg2: i32) -> (i32, i32) {
    %c0_i32 = arith.constant 0 : i32
    return %arg0, %arg2 : i32, i32
  }
  func.func @transform_1(%arg0: i32, %arg1: i32, %arg2: i32) -> (i32, i32) {
    %c0_i32 = arith.constant 0 : i32
    return %arg2, %arg1 : i32, i32
  }
  func.func @transform_2(%arg0: i32, %arg1: i32, %arg2: i32) -> (i32, i32) {
    %c0_i32 = arith.constant 0 : i32
    %c0_i32_0 = arith.constant 0 : i32
    return %c0_i32, %arg1 : i32, i32
  }
  func.func @transform_3(%arg0: i32, %arg1: i32, %arg2: i32) -> (i32, i32) {
    %c0_i32 = arith.constant 0 : i32
    return %arg0, %arg1 : i32, i32
  }
}

module attributes {stable_mosaic.version = 11 : i64} {
  func.func @_maxpool_kernel(%arg0: i32, %arg1: memref<1x49x128xbf16, #tpu.memory_space<vmem>>, %arg2: memref<1x49x128xbf16, #tpu.memory_space<vmem>>, %arg3: memref<1x49x128xbf16, #tpu.memory_space<vmem>>, %arg4: memref<1x49x128xbf16, #tpu.memory_space<vmem>>, %arg5: memref<1x49x128xbf16, #tpu.memory_space<vmem>>, %arg6: memref<1x49x128xbf16, #tpu.memory_space<vmem>>, %arg7: memref<1x49x128xbf16, #tpu.memory_space<vmem>>, %arg8: memref<1x49x128xbf16, #tpu.memory_space<vmem>>, %arg9: memref<1x49x128xbf16, #tpu.memory_space<vmem>>, %arg10: memref<1x49x128xbf16, #tpu.memory_space<vmem>>) attributes {dimension_semantics = [#tpu.dimension_semantics<parallel>], iteration_bounds = array<i64: 2>, scalar_prefetch = 0 : i64, scratch_operands = 0 : i64, tpu.core_type = #tpu.core_type<tc>, window_params = [{transform_indices = @transform_0, window_bounds = array<i64: 1, 49, 128>}, {transform_indices = @transform_1, window_bounds = array<i64: 1, 49, 128>}, {transform_indices = @transform_2, window_bounds = array<i64: 1, 49, 128>}, {transform_indices = @transform_3, window_bounds = array<i64: 1, 49, 128>}, {transform_indices = @transform_4, window_bounds = array<i64: 1, 49, 128>}, {transform_indices = @transform_5, window_bounds = array<i64: 1, 49, 128>}, {transform_indices = @transform_6, window_bounds = array<i64: 1, 49, 128>}, {transform_indices = @transform_7, window_bounds = array<i64: 1, 49, 128>}, {transform_indices = @transform_8, window_bounds = array<i64: 1, 49, 128>}, {transform_indices = @transform_9, window_bounds = array<i64: 1, 49, 128>}]} {
    %c0 = arith.constant 0 : index
    %c0_0 = arith.constant 0 : index
    %c0_1 = arith.constant 0 : index
    %0 = vector.load %arg1[%c0, %c0_0, %c0_1] : memref<1x49x128xbf16, #tpu.memory_space<vmem>>, vector<1x49x128xbf16>
    %c0_2 = arith.constant 0 : index
    %c0_3 = arith.constant 0 : index
    %c0_4 = arith.constant 0 : index
    %1 = vector.load %arg2[%c0_2, %c0_3, %c0_4] : memref<1x49x128xbf16, #tpu.memory_space<vmem>>, vector<1x49x128xbf16>
    %2 = arith.maximumf %0, %1 : vector<1x49x128xbf16>
    %c0_5 = arith.constant 0 : index
    %c0_6 = arith.constant 0 : index
    %c0_7 = arith.constant 0 : index
    %3 = vector.load %arg3[%c0_5, %c0_6, %c0_7] : memref<1x49x128xbf16, #tpu.memory_space<vmem>>, vector<1x49x128xbf16>
    %4 = arith.maximumf %2, %3 : vector<1x49x128xbf16>
    %c0_8 = arith.constant 0 : index
    %c0_9 = arith.constant 0 : index
    %c0_10 = arith.constant 0 : index
    %5 = vector.load %arg4[%c0_8, %c0_9, %c0_10] : memref<1x49x128xbf16, #tpu.memory_space<vmem>>, vector<1x49x128xbf16>
    %6 = arith.maximumf %4, %5 : vector<1x49x128xbf16>
    %c0_11 = arith.constant 0 : index
    %c0_12 = arith.constant 0 : index
    %c0_13 = arith.constant 0 : index
    %7 = vector.load %arg5[%c0_11, %c0_12, %c0_13] : memref<1x49x128xbf16, #tpu.memory_space<vmem>>, vector<1x49x128xbf16>
    %8 = arith.maximumf %6, %7 : vector<1x49x128xbf16>
    %c0_14 = arith.constant 0 : index
    %c0_15 = arith.constant 0 : index
    %c0_16 = arith.constant 0 : index
    %9 = vector.load %arg6[%c0_14, %c0_15, %c0_16] : memref<1x49x128xbf16, #tpu.memory_space<vmem>>, vector<1x49x128xbf16>
    %10 = arith.maximumf %8, %9 : vector<1x49x128xbf16>
    %c0_17 = arith.constant 0 : index
    %c0_18 = arith.constant 0 : index
    %c0_19 = arith.constant 0 : index
    %11 = vector.load %arg7[%c0_17, %c0_18, %c0_19] : memref<1x49x128xbf16, #tpu.memory_space<vmem>>, vector<1x49x128xbf16>
    %12 = arith.maximumf %10, %11 : vector<1x49x128xbf16>
    %c0_20 = arith.constant 0 : index
    %c0_21 = arith.constant 0 : index
    %c0_22 = arith.constant 0 : index
    %13 = vector.load %arg8[%c0_20, %c0_21, %c0_22] : memref<1x49x128xbf16, #tpu.memory_space<vmem>>, vector<1x49x128xbf16>
    %14 = arith.maximumf %12, %13 : vector<1x49x128xbf16>
    %c0_23 = arith.constant 0 : index
    %c0_24 = arith.constant 0 : index
    %c0_25 = arith.constant 0 : index
    %15 = vector.load %arg9[%c0_23, %c0_24, %c0_25] : memref<1x49x128xbf16, #tpu.memory_space<vmem>>, vector<1x49x128xbf16>
    %16 = arith.maximumf %14, %15 : vector<1x49x128xbf16>
    %c0_26 = arith.constant 0 : index
    %c0_27 = arith.constant 0 : index
    %c0_28 = arith.constant 0 : index
    %17 = vector.load %arg10[%c0_26, %c0_27, %c0_28] : memref<1x49x128xbf16, #tpu.memory_space<vmem>>, vector<1x49x128xbf16>
    tpu.vector_store %arg10[%c0_26, %c0_27, %c0_28], %16 {strides = array<i32>} : memref<1x49x128xbf16, #tpu.memory_space<vmem>>, vector<1x49x128xbf16>,
    return
  }
  func.func @transform_0(%arg0: i32) -> (i32, i32, i32) {
    %c0_i32 = arith.constant 0 : i32
    %c0_i32_0 = arith.constant 0 : i32
    %c0_i32_1 = arith.constant 0 : i32
    return %arg0, %c0_i32, %c0_i32_0 : i32, i32, i32
  }
  func.func @transform_1(%arg0: i32) -> (i32, i32, i32) {
    %c0_i32 = arith.constant 0 : i32
    %c0_i32_0 = arith.constant 0 : i32
    %c0_i32_1 = arith.constant 0 : i32
    return %arg0, %c0_i32, %c0_i32_0 : i32, i32, i32
  }
  func.func @transform_2(%arg0: i32) -> (i32, i32, i32) {
    %c0_i32 = arith.constant 0 : i32
    %c0_i32_0 = arith.constant 0 : i32
    %c0_i32_1 = arith.constant 0 : i32
    return %arg0, %c0_i32, %c0_i32_0 : i32, i32, i32
  }
  func.func @transform_3(%arg0: i32) -> (i32, i32, i32) {
    %c0_i32 = arith.constant 0 : i32
    %c0_i32_0 = arith.constant 0 : i32
    %c0_i32_1 = arith.constant 0 : i32
    return %arg0, %c0_i32, %c0_i32_0 : i32, i32, i32
  }
  func.func @transform_4(%arg0: i32) -> (i32, i32, i32) {
    %c0_i32 = arith.constant 0 : i32
    %c0_i32_0 = arith.constant 0 : i32
    %c0_i32_1 = arith.constant 0 : i32
    return %arg0, %c0_i32, %c0_i32_0 : i32, i32, i32
  }
  func.func @transform_5(%arg0: i32) -> (i32, i32, i32) {
    %c0_i32 = arith.constant 0 : i32
    %c0_i32_0 = arith.constant 0 : i32
    %c0_i32_1 = arith.constant 0 : i32
    return %arg0, %c0_i32, %c0_i32_0 : i32, i32, i32
  }
  func.func @transform_6(%arg0: i32) -> (i32, i32, i32) {
    %c0_i32 = arith.constant 0 : i32
    %c0_i32_0 = arith.constant 0 : i32
    %c0_i32_1 = arith.constant 0 : i32
    return %arg0, %c0_i32, %c0_i32_0 : i32, i32, i32
  }
  func.func @transform_7(%arg0: i32) -> (i32, i32, i32) {
    %c0_i32 = arith.constant 0 : i32
    %c0_i32_0 = arith.constant 0 : i32
    %c0_i32_1 = arith.constant 0 : i32
    return %arg0, %c0_i32, %c0_i32_0 : i32, i32, i32
  }
  func.func @transform_8(%arg0: i32) -> (i32, i32, i32) {
    %c0_i32 = arith.constant 0 : i32
    %c0_i32_0 = arith.constant 0 : i32
    %c0_i32_1 = arith.constant 0 : i32
    return %arg0, %c0_i32, %c0_i32_0 : i32, i32, i32
  }
  func.func @transform_9(%arg0: i32) -> (i32, i32, i32) {
    %c0_i32 = arith.constant 0 : i32
    %c0_i32_0 = arith.constant 0 : i32
    %c0_i32_1 = arith.constant 0 : i32
    return %arg0, %c0_i32, %c0_i32_0 : i32, i32, i32
  }
}

module attributes {stable_mosaic.version = 11 : i64} {
  func.func @_gemm_bias_act_kernel(%arg0: i32, %arg1: i32, %arg2: i32, %arg3: memref<104x640xbf16, #tpu.memory_space<vmem>>, %arg4: memref<640x256xbf16, #tpu.memory_space<vmem>>, %arg5: memref<1x256xf32, #tpu.memory_space<vmem>>, %arg6: memref<104x256xbf16, #tpu.memory_space<vmem>>, %arg7: memref<104x256xf32, #tpu.memory_space<vmem>>) attributes {dimension_semantics = [#tpu.dimension_semantics<parallel>, #tpu.dimension_semantics<parallel>, #tpu.dimension_semantics<arbitrary>], iteration_bounds = array<i64: 1, 1, 5>, scalar_prefetch = 0 : i64, scratch_operands = 1 : i64, tpu.core_type = #tpu.core_type<tc>, window_params = [{transform_indices = @transform_0, window_bounds = array<i64: 104, 640>}, {transform_indices = @transform_1, window_bounds = array<i64: 640, 256>}, {transform_indices = @transform_2, window_bounds = array<i64: 1, 256>}, {transform_indices = @transform_3, window_bounds = array<i64: 104, 256>}]} {
    %c0_i32 = arith.constant 0 : i32
    %0 = arith.cmpi eq, %arg2, %c0_i32 : i32
    %1 = arith.extui %0 : i1 to i32
    %c0_i32_0 = arith.constant 0 : i32
    %2 = arith.cmpi ne, %1, %c0_i32_0 : i32
    scf.if %2 {
      %cst_9 = arith.constant 0.000000e+00 : f32
      %12 = vector.broadcast %cst_9 : f32 to vector<104x256xf32>
      %c0_10 = arith.constant 0 : index
      %c0_11 = arith.constant 0 : index
      %13 = vector.load %arg7[%c0_10, %c0_11] : memref<104x256xf32, #tpu.memory_space<vmem>>, vector<104x256xf32>
      tpu.vector_store %arg7[%c0_10, %c0_11], %12 {strides = array<i32>} : memref<104x256xf32, #tpu.memory_space<vmem>>, vector<104x256xf32>,
    } else {
    }
    %c0 = arith.constant 0 : index
    %c0_1 = arith.constant 0 : index
    %3 = vector.load %arg7[%c0, %c0_1] : memref<104x256xf32, #tpu.memory_space<vmem>>, vector<104x256xf32>
    %c0_2 = arith.constant 0 : index
    %c0_3 = arith.constant 0 : index
    %4 = vector.load %arg3[%c0_2, %c0_3] : memref<104x640xbf16, #tpu.memory_space<vmem>>, vector<104x640xbf16>
    %c0_4 = arith.constant 0 : index
    %c0_5 = arith.constant 0 : index
    %5 = vector.load %arg4[%c0_4, %c0_5] : memref<640x256xbf16, #tpu.memory_space<vmem>>, vector<640x256xbf16>
    %cst = arith.constant dense<0.000000e+00> : vector<104x256xf32>
    %6 = tpu.matmul %4, %5, %cst {dimension_numbers = #tpu.dot_dimension_numbers<[1], [0], [0], [1], [0, 0, 1, 1], [], []>} : vector<104x640xbf16>, vector<640x256xbf16>, vector<104x256xf32> -> vector<104x256xf32>
    %7 = arith.addf %3, %6 : vector<104x256xf32>
    %c0_6 = arith.constant 0 : index
    %c0_7 = arith.constant 0 : index
    %8 = vector.load %arg7[%c0_6, %c0_7] : memref<104x256xf32, #tpu.memory_space<vmem>>, vector<104x256xf32>
    tpu.vector_store %arg7[%c0_6, %c0_7], %7 {strides = array<i32>} : memref<104x256xf32, #tpu.memory_space<vmem>>, vector<104x256xf32>,
    %c4_i32 = arith.constant 4 : i32
    %9 = arith.cmpi eq, %arg2, %c4_i32 : i32
    %10 = arith.extui %9 : i1 to i32
    %c0_i32_8 = arith.constant 0 : i32
    %11 = arith.cmpi ne, %10, %c0_i32_8 : i32
    scf.if %11 {
      %c0_9 = arith.constant 0 : index
      %c0_10 = arith.constant 0 : index
      %12 = vector.load %arg7[%c0_9, %c0_10] : memref<104x256xf32, #tpu.memory_space<vmem>>, vector<104x256xf32>
      %c0_11 = arith.constant 0 : index
      %c0_12 = arith.constant 0 : index
      %13 = vector.load %arg5[%c0_11, %c0_12] : memref<1x256xf32, #tpu.memory_space<vmem>>, vector<1x256xf32>
      %14 = vector.broadcast %13 : vector<1x256xf32> to vector<104x256xf32>
      %15 = arith.addf %12, %14 : vector<104x256xf32>
      %cst_13 = arith.constant 0.000000e+00 : f32
      %16 = vector.broadcast %cst_13 : f32 to vector<104x256xf32>
      %17 = arith.maximumf %15, %16 : vector<104x256xf32>
      %18 = arith.truncf %17 : vector<104x256xf32> to vector<104x256xbf16>
      %c0_14 = arith.constant 0 : index
      %c0_15 = arith.constant 0 : index
      %19 = vector.load %arg6[%c0_14, %c0_15] : memref<104x256xbf16, #tpu.memory_space<vmem>>, vector<104x256xbf16>
      tpu.vector_store %arg6[%c0_14, %c0_15], %18 {strides = array<i32>} : memref<104x256xbf16, #tpu.memory_space<vmem>>, vector<104x256xbf16>,
    } else {
    }
    return
  }
  func.func @transform_0(%arg0: i32, %arg1: i32, %arg2: i32) -> (i32, i32) {
    %c0_i32 = arith.constant 0 : i32
    return %arg0, %arg2 : i32, i32
  }
  func.func @transform_1(%arg0: i32, %arg1: i32, %arg2: i32) -> (i32, i32) {
    %c0_i32 = arith.constant 0 : i32
    return %arg2, %arg1 : i32, i32
  }
  func.func @transform_2(%arg0: i32, %arg1: i32, %arg2: i32) -> (i32, i32) {
    %c0_i32 = arith.constant 0 : i32
    %c0_i32_0 = arith.constant 0 : i32
    return %c0_i32, %arg1 : i32, i32
  }
  func.func @transform_3(%arg0: i32, %arg1: i32, %arg2: i32) -> (i32, i32) {
    %c0_i32 = arith.constant 0 : i32
    return %arg0, %arg1 : i32, i32
  }
}

module attributes {stable_mosaic.version = 11 : i64} {
  func.func @_maxpool_kernel(%arg0: i32, %arg1: memref<1x9x256xbf16, #tpu.memory_space<vmem>>, %arg2: memref<1x9x256xbf16, #tpu.memory_space<vmem>>, %arg3: memref<1x9x256xbf16, #tpu.memory_space<vmem>>, %arg4: memref<1x9x256xbf16, #tpu.memory_space<vmem>>, %arg5: memref<1x9x256xbf16, #tpu.memory_space<vmem>>, %arg6: memref<1x9x256xbf16, #tpu.memory_space<vmem>>, %arg7: memref<1x9x256xbf16, #tpu.memory_space<vmem>>, %arg8: memref<1x9x256xbf16, #tpu.memory_space<vmem>>, %arg9: memref<1x9x256xbf16, #tpu.memory_space<vmem>>, %arg10: memref<1x9x256xbf16, #tpu.memory_space<vmem>>) attributes {dimension_semantics = [#tpu.dimension_semantics<parallel>], iteration_bounds = array<i64: 2>, scalar_prefetch = 0 : i64, scratch_operands = 0 : i64, tpu.core_type = #tpu.core_type<tc>, window_params = [{transform_indices = @transform_0, window_bounds = array<i64: 1, 9, 256>}, {transform_indices = @transform_1, window_bounds = array<i64: 1, 9, 256>}, {transform_indices = @transform_2, window_bounds = array<i64: 1, 9, 256>}, {transform_indices = @transform_3, window_bounds = array<i64: 1, 9, 256>}, {transform_indices = @transform_4, window_bounds = array<i64: 1, 9, 256>}, {transform_indices = @transform_5, window_bounds = array<i64: 1, 9, 256>}, {transform_indices = @transform_6, window_bounds = array<i64: 1, 9, 256>}, {transform_indices = @transform_7, window_bounds = array<i64: 1, 9, 256>}, {transform_indices = @transform_8, window_bounds = array<i64: 1, 9, 256>}, {transform_indices = @transform_9, window_bounds = array<i64: 1, 9, 256>}]} {
    %c0 = arith.constant 0 : index
    %c0_0 = arith.constant 0 : index
    %c0_1 = arith.constant 0 : index
    %0 = vector.load %arg1[%c0, %c0_0, %c0_1] : memref<1x9x256xbf16, #tpu.memory_space<vmem>>, vector<1x9x256xbf16>
    %c0_2 = arith.constant 0 : index
    %c0_3 = arith.constant 0 : index
    %c0_4 = arith.constant 0 : index
    %1 = vector.load %arg2[%c0_2, %c0_3, %c0_4] : memref<1x9x256xbf16, #tpu.memory_space<vmem>>, vector<1x9x256xbf16>
    %2 = arith.maximumf %0, %1 : vector<1x9x256xbf16>
    %c0_5 = arith.constant 0 : index
    %c0_6 = arith.constant 0 : index
    %c0_7 = arith.constant 0 : index
    %3 = vector.load %arg3[%c0_5, %c0_6, %c0_7] : memref<1x9x256xbf16, #tpu.memory_space<vmem>>, vector<1x9x256xbf16>
    %4 = arith.maximumf %2, %3 : vector<1x9x256xbf16>
    %c0_8 = arith.constant 0 : index
    %c0_9 = arith.constant 0 : index
    %c0_10 = arith.constant 0 : index
    %5 = vector.load %arg4[%c0_8, %c0_9, %c0_10] : memref<1x9x256xbf16, #tpu.memory_space<vmem>>, vector<1x9x256xbf16>
    %6 = arith.maximumf %4, %5 : vector<1x9x256xbf16>
    %c0_11 = arith.constant 0 : index
    %c0_12 = arith.constant 0 : index
    %c0_13 = arith.constant 0 : index
    %7 = vector.load %arg5[%c0_11, %c0_12, %c0_13] : memref<1x9x256xbf16, #tpu.memory_space<vmem>>, vector<1x9x256xbf16>
    %8 = arith.maximumf %6, %7 : vector<1x9x256xbf16>
    %c0_14 = arith.constant 0 : index
    %c0_15 = arith.constant 0 : index
    %c0_16 = arith.constant 0 : index
    %9 = vector.load %arg6[%c0_14, %c0_15, %c0_16] : memref<1x9x256xbf16, #tpu.memory_space<vmem>>, vector<1x9x256xbf16>
    %10 = arith.maximumf %8, %9 : vector<1x9x256xbf16>
    %c0_17 = arith.constant 0 : index
    %c0_18 = arith.constant 0 : index
    %c0_19 = arith.constant 0 : index
    %11 = vector.load %arg7[%c0_17, %c0_18, %c0_19] : memref<1x9x256xbf16, #tpu.memory_space<vmem>>, vector<1x9x256xbf16>
    %12 = arith.maximumf %10, %11 : vector<1x9x256xbf16>
    %c0_20 = arith.constant 0 : index
    %c0_21 = arith.constant 0 : index
    %c0_22 = arith.constant 0 : index
    %13 = vector.load %arg8[%c0_20, %c0_21, %c0_22] : memref<1x9x256xbf16, #tpu.memory_space<vmem>>, vector<1x9x256xbf16>
    %14 = arith.maximumf %12, %13 : vector<1x9x256xbf16>
    %c0_23 = arith.constant 0 : index
    %c0_24 = arith.constant 0 : index
    %c0_25 = arith.constant 0 : index
    %15 = vector.load %arg9[%c0_23, %c0_24, %c0_25] : memref<1x9x256xbf16, #tpu.memory_space<vmem>>, vector<1x9x256xbf16>
    %16 = arith.maximumf %14, %15 : vector<1x9x256xbf16>
    %c0_26 = arith.constant 0 : index
    %c0_27 = arith.constant 0 : index
    %c0_28 = arith.constant 0 : index
    %17 = vector.load %arg10[%c0_26, %c0_27, %c0_28] : memref<1x9x256xbf16, #tpu.memory_space<vmem>>, vector<1x9x256xbf16>
    tpu.vector_store %arg10[%c0_26, %c0_27, %c0_28], %16 {strides = array<i32>} : memref<1x9x256xbf16, #tpu.memory_space<vmem>>, vector<1x9x256xbf16>,
    return
  }
  func.func @transform_0(%arg0: i32) -> (i32, i32, i32) {
    %c0_i32 = arith.constant 0 : i32
    %c0_i32_0 = arith.constant 0 : i32
    %c0_i32_1 = arith.constant 0 : i32
    return %arg0, %c0_i32, %c0_i32_0 : i32, i32, i32
  }
  func.func @transform_1(%arg0: i32) -> (i32, i32, i32) {
    %c0_i32 = arith.constant 0 : i32
    %c0_i32_0 = arith.constant 0 : i32
    %c0_i32_1 = arith.constant 0 : i32
    return %arg0, %c0_i32, %c0_i32_0 : i32, i32, i32
  }
  func.func @transform_2(%arg0: i32) -> (i32, i32, i32) {
    %c0_i32 = arith.constant 0 : i32
    %c0_i32_0 = arith.constant 0 : i32
    %c0_i32_1 = arith.constant 0 : i32
    return %arg0, %c0_i32, %c0_i32_0 : i32, i32, i32
  }
  func.func @transform_3(%arg0: i32) -> (i32, i32, i32) {
    %c0_i32 = arith.constant 0 : i32
    %c0_i32_0 = arith.constant 0 : i32
    %c0_i32_1 = arith.constant 0 : i32
    return %arg0, %c0_i32, %c0_i32_0 : i32, i32, i32
  }
  func.func @transform_4(%arg0: i32) -> (i32, i32, i32) {
    %c0_i32 = arith.constant 0 : i32
    %c0_i32_0 = arith.constant 0 : i32
    %c0_i32_1 = arith.constant 0 : i32
    return %arg0, %c0_i32, %c0_i32_0 : i32, i32, i32
  }
  func.func @transform_5(%arg0: i32) -> (i32, i32, i32) {
    %c0_i32 = arith.constant 0 : i32
    %c0_i32_0 = arith.constant 0 : i32
    %c0_i32_1 = arith.constant 0 : i32
    return %arg0, %c0_i32, %c0_i32_0 : i32, i32, i32
  }
  func.func @transform_6(%arg0: i32) -> (i32, i32, i32) {
    %c0_i32 = arith.constant 0 : i32
    %c0_i32_0 = arith.constant 0 : i32
    %c0_i32_1 = arith.constant 0 : i32
    return %arg0, %c0_i32, %c0_i32_0 : i32, i32, i32
  }
  func.func @transform_7(%arg0: i32) -> (i32, i32, i32) {
    %c0_i32 = arith.constant 0 : i32
    %c0_i32_0 = arith.constant 0 : i32
    %c0_i32_1 = arith.constant 0 : i32
    return %arg0, %c0_i32, %c0_i32_0 : i32, i32, i32
  }
  func.func @transform_8(%arg0: i32) -> (i32, i32, i32) {
    %c0_i32 = arith.constant 0 : i32
    %c0_i32_0 = arith.constant 0 : i32
    %c0_i32_1 = arith.constant 0 : i32
    return %arg0, %c0_i32, %c0_i32_0 : i32, i32, i32
  }
  func.func @transform_9(%arg0: i32) -> (i32, i32, i32) {
    %c0_i32 = arith.constant 0 : i32
    %c0_i32_0 = arith.constant 0 : i32
    %c0_i32_1 = arith.constant 0 : i32
    return %arg0, %c0_i32, %c0_i32_0 : i32, i32, i32
  }
}

module attributes {stable_mosaic.version = 11 : i64} {
  func.func @_gemm_bias_act_kernel(%arg0: i32, %arg1: i32, %arg2: i32, %arg3: memref<24x768xbf16, #tpu.memory_space<vmem>>, %arg4: memref<768x128xbf16, #tpu.memory_space<vmem>>, %arg5: memref<1x128xf32, #tpu.memory_space<vmem>>, %arg6: memref<24x128xbf16, #tpu.memory_space<vmem>>, %arg7: memref<24x128xf32, #tpu.memory_space<vmem>>) attributes {dimension_semantics = [#tpu.dimension_semantics<parallel>, #tpu.dimension_semantics<parallel>, #tpu.dimension_semantics<arbitrary>], iteration_bounds = array<i64: 1, 3, 3>, scalar_prefetch = 0 : i64, scratch_operands = 1 : i64, tpu.core_type = #tpu.core_type<tc>, window_params = [{transform_indices = @transform_0, window_bounds = array<i64: 24, 768>}, {transform_indices = @transform_1, window_bounds = array<i64: 768, 128>}, {transform_indices = @transform_2, window_bounds = array<i64: 1, 128>}, {transform_indices = @transform_3, window_bounds = array<i64: 24, 128>}]} {
    %c0_i32 = arith.constant 0 : i32
    %0 = arith.cmpi eq, %arg2, %c0_i32 : i32
    %1 = arith.extui %0 : i1 to i32
    %c0_i32_0 = arith.constant 0 : i32
    %2 = arith.cmpi ne, %1, %c0_i32_0 : i32
    scf.if %2 {
      %cst_9 = arith.constant 0.000000e+00 : f32
      %12 = vector.broadcast %cst_9 : f32 to vector<24x128xf32>
      %c0_10 = arith.constant 0 : index
      %c0_11 = arith.constant 0 : index
      %13 = vector.load %arg7[%c0_10, %c0_11] : memref<24x128xf32, #tpu.memory_space<vmem>>, vector<24x128xf32>
      tpu.vector_store %arg7[%c0_10, %c0_11], %12 {strides = array<i32>} : memref<24x128xf32, #tpu.memory_space<vmem>>, vector<24x128xf32>,
    } else {
    }
    %c0 = arith.constant 0 : index
    %c0_1 = arith.constant 0 : index
    %3 = vector.load %arg7[%c0, %c0_1] : memref<24x128xf32, #tpu.memory_space<vmem>>, vector<24x128xf32>
    %c0_2 = arith.constant 0 : index
    %c0_3 = arith.constant 0 : index
    %4 = vector.load %arg3[%c0_2, %c0_3] : memref<24x768xbf16, #tpu.memory_space<vmem>>, vector<24x768xbf16>
    %c0_4 = arith.constant 0 : index
    %c0_5 = arith.constant 0 : index
    %5 = vector.load %arg4[%c0_4, %c0_5] : memref<768x128xbf16, #tpu.memory_space<vmem>>, vector<768x128xbf16>
    %cst = arith.constant dense<0.000000e+00> : vector<24x128xf32>
    %6 = tpu.matmul %4, %5, %cst {dimension_numbers = #tpu.dot_dimension_numbers<[1], [0], [0], [1], [0, 0, 1, 1], [], []>} : vector<24x768xbf16>, vector<768x128xbf16>, vector<24x128xf32> -> vector<24x128xf32>
    %7 = arith.addf %3, %6 : vector<24x128xf32>
    %c0_6 = arith.constant 0 : index
    %c0_7 = arith.constant 0 : index
    %8 = vector.load %arg7[%c0_6, %c0_7] : memref<24x128xf32, #tpu.memory_space<vmem>>, vector<24x128xf32>
    tpu.vector_store %arg7[%c0_6, %c0_7], %7 {strides = array<i32>} : memref<24x128xf32, #tpu.memory_space<vmem>>, vector<24x128xf32>,
    %c2_i32 = arith.constant 2 : i32
    %9 = arith.cmpi eq, %arg2, %c2_i32 : i32
    %10 = arith.extui %9 : i1 to i32
    %c0_i32_8 = arith.constant 0 : i32
    %11 = arith.cmpi ne, %10, %c0_i32_8 : i32
    scf.if %11 {
      %c0_9 = arith.constant 0 : index
      %c0_10 = arith.constant 0 : index
      %12 = vector.load %arg7[%c0_9, %c0_10] : memref<24x128xf32, #tpu.memory_space<vmem>>, vector<24x128xf32>
      %c0_11 = arith.constant 0 : index
      %c0_12 = arith.constant 0 : index
      %13 = vector.load %arg5[%c0_11, %c0_12] : memref<1x128xf32, #tpu.memory_space<vmem>>, vector<1x128xf32>
      %14 = vector.broadcast %13 : vector<1x128xf32> to vector<24x128xf32>
      %15 = arith.addf %12, %14 : vector<24x128xf32>
      %cst_13 = arith.constant 0.000000e+00 : f32
      %16 = vector.broadcast %cst_13 : f32 to vector<24x128xf32>
      %17 = arith.maximumf %15, %16 : vector<24x128xf32>
      %18 = arith.truncf %17 : vector<24x128xf32> to vector<24x128xbf16>
      %c0_14 = arith.constant 0 : index
      %c0_15 = arith.constant 0 : index
      %19 = vector.load %arg6[%c0_14, %c0_15] : memref<24x128xbf16, #tpu.memory_space<vmem>>, vector<24x128xbf16>
      tpu.vector_store %arg6[%c0_14, %c0_15], %18 {strides = array<i32>} : memref<24x128xbf16, #tpu.memory_space<vmem>>, vector<24x128xbf16>,
    } else {
    }
    return
  }
  func.func @transform_0(%arg0: i32, %arg1: i32, %arg2: i32) -> (i32, i32) {
    %c0_i32 = arith.constant 0 : i32
    return %arg0, %arg2 : i32, i32
  }
  func.func @transform_1(%arg0: i32, %arg1: i32, %arg2: i32) -> (i32, i32) {
    %c0_i32 = arith.constant 0 : i32
    return %arg2, %arg1 : i32, i32
  }
  func.func @transform_2(%arg0: i32, %arg1: i32, %arg2: i32) -> (i32, i32) {
    %c0_i32 = arith.constant 0 : i32
    %c0_i32_0 = arith.constant 0 : i32
    return %c0_i32, %arg1 : i32, i32
  }
  func.func @transform_3(%arg0: i32, %arg1: i32, %arg2: i32) -> (i32, i32) {
    %c0_i32 = arith.constant 0 : i32
    return %arg0, %arg1 : i32, i32
  }
}

module attributes {stable_mosaic.version = 11 : i64} {
  func.func @_gemm_bias_act_kernel(%arg0: i32, %arg1: i32, %arg2: i32, %arg3: memref<24x384xbf16, #tpu.memory_space<vmem>>, %arg4: memref<384x256xbf16, #tpu.memory_space<vmem>>, %arg5: memref<1x256xf32, #tpu.memory_space<vmem>>, %arg6: memref<24x256xbf16, #tpu.memory_space<vmem>>, %arg7: memref<24x256xf32, #tpu.memory_space<vmem>>) attributes {dimension_semantics = [#tpu.dimension_semantics<parallel>, #tpu.dimension_semantics<parallel>, #tpu.dimension_semantics<arbitrary>], iteration_bounds = array<i64: 1, 1, 9>, scalar_prefetch = 0 : i64, scratch_operands = 1 : i64, tpu.core_type = #tpu.core_type<tc>, window_params = [{transform_indices = @transform_0, window_bounds = array<i64: 24, 384>}, {transform_indices = @transform_1, window_bounds = array<i64: 384, 256>}, {transform_indices = @transform_2, window_bounds = array<i64: 1, 256>}, {transform_indices = @transform_3, window_bounds = array<i64: 24, 256>}]} {
    %c0_i32 = arith.constant 0 : i32
    %0 = arith.cmpi eq, %arg2, %c0_i32 : i32
    %1 = arith.extui %0 : i1 to i32
    %c0_i32_0 = arith.constant 0 : i32
    %2 = arith.cmpi ne, %1, %c0_i32_0 : i32
    scf.if %2 {
      %cst_9 = arith.constant 0.000000e+00 : f32
      %12 = vector.broadcast %cst_9 : f32 to vector<24x256xf32>
      %c0_10 = arith.constant 0 : index
      %c0_11 = arith.constant 0 : index
      %13 = vector.load %arg7[%c0_10, %c0_11] : memref<24x256xf32, #tpu.memory_space<vmem>>, vector<24x256xf32>
      tpu.vector_store %arg7[%c0_10, %c0_11], %12 {strides = array<i32>} : memref<24x256xf32, #tpu.memory_space<vmem>>, vector<24x256xf32>,
    } else {
    }
    %c0 = arith.constant 0 : index
    %c0_1 = arith.constant 0 : index
    %3 = vector.load %arg7[%c0, %c0_1] : memref<24x256xf32, #tpu.memory_space<vmem>>, vector<24x256xf32>
    %c0_2 = arith.constant 0 : index
    %c0_3 = arith.constant 0 : index
    %4 = vector.load %arg3[%c0_2, %c0_3] : memref<24x384xbf16, #tpu.memory_space<vmem>>, vector<24x384xbf16>
    %c0_4 = arith.constant 0 : index
    %c0_5 = arith.constant 0 : index
    %5 = vector.load %arg4[%c0_4, %c0_5] : memref<384x256xbf16, #tpu.memory_space<vmem>>, vector<384x256xbf16>
    %cst = arith.constant dense<0.000000e+00> : vector<24x256xf32>
    %6 = tpu.matmul %4, %5, %cst {dimension_numbers = #tpu.dot_dimension_numbers<[1], [0], [0], [1], [0, 0, 1, 1], [], []>} : vector<24x384xbf16>, vector<384x256xbf16>, vector<24x256xf32> -> vector<24x256xf32>
    %7 = arith.addf %3, %6 : vector<24x256xf32>
    %c0_6 = arith.constant 0 : index
    %c0_7 = arith.constant 0 : index
    %8 = vector.load %arg7[%c0_6, %c0_7] : memref<24x256xf32, #tpu.memory_space<vmem>>, vector<24x256xf32>
    tpu.vector_store %arg7[%c0_6, %c0_7], %7 {strides = array<i32>} : memref<24x256xf32, #tpu.memory_space<vmem>>, vector<24x256xf32>,
    %c8_i32 = arith.constant 8 : i32
    %9 = arith.cmpi eq, %arg2, %c8_i32 : i32
    %10 = arith.extui %9 : i1 to i32
    %c0_i32_8 = arith.constant 0 : i32
    %11 = arith.cmpi ne, %10, %c0_i32_8 : i32
    scf.if %11 {
      %c0_9 = arith.constant 0 : index
      %c0_10 = arith.constant 0 : index
      %12 = vector.load %arg7[%c0_9, %c0_10] : memref<24x256xf32, #tpu.memory_space<vmem>>, vector<24x256xf32>
      %c0_11 = arith.constant 0 : index
      %c0_12 = arith.constant 0 : index
      %13 = vector.load %arg5[%c0_11, %c0_12] : memref<1x256xf32, #tpu.memory_space<vmem>>, vector<1x256xf32>
      %14 = vector.broadcast %13 : vector<1x256xf32> to vector<24x256xf32>
      %15 = arith.addf %12, %14 : vector<24x256xf32>
      %cst_13 = arith.constant 0.000000e+00 : f32
      %16 = vector.broadcast %cst_13 : f32 to vector<24x256xf32>
      %17 = arith.maximumf %15, %16 : vector<24x256xf32>
      %18 = arith.truncf %17 : vector<24x256xf32> to vector<24x256xbf16>
      %c0_14 = arith.constant 0 : index
      %c0_15 = arith.constant 0 : index
      %19 = vector.load %arg6[%c0_14, %c0_15] : memref<24x256xbf16, #tpu.memory_space<vmem>>, vector<24x256xbf16>
      tpu.vector_store %arg6[%c0_14, %c0_15], %18 {strides = array<i32>} : memref<24x256xbf16, #tpu.memory_space<vmem>>, vector<24x256xbf16>,
    } else {
    }
    return
  }
  func.func @transform_0(%arg0: i32, %arg1: i32, %arg2: i32) -> (i32, i32) {
    %c0_i32 = arith.constant 0 : i32
    return %arg0, %arg2 : i32, i32
  }
  func.func @transform_1(%arg0: i32, %arg1: i32, %arg2: i32) -> (i32, i32) {
    %c0_i32 = arith.constant 0 : i32
    return %arg2, %arg1 : i32, i32
  }
  func.func @transform_2(%arg0: i32, %arg1: i32, %arg2: i32) -> (i32, i32) {
    %c0_i32 = arith.constant 0 : i32
    %c0_i32_0 = arith.constant 0 : i32
    return %c0_i32, %arg1 : i32, i32
  }
  func.func @transform_3(%arg0: i32, %arg1: i32, %arg2: i32) -> (i32, i32) {
    %c0_i32 = arith.constant 0 : i32
    return %arg0, %arg1 : i32, i32
  }
}

module attributes {stable_mosaic.version = 11 : i64} {
  func.func @_gemm_bias_act_kernel(%arg0: i32, %arg1: i32, %arg2: i32, %arg3: memref<24x768xbf16, #tpu.memory_space<vmem>>, %arg4: memref<768x256xbf16, #tpu.memory_space<vmem>>, %arg5: memref<1x256xf32, #tpu.memory_space<vmem>>, %arg6: memref<24x256xbf16, #tpu.memory_space<vmem>>, %arg7: memref<24x256xf32, #tpu.memory_space<vmem>>) attributes {dimension_semantics = [#tpu.dimension_semantics<parallel>, #tpu.dimension_semantics<parallel>, #tpu.dimension_semantics<arbitrary>], iteration_bounds = array<i64: 1, 1, 3>, scalar_prefetch = 0 : i64, scratch_operands = 1 : i64, tpu.core_type = #tpu.core_type<tc>, window_params = [{transform_indices = @transform_0, window_bounds = array<i64: 24, 768>}, {transform_indices = @transform_1, window_bounds = array<i64: 768, 256>}, {transform_indices = @transform_2, window_bounds = array<i64: 1, 256>}, {transform_indices = @transform_3, window_bounds = array<i64: 24, 256>}]} {
    %c0_i32 = arith.constant 0 : i32
    %0 = arith.cmpi eq, %arg2, %c0_i32 : i32
    %1 = arith.extui %0 : i1 to i32
    %c0_i32_0 = arith.constant 0 : i32
    %2 = arith.cmpi ne, %1, %c0_i32_0 : i32
    scf.if %2 {
      %cst_9 = arith.constant 0.000000e+00 : f32
      %12 = vector.broadcast %cst_9 : f32 to vector<24x256xf32>
      %c0_10 = arith.constant 0 : index
      %c0_11 = arith.constant 0 : index
      %13 = vector.load %arg7[%c0_10, %c0_11] : memref<24x256xf32, #tpu.memory_space<vmem>>, vector<24x256xf32>
      tpu.vector_store %arg7[%c0_10, %c0_11], %12 {strides = array<i32>} : memref<24x256xf32, #tpu.memory_space<vmem>>, vector<24x256xf32>,
    } else {
    }
    %c0 = arith.constant 0 : index
    %c0_1 = arith.constant 0 : index
    %3 = vector.load %arg7[%c0, %c0_1] : memref<24x256xf32, #tpu.memory_space<vmem>>, vector<24x256xf32>
    %c0_2 = arith.constant 0 : index
    %c0_3 = arith.constant 0 : index
    %4 = vector.load %arg3[%c0_2, %c0_3] : memref<24x768xbf16, #tpu.memory_space<vmem>>, vector<24x768xbf16>
    %c0_4 = arith.constant 0 : index
    %c0_5 = arith.constant 0 : index
    %5 = vector.load %arg4[%c0_4, %c0_5] : memref<768x256xbf16, #tpu.memory_space<vmem>>, vector<768x256xbf16>
    %cst = arith.constant dense<0.000000e+00> : vector<24x256xf32>
    %6 = tpu.matmul %4, %5, %cst {dimension_numbers = #tpu.dot_dimension_numbers<[1], [0], [0], [1], [0, 0, 1, 1], [], []>} : vector<24x768xbf16>, vector<768x256xbf16>, vector<24x256xf32> -> vector<24x256xf32>
    %7 = arith.addf %3, %6 : vector<24x256xf32>
    %c0_6 = arith.constant 0 : index
    %c0_7 = arith.constant 0 : index
    %8 = vector.load %arg7[%c0_6, %c0_7] : memref<24x256xf32, #tpu.memory_space<vmem>>, vector<24x256xf32>
    tpu.vector_store %arg7[%c0_6, %c0_7], %7 {strides = array<i32>} : memref<24x256xf32, #tpu.memory_space<vmem>>, vector<24x256xf32>,
    %c2_i32 = arith.constant 2 : i32
    %9 = arith.cmpi eq, %arg2, %c2_i32 : i32
    %10 = arith.extui %9 : i1 to i32
    %c0_i32_8 = arith.constant 0 : i32
    %11 = arith.cmpi ne, %10, %c0_i32_8 : i32
    scf.if %11 {
      %c0_9 = arith.constant 0 : index
      %c0_10 = arith.constant 0 : index
      %12 = vector.load %arg7[%c0_9, %c0_10] : memref<24x256xf32, #tpu.memory_space<vmem>>, vector<24x256xf32>
      %c0_11 = arith.constant 0 : index
      %c0_12 = arith.constant 0 : index
      %13 = vector.load %arg5[%c0_11, %c0_12] : memref<1x256xf32, #tpu.memory_space<vmem>>, vector<1x256xf32>
      %14 = vector.broadcast %13 : vector<1x256xf32> to vector<24x256xf32>
      %15 = arith.addf %12, %14 : vector<24x256xf32>
      %cst_13 = arith.constant 0.000000e+00 : f32
      %16 = vector.broadcast %cst_13 : f32 to vector<24x256xf32>
      %17 = arith.maximumf %15, %16 : vector<24x256xf32>
      %18 = arith.truncf %17 : vector<24x256xf32> to vector<24x256xbf16>
      %c0_14 = arith.constant 0 : index
      %c0_15 = arith.constant 0 : index
      %19 = vector.load %arg6[%c0_14, %c0_15] : memref<24x256xbf16, #tpu.memory_space<vmem>>, vector<24x256xbf16>
      tpu.vector_store %arg6[%c0_14, %c0_15], %18 {strides = array<i32>} : memref<24x256xbf16, #tpu.memory_space<vmem>>, vector<24x256xbf16>,
    } else {
    }
    return
  }
  func.func @transform_0(%arg0: i32, %arg1: i32, %arg2: i32) -> (i32, i32) {
    %c0_i32 = arith.constant 0 : i32
    return %arg0, %arg2 : i32, i32
  }
  func.func @transform_1(%arg0: i32, %arg1: i32, %arg2: i32) -> (i32, i32) {
    %c0_i32 = arith.constant 0 : i32
    return %arg2, %arg1 : i32, i32
  }
  func.func @transform_2(%arg0: i32, %arg1: i32, %arg2: i32) -> (i32, i32) {
    %c0_i32 = arith.constant 0 : i32
    %c0_i32_0 = arith.constant 0 : i32
    return %c0_i32, %arg1 : i32, i32
  }
  func.func @transform_3(%arg0: i32, %arg1: i32, %arg2: i32) -> (i32, i32) {
    %c0_i32 = arith.constant 0 : i32
    return %arg0, %arg1 : i32, i32
  }
}

module attributes {stable_mosaic.version = 11 : i64} {
  func.func @_gemm_bias_act_kernel(%arg0: i32, %arg1: i32, %arg2: i32, %arg3: memref<8x256xbf16, #tpu.memory_space<vmem>>, %arg4: memref<256x256xbf16, #tpu.memory_space<vmem>>, %arg5: memref<1x256xf32, #tpu.memory_space<vmem>>, %arg6: memref<8x256xbf16, #tpu.memory_space<vmem>>, %arg7: memref<8x256xf32, #tpu.memory_space<vmem>>) attributes {dimension_semantics = [#tpu.dimension_semantics<parallel>, #tpu.dimension_semantics<parallel>, #tpu.dimension_semantics<arbitrary>], iteration_bounds = array<i64: 1, 1, 1>, scalar_prefetch = 0 : i64, scratch_operands = 1 : i64, tpu.core_type = #tpu.core_type<tc>, window_params = [{transform_indices = @transform_0, window_bounds = array<i64: 8, 256>}, {transform_indices = @transform_1, window_bounds = array<i64: 256, 256>}, {transform_indices = @transform_2, window_bounds = array<i64: 1, 256>}, {transform_indices = @transform_3, window_bounds = array<i64: 8, 256>}]} {
    %c0_i32 = arith.constant 0 : i32
    %0 = arith.cmpi eq, %arg2, %c0_i32 : i32
    %1 = arith.extui %0 : i1 to i32
    %c0_i32_0 = arith.constant 0 : i32
    %2 = arith.cmpi ne, %1, %c0_i32_0 : i32
    scf.if %2 {
      %cst_10 = arith.constant 0.000000e+00 : f32
      %12 = vector.broadcast %cst_10 : f32 to vector<8x256xf32>
      %c0_11 = arith.constant 0 : index
      %c0_12 = arith.constant 0 : index
      %13 = vector.load %arg7[%c0_11, %c0_12] : memref<8x256xf32, #tpu.memory_space<vmem>>, vector<8x256xf32>
      tpu.vector_store %arg7[%c0_11, %c0_12], %12 {strides = array<i32>} : memref<8x256xf32, #tpu.memory_space<vmem>>, vector<8x256xf32>,
    } else {
    }
    %c0 = arith.constant 0 : index
    %c0_1 = arith.constant 0 : index
    %3 = vector.load %arg7[%c0, %c0_1] : memref<8x256xf32, #tpu.memory_space<vmem>>, vector<8x256xf32>
    %c0_2 = arith.constant 0 : index
    %c0_3 = arith.constant 0 : index
    %4 = vector.load %arg3[%c0_2, %c0_3] : memref<8x256xbf16, #tpu.memory_space<vmem>>, vector<8x256xbf16>
    %c0_4 = arith.constant 0 : index
    %c0_5 = arith.constant 0 : index
    %5 = vector.load %arg4[%c0_4, %c0_5] : memref<256x256xbf16, #tpu.memory_space<vmem>>, vector<256x256xbf16>
    %cst = arith.constant dense<0.000000e+00> : vector<8x256xf32>
    %6 = tpu.matmul %4, %5, %cst {dimension_numbers = #tpu.dot_dimension_numbers<[1], [0], [0], [1], [0, 0, 1, 1], [], []>} : vector<8x256xbf16>, vector<256x256xbf16>, vector<8x256xf32> -> vector<8x256xf32>
    %7 = arith.addf %3, %6 : vector<8x256xf32>
    %c0_6 = arith.constant 0 : index
    %c0_7 = arith.constant 0 : index
    %8 = vector.load %arg7[%c0_6, %c0_7] : memref<8x256xf32, #tpu.memory_space<vmem>>, vector<8x256xf32>
    tpu.vector_store %arg7[%c0_6, %c0_7], %7 {strides = array<i32>} : memref<8x256xf32, #tpu.memory_space<vmem>>, vector<8x256xf32>,
    %c0_i32_8 = arith.constant 0 : i32
    %9 = arith.cmpi eq, %arg2, %c0_i32_8 : i32
    %10 = arith.extui %9 : i1 to i32
    %c0_i32_9 = arith.constant 0 : i32
    %11 = arith.cmpi ne, %10, %c0_i32_9 : i32
    scf.if %11 {
      %c0_10 = arith.constant 0 : index
      %c0_11 = arith.constant 0 : index
      %12 = vector.load %arg7[%c0_10, %c0_11] : memref<8x256xf32, #tpu.memory_space<vmem>>, vector<8x256xf32>
      %c0_12 = arith.constant 0 : index
      %c0_13 = arith.constant 0 : index
      %13 = vector.load %arg5[%c0_12, %c0_13] : memref<1x256xf32, #tpu.memory_space<vmem>>, vector<1x256xf32>
      %14 = vector.broadcast %13 : vector<1x256xf32> to vector<8x256xf32>
      %15 = arith.addf %12, %14 : vector<8x256xf32>
      %cst_14 = arith.constant 0.000000e+00 : f32
      %16 = vector.broadcast %cst_14 : f32 to vector<8x256xf32>
      %17 = arith.maximumf %15, %16 : vector<8x256xf32>
      %18 = arith.truncf %17 : vector<8x256xf32> to vector<8x256xbf16>
      %c0_15 = arith.constant 0 : index
      %c0_16 = arith.constant 0 : index
      %19 = vector.load %arg6[%c0_15, %c0_16] : memref<8x256xbf16, #tpu.memory_space<vmem>>, vector<8x256xbf16>
      tpu.vector_store %arg6[%c0_15, %c0_16], %18 {strides = array<i32>} : memref<8x256xbf16, #tpu.memory_space<vmem>>, vector<8x256xbf16>,
    } else {
    }
    return
  }
  func.func @transform_0(%arg0: i32, %arg1: i32, %arg2: i32) -> (i32, i32) {
    %c0_i32 = arith.constant 0 : i32
    return %arg0, %arg2 : i32, i32
  }
  func.func @transform_1(%arg0: i32, %arg1: i32, %arg2: i32) -> (i32, i32) {
    %c0_i32 = arith.constant 0 : i32
    return %arg2, %arg1 : i32, i32
  }
  func.func @transform_2(%arg0: i32, %arg1: i32, %arg2: i32) -> (i32, i32) {
    %c0_i32 = arith.constant 0 : i32
    %c0_i32_0 = arith.constant 0 : i32
    return %c0_i32, %arg1 : i32, i32
  }
  func.func @transform_3(%arg0: i32, %arg1: i32, %arg2: i32) -> (i32, i32) {
    %c0_i32 = arith.constant 0 : i32
    return %arg0, %arg1 : i32, i32
  }
}

module attributes {stable_mosaic.version = 11 : i64} {
  func.func @_gemm_bias_act_kernel(%arg0: i32, %arg1: i32, %arg2: i32, %arg3: memref<8x256xbf16, #tpu.memory_space<vmem>>, %arg4: memref<256x128xbf16, #tpu.memory_space<vmem>>, %arg5: memref<1x128xf32, #tpu.memory_space<vmem>>, %arg6: memref<8x128xbf16, #tpu.memory_space<vmem>>, %arg7: memref<8x128xf32, #tpu.memory_space<vmem>>) attributes {dimension_semantics = [#tpu.dimension_semantics<parallel>, #tpu.dimension_semantics<parallel>, #tpu.dimension_semantics<arbitrary>], iteration_bounds = array<i64: 1, 1, 1>, scalar_prefetch = 0 : i64, scratch_operands = 1 : i64, tpu.core_type = #tpu.core_type<tc>, window_params = [{transform_indices = @transform_0, window_bounds = array<i64: 8, 256>}, {transform_indices = @transform_1, window_bounds = array<i64: 256, 128>}, {transform_indices = @transform_2, window_bounds = array<i64: 1, 128>}, {transform_indices = @transform_3, window_bounds = array<i64: 8, 128>}]} {
    %c0_i32 = arith.constant 0 : i32
    %0 = arith.cmpi eq, %arg2, %c0_i32 : i32
    %1 = arith.extui %0 : i1 to i32
    %c0_i32_0 = arith.constant 0 : i32
    %2 = arith.cmpi ne, %1, %c0_i32_0 : i32
    scf.if %2 {
      %cst_10 = arith.constant 0.000000e+00 : f32
      %12 = vector.broadcast %cst_10 : f32 to vector<8x128xf32>
      %c0_11 = arith.constant 0 : index
      %c0_12 = arith.constant 0 : index
      %13 = vector.load %arg7[%c0_11, %c0_12] : memref<8x128xf32, #tpu.memory_space<vmem>>, vector<8x128xf32>
      tpu.vector_store %arg7[%c0_11, %c0_12], %12 {strides = array<i32>} : memref<8x128xf32, #tpu.memory_space<vmem>>, vector<8x128xf32>,
    } else {
    }
    %c0 = arith.constant 0 : index
    %c0_1 = arith.constant 0 : index
    %3 = vector.load %arg7[%c0, %c0_1] : memref<8x128xf32, #tpu.memory_space<vmem>>, vector<8x128xf32>
    %c0_2 = arith.constant 0 : index
    %c0_3 = arith.constant 0 : index
    %4 = vector.load %arg3[%c0_2, %c0_3] : memref<8x256xbf16, #tpu.memory_space<vmem>>, vector<8x256xbf16>
    %c0_4 = arith.constant 0 : index
    %c0_5 = arith.constant 0 : index
    %5 = vector.load %arg4[%c0_4, %c0_5] : memref<256x128xbf16, #tpu.memory_space<vmem>>, vector<256x128xbf16>
    %cst = arith.constant dense<0.000000e+00> : vector<8x128xf32>
    %6 = tpu.matmul %4, %5, %cst {dimension_numbers = #tpu.dot_dimension_numbers<[1], [0], [0], [1], [0, 0, 1, 1], [], []>} : vector<8x256xbf16>, vector<256x128xbf16>, vector<8x128xf32> -> vector<8x128xf32>
    %7 = arith.addf %3, %6 : vector<8x128xf32>
    %c0_6 = arith.constant 0 : index
    %c0_7 = arith.constant 0 : index
    %8 = vector.load %arg7[%c0_6, %c0_7] : memref<8x128xf32, #tpu.memory_space<vmem>>, vector<8x128xf32>
    tpu.vector_store %arg7[%c0_6, %c0_7], %7 {strides = array<i32>} : memref<8x128xf32, #tpu.memory_space<vmem>>, vector<8x128xf32>,
    %c0_i32_8 = arith.constant 0 : i32
    %9 = arith.cmpi eq, %arg2, %c0_i32_8 : i32
    %10 = arith.extui %9 : i1 to i32
    %c0_i32_9 = arith.constant 0 : i32
    %11 = arith.cmpi ne, %10, %c0_i32_9 : i32
    scf.if %11 {
      %c0_10 = arith.constant 0 : index
      %c0_11 = arith.constant 0 : index
      %12 = vector.load %arg7[%c0_10, %c0_11] : memref<8x128xf32, #tpu.memory_space<vmem>>, vector<8x128xf32>
      %c0_12 = arith.constant 0 : index
      %c0_13 = arith.constant 0 : index
      %13 = vector.load %arg5[%c0_12, %c0_13] : memref<1x128xf32, #tpu.memory_space<vmem>>, vector<1x128xf32>
      %14 = vector.broadcast %13 : vector<1x128xf32> to vector<8x128xf32>
      %15 = arith.addf %12, %14 : vector<8x128xf32>
      %16 = arith.truncf %15 : vector<8x128xf32> to vector<8x128xbf16>
      %c0_14 = arith.constant 0 : index
      %c0_15 = arith.constant 0 : index
      %17 = vector.load %arg6[%c0_14, %c0_15] : memref<8x128xbf16, #tpu.memory_space<vmem>>, vector<8x128xbf16>
      tpu.vector_store %arg6[%c0_14, %c0_15], %16 {strides = array<i32>} : memref<8x128xbf16, #tpu.memory_space<vmem>>, vector<8x128xbf16>,
    } else {
    }
    return
  }
  func.func @transform_0(%arg0: i32, %arg1: i32, %arg2: i32) -> (i32, i32) {
    %c0_i32 = arith.constant 0 : i32
    return %arg0, %arg2 : i32, i32
  }
  func.func @transform_1(%arg0: i32, %arg1: i32, %arg2: i32) -> (i32, i32) {
    %c0_i32 = arith.constant 0 : i32
    return %arg2, %arg1 : i32, i32
  }
  func.func @transform_2(%arg0: i32, %arg1: i32, %arg2: i32) -> (i32, i32) {
    %c0_i32 = arith.constant 0 : i32
    %c0_i32_0 = arith.constant 0 : i32
    return %c0_i32, %arg1 : i32, i32
  }
  func.func @transform_3(%arg0: i32, %arg1: i32, %arg2: i32) -> (i32, i32) {
    %c0_i32 = arith.constant 0 : i32
    return %arg0, %arg1 : i32, i32
  }
}

module attributes {stable_mosaic.version = 11 : i64} {
  func.func @_gemm_bias_act_kernel(%arg0: i32, %arg1: i32, %arg2: i32, %arg3: memref<8x768xbf16, #tpu.memory_space<vmem>>, %arg4: memref<768x256xbf16, #tpu.memory_space<vmem>>, %arg5: memref<1x256xf32, #tpu.memory_space<vmem>>, %arg6: memref<8x256xbf16, #tpu.memory_space<vmem>>, %arg7: memref<8x256xf32, #tpu.memory_space<vmem>>) attributes {dimension_semantics = [#tpu.dimension_semantics<parallel>, #tpu.dimension_semantics<parallel>, #tpu.dimension_semantics<arbitrary>], iteration_bounds = array<i64: 1, 1, 3>, scalar_prefetch = 0 : i64, scratch_operands = 1 : i64, tpu.core_type = #tpu.core_type<tc>, window_params = [{transform_indices = @transform_0, window_bounds = array<i64: 8, 768>}, {transform_indices = @transform_1, window_bounds = array<i64: 768, 256>}, {transform_indices = @transform_2, window_bounds = array<i64: 1, 256>}, {transform_indices = @transform_3, window_bounds = array<i64: 8, 256>}]} {
    %c0_i32 = arith.constant 0 : i32
    %0 = arith.cmpi eq, %arg2, %c0_i32 : i32
    %1 = arith.extui %0 : i1 to i32
    %c0_i32_0 = arith.constant 0 : i32
    %2 = arith.cmpi ne, %1, %c0_i32_0 : i32
    scf.if %2 {
      %cst_9 = arith.constant 0.000000e+00 : f32
      %12 = vector.broadcast %cst_9 : f32 to vector<8x256xf32>
      %c0_10 = arith.constant 0 : index
      %c0_11 = arith.constant 0 : index
      %13 = vector.load %arg7[%c0_10, %c0_11] : memref<8x256xf32, #tpu.memory_space<vmem>>, vector<8x256xf32>
      tpu.vector_store %arg7[%c0_10, %c0_11], %12 {strides = array<i32>} : memref<8x256xf32, #tpu.memory_space<vmem>>, vector<8x256xf32>,
    } else {
    }
    %c0 = arith.constant 0 : index
    %c0_1 = arith.constant 0 : index
    %3 = vector.load %arg7[%c0, %c0_1] : memref<8x256xf32, #tpu.memory_space<vmem>>, vector<8x256xf32>
    %c0_2 = arith.constant 0 : index
    %c0_3 = arith.constant 0 : index
    %4 = vector.load %arg3[%c0_2, %c0_3] : memref<8x768xbf16, #tpu.memory_space<vmem>>, vector<8x768xbf16>
    %c0_4 = arith.constant 0 : index
    %c0_5 = arith.constant 0 : index
    %5 = vector.load %arg4[%c0_4, %c0_5] : memref<768x256xbf16, #tpu.memory_space<vmem>>, vector<768x256xbf16>
    %cst = arith.constant dense<0.000000e+00> : vector<8x256xf32>
    %6 = tpu.matmul %4, %5, %cst {dimension_numbers = #tpu.dot_dimension_numbers<[1], [0], [0], [1], [0, 0, 1, 1], [], []>} : vector<8x768xbf16>, vector<768x256xbf16>, vector<8x256xf32> -> vector<8x256xf32>
    %7 = arith.addf %3, %6 : vector<8x256xf32>
    %c0_6 = arith.constant 0 : index
    %c0_7 = arith.constant 0 : index
    %8 = vector.load %arg7[%c0_6, %c0_7] : memref<8x256xf32, #tpu.memory_space<vmem>>, vector<8x256xf32>
    tpu.vector_store %arg7[%c0_6, %c0_7], %7 {strides = array<i32>} : memref<8x256xf32, #tpu.memory_space<vmem>>, vector<8x256xf32>,
    %c2_i32 = arith.constant 2 : i32
    %9 = arith.cmpi eq, %arg2, %c2_i32 : i32
    %10 = arith.extui %9 : i1 to i32
    %c0_i32_8 = arith.constant 0 : i32
    %11 = arith.cmpi ne, %10, %c0_i32_8 : i32
    scf.if %11 {
      %c0_9 = arith.constant 0 : index
      %c0_10 = arith.constant 0 : index
      %12 = vector.load %arg7[%c0_9, %c0_10] : memref<8x256xf32, #tpu.memory_space<vmem>>, vector<8x256xf32>
      %c0_11 = arith.constant 0 : index
      %c0_12 = arith.constant 0 : index
      %13 = vector.load %arg5[%c0_11, %c0_12] : memref<1x256xf32, #tpu.memory_space<vmem>>, vector<1x256xf32>
      %14 = vector.broadcast %13 : vector<1x256xf32> to vector<8x256xf32>
      %15 = arith.addf %12, %14 : vector<8x256xf32>
      %cst_13 = arith.constant 0.000000e+00 : f32
      %16 = vector.broadcast %cst_13 : f32 to vector<8x256xf32>
      %17 = arith.maximumf %15, %16 : vector<8x256xf32>
      %18 = arith.truncf %17 : vector<8x256xf32> to vector<8x256xbf16>
      %c0_14 = arith.constant 0 : index
      %c0_15 = arith.constant 0 : index
      %19 = vector.load %arg6[%c0_14, %c0_15] : memref<8x256xbf16, #tpu.memory_space<vmem>>, vector<8x256xbf16>
      tpu.vector_store %arg6[%c0_14, %c0_15], %18 {strides = array<i32>} : memref<8x256xbf16, #tpu.memory_space<vmem>>, vector<8x256xbf16>,
    } else {
    }
    return
  }
  func.func @transform_0(%arg0: i32, %arg1: i32, %arg2: i32) -> (i32, i32) {
    %c0_i32 = arith.constant 0 : i32
    return %arg0, %arg2 : i32, i32
  }
  func.func @transform_1(%arg0: i32, %arg1: i32, %arg2: i32) -> (i32, i32) {
    %c0_i32 = arith.constant 0 : i32
    return %arg2, %arg1 : i32, i32
  }
  func.func @transform_2(%arg0: i32, %arg1: i32, %arg2: i32) -> (i32, i32) {
    %c0_i32 = arith.constant 0 : i32
    %c0_i32_0 = arith.constant 0 : i32
    return %c0_i32, %arg1 : i32, i32
  }
  func.func @transform_3(%arg0: i32, %arg1: i32, %arg2: i32) -> (i32, i32) {
    %c0_i32 = arith.constant 0 : i32
    return %arg0, %arg1 : i32, i32
  }
}

</mosaic_0001>

<llo_original>
// kernel: localizer_alexnet_forward.10
$region0: #{localizer_alexnet_forward.10}
  #allocation0 [shape = 'u32[]', space=smem, size = 0x4, offset = 0x4, fixed_abs, tag = 'smem constant byte address 0x4 - core index']
  #allocation1 [shape = 'u32[144,128]{1,0:T(1,128)}', space=vmem, size = 0x12000, scoped, tag = 'internal scratch']
  #allocation2 [shape = 'f32[256,128]{1,0:T(8,128)}', space=vmem, size = 0x20000, scoped, tag = 'scratch operand']
  %s0 = inlined_call_operand.vmem [shape: bf16[512,363], index: 0, kind: input, shape index: {}]
  %s1 = inlined_call_operand.vmem [shape: bf16[363,128], index: 1, kind: input, shape index: {}]
  %s2 = inlined_call_operand.vmem [shape: f32[1,128], index: 2, kind: input, shape index: {}]
  %s3 = inlined_call_operand.vmem [shape: bf16[512,128], index: 3, kind: output, shape index: {}]
  %s4 = sld [smem:[#allocation0]]
  $region53: #{localizer_alexnet_forward.10} parent=0
    _
  %s6 = ssub.s32 1, %s4
  %s7 = scalar_select 0, %s6, %s4
  loop: start=0, step=1, limit=4
  $region2: #{localizer_alexnet_forward.10} parent=0 // loop_pre_header
    _
  $region3: #{localizer_alexnet_forward.10} parent=0 // loop_header
    %s9 = sphi 0, %s13
    %p10 = scmp.ge.s32.totalorder %s9, 4
    %s16 = sphi 0, %s35
    %s17 = sphi 0, %s31
    %s18 = sphi 0, %s27
    %s19 = sphi 0, %s16
    %s20 = sphi 0, %s17
    %s21 = sphi 0, %s18
    %s22 = sphi 0, %s19
    %s23 = sphi 0, %s20
    %s24 = sphi 0, %s21
    %s40 = sphi 0, %s42
    %s43 = sphi 0, %s40
    %s44 = sphi 0, %s43
    %s60 = sphi 0, %s44
    %s68 = sphi 0, %s70
    %s71 = sphi 0, %s68
    %s72 = sphi 0, %s71
    %s88 = sphi 0, %s72
    %s94 = sphi 0, %s96
    %s97 = sphi 0, %s94
    %s98 = sphi 0, %s97
    %s114 = sphi 0, %s98
    %s122 = sphi 0, %s124
    %s125 = sphi 0, %s122
    %s126 = sphi 0, %s125
    %s142 = sphi 0, %s126
  $region4: #{localizer_alexnet_forward.10} parent=0 // loop_header_branch
    %12 = sbr.rel (%p10) target = $region8
  $region5: #{localizer_alexnet_forward.10} parent=0 // loop_body
    %s14 = ssub.s32 %s9, 1
    %s15 = ssub.s32 %s9, 2
    %s25 = sadd.s32 1, %s18
    %p26 = scmp.ge.s32.totalorder %s25, 1
    %s27 = scalar_select %p26, 0, %s25
    %s28 = sadd.s32 1, %s17
    %s29 = scalar_select %p26, %s28, %s17
    %p30 = scmp.ge.s32.totalorder %s29, 1
    %s31 = scalar_select %p30, 0, %s29
    %s32 = sadd.s32 1, %s16
    %s33 = scalar_select %p30, %s32, %s16
    %p34 = scmp.ge.s32.totalorder %s33, 2
    %s35 = scalar_select %p34, 0, %s33
    %s36 = ssub.s32 %s16, %s35
    %s37 = ssub.s32 %s18, %s27
    %s38 = sor.u32 %s36, %s37
    %p39 = scmp.eq.s32.totalorder %s38, 0
    %s41 = sadd.s32 %s40, 1
    %s42 = scalar_select %p39, %s40, %s41
    %p45 = pneg %p39
    %p46 = scmp.eq.s32.totalorder %s9, 1
    %p47 = por %p45, %p46
    %p48 = scmp.ne.s32.totalorder %s40, %s43
    %p49 = scmp.eq.s32.totalorder %s9, 0
    %p50 = por %p48, %p49
    %p51 = scmp.ne.s32.totalorder %s40, %s43
    %p52 = scmp.eq.s32.totalorder %s14, 1
    %p53 = por %p51, %p52
    %p54 = scmp.ne.s32.totalorder %s43, %s44
    %p55 = scmp.eq.s32.totalorder %s14, 0
    %p56 = por %p54, %p55
    %p57 = scmp.ne.s32.totalorder %s43, %s44
    %p58 = scmp.eq.s32.totalorder %s15, 1
    %p59 = por %p57, %p58
    %p61 = scmp.ne.s32.totalorder %s44, %s60
    %p62 = scmp.eq.s32.totalorder %s15, 0
    %p63 = por %p61, %p62
    %s64 = ssub.s32 %s18, %s27
    %s65 = ssub.s32 %s17, %s31
    %s66 = sor.u32 %s64, %s65
    %p67 = scmp.eq.s32.totalorder %s66, 0
    %s69 = sadd.s32 %s68, 1
    %s70 = scalar_select %p67, %s68, %s69
    %p73 = pneg %p67
    %p74 = scmp.eq.s32.totalorder %s9, 1
    %p75 = por %p73, %p74
    %p76 = scmp.ne.s32.totalorder %s68, %s71
    %p77 = scmp.eq.s32.totalorder %s9, 0
    %p78 = por %p76, %p77
    %p79 = scmp.ne.s32.totalorder %s68, %s71
    %p80 = scmp.eq.s32.totalorder %s14, 1
    %p81 = por %p79, %p80
    %p82 = scmp.ne.s32.totalorder %s71, %s72
    %p83 = scmp.eq.s32.totalorder %s14, 0
    %p84 = por %p82, %p83
    %p85 = scmp.ne.s32.totalorder %s71, %s72
    %p86 = scmp.eq.s32.totalorder %s15, 1
    %p87 = por %p85, %p86
    %p89 = scmp.ne.s32.totalorder %s72, %s88
    %p90 = scmp.eq.s32.totalorder %s15, 0
    %p91 = por %p89, %p90
    %s92 = ssub.s32 %s17, %s31
    %p93 = scmp.eq.s32.totalorder %s92, 0
    %s95 = sadd.s32 %s94, 1
    %s96 = scalar_select %p93, %s94, %s95
    %p99 = pneg %p93
    %p100 = scmp.eq.s32.totalorder %s9, 1
    %p101 = por %p99, %p100
    %p102 = scmp.ne.s32.totalorder %s94, %s97
    %p103 = scmp.eq.s32.totalorder %s9, 0
    %p104 = por %p102, %p103
    %p105 = scmp.ne.s32.totalorder %s94, %s97
    %p106 = scmp.eq.s32.totalorder %s14, 1
    %p107 = por %p105, %p106
    %p108 = scmp.ne.s32.totalorder %s97, %s98
    %p109 = scmp.eq.s32.totalorder %s14, 0
    %p110 = por %p108, %p109
    %p111 = scmp.ne.s32.totalorder %s97, %s98
    %p112 = scmp.eq.s32.totalorder %s15, 1
    %p113 = por %p111, %p112
    %p115 = scmp.ne.s32.totalorder %s98, %s114
    %p116 = scmp.eq.s32.totalorder %s15, 0
    %p117 = por %p115, %p116
    %s118 = ssub.s32 %s16, %s35
    %s119 = ssub.s32 %s17, %s31
    %s120 = sor.u32 %s118, %s119
    %p121 = scmp.eq.s32.totalorder %s120, 0
    %s123 = sadd.s32 %s122, 1
    %s124 = scalar_select %p121, %s122, %s123
    %p127 = pneg %p121
    %p128 = scmp.eq.s32.totalorder %s9, 1
    %p129 = por %p127, %p128
    %p130 = scmp.ne.s32.totalorder %s122, %s125
    %p131 = scmp.eq.s32.totalorder %s9, 0
    %p132 = por %p130, %p131
    %p133 = scmp.ne.s32.totalorder %s122, %s125
    %p134 = scmp.eq.s32.totalorder %s14, 1
    %p135 = por %p133, %p134
    %p136 = scmp.ne.s32.totalorder %s125, %s126
    %p137 = scmp.eq.s32.totalorder %s14, 0
    %p138 = por %p136, %p137
    %p139 = scmp.ne.s32.totalorder %s125, %s126
    %p140 = scmp.eq.s32.totalorder %s15, 1
    %p141 = por %p139, %p140
    %p143 = scmp.ne.s32.totalorder %s126, %s142
    %p144 = scmp.eq.s32.totalorder %s15, 0
    %p145 = por %p143, %p144
    %p146 = scmp.le.s32.totalorder 1, %s9
    %p147 = scmp.lt.s32.totalorder %s9, 3
    %p148 = pnand %p146, %p147
    %p149 = pneg %p148
    // Predicated region
    $region9: #{localizer_alexnet_forward.10} parent=5 // pred_check
      _
    $region10: #{localizer_alexnet_forward.10} parent=5 // pred_check_branch
      %151 = sbr.rel (%p148) target = $region12
    $region11: #{localizer_alexnet_forward.10} parent=5 // pred_region
      %s152 = ssub.s32 %s9, 1
      // Predicated region
      $region13: #{localizer_alexnet_forward.10} parent=11 // pred_check
        %p153 = pneg %p84
      $region14: #{localizer_alexnet_forward.10} parent=11 // pred_check_branch
        %155 = sbr.rel (%p153) target = $region16
      $region15: #{localizer_alexnet_forward.10} parent=11 // pred_region
        %s156 = smul.u32 46, %s21
        %p157 = scmp.lt.s32.totalorder %s156, 45
        %s158 = scalar_select %p157, %s156, 45
        %p159 = scmp.lt.s32.totalorder %s20, 0
        %s160 = scalar_select %p159, %s20, 0
        %s161 = sadd.s32 %s160, %s158
        %s162 = smul.addr %s161, 4
        %s163 = scalar_lea.vmem %s1, %s162
        %s164 = smul.u32 46, %s21
      $region16: #{localizer_alexnet_forward.10} parent=11 // pred_fallthru
        _
      // Predicated region
      $region17: #{localizer_alexnet_forward.10} parent=11 // pred_check
        %p165 = pneg %p110
      $region18: #{localizer_alexnet_forward.10} parent=11 // pred_check_branch
        %167 = sbr.rel (%p165) target = $region20
      $region19: #{localizer_alexnet_forward.10} parent=11 // pred_region
        %p168 = scmp.lt.s32.totalorder %s20, 0
        %s169 = scalar_select %p168, %s20, 0
        %s170 = scalar_lea.vmem %s2, %s169
      $region20: #{localizer_alexnet_forward.10} parent=11 // pred_fallthru
        _
    $region12: #{localizer_alexnet_forward.10} parent=5 // pred_fallthru
      _
    %p171 = scmp.lt.s32.totalorder %s9, 2
    // Predicated region
    $region21: #{localizer_alexnet_forward.10} parent=5 // pred_check
      %p172 = pneg %p171
    $region22: #{localizer_alexnet_forward.10} parent=5 // pred_check_branch
      %174 = sbr.rel (%p172) target = $region24
    $region23: #{localizer_alexnet_forward.10} parent=5 // pred_region
      // Predicated region
      $region25: #{localizer_alexnet_forward.10} parent=23 // pred_check
        %p175 = pneg %p50
      $region26: #{localizer_alexnet_forward.10} parent=23 // pred_check_branch
        %177 = sbr.rel (%p175) target = $region28
      $region27: #{localizer_alexnet_forward.10} parent=23 // pred_region
        %s178 = smul.u32 32, %s16
        %s179 = smul.u32 3, %s18
        %p180 = scmp.lt.s32.totalorder %s178, 63
        %s181 = scalar_select %p180, %s178, 63
        %p182 = scmp.lt.s32.totalorder %s179, 2
        %s183 = scalar_select %p182, %s179, 2
        %s184 = smul.addr %s181, 3
        %s185 = sadd.s32 %s183, %s184
        %s186 = smul.addr %s185, 4
        %s187 = scalar_lea.vmem %s0, %s186
        %s188 = smul.u32 32, %s16
        %s189 = smul.u32 3, %s18
      $region28: #{localizer_alexnet_forward.10} parent=23 // pred_fallthru
        _
    $region24: #{localizer_alexnet_forward.10} parent=5 // pred_fallthru
      _
    %p190 = scmp.le.s32.totalorder 1, %s9
    %p191 = scmp.lt.s32.totalorder %s9, 3
    %p192 = pnand %p190, %p191
    %p193 = pneg %p192
    // Predicated region
    $region29: #{localizer_alexnet_forward.10} parent=5 // pred_check
      _
    $region30: #{localizer_alexnet_forward.10} parent=5 // pred_check_branch
      %195 = sbr.rel (%p192) target = $region32
    $region31: #{localizer_alexnet_forward.10} parent=5 // pred_region
      %s196 = ssub.s32 %s9, 1
      %s197 = smul.u32 32, %s19
      %s198 = smul.u32 3, %s21
      %p199 = scmp.lt.s32.totalorder %s197, 63
      %s200 = scalar_select %p199, %s197, 63
      %p201 = scmp.lt.s32.totalorder %s198, 2
      %s202 = scalar_select %p201, %s198, 2
      %s203 = smul.addr %s200, 3
      %s204 = sadd.s32 %s202, %s203
      %s205 = smul.addr %s204, 4
      %s206 = scalar_lea.vmem %s0, %s205
      %p207 = pneg %p56
      %p208 = pneg %p53
      %s209 = smul.u32 46, %s21
      %p210 = scmp.lt.s32.totalorder %s209, 45
      %s211 = scalar_select %p210, %s209, 45
      %p212 = scmp.lt.s32.totalorder %s20, 0
      %s213 = scalar_select %p212, %s20, 0
      %s214 = sadd.s32 %s213, %s211
      %s215 = smul.addr %s214, 4
      %s216 = scalar_lea.vmem %s1, %s215
      %p217 = pneg %p84
      %p218 = pneg %p81
      %p219 = scmp.lt.s32.totalorder %s20, 0
      %s220 = scalar_select %p219, %s20, 0
      %s221 = scalar_lea.vmem %s2, %s220
      %p222 = pneg %p110
      %p223 = pneg %p107
      %p224 = pneg %p138
      %p225 = pneg %p135
      %s226 = smul.u32 32, %s19
      %p227 = scmp.lt.s32.totalorder %s226, 63
      %s228 = scalar_select %p227, %s226, 63
      %p229 = scmp.lt.s32.totalorder %s20, 0
      %s230 = scalar_select %p229, %s20, 0
      %s231 = sadd.s32 %s230, %s228
      %s232 = smul.addr %s231, 4
      %s233 = scalar_lea.vmem %s3, %s232
      %s234 = smul.u32 32, %s19
      %s235 = smul.u32 3, %s21
      %p236 = scmp.lt.s32.totalorder %s234, 63
      %s237 = scalar_select %p236, %s234, 63
      %p238 = scmp.lt.s32.totalorder %s235, 2
      %s239 = scalar_select %p238, %s235, 2
      %s240 = smul.addr %s237, 3
      %s241 = sadd.s32 %s239, %s240
      %s242 = smul.addr %s241, 4
      %s243 = scalar_lea.vmem %s0, %s242
      %s244 = smul.u32 32, %s19
      %s245 = smul.u32 3, %s21
      %s246 = smul.u32 46, %s21
      %p247 = scmp.lt.s32.totalorder %s246, 45
      %s248 = scalar_select %p247, %s246, 45
      %p249 = scmp.lt.s32.totalorder %s20, 0
      %s250 = scalar_select %p249, %s20, 0
      %s251 = sadd.s32 %s250, %s248
      %s252 = smul.addr %s251, 4
      %s253 = scalar_lea.vmem %s1, %s252
      %s254 = smul.u32 46, %s21
      %p255 = scmp.lt.s32.totalorder %s20, 0
      %s256 = scalar_select %p255, %s20, 0
      %s257 = scalar_lea.vmem %s2, %s256
      %s258 = smul.u32 32, %s19
      %p259 = scmp.lt.s32.totalorder %s258, 63
      %s260 = scalar_select %p259, %s258, 63
      %p261 = scmp.lt.s32.totalorder %s20, 0
      %s262 = scalar_select %p261, %s20, 0
      %s263 = sadd.s32 %s262, %s260
      %s264 = smul.addr %s263, 4
      %s265 = scalar_lea.vmem %s3, %s264
      %s266 = smul.u32 32, %s19
      %p268 = scmp.eq.s32.totalorder %s21, 0
      // Predicated region
      $region33: #{localizer_alexnet_forward.10} parent=31 // pred_check
        %p269 = pneg %p268
      $region34: #{localizer_alexnet_forward.10} parent=31 // pred_check_branch
        %271 = sbr.rel (%p269) target = $region36
      $region35: #{localizer_alexnet_forward.10} parent=31 // pred_region
        %272 = vst [vmem:[#allocation2] sm:$0xff] 0.0
        %273 = vst [vmem:[#allocation2 + $0x8] sm:$0xff] 0.0
        %274 = vst [vmem:[#allocation2 + $0x10] sm:$0xff] 0.0
        %275 = vst [vmem:[#allocation2 + $0x18] sm:$0xff] 0.0
        %276 = vst [vmem:[#allocation2 + $0x20] sm:$0xff] 0.0
        %277 = vst [vmem:[#allocation2 + $0x28] sm:$0xff] 0.0
        %278 = vst [vmem:[#allocation2 + $0x30] sm:$0xff] 0.0
        %279 = vst [vmem:[#allocation2 + $0x38] sm:$0xff] 0.0
        %280 = vst [vmem:[#allocation2 + $0x40] sm:$0xff] 0.0
        %281 = vst [vmem:[#allocation2 + $0x48] sm:$0xff] 0.0
        %282 = vst [vmem:[#allocation2 + $0x50] sm:$0xff] 0.0
        %283 = vst [vmem:[#allocation2 + $0x58] sm:$0xff] 0.0
        %284 = vst [vmem:[#allocation2 + $0x60] sm:$0xff] 0.0
        %285 = vst [vmem:[#allocation2 + $0x68] sm:$0xff] 0.0
        %286 = vst [vmem:[#allocation2 + $0x70] sm:$0xff] 0.0
        %287 = vst [vmem:[#allocation2 + $0x78] sm:$0xff] 0.0
        %288 = vst [vmem:[#allocation2 + $0x80] sm:$0xff] 0.0
        %289 = vst [vmem:[#allocation2 + $0x88] sm:$0xff] 0.0
        %290 = vst [vmem:[#allocation2 + $0x90] sm:$0xff] 0.0
        %291 = vst [vmem:[#allocation2 + $0x98] sm:$0xff] 0.0
        %292 = vst [vmem:[#allocation2 + $0xa0] sm:$0xff] 0.0
        %293 = vst [vmem:[#allocation2 + $0xa8] sm:$0xff] 0.0
        %294 = vst [vmem:[#allocation2 + $0xb0] sm:$0xff] 0.0
        %295 = vst [vmem:[#allocation2 + $0xb8] sm:$0xff] 0.0
        %296 = vst [vmem:[#allocation2 + $0xc0] sm:$0xff] 0.0
        %297 = vst [vmem:[#allocation2 + $0xc8] sm:$0xff] 0.0
        %298 = vst [vmem:[#allocation2 + $0xd0] sm:$0xff] 0.0
        %299 = vst [vmem:[#allocation2 + $0xd8] sm:$0xff] 0.0
        %300 = vst [vmem:[#allocation2 + $0xe0] sm:$0xff] 0.0
        %301 = vst [vmem:[#allocation2 + $0xe8] sm:$0xff] 0.0
        %302 = vst [vmem:[#allocation2 + $0xf0] sm:$0xff] 0.0
        %303 = vst [vmem:[#allocation2 + $0xf8] sm:$0xff] 0.0
      $region36: #{localizer_alexnet_forward.10} parent=31 // pred_fallthru
        _
      %v304 = vld [vmem:[#allocation2] sm:$0xff]
      %v305 = vld [vmem:[#allocation2 + $0x8] sm:$0xff]
      %v306 = vld [vmem:[#allocation2 + $0x10] sm:$0xff]
      %v307 = vld [vmem:[#allocation2 + $0x18] sm:$0xff]
      %v308 = vld [vmem:[#allocation2 + $0x20] sm:$0xff]
      %v309 = vld [vmem:[#allocation2 + $0x28] sm:$0xff]
      %v310 = vld [vmem:[#allocation2 + $0x30] sm:$0xff]
      %v311 = vld [vmem:[#allocation2 + $0x38] sm:$0xff]
      %v312 = vld [vmem:[#allocation2 + $0x40] sm:$0xff]
      %v313 = vld [vmem:[#allocation2 + $0x48] sm:$0xff]
      %v314 = vld [vmem:[#allocation2 + $0x50] sm:$0xff]
      %v315 = vld [vmem:[#allocation2 + $0x58] sm:$0xff]
      %v316 = vld [vmem:[#allocation2 + $0x60] sm:$0xff]
      %v317 = vld [vmem:[#allocation2 + $0x68] sm:$0xff]
      %v318 = vld [vmem:[#allocation2 + $0x70] sm:$0xff]
      %v319 = vld [vmem:[#allocation2 + $0x78] sm:$0xff]
      %v320 = vld [vmem:[#allocation2 + $0x80] sm:$0xff]
      %v321 = vld [vmem:[#allocation2 + $0x88] sm:$0xff]
      %v322 = vld [vmem:[#allocation2 + $0x90] sm:$0xff]
      %v323 = vld [vmem:[#allocation2 + $0x98] sm:$0xff]
      %v324 = vld [vmem:[#allocation2 + $0xa0] sm:$0xff]
      %v325 = vld [vmem:[#allocation2 + $0xa8] sm:$0xff]
      %v326 = vld [vmem:[#allocation2 + $0xb0] sm:$0xff]
      %v327 = vld [vmem:[#allocation2 + $0xb8] sm:$0xff]
      %v328 = vld [vmem:[#allocation2 + $0xc0] sm:$0xff]
      %v329 = vld [vmem:[#allocation2 + $0xc8] sm:$0xff]
      %v330 = vld [vmem:[#allocation2 + $0xd0] sm:$0xff]
      %v331 = vld [vmem:[#allocation2 + $0xd8] sm:$0xff]
      %v332 = vld [vmem:[#allocation2 + $0xe0] sm:$0xff]
      %v333 = vld [vmem:[#allocation2 + $0xe8] sm:$0xff]
      %v334 = vld [vmem:[#allocation2 + $0xf0] sm:$0xff]
      %v335 = vld [vmem:[#allocation2 + $0xf8] sm:$0xff]
      %v336 = vld [vmem:[%s243] sm:$0xff]
      %v337 = vld [vmem:[%s243 + $0x8] sm:$0xf]
      %v338 = vld [vmem:[%s243 + $0xc] sm:$0xff]
      %v339 = vld [vmem:[%s243 + $0x14] sm:$0xf]
      %v340 = vld [vmem:[%s243 + $0x18] sm:$0xff]
      %v341 = vld [vmem:[%s243 + $0x20] sm:$0xf]
      %v342 = vld [vmem:[%s243 + $0x24] sm:$0xff]
      %v343 = vld [vmem:[%s243 + $0x2c] sm:$0xf]
      %v344 = vld [vmem:[%s243 + $0x30] sm:$0xff]
      %v345 = vld [vmem:[%s243 + $0x38] sm:$0xf]
      %v346 = vld [vmem:[%s243 + $0x3c] sm:$0xff]
      %v347 = vld [vmem:[%s243 + $0x44] sm:$0xf]
      %v348 = vld [vmem:[%s243 + $0x48] sm:$0xff]
      %v349 = vld [vmem:[%s243 + $0x50] sm:$0xf]
      %v350 = vld [vmem:[%s243 + $0x54] sm:$0xff]
      %v351 = vld [vmem:[%s243 + $0x5c] sm:$0xf]
      %v352 = vld [vmem:[%s243 + $0x60] sm:$0xff]
      %v353 = vld [vmem:[%s243 + $0x68] sm:$0xf]
      %v354 = vld [vmem:[%s243 + $0x6c] sm:$0xff]
      %v355 = vld [vmem:[%s243 + $0x74] sm:$0xf]
      %v356 = vld [vmem:[%s243 + $0x78] sm:$0xff]
      %v357 = vld [vmem:[%s243 + $0x80] sm:$0xf]
      %v358 = vld [vmem:[%s243 + $0x84] sm:$0xff]
      %v359 = vld [vmem:[%s243 + $0x8c] sm:$0xf]
      %v360 = vld [vmem:[%s243 + $0x90] sm:$0xff]
      %v361 = vld [vmem:[%s243 + $0x98] sm:$0xf]
      %v362 = vld [vmem:[%s243 + $0x9c] sm:$0xff]
      %v363 = vld [vmem:[%s243 + $0xa4] sm:$0xf]
      %v364 = vld [vmem:[%s243 + $0xa8] sm:$0xff]
      %v365 = vld [vmem:[%s243 + $0xb0] sm:$0xf]
      %v366 = vld [vmem:[%s243 + $0xb4] sm:$0xff]
      %v367 = vld [vmem:[%s243 + $0xbc] sm:$0xf]
      %v368 = vld [vmem:[%s243 + $0xc0] sm:$0xff]
      %v369 = vld [vmem:[%s243 + $0xc8] sm:$0xf]
      %v370 = vld [vmem:[%s243 + $0xcc] sm:$0xff]
      %v371 = vld [vmem:[%s243 + $0xd4] sm:$0xf]
      %v372 = vld [vmem:[%s243 + $0xd8] sm:$0xff]
      %v373 = vld [vmem:[%s243 + $0xe0] sm:$0xf]
      %v374 = vld [vmem:[%s243 + $0xe4] sm:$0xff]
      %v375 = vld [vmem:[%s243 + $0xec] sm:$0xf]
      %v376 = vld [vmem:[%s243 + $0xf0] sm:$0xff]
      %v377 = vld [vmem:[%s243 + $0xf8] sm:$0xf]
      %v378 = vld [vmem:[%s243 + $0xfc] sm:$0xff]
      %v379 = vld [vmem:[%s243 + $0x104] sm:$0xf]
      %v380 = vld [vmem:[%s243 + $0x108] sm:$0xff]
      %v381 = vld [vmem:[%s243 + $0x110] sm:$0xf]
      %v382 = vld [vmem:[%s243 + $0x114] sm:$0xff]
      %v383 = vld [vmem:[%s243 + $0x11c] sm:$0xf]
      %v384 = vld [vmem:[%s243 + $0x120] sm:$0xff]
      %v385 = vld [vmem:[%s243 + $0x128] sm:$0xf]
      %v386 = vld [vmem:[%s243 + $0x12c] sm:$0xff]
      %v387 = vld [vmem:[%s243 + $0x134] sm:$0xf]
      %v388 = vld [vmem:[%s243 + $0x138] sm:$0xff]
      %v389 = vld [vmem:[%s243 + $0x140] sm:$0xf]
      %v390 = vld [vmem:[%s243 + $0x144] sm:$0xff]
      %v391 = vld [vmem:[%s243 + $0x14c] sm:$0xf]
      %v392 = vld [vmem:[%s243 + $0x150] sm:$0xff]
      %v393 = vld [vmem:[%s243 + $0x158] sm:$0xf]
      %v394 = vld [vmem:[%s243 + $0x15c] sm:$0xff]
      %v395 = vld [vmem:[%s243 + $0x164] sm:$0xf]
      %v396 = vld [vmem:[%s243 + $0x168] sm:$0xff]
      %v397 = vld [vmem:[%s243 + $0x170] sm:$0xf]
      %v398 = vld [vmem:[%s243 + $0x174] sm:$0xff]
      %v399 = vld [vmem:[%s243 + $0x17c] sm:$0xf]
      %v400 = vld [vmem:[%s253] sm:$0xf]
      %v401 = vld [vmem:[%s253 + $0x4] sm:$0xf]
      %v402 = vld [vmem:[%s253 + $0x8] sm:$0xf]
      %v403 = vld [vmem:[%s253 + $0xc] sm:$0xf]
      %v404 = vld [vmem:[%s253 + $0x10] sm:$0xf]
      %v405 = vld [vmem:[%s253 + $0x14] sm:$0xf]
      %v406 = vld [vmem:[%s253 + $0x18] sm:$0xf]
      %v407 = vld [vmem:[%s253 + $0x1c] sm:$0xf]
      %v408 = vld [vmem:[%s253 + $0x20] sm:$0xf]
      %v409 = vld [vmem:[%s253 + $0x24] sm:$0xf]
      %v410 = vld [vmem:[%s253 + $0x28] sm:$0xf]
      %v411 = vld [vmem:[%s253 + $0x2c] sm:$0xf]
      %v412 = vld [vmem:[%s253 + $0x30] sm:$0xf]
      %v413 = vld [vmem:[%s253 + $0x34] sm:$0xf]
      %v414 = vld [vmem:[%s253 + $0x38] sm:$0xf]
      %v415 = vld [vmem:[%s253 + $0x3c] sm:$0xf]
      %v416 = vld [vmem:[%s253 + $0x40] sm:$0xf]
      %v417 = vld [vmem:[%s253 + $0x44] sm:$0xf]
      %v418 = vld [vmem:[%s253 + $0x48] sm:$0xf]
      %v419 = vld [vmem:[%s253 + $0x4c] sm:$0xf]
      %v420 = vld [vmem:[%s253 + $0x50] sm:$0xf]
      %v421 = vld [vmem:[%s253 + $0x54] sm:$0xf]
      %v422 = vld [vmem:[%s253 + $0x58] sm:$0xf]
      %v423 = vld [vmem:[%s253 + $0x5c] sm:$0xf]
      %v424 = vld [vmem:[%s253 + $0x60] sm:$0xf]
      %v425 = vld [vmem:[%s253 + $0x64] sm:$0xf]
      %v426 = vld [vmem:[%s253 + $0x68] sm:$0xf]
      %v427 = vld [vmem:[%s253 + $0x6c] sm:$0xf]
      %v428 = vld [vmem:[%s253 + $0x70] sm:$0xf]
      %v429 = vld [vmem:[%s253 + $0x74] sm:$0xf]
      %v430 = vld [vmem:[%s253 + $0x78] sm:$0xf]
      %v431 = vld [vmem:[%s253 + $0x7c] sm:$0xf]
      %v432 = vld [vmem:[%s253 + $0x80] sm:$0xf]
      %v433 = vld [vmem:[%s253 + $0x84] sm:$0xf]
      %v434 = vld [vmem:[%s253 + $0x88] sm:$0xf]
      %v435 = vld [vmem:[%s253 + $0x8c] sm:$0xf]
      %v436 = vld [vmem:[%s253 + $0x90] sm:$0xf]
      %v437 = vld [vmem:[%s253 + $0x94] sm:$0xf]
      %v438 = vld [vmem:[%s253 + $0x98] sm:$0xf]
      %v439 = vld [vmem:[%s253 + $0x9c] sm:$0xf]
      %v440 = vld [vmem:[%s253 + $0xa0] sm:$0xf]
      %v441 = vld [vmem:[%s253 + $0xa4] sm:$0xf]
      %v442 = vld [vmem:[%s253 + $0xa8] sm:$0xf]
      %v443 = vld [vmem:[%s253 + $0xac] sm:$0xf]
      %v444 = vld [vmem:[%s253 + $0xb0] sm:$0xf]
      %v445 = vld [vmem:[%s253 + $0xb4] sm:$0x3]
      %v510 = vunpack.c.l.b16 %v336
      %v511 = vunpack.c.h.b16 %v336
      %v512 = vunpack.c.l.b16 %v337
      %v513 = vunpack.c.l.b16 %v338
      %v514 = vunpack.c.h.b16 %v338
      %v515 = vunpack.c.l.b16 %v339
      %v516 = vunpack.c.l.b16 %v340
      %v517 = vunpack.c.h.b16 %v340
      %v518 = vunpack.c.l.b16 %v341
      %v519 = vunpack.c.l.b16 %v342
      %v520 = vunpack.c.h.b16 %v342
      %v521 = vunpack.c.l.b16 %v343
      %v522 = vunpack.c.l.b16 %v344
      %v523 = vunpack.c.h.b16 %v344
      %v524 = vunpack.c.l.b16 %v345
      %v525 = vunpack.c.l.b16 %v346
      %v526 = vunpack.c.h.b16 %v346
      %v527 = vunpack.c.l.b16 %v347
      %v528 = vunpack.c.l.b16 %v348
      %v529 = vunpack.c.h.b16 %v348
      %v530 = vunpack.c.l.b16 %v349
      %v531 = vunpack.c.l.b16 %v350
      %v532 = vunpack.c.h.b16 %v350
      %v533 = vunpack.c.l.b16 %v351
      %v534 = vunpack.c.l.b16 %v352
      %v535 = vunpack.c.h.b16 %v352
      %v536 = vunpack.c.l.b16 %v353
      %v537 = vunpack.c.l.b16 %v354
      %v538 = vunpack.c.h.b16 %v354
      %v539 = vunpack.c.l.b16 %v355
      %v540 = vunpack.c.l.b16 %v356
      %v541 = vunpack.c.h.b16 %v356
      %v542 = vunpack.c.l.b16 %v357
      %v543 = vunpack.c.l.b16 %v358
      %v544 = vunpack.c.h.b16 %v358
      %v545 = vunpack.c.l.b16 %v359
      %v546 = vunpack.c.l.b16 %v360
      %v547 = vunpack.c.h.b16 %v360
      %v548 = vunpack.c.l.b16 %v361
      %v549 = vunpack.c.l.b16 %v362
      %v550 = vunpack.c.h.b16 %v362
      %v551 = vunpack.c.l.b16 %v363
      %v552 = vunpack.c.l.b16 %v364
      %v553 = vunpack.c.h.b16 %v364
      %v554 = vunpack.c.l.b16 %v365
      %v555 = vunpack.c.l.b16 %v366
      %v556 = vunpack.c.h.b16 %v366
      %v557 = vunpack.c.l.b16 %v367
      %v558 = vunpack.c.l.b16 %v368
      %v559 = vunpack.c.h.b16 %v368
      %v560 = vunpack.c.l.b16 %v369
      %v561 = vunpack.c.l.b16 %v370
      %v562 = vunpack.c.h.b16 %v370
      %v563 = vunpack.c.l.b16 %v371
      %v564 = vunpack.c.l.b16 %v372
      %v565 = vunpack.c.h.b16 %v372
      %v566 = vunpack.c.l.b16 %v373
      %v567 = vunpack.c.l.b16 %v374
      %v568 = vunpack.c.h.b16 %v374
      %v569 = vunpack.c.l.b16 %v375
      %v570 = vunpack.c.l.b16 %v376
      %v571 = vunpack.c.h.b16 %v376
      %v572 = vunpack.c.l.b16 %v377
      %v573 = vunpack.c.l.b16 %v378
      %v574 = vunpack.c.h.b16 %v378
      %v575 = vunpack.c.l.b16 %v379
      %v576 = vunpack.c.l.b16 %v380
      %v577 = vunpack.c.h.b16 %v380
      %v578 = vunpack.c.l.b16 %v381
      %v579 = vunpack.c.l.b16 %v382
      %v580 = vunpack.c.h.b16 %v382
      %v581 = vunpack.c.l.b16 %v383
      %v582 = vunpack.c.l.b16 %v384
      %v583 = vunpack.c.h.b16 %v384
      %v584 = vunpack.c.l.b16 %v385
      %v585 = vunpack.c.l.b16 %v386
      %v586 = vunpack.c.h.b16 %v386
      %v587 = vunpack.c.l.b16 %v387
      %v588 = vunpack.c.l.b16 %v388
      %v589 = vunpack.c.h.b16 %v388
      %v590 = vunpack.c.l.b16 %v389
      %v591 = vunpack.c.l.b16 %v390
      %v592 = vunpack.c.h.b16 %v390
      %v593 = vunpack.c.l.b16 %v391
      %v594 = vunpack.c.l.b16 %v392
      %v595 = vunpack.c.h.b16 %v392
      %v596 = vunpack.c.l.b16 %v393
      %v597 = vunpack.c.l.b16 %v394
      %v598 = vunpack.c.h.b16 %v394
      %v599 = vunpack.c.l.b16 %v395
      %v600 = vunpack.c.l.b16 %v396
      %v601 = vunpack.c.h.b16 %v396
      %v602 = vunpack.c.l.b16 %v397
      %v603 = vunpack.c.l.b16 %v398
      %v604 = vunpack.c.h.b16 %v398
      %v605 = vunpack.c.l.b16 %v399
      %v606 = vpack.c.b16 %v513, %v510
      %v607 = vpack.c.b16 %v514, %v511
      %v608 = vpack.c.b16 %v515, %v512
      %v609 = vpack.c.b16 %v519, %v516
      %v610 = vpack.c.b16 %v520, %v517
      %v611 = vpack.c.b16 %v521, %v518
      %v612 = vpack.c.b16 %v525, %v522
      %v613 = vpack.c.b16 %v526, %v523
      %v614 = vpack.c.b16 %v527, %v524
      %v615 = vpack.c.b16 %v531, %v528
      %v616 = vpack.c.b16 %v532, %v529
      %v617 = vpack.c.b16 %v533, %v530
      %v618 = vpack.c.b16 %v537, %v534
      %v619 = vpack.c.b16 %v538, %v535
      %v620 = vpack.c.b16 %v539, %v536
      %v621 = vpack.c.b16 %v543, %v540
      %v622 = vpack.c.b16 %v544, %v541
      %v623 = vpack.c.b16 %v545, %v542
      %v624 = vpack.c.b16 %v549, %v546
      %v625 = vpack.c.b16 %v550, %v547
      %v626 = vpack.c.b16 %v551, %v548
      %v627 = vpack.c.b16 %v555, %v552
      %v628 = vpack.c.b16 %v556, %v553
      %v629 = vpack.c.b16 %v557, %v554
      %v630 = vpack.c.b16 %v561, %v558
      %v631 = vpack.c.b16 %v562, %v559
      %v632 = vpack.c.b16 %v563, %v560
      %v633 = vpack.c.b16 %v567, %v564
      %v634 = vpack.c.b16 %v568, %v565
      %v635 = vpack.c.b16 %v569, %v566
      %v636 = vpack.c.b16 %v573, %v570
      %v637 = vpack.c.b16 %v574, %v571
      %v638 = vpack.c.b16 %v575, %v572
      %v639 = vpack.c.b16 %v579, %v576
      %v640 = vpack.c.b16 %v580, %v577
      %v641 = vpack.c.b16 %v581, %v578
      %v642 = vpack.c.b16 %v585, %v582
      %v643 = vpack.c.b16 %v586, %v583
      %v644 = vpack.c.b16 %v587, %v584
      %v645 = vpack.c.b16 %v591, %v588
      %v646 = vpack.c.b16 %v592, %v589
      %v647 = vpack.c.b16 %v593, %v590
      %v648 = vpack.c.b16 %v597, %v594
      %v649 = vpack.c.b16 %v598, %v595
      %v650 = vpack.c.b16 %v599, %v596
      %v651 = vpack.c.b16 %v603, %v600
      %v652 = vpack.c.b16 %v604, %v601
      %v653 = vpack.c.b16 %v605, %v602
      %v732 = vunpack.c.l.b16 %v400
      %v733 = vunpack.c.l.b16 %v401
      %v734 = vunpack.c.l.b16 %v402
      %v735 = vunpack.c.l.b16 %v403
      %v736 = vunpack.c.l.b16 %v404
      %v737 = vunpack.c.l.b16 %v405
      %v738 = vunpack.c.l.b16 %v406
      %v739 = vunpack.c.l.b16 %v407
      %v740 = vunpack.c.l.b16 %v408
      %v741 = vunpack.c.l.b16 %v409
      %v742 = vunpack.c.l.b16 %v410
      %v743 = vunpack.c.l.b16 %v411
      %v744 = vunpack.c.l.b16 %v412
      %v745 = vunpack.c.l.b16 %v413
      %v746 = vunpack.c.l.b16 %v414
      %v747 = vunpack.c.l.b16 %v415
      %v748 = vunpack.c.l.b16 %v416
      %v749 = vunpack.c.l.b16 %v417
      %v750 = vunpack.c.l.b16 %v418
      %v751 = vunpack.c.l.b16 %v419
      %v752 = vunpack.c.l.b16 %v420
      %v753 = vunpack.c.l.b16 %v421
      %v754 = vunpack.c.l.b16 %v422
      %v755 = vunpack.c.l.b16 %v423
      %v756 = vunpack.c.l.b16 %v424
      %v757 = vunpack.c.l.b16 %v425
      %v758 = vunpack.c.l.b16 %v426
      %v759 = vunpack.c.l.b16 %v427
      %v760 = vunpack.c.l.b16 %v428
      %v761 = vunpack.c.l.b16 %v429
      %v762 = vunpack.c.l.b16 %v430
      %v763 = vunpack.c.l.b16 %v431
      %v764 = vunpack.c.l.b16 %v432
      %v765 = vunpack.c.l.b16 %v433
      %v766 = vunpack.c.l.b16 %v434
      %v767 = vunpack.c.l.b16 %v435
      %v768 = vunpack.c.l.b16 %v436
      %v769 = vunpack.c.l.b16 %v437
      %v770 = vunpack.c.l.b16 %v438
      %v771 = vunpack.c.l.b16 %v439
      %v772 = vunpack.c.l.b16 %v440
      %v773 = vunpack.c.l.b16 %v441
      %v774 = vunpack.c.l.b16 %v442
      %v775 = vunpack.c.l.b16 %v443
      %v776 = vunpack.c.l.b16 %v444
      %v777 = vunpack.c.l.b16 %v445
      %v778 = vpack.c.b16 %v733, %v732
      %v779 = vpack.c.b16 %v735, %v734
      %v780 = vpack.c.b16 %v737, %v736
      %v781 = vpack.c.b16 %v739, %v738
      %v782 = vpack.c.b16 %v741, %v740
      %v783 = vpack.c.b16 %v743, %v742
      %v784 = vpack.c.b16 %v745, %v744
      %v785 = vpack.c.b16 %v747, %v746
      %v786 = vpack.c.b16 %v749, %v748
      %v787 = vpack.c.b16 %v751, %v750
      %v788 = vpack.c.b16 %v753, %v752
      %v789 = vpack.c.b16 %v755, %v754
      %v790 = vpack.c.b16 %v757, %v756
      %v791 = vpack.c.b16 %v759, %v758
      %v792 = vpack.c.b16 %v761, %v760
      %v793 = vpack.c.b16 %v763, %v762
      %v794 = vpack.c.b16 %v765, %v764
      %v795 = vpack.c.b16 %v767, %v766
      %v796 = vpack.c.b16 %v769, %v768
      %v797 = vpack.c.b16 %v771, %v770
      %v798 = vpack.c.b16 %v773, %v772
      %v799 = vpack.c.b16 %v775, %v774
      %v800 = vpack.c.b16 %v777, %v776
      %vm823 = vcmask 875520
      %v825 = vsel %vm823, %v608, 0
      %v828 = vsel %vm823, %v611, 0
      %v831 = vsel %vm823, %v614, 0
      %v834 = vsel %vm823, %v617, 0
      %v837 = vsel %vm823, %v620, 0
      %v840 = vsel %vm823, %v623, 0
      %v843 = vsel %vm823, %v626, 0
      %v846 = vsel %vm823, %v629, 0
      %v849 = vsel %vm823, %v632, 0
      %v852 = vsel %vm823, %v635, 0
      %v855 = vsel %vm823, %v638, 0
      %v858 = vsel %vm823, %v641, 0
      %v861 = vsel %vm823, %v644, 0
      %v864 = vsel %vm823, %v647, 0
      %v867 = vsel %vm823, %v650, 0
      %v870 = vsel %vm823, %v653, 0
      %vm872 = vcmask 1044480
      %vm873 = vcmask 1045504
      %v874 = vsel %vm872, 4294967295, 65535
      %v875 = vsel %vm873, %v874, 0
      %v877 = vand.u32 %v800, %v875
      %879 = vmatprep.subr.bf16.mxu0 0
      %880 = vmatpush1.bf16.msra.mxu0 %v785
      %881 = vmatprep.subr.bf16.mxu0 0
      %882 = vmatpush1.bf16.msra.mxu0 %v784
      %883 = vmatprep.subr.bf16.mxu0 0
      %884 = vmatpush1.bf16.msra.mxu0 %v783
      %885 = vmatprep.subr.bf16.mxu0 0
      %886 = vmatpush1.bf16.msra.mxu0 %v782
      %887 = vmatprep.subr.bf16.mxu0 0
      %888 = vmatpush1.bf16.msra.mxu0 %v781
      %889 = vmatprep.subr.bf16.mxu0 0
      %890 = vmatpush1.bf16.msra.mxu0 %v780
      %891 = vmatprep.subr.bf16.mxu0 0
      %892 = vmatpush1.bf16.msra.mxu0 %v779
      %893 = vmatprep.subr.bf16.mxu0 0
      %894 = vmatpush1.bf16.msra.mxu0 %v778
      %895 = vmatprep.subr.bf16.mxu0 0
      %896 = vmatpush2.bf16.msra.mxu0 %v793
      %897 = vmatprep.subr.bf16.mxu0 0
      %898 = vmatpush2.bf16.msra.mxu0 %v792
      %899 = vmatprep.subr.bf16.mxu0 0
      %900 = vmatpush2.bf16.msra.mxu0 %v791
      %901 = vmatprep.subr.bf16.mxu0 0
      %902 = vmatpush2.bf16.msra.mxu0 %v790
      %903 = vmatprep.subr.bf16.mxu0 0
      %904 = vmatpush2.bf16.msra.mxu0 %v789
      %905 = vmatprep.subr.bf16.mxu0 0
      %906 = vmatpush2.bf16.msra.mxu0 %v788
      %907 = vmatprep.subr.bf16.mxu0 0
      %908 = vmatpush2.bf16.msra.mxu0 %v787
      %909 = vmatprep.subr.bf16.mxu0 0
      %910 = vmatpush2.bf16.msra.mxu0 %v786
      %911 = vmatprep.mubr.bf16.mxu0 %v607
      %912 = vmatmul.mubr.bf16.gmra.mxu0 %v606
      %v913 = vpop.f32.mrf.mxu0
      %v914 = vadd.f32 0.0, %v913
      %v915 = vpop.f32.mrf.mxu0
      %v916 = vpop.f32.mrf.mxu0
      %v917 = vadd.f32 0.0, %v916
      %v918 = vpop.f32.mrf.mxu0
      %919 = vmatprep.mubr.bf16.mxu0 %v610
      %920 = vmatmul.mubr.bf16.gmra.mxu0 %v609
      %v921 = vpop.f32.mrf.mxu0
      %v922 = vadd.f32 0.0, %v921
      %v923 = vpop.f32.mrf.mxu0
      %v924 = vpop.f32.mrf.mxu0
      %v925 = vadd.f32 0.0, %v924
      %v926 = vpop.f32.mrf.mxu0
      %927 = vmatprep.mubr.bf16.mxu0 %v613
      %928 = vmatmul.mubr.bf16.gmra.mxu0 %v612
      %v929 = vpop.f32.mrf.mxu0
      %v930 = vadd.f32 0.0, %v929
      %v931 = vpop.f32.mrf.mxu0
      %v932 = vpop.f32.mrf.mxu0
      %v933 = vadd.f32 0.0, %v932
      %v934 = vpop.f32.mrf.mxu0
      %935 = vmatprep.mubr.bf16.mxu0 %v616
      %936 = vmatmul.mubr.bf16.gmra.mxu0 %v615
      %v937 = vpop.f32.mrf.mxu0
      %v938 = vadd.f32 0.0, %v937
      %v939 = vpop.f32.mrf.mxu0
      %v940 = vpop.f32.mrf.mxu0
      %v941 = vadd.f32 0.0, %v940
      %v942 = vpop.f32.mrf.mxu0
      %943 = vmatprep.mubr.bf16.mxu0 %v619
      %944 = vmatmul.mubr.bf16.gmra.mxu0 %v618
      %v945 = vpop.f32.mrf.mxu0
      %v946 = vadd.f32 0.0, %v945
      %v947 = vpop.f32.mrf.mxu0
      %v948 = vpop.f32.mrf.mxu0
      %v949 = vadd.f32 0.0, %v948
      %v950 = vpop.f32.mrf.mxu0
      %951 = vmatprep.mubr.bf16.mxu0 %v622
      %952 = vmatmul.mubr.bf16.gmra.mxu0 %v621
      %v953 = vpop.f32.mrf.mxu0
      %v954 = vadd.f32 0.0, %v953
      %v955 = vpop.f32.mrf.mxu0
      %v956 = vpop.f32.mrf.mxu0
      %v957 = vadd.f32 0.0, %v956
      %v958 = vpop.f32.mrf.mxu0
      %959 = vmatprep.mubr.bf16.mxu0 %v625
      %960 = vmatmul.mubr.bf16.gmra.mxu0 %v624
      %v961 = vpop.f32.mrf.mxu0
      %v962 = vadd.f32 0.0, %v961
      %v963 = vpop.f32.mrf.mxu0
      %v964 = vpop.f32.mrf.mxu0
      %v965 = vadd.f32 0.0, %v964
      %v966 = vpop.f32.mrf.mxu0
      %967 = vmatprep.mubr.bf16.mxu0 %v628
      %968 = vmatmul.mubr.bf16.gmra.mxu0 %v627
      %v969 = vpop.f32.mrf.mxu0
      %v970 = vadd.f32 0.0, %v969
      %v971 = vpop.f32.mrf.mxu0
      %v972 = vpop.f32.mrf.mxu0
      %v973 = vadd.f32 0.0, %v972
      %v974 = vpop.f32.mrf.mxu0
      %975 = vmatprep.mubr.bf16.mxu0 %v631
      %976 = vmatmul.mubr.bf16.gmra.mxu0 %v630
      %v977 = vpop.f32.mrf.mxu0
      %v978 = vadd.f32 0.0, %v977
      %v979 = vpop.f32.mrf.mxu0
      %v980 = vpop.f32.mrf.mxu0
      %v981 = vadd.f32 0.0, %v980
      %v982 = vpop.f32.mrf.mxu0
      %983 = vmatprep.mubr.bf16.mxu0 %v634
      %984 = vmatmul.mubr.bf16.gmra.mxu0 %v633
      %v985 = vpop.f32.mrf.mxu0
      %v986 = vadd.f32 0.0, %v985
      %v987 = vpop.f32.mrf.mxu0
      %v988 = vpop.f32.mrf.mxu0
      %v989 = vadd.f32 0.0, %v988
      %v990 = vpop.f32.mrf.mxu0
      %991 = vmatprep.mubr.bf16.mxu0 %v637
      %992 = vmatmul.mubr.bf16.gmra.mxu0 %v636
      %v993 = vpop.f32.mrf.mxu0
      %v994 = vadd.f32 0.0, %v993
      %v995 = vpop.f32.mrf.mxu0
      %v996 = vpop.f32.mrf.mxu0
      %v997 = vadd.f32 0.0, %v996
      %v998 = vpop.f32.mrf.mxu0
      %999 = vmatprep.mubr.bf16.mxu0 %v640
      %1000 = vmatmul.mubr.bf16.gmra.mxu0 %v639
      %v1001 = vpop.f32.mrf.mxu0
      %v1002 = vadd.f32 0.0, %v1001
      %v1003 = vpop.f32.mrf.mxu0
      %v1004 = vpop.f32.mrf.mxu0
      %v1005 = vadd.f32 0.0, %v1004
      %v1006 = vpop.f32.mrf.mxu0
      %1007 = vmatprep.mubr.bf16.mxu0 %v643
      %1008 = vmatmul.mubr.bf16.gmra.mxu0 %v642
      %v1009 = vpop.f32.mrf.mxu0
      %v1010 = vadd.f32 0.0, %v1009
      %v1011 = vpop.f32.mrf.mxu0
      %v1012 = vpop.f32.mrf.mxu0
      %v1013 = vadd.f32 0.0, %v1012
      %v1014 = vpop.f32.mrf.mxu0
      %1015 = vmatprep.mubr.bf16.mxu0 %v646
      %1016 = vmatmul.mubr.bf16.gmra.mxu0 %v645
      %v1017 = vpop.f32.mrf.mxu0
      %v1018 = vadd.f32 0.0, %v1017
      %v1019 = vpop.f32.mrf.mxu0
      %v1020 = vpop.f32.mrf.mxu0
      %v1021 = vadd.f32 0.0, %v1020
      %v1022 = vpop.f32.mrf.mxu0
      %1023 = vmatprep.mubr.bf16.mxu0 %v649
      %1024 = vmatmul.mubr.bf16.gmra.mxu0 %v648
      %v1025 = vpop.f32.mrf.mxu0
      %v1026 = vadd.f32 0.0, %v1025
      %v1027 = vpop.f32.mrf.mxu0
      %v1028 = vpop.f32.mrf.mxu0
      %v1029 = vadd.f32 0.0, %v1028
      %v1030 = vpop.f32.mrf.mxu0
      %1031 = vmatprep.mubr.bf16.mxu0 %v652
      %1032 = vmatmul.mubr.bf16.gmra.mxu0 %v651
      %v1033 = vpop.f32.mrf.mxu0
      %v1034 = vadd.f32 0.0, %v1033
      %v1035 = vpop.f32.mrf.mxu0
      %v1036 = vpop.f32.mrf.mxu0
      %v1037 = vadd.f32 0.0, %v1036
      %v1038 = vpop.f32.mrf.mxu0
      %1039 = vdwg.mxu0
      %1040 = vmatprep.subr.bf16.mxu0 0
      %1041 = vmatpush1.bf16.msra.mxu0 0
      %1042 = vmatprep.subr.bf16.mxu0 0
      %1043 = vmatpush1.bf16.msra.mxu0 %v877
      %1044 = vmatprep.subr.bf16.mxu0 0
      %1045 = vmatpush1.bf16.msra.mxu0 %v799
      %1046 = vmatprep.subr.bf16.mxu0 0
      %1047 = vmatpush1.bf16.msra.mxu0 %v798
      %1048 = vmatprep.subr.bf16.mxu0 0
      %1049 = vmatpush1.bf16.msra.mxu0 %v797
      %1050 = vmatprep.subr.bf16.mxu0 0
      %1051 = vmatpush1.bf16.msra.mxu0 %v796
      %1052 = vmatprep.subr.bf16.mxu0 0
      %1053 = vmatpush1.bf16.msra.mxu0 %v795
      %1054 = vmatprep.subr.bf16.mxu0 0
      %1055 = vmatpush1.bf16.msra.mxu0 %v794
      %1056 = vmatprep.subr.bf16.mxu0 0
      %1057 = vmatpush2.bf16.msra.mxu0 0
      %1058 = vmatprep.subr.bf16.mxu0 0
      %1059 = vmatpush2.bf16.msra.mxu0 0
      %1060 = vmatprep.subr.bf16.mxu0 0
      %1061 = vmatpush2.bf16.msra.mxu0 0
      %1062 = vmatprep.subr.bf16.mxu0 0
      %1063 = vmatpush2.bf16.msra.mxu0 0
      %1064 = vmatprep.subr.bf16.mxu0 0
      %1065 = vmatpush2.bf16.msra.mxu0 0
      %1066 = vmatprep.subr.bf16.mxu0 0
      %1067 = vmatpush2.bf16.msra.mxu0 0
      %1068 = vmatprep.subr.bf16.mxu0 0
      %1069 = vmatpush2.bf16.msra.mxu0 0
      %1070 = vmatprep.subr.bf16.mxu0 0
      %1071 = vmatpush2.bf16.msra.mxu0 0
      %1072 = vmatprep.mubr.bf16.mxu0 0
      %1073 = vmatmul.mubr.bf16.gmra.mxu0 %v825
      %v1074 = vpop.f32.mrf.mxu0
      %v1075 = vadd.f32 %v914, %v1074
      %v1076 = vpop.f32.mrf.mxu0
      %v1077 = vpop.f32.mrf.mxu0
      %v1078 = vadd.f32 %v917, %v1077
      %v1079 = vpop.f32.mrf.mxu0
      %1080 = vmatprep.mubr.bf16.mxu0 0
      %1081 = vmatmul.mubr.bf16.gmra.mxu0 %v828
      %v1082 = vpop.f32.mrf.mxu0
      %v1083 = vadd.f32 %v922, %v1082
      %v1084 = vpop.f32.mrf.mxu0
      %v1085 = vpop.f32.mrf.mxu0
      %v1086 = vadd.f32 %v925, %v1085
      %v1087 = vpop.f32.mrf.mxu0
      %1088 = vmatprep.mubr.bf16.mxu0 0
      %1089 = vmatmul.mubr.bf16.gmra.mxu0 %v831
      %v1090 = vpop.f32.mrf.mxu0
      %v1091 = vadd.f32 %v930, %v1090
      %v1092 = vpop.f32.mrf.mxu0
      %v1093 = vpop.f32.mrf.mxu0
      %v1094 = vadd.f32 %v933, %v1093
      %v1095 = vpop.f32.mrf.mxu0
      %1096 = vmatprep.mubr.bf16.mxu0 0
      %1097 = vmatmul.mubr.bf16.gmra.mxu0 %v834
      %v1098 = vpop.f32.mrf.mxu0
      %v1099 = vadd.f32 %v938, %v1098
      %v1100 = vpop.f32.mrf.mxu0
      %v1101 = vpop.f32.mrf.mxu0
      %v1102 = vadd.f32 %v941, %v1101
      %v1103 = vpop.f32.mrf.mxu0
      %1104 = vmatprep.mubr.bf16.mxu0 0
      %1105 = vmatmul.mubr.bf16.gmra.mxu0 %v837
      %v1106 = vpop.f32.mrf.mxu0
      %v1107 = vadd.f32 %v946, %v1106
      %v1108 = vpop.f32.mrf.mxu0
      %v1109 = vpop.f32.mrf.mxu0
      %v1110 = vadd.f32 %v949, %v1109
      %v1111 = vpop.f32.mrf.mxu0
      %1112 = vmatprep.mubr.bf16.mxu0 0
      %1113 = vmatmul.mubr.bf16.gmra.mxu0 %v840
      %v1114 = vpop.f32.mrf.mxu0
      %v1115 = vadd.f32 %v954, %v1114
      %v1116 = vpop.f32.mrf.mxu0
      %v1117 = vpop.f32.mrf.mxu0
      %v1118 = vadd.f32 %v957, %v1117
      %v1119 = vpop.f32.mrf.mxu0
      %1120 = vmatprep.mubr.bf16.mxu0 0
      %1121 = vmatmul.mubr.bf16.gmra.mxu0 %v843
      %v1122 = vpop.f32.mrf.mxu0
      %v1123 = vadd.f32 %v962, %v1122
      %v1124 = vpop.f32.mrf.mxu0
      %v1125 = vpop.f32.mrf.mxu0
      %v1126 = vadd.f32 %v965, %v1125
      %v1127 = vpop.f32.mrf.mxu0
      %1128 = vmatprep.mubr.bf16.mxu0 0
      %1129 = vmatmul.mubr.bf16.gmra.mxu0 %v846
      %v1130 = vpop.f32.mrf.mxu0
      %v1131 = vadd.f32 %v970, %v1130
      %v1132 = vpop.f32.mrf.mxu0
      %v1133 = vpop.f32.mrf.mxu0
      %v1134 = vadd.f32 %v973, %v1133
      %v1135 = vpop.f32.mrf.mxu0
      %1136 = vmatprep.mubr.bf16.mxu0 0
      %1137 = vmatmul.mubr.bf16.gmra.mxu0 %v849
      %v1138 = vpop.f32.mrf.mxu0
      %v1139 = vadd.f32 %v978, %v1138
      %v1140 = vpop.f32.mrf.mxu0
      %v1141 = vpop.f32.mrf.mxu0
      %v1142 = vadd.f32 %v981, %v1141
      %v1143 = vpop.f32.mrf.mxu0
      %1144 = vmatprep.mubr.bf16.mxu0 0
      %1145 = vmatmul.mubr.bf16.gmra.mxu0 %v852
      %v1146 = vpop.f32.mrf.mxu0
      %v1147 = vadd.f32 %v986, %v1146
      %v1148 = vpop.f32.mrf.mxu0
      %v1149 = vpop.f32.mrf.mxu0
      %v1150 = vadd.f32 %v989, %v1149
      %v1151 = vpop.f32.mrf.mxu0
      %1152 = vmatprep.mubr.bf16.mxu0 0
      %1153 = vmatmul.mubr.bf16.gmra.mxu0 %v855
      %v1154 = vpop.f32.mrf.mxu0
      %v1155 = vadd.f32 %v994, %v1154
      %v1156 = vpop.f32.mrf.mxu0
      %v1157 = vpop.f32.mrf.mxu0
      %v1158 = vadd.f32 %v997, %v1157
      %v1159 = vpop.f32.mrf.mxu0
      %1160 = vmatprep.mubr.bf16.mxu0 0
      %1161 = vmatmul.mubr.bf16.gmra.mxu0 %v858
      %v1162 = vpop.f32.mrf.mxu0
      %v1163 = vadd.f32 %v1002, %v1162
      %v1164 = vpop.f32.mrf.mxu0
      %v1165 = vpop.f32.mrf.mxu0
      %v1166 = vadd.f32 %v1005, %v1165
      %v1167 = vpop.f32.mrf.mxu0
      %1168 = vmatprep.mubr.bf16.mxu0 0
      %1169 = vmatmul.mubr.bf16.gmra.mxu0 %v861
      %v1170 = vpop.f32.mrf.mxu0
      %v1171 = vadd.f32 %v1010, %v1170
      %v1172 = vpop.f32.mrf.mxu0
      %v1173 = vpop.f32.mrf.mxu0
      %v1174 = vadd.f32 %v1013, %v1173
      %v1175 = vpop.f32.mrf.mxu0
      %1176 = vmatprep.mubr.bf16.mxu0 0
      %1177 = vmatmul.mubr.bf16.gmra.mxu0 %v864
      %v1178 = vpop.f32.mrf.mxu0
      %v1179 = vadd.f32 %v1018, %v1178
      %v1180 = vpop.f32.mrf.mxu0
      %v1181 = vpop.f32.mrf.mxu0
      %v1182 = vadd.f32 %v1021, %v1181
      %v1183 = vpop.f32.mrf.mxu0
      %1184 = vmatprep.mubr.bf16.mxu0 0
      %1185 = vmatmul.mubr.bf16.gmra.mxu0 %v867
      %v1186 = vpop.f32.mrf.mxu0
      %v1187 = vadd.f32 %v1026, %v1186
      %v1188 = vpop.f32.mrf.mxu0
      %v1189 = vpop.f32.mrf.mxu0
      %v1190 = vadd.f32 %v1029, %v1189
      %v1191 = vpop.f32.mrf.mxu0
      %1192 = vmatprep.mubr.bf16.mxu0 0
      %1193 = vmatmul.mubr.bf16.gmra.mxu0 %v870
      %v1194 = vpop.f32.mrf.mxu0
      %v1195 = vadd.f32 %v1034, %v1194
      %v1196 = vpop.f32.mrf.mxu0
      %v1197 = vpop.f32.mrf.mxu0
      %v1198 = vadd.f32 %v1037, %v1197
      %v1199 = vpop.f32.mrf.mxu0
      %1200 = vdwg.mxu0
      %v1201 = vadd.f32 %v304, %v1075
      %v1202 = vadd.f32 %v305, %v1078
      %v1203 = vadd.f32 %v306, %v1083
      %v1204 = vadd.f32 %v307, %v1086
      %v1205 = vadd.f32 %v308, %v1091
      %v1206 = vadd.f32 %v309, %v1094
      %v1207 = vadd.f32 %v310, %v1099
      %v1208 = vadd.f32 %v311, %v1102
      %v1209 = vadd.f32 %v312, %v1107
      %v1210 = vadd.f32 %v313, %v1110
      %v1211 = vadd.f32 %v314, %v1115
      %v1212 = vadd.f32 %v315, %v1118
      %v1213 = vadd.f32 %v316, %v1123
      %v1214 = vadd.f32 %v317, %v1126
      %v1215 = vadd.f32 %v318, %v1131
      %v1216 = vadd.f32 %v319, %v1134
      %v1217 = vadd.f32 %v320, %v1139
      %v1218 = vadd.f32 %v321, %v1142
      %v1219 = vadd.f32 %v322, %v1147
      %v1220 = vadd.f32 %v323, %v1150
      %v1221 = vadd.f32 %v324, %v1155
      %v1222 = vadd.f32 %v325, %v1158
      %v1223 = vadd.f32 %v326, %v1163
      %v1224 = vadd.f32 %v327, %v1166
      %v1225 = vadd.f32 %v328, %v1171
      %v1226 = vadd.f32 %v329, %v1174
      %v1227 = vadd.f32 %v330, %v1179
      %v1228 = vadd.f32 %v331, %v1182
      %v1229 = vadd.f32 %v332, %v1187
      %v1230 = vadd.f32 %v333, %v1190
      %v1231 = vadd.f32 %v334, %v1195
      %v1232 = vadd.f32 %v335, %v1198
      %1233 = vst [vmem:[#allocation2] sm:$0xff] %v1201
      %1234 = vst [vmem:[#allocation2 + $0x8] sm:$0xff] %v1202
      %1235 = vst [vmem:[#allocation2 + $0x10] sm:$0xff] %v1203
      %1236 = vst [vmem:[#allocation2 + $0x18] sm:$0xff] %v1204
      %1237 = vst [vmem:[#allocation2 + $0x20] sm:$0xff] %v1205
      %1238 = vst [vmem:[#allocation2 + $0x28] sm:$0xff] %v1206
      %1239 = vst [vmem:[#allocation2 + $0x30] sm:$0xff] %v1207
      %1240 = vst [vmem:[#allocation2 + $0x38] sm:$0xff] %v1208
      %1241 = vst [vmem:[#allocation2 + $0x40] sm:$0xff] %v1209
      %1242 = vst [vmem:[#allocation2 + $0x48] sm:$0xff] %v1210
      %1243 = vst [vmem:[#allocation2 + $0x50] sm:$0xff] %v1211
      %1244 = vst [vmem:[#allocation2 + $0x58] sm:$0xff] %v1212
      %1245 = vst [vmem:[#allocation2 + $0x60] sm:$0xff] %v1213
      %1246 = vst [vmem:[#allocation2 + $0x68] sm:$0xff] %v1214
      %1247 = vst [vmem:[#allocation2 + $0x70] sm:$0xff] %v1215
      %1248 = vst [vmem:[#allocation2 + $0x78] sm:$0xff] %v1216
      %1249 = vst [vmem:[#allocation2 + $0x80] sm:$0xff] %v1217
      %1250 = vst [vmem:[#allocation2 + $0x88] sm:$0xff] %v1218
      %1251 = vst [vmem:[#allocation2 + $0x90] sm:$0xff] %v1219
      %1252 = vst [vmem:[#allocation2 + $0x98] sm:$0xff] %v1220
      %1253 = vst [vmem:[#allocation2 + $0xa0] sm:$0xff] %v1221
      %1254 = vst [vmem:[#allocation2 + $0xa8] sm:$0xff] %v1222
      %1255 = vst [vmem:[#allocation2 + $0xb0] sm:$0xff] %v1223
      %1256 = vst [vmem:[#allocation2 + $0xb8] sm:$0xff] %v1224
      %1257 = vst [vmem:[#allocation2 + $0xc0] sm:$0xff] %v1225
      %1258 = vst [vmem:[#allocation2 + $0xc8] sm:$0xff] %v1226
      %1259 = vst [vmem:[#allocation2 + $0xd0] sm:$0xff] %v1227
      %1260 = vst [vmem:[#allocation2 + $0xd8] sm:$0xff] %v1228
      %1261 = vst [vmem:[#allocation2 + $0xe0] sm:$0xff] %v1229
      %1262 = vst [vmem:[#allocation2 + $0xe8] sm:$0xff] %v1230
      %1263 = vst [vmem:[#allocation2 + $0xf0] sm:$0xff] %v1231
      %1264 = vst [vmem:[#allocation2 + $0xf8] sm:$0xff] %v1232
      // Predicated region
      $region37: #{localizer_alexnet_forward.10} parent=31 // pred_check
        %p1265 = pneg %p268
      $region38: #{localizer_alexnet_forward.10} parent=31 // pred_check_branch
        %1267 = sbr.rel (%p1265) target = $region40
      $region39: #{localizer_alexnet_forward.10} parent=31 // pred_region
        %v1268 = vld [vmem:[#allocation2] sm:$0xff]
        %v1269 = vld [vmem:[#allocation2 + $0x8] sm:$0xff]
        %v1270 = vld [vmem:[#allocation2 + $0x10] sm:$0xff]
        %v1271 = vld [vmem:[#allocation2 + $0x18] sm:$0xff]
        %v1272 = vld [vmem:[#allocation2 + $0x20] sm:$0xff]
        %v1273 = vld [vmem:[#allocation2 + $0x28] sm:$0xff]
        %v1274 = vld [vmem:[#allocation2 + $0x30] sm:$0xff]
        %v1275 = vld [vmem:[#allocation2 + $0x38] sm:$0xff]
        %v1276 = vld [vmem:[#allocation2 + $0x40] sm:$0xff]
        %v1277 = vld [vmem:[#allocation2 + $0x48] sm:$0xff]
        %v1278 = vld [vmem:[#allocation2 + $0x50] sm:$0xff]
        %v1279 = vld [vmem:[#allocation2 + $0x58] sm:$0xff]
        %v1280 = vld [vmem:[#allocation2 + $0x60] sm:$0xff]
        %v1281 = vld [vmem:[#allocation2 + $0x68] sm:$0xff]
        %v1282 = vld [vmem:[#allocation2 + $0x70] sm:$0xff]
        %v1283 = vld [vmem:[#allocation2 + $0x78] sm:$0xff]
        %v1284 = vld [vmem:[#allocation2 + $0x80] sm:$0xff]
        %v1285 = vld [vmem:[#allocation2 + $0x88] sm:$0xff]
        %v1286 = vld [vmem:[#allocation2 + $0x90] sm:$0xff]
        %v1287 = vld [vmem:[#allocation2 + $0x98] sm:$0xff]
        %v1288 = vld [vmem:[#allocation2 + $0xa0] sm:$0xff]
        %v1289 = vld [vmem:[#allocation2 + $0xa8] sm:$0xff]
        %v1290 = vld [vmem:[#allocation2 + $0xb0] sm:$0xff]
        %v1291 = vld [vmem:[#allocation2 + $0xb8] sm:$0xff]
        %v1292 = vld [vmem:[#allocation2 + $0xc0] sm:$0xff]
        %v1293 = vld [vmem:[#allocation2 + $0xc8] sm:$0xff]
        %v1294 = vld [vmem:[#allocation2 + $0xd0] sm:$0xff]
        %v1295 = vld [vmem:[#allocation2 + $0xd8] sm:$0xff]
        %v1296 = vld [vmem:[#allocation2 + $0xe0] sm:$0xff]
        %v1297 = vld [vmem:[#allocation2 + $0xe8] sm:$0xff]
        %v1298 = vld [vmem:[#allocation2 + $0xf0] sm:$0xff]
        %v1299 = vld [vmem:[#allocation2 + $0xf8] sm:$0xff]
        %v1300 = vld [vmem:[%s257] sm:$0x1]
        %v1302 = vlaneseq
        %v1303 = vshrl.u32 %v1302, 7
        %v1304 = vsub.s32 0, %v1303
        %v1305 = vrot.slane %v1300, %v1304
        %v1307 = vadd.f32 %v1268, %v1305
        %v1308 = vadd.f32 %v1269, %v1305
        %v1309 = vadd.f32 %v1270, %v1305
        %v1310 = vadd.f32 %v1271, %v1305
        %v1311 = vadd.f32 %v1272, %v1305
        %v1312 = vadd.f32 %v1273, %v1305
        %v1313 = vadd.f32 %v1274, %v1305
        %v1314 = vadd.f32 %v1275, %v1305
        %v1315 = vadd.f32 %v1276, %v1305
        %v1316 = vadd.f32 %v1277, %v1305
        %v1317 = vadd.f32 %v1278, %v1305
        %v1318 = vadd.f32 %v1279, %v1305
        %v1319 = vadd.f32 %v1280, %v1305
        %v1320 = vadd.f32 %v1281, %v1305
        %v1321 = vadd.f32 %v1282, %v1305
        %v1322 = vadd.f32 %v1283, %v1305
        %v1323 = vadd.f32 %v1284, %v1305
        %v1324 = vadd.f32 %v1285, %v1305
        %v1325 = vadd.f32 %v1286, %v1305
        %v1326 = vadd.f32 %v1287, %v1305
        %v1327 = vadd.f32 %v1288, %v1305
        %v1328 = vadd.f32 %v1289, %v1305
        %v1329 = vadd.f32 %v1290, %v1305
        %v1330 = vadd.f32 %v1291, %v1305
        %v1331 = vadd.f32 %v1292, %v1305
        %v1332 = vadd.f32 %v1293, %v1305
        %v1333 = vadd.f32 %v1294, %v1305
        %v1334 = vadd.f32 %v1295, %v1305
        %v1335 = vadd.f32 %v1296, %v1305
        %v1336 = vadd.f32 %v1297, %v1305
        %v1337 = vadd.f32 %v1298, %v1305
        %v1338 = vadd.f32 %v1299, %v1305
        %v1339 = vmax.f32 %v1307, 0.0
        %v1340 = vmax.f32 %v1308, 0.0
        %v1341 = vmax.f32 %v1309, 0.0
        %v1342 = vmax.f32 %v1310, 0.0
        %v1343 = vmax.f32 %v1311, 0.0
        %v1344 = vmax.f32 %v1312, 0.0
        %v1345 = vmax.f32 %v1313, 0.0
        %v1346 = vmax.f32 %v1314, 0.0
        %v1347 = vmax.f32 %v1315, 0.0
        %v1348 = vmax.f32 %v1316, 0.0
        %v1349 = vmax.f32 %v1317, 0.0
        %v1350 = vmax.f32 %v1318, 0.0
        %v1351 = vmax.f32 %v1319, 0.0
        %v1352 = vmax.f32 %v1320, 0.0
        %v1353 = vmax.f32 %v1321, 0.0
        %v1354 = vmax.f32 %v1322, 0.0
        %v1355 = vmax.f32 %v1323, 0.0
        %v1356 = vmax.f32 %v1324, 0.0
        %v1357 = vmax.f32 %v1325, 0.0
        %v1358 = vmax.f32 %v1326, 0.0
        %v1359 = vmax.f32 %v1327, 0.0
        %v1360 = vmax.f32 %v1328, 0.0
        %v1361 = vmax.f32 %v1329, 0.0
        %v1362 = vmax.f32 %v1330, 0.0
        %v1363 = vmax.f32 %v1331, 0.0
        %v1364 = vmax.f32 %v1332, 0.0
        %v1365 = vmax.f32 %v1333, 0.0
        %v1366 = vmax.f32 %v1334, 0.0
        %v1367 = vmax.f32 %v1335, 0.0
        %v1368 = vmax.f32 %v1336, 0.0
        %v1369 = vmax.f32 %v1337, 0.0
        %v1370 = vmax.f32 %v1338, 0.0
        %v1371 = vpack.c.bf16 %v1340, %v1339
        %v1372 = vpack.c.bf16 %v1342, %v1341
        %v1373 = vpack.c.bf16 %v1344, %v1343
        %v1374 = vpack.c.bf16 %v1346, %v1345
        %v1375 = vpack.c.bf16 %v1348, %v1347
        %v1376 = vpack.c.bf16 %v1350, %v1349
        %v1377 = vpack.c.bf16 %v1352, %v1351
        %v1378 = vpack.c.bf16 %v1354, %v1353
        %v1379 = vpack.c.bf16 %v1356, %v1355
        %v1380 = vpack.c.bf16 %v1358, %v1357
        %v1381 = vpack.c.bf16 %v1360, %v1359
        %v1382 = vpack.c.bf16 %v1362, %v1361
        %v1383 = vpack.c.bf16 %v1364, %v1363
        %v1384 = vpack.c.bf16 %v1366, %v1365
        %v1385 = vpack.c.bf16 %v1368, %v1367
        %v1386 = vpack.c.bf16 %v1370, %v1369
        %v1403 = vunpack.c.l.b16 %v1371
        %v1404 = vunpack.c.h.b16 %v1371
        %v1405 = vunpack.c.l.b16 %v1372
        %v1406 = vunpack.c.h.b16 %v1372
        %v1407 = vunpack.c.l.b16 %v1373
        %v1408 = vunpack.c.h.b16 %v1373
        %v1409 = vunpack.c.l.b16 %v1374
        %v1410 = vunpack.c.h.b16 %v1374
        %v1411 = vunpack.c.l.b16 %v1375
        %v1412 = vunpack.c.h.b16 %v1375
        %v1413 = vunpack.c.l.b16 %v1376
        %v1414 = vunpack.c.h.b16 %v1376
        %v1415 = vunpack.c.l.b16 %v1377
        %v1416 = vunpack.c.h.b16 %v1377
        %v1417 = vunpack.c.l.b16 %v1378
        %v1418 = vunpack.c.h.b16 %v1378
        %v1419 = vunpack.c.l.b16 %v1379
        %v1420 = vunpack.c.h.b16 %v1379
        %v1421 = vunpack.c.l.b16 %v1380
        %v1422 = vunpack.c.h.b16 %v1380
        %v1423 = vunpack.c.l.b16 %v1381
        %v1424 = vunpack.c.h.b16 %v1381
        %v1425 = vunpack.c.l.b16 %v1382
        %v1426 = vunpack.c.h.b16 %v1382
        %v1427 = vunpack.c.l.b16 %v1383
        %v1428 = vunpack.c.h.b16 %v1383
        %v1429 = vunpack.c.l.b16 %v1384
        %v1430 = vunpack.c.h.b16 %v1384
        %v1431 = vunpack.c.l.b16 %v1385
        %v1432 = vunpack.c.h.b16 %v1385
        %v1433 = vunpack.c.l.b16 %v1386
        %v1434 = vunpack.c.h.b16 %v1386
        %v1435 = vpack.c.b16 %v1403, %v1403
        %v1436 = vpack.c.b16 %v1404, %v1404
        %v1437 = vpack.c.b16 %v1405, %v1405
        %v1438 = vpack.c.b16 %v1406, %v1406
        %v1439 = vpack.c.b16 %v1407, %v1407
        %v1440 = vpack.c.b16 %v1408, %v1408
        %v1441 = vpack.c.b16 %v1409, %v1409
        %v1442 = vpack.c.b16 %v1410, %v1410
        %v1443 = vpack.c.b16 %v1411, %v1411
        %v1444 = vpack.c.b16 %v1412, %v1412
        %v1445 = vpack.c.b16 %v1413, %v1413
        %v1446 = vpack.c.b16 %v1414, %v1414
        %v1447 = vpack.c.b16 %v1415, %v1415
        %v1448 = vpack.c.b16 %v1416, %v1416
        %v1449 = vpack.c.b16 %v1417, %v1417
        %v1450 = vpack.c.b16 %v1418, %v1418
        %v1451 = vpack.c.b16 %v1419, %v1419
        %v1452 = vpack.c.b16 %v1420, %v1420
        %v1453 = vpack.c.b16 %v1421, %v1421
        %v1454 = vpack.c.b16 %v1422, %v1422
        %v1455 = vpack.c.b16 %v1423, %v1423
        %v1456 = vpack.c.b16 %v1424, %v1424
        %v1457 = vpack.c.b16 %v1425, %v1425
        %v1458 = vpack.c.b16 %v1426, %v1426
        %v1459 = vpack.c.b16 %v1427, %v1427
        %v1460 = vpack.c.b16 %v1428, %v1428
        %v1461 = vpack.c.b16 %v1429, %v1429
        %v1462 = vpack.c.b16 %v1430, %v1430
        %v1463 = vpack.c.b16 %v1431, %v1431
        %v1464 = vpack.c.b16 %v1432, %v1432
        %v1465 = vpack.c.b16 %v1433, %v1433
        %v1466 = vpack.c.b16 %v1434, %v1434
        %1499 = vst [vmem:[%s265] sm:$0xf] %v1435
        %1500 = vst [vmem:[%s265 + $0x4] sm:$0xf] %v1436
        %1501 = vst [vmem:[%s265 + $0x8] sm:$0xf] %v1437
        %1502 = vst [vmem:[%s265 + $0xc] sm:$0xf] %v1438
        %1503 = vst [vmem:[%s265 + $0x10] sm:$0xf] %v1439
        %1504 = vst [vmem:[%s265 + $0x14] sm:$0xf] %v1440
        %1505 = vst [vmem:[%s265 + $0x18] sm:$0xf] %v1441
        %1506 = vst [vmem:[%s265 + $0x1c] sm:$0xf] %v1442
        %1507 = vst [vmem:[%s265 + $0x20] sm:$0xf] %v1443
        %1508 = vst [vmem:[%s265 + $0x24] sm:$0xf] %v1444
        %1509 = vst [vmem:[%s265 + $0x28] sm:$0xf] %v1445
        %1510 = vst [vmem:[%s265 + $0x2c] sm:$0xf] %v1446
        %1511 = vst [vmem:[%s265 + $0x30] sm:$0xf] %v1447
        %1512 = vst [vmem:[%s265 + $0x34] sm:$0xf] %v1448
        %1513 = vst [vmem:[%s265 + $0x38] sm:$0xf] %v1449
        %1514 = vst [vmem:[%s265 + $0x3c] sm:$0xf] %v1450
        %1515 = vst [vmem:[%s265 + $0x40] sm:$0xf] %v1451
        %1516 = vst [vmem:[%s265 + $0x44] sm:$0xf] %v1452
        %1517 = vst [vmem:[%s265 + $0x48] sm:$0xf] %v1453
        %1518 = vst [vmem:[%s265 + $0x4c] sm:$0xf] %v1454
        %1519 = vst [vmem:[%s265 + $0x50] sm:$0xf] %v1455
        %1520 = vst [vmem:[%s265 + $0x54] sm:$0xf] %v1456
        %1521 = vst [vmem:[%s265 + $0x58] sm:$0xf] %v1457
        %1522 = vst [vmem:[%s265 + $0x5c] sm:$0xf] %v1458
        %1523 = vst [vmem:[%s265 + $0x60] sm:$0xf] %v1459
        %1524 = vst [vmem:[%s265 + $0x64] sm:$0xf] %v1460
        %1525 = vst [vmem:[%s265 + $0x68] sm:$0xf] %v1461
        %1526 = vst [vmem:[%s265 + $0x6c] sm:$0xf] %v1462
        %1527 = vst [vmem:[%s265 + $0x70] sm:$0xf] %v1463
        %1528 = vst [vmem:[%s265 + $0x74] sm:$0xf] %v1464
        %1529 = vst [vmem:[%s265 + $0x78] sm:$0xf] %v1465
        %1530 = vst [vmem:[%s265 + $0x7c] sm:$0xf] %v1466
      $region40: #{localizer_alexnet_forward.10} parent=31 // pred_fallthru
        _
      %s1531 = smul.u32 32, %s19
      %p1532 = scmp.lt.s32.totalorder %s1531, 63
      %s1533 = scalar_select %p1532, %s1531, 63
      %p1534 = scmp.lt.s32.totalorder %s20, 0
      %s1535 = scalar_select %p1534, %s20, 0
      %s1536 = sadd.s32 %s1535, %s1533
      %s1537 = smul.addr %s1536, 4
      %s1538 = scalar_lea.vmem %s3, %s1537
      // Predicated region
      $region41: #{localizer_alexnet_forward.10} parent=31 // pred_check
        %p1539 = pneg %p135
      $region42: #{localizer_alexnet_forward.10} parent=31 // pred_check_branch
        %1541 = sbr.rel (%p1539) target = $region44
      $region43: #{localizer_alexnet_forward.10} parent=31 // pred_region
        %s1542 = smul.u32 32, %s19
      $region44: #{localizer_alexnet_forward.10} parent=31 // pred_fallthru
        _
    $region32: #{localizer_alexnet_forward.10} parent=5 // pred_fallthru
      _
    %p1543 = scmp.le.s32.totalorder 2, %s9
    // Predicated region
    $region45: #{localizer_alexnet_forward.10} parent=5 // pred_check
      %p1544 = pneg %p1543
    $region46: #{localizer_alexnet_forward.10} parent=5 // pred_check_branch
      %1546 = sbr.rel (%p1544) target = $region48
    $region47: #{localizer_alexnet_forward.10} parent=5 // pred_region
      %s1547 = ssub.s32 %s9, 2
      // Predicated region
      $region49: #{localizer_alexnet_forward.10} parent=47 // pred_check
        %p1548 = pneg %p141
      $region50: #{localizer_alexnet_forward.10} parent=47 // pred_check_branch
        %1550 = sbr.rel (%p1548) target = $region52
      $region51: #{localizer_alexnet_forward.10} parent=47 // pred_region
        %s1551 = smul.u32 32, %s22
        %p1552 = scmp.lt.s32.totalorder %s1551, 63
        %s1553 = scalar_select %p1552, %s1551, 63
        %p1554 = scmp.lt.s32.totalorder %s23, 0
        %s1555 = scalar_select %p1554, %s23, 0
        %s1556 = sadd.s32 %s1555, %s1553
        %s1557 = smul.addr %s1556, 4
        %s1558 = scalar_lea.vmem %s3, %s1557
      $region52: #{localizer_alexnet_forward.10} parent=47 // pred_fallthru
        _
    $region48: #{localizer_alexnet_forward.10} parent=5 // pred_fallthru
      _
  $region6: #{localizer_alexnet_forward.10} parent=0 // loop_footer
    %s13 = sadd.s32 1, %s9
  $region7: #{localizer_alexnet_forward.10} parent=0 // loop_footer_branch
    %8 = sbr.rel target = $region3
  $region8: #{localizer_alexnet_forward.10} parent=0 // loop_exit
    _

// kernel: localizer_alexnet_forward.11
$region0: #{localizer_alexnet_forward.11}
  #allocation0 [shape = 'u32[]', space=smem, size = 0x4, offset = 0x4, fixed_abs, tag = 'smem constant byte address 0x4 - core index']
  #allocation1 [shape = 'u32[144,128]{1,0:T(1,128)}', space=vmem, size = 0x12000, scoped, tag = 'internal scratch']
  %s0 = inlined_call_operand.vmem [shape: bf16[2,49,128], index: 0, kind: input, shape index: {}]
  %s1 = inlined_call_operand.vmem [shape: bf16[2,49,128], index: 1, kind: input, shape index: {}]
  %s2 = inlined_call_operand.vmem [shape: bf16[2,49,128], index: 2, kind: input, shape index: {}]
  %s3 = inlined_call_operand.vmem [shape: bf16[2,49,128], index: 3, kind: input, shape index: {}]
  %s4 = inlined_call_operand.vmem [shape: bf16[2,49,128], index: 4, kind: input, shape index: {}]
  %s5 = inlined_call_operand.vmem [shape: bf16[2,49,128], index: 5, kind: input, shape index: {}]
  %s6 = inlined_call_operand.vmem [shape: bf16[2,49,128], index: 6, kind: input, shape index: {}]
  %s7 = inlined_call_operand.vmem [shape: bf16[2,49,128], index: 7, kind: input, shape index: {}]
  %s8 = inlined_call_operand.vmem [shape: bf16[2,49,128], index: 8, kind: input, shape index: {}]
  %s9 = inlined_call_operand.vmem [shape: bf16[2,49,128], index: 9, kind: output, shape index: {}]
  %s10 = sld [smem:[#allocation0]]
  $region69: #{localizer_alexnet_forward.11} parent=0
    _
  %s12 = ssub.s32 1, %s10
  %s13 = scalar_select 0, %s12, %s10
  loop: start=0, step=1, limit=4
  $region2: #{localizer_alexnet_forward.11} parent=0 // loop_pre_header
    _
  $region3: #{localizer_alexnet_forward.11} parent=0 // loop_header
    %s15 = sphi 0, %s19
    %p16 = scmp.ge.s32.totalorder %s15, 4
    %s25 = sphi 0, %s27
    %s28 = sphi 0, %s25
    %s29 = sphi 0, %s28
    %s45 = sphi 0, %s29
    %s51 = sphi 0, %s53
    %s54 = sphi 0, %s51
    %s55 = sphi 0, %s54
    %s71 = sphi 0, %s55
    %s77 = sphi 0, %s79
    %s80 = sphi 0, %s77
    %s81 = sphi 0, %s80
    %s97 = sphi 0, %s81
    %s103 = sphi 0, %s105
    %s106 = sphi 0, %s103
    %s107 = sphi 0, %s106
    %s123 = sphi 0, %s107
    %s129 = sphi 0, %s131
    %s132 = sphi 0, %s129
    %s133 = sphi 0, %s132
    %s149 = sphi 0, %s133
    %s155 = sphi 0, %s157
    %s158 = sphi 0, %s155
    %s159 = sphi 0, %s158
    %s175 = sphi 0, %s159
    %s181 = sphi 0, %s183
    %s184 = sphi 0, %s181
    %s185 = sphi 0, %s184
    %s201 = sphi 0, %s185
    %s207 = sphi 0, %s209
    %s210 = sphi 0, %s207
    %s211 = sphi 0, %s210
    %s227 = sphi 0, %s211
    %s233 = sphi 0, %s235
    %s236 = sphi 0, %s233
    %s237 = sphi 0, %s236
    %s253 = sphi 0, %s237
    %s259 = sphi 0, %s261
    %s262 = sphi 0, %s259
    %s263 = sphi 0, %s262
    %s279 = sphi 0, %s263
  $region4: #{localizer_alexnet_forward.11} parent=0 // loop_header_branch
    %18 = sbr.rel (%p16) target = $region8
  $region5: #{localizer_alexnet_forward.11} parent=0 // loop_body
    %s20 = ssub.s32 %s15, 1
    %s21 = ssub.s32 %s15, 2
    %s22 = sadd.s32 %s15, 1
    %s23 = ssub.s32 %s15, %s22
    %p24 = scmp.eq.s32.totalorder %s23, 0
    %s26 = sadd.s32 %s25, 1
    %s27 = scalar_select %p24, %s25, %s26
    %p30 = pneg %p24
    %p31 = scmp.eq.s32.totalorder %s15, 1
    %p32 = por %p30, %p31
    %p33 = scmp.ne.s32.totalorder %s25, %s28
    %p34 = scmp.eq.s32.totalorder %s15, 0
    %p35 = por %p33, %p34
    %p36 = scmp.ne.s32.totalorder %s25, %s28
    %p37 = scmp.eq.s32.totalorder %s20, 1
    %p38 = por %p36, %p37
    %p39 = scmp.ne.s32.totalorder %s28, %s29
    %p40 = scmp.eq.s32.totalorder %s20, 0
    %p41 = por %p39, %p40
    %p42 = scmp.ne.s32.totalorder %s28, %s29
    %p43 = scmp.eq.s32.totalorder %s21, 1
    %p44 = por %p42, %p43
    %p46 = scmp.ne.s32.totalorder %s29, %s45
    %p47 = scmp.eq.s32.totalorder %s21, 0
    %p48 = por %p46, %p47
    %s49 = ssub.s32 %s15, %s22
    %p50 = scmp.eq.s32.totalorder %s49, 0
    %s52 = sadd.s32 %s51, 1
    %s53 = scalar_select %p50, %s51, %s52
    %p56 = pneg %p50
    %p57 = scmp.eq.s32.totalorder %s15, 1
    %p58 = por %p56, %p57
    %p59 = scmp.ne.s32.totalorder %s51, %s54
    %p60 = scmp.eq.s32.totalorder %s15, 0
    %p61 = por %p59, %p60
    %p62 = scmp.ne.s32.totalorder %s51, %s54
    %p63 = scmp.eq.s32.totalorder %s20, 1
    %p64 = por %p62, %p63
    %p65 = scmp.ne.s32.totalorder %s54, %s55
    %p66 = scmp.eq.s32.totalorder %s20, 0
    %p67 = por %p65, %p66
    %p68 = scmp.ne.s32.totalorder %s54, %s55
    %p69 = scmp.eq.s32.totalorder %s21, 1
    %p70 = por %p68, %p69
    %p72 = scmp.ne.s32.totalorder %s55, %s71
    %p73 = scmp.eq.s32.totalorder %s21, 0
    %p74 = por %p72, %p73
    %s75 = ssub.s32 %s15, %s22
    %p76 = scmp.eq.s32.totalorder %s75, 0
    %s78 = sadd.s32 %s77, 1
    %s79 = scalar_select %p76, %s77, %s78
    %p82 = pneg %p76
    %p83 = scmp.eq.s32.totalorder %s15, 1
    %p84 = por %p82, %p83
    %p85 = scmp.ne.s32.totalorder %s77, %s80
    %p86 = scmp.eq.s32.totalorder %s15, 0
    %p87 = por %p85, %p86
    %p88 = scmp.ne.s32.totalorder %s77, %s80
    %p89 = scmp.eq.s32.totalorder %s20, 1
    %p90 = por %p88, %p89
    %p91 = scmp.ne.s32.totalorder %s80, %s81
    %p92 = scmp.eq.s32.totalorder %s20, 0
    %p93 = por %p91, %p92
    %p94 = scmp.ne.s32.totalorder %s80, %s81
    %p95 = scmp.eq.s32.totalorder %s21, 1
    %p96 = por %p94, %p95
    %p98 = scmp.ne.s32.totalorder %s81, %s97
    %p99 = scmp.eq.s32.totalorder %s21, 0
    %p100 = por %p98, %p99
    %s101 = ssub.s32 %s15, %s22
    %p102 = scmp.eq.s32.totalorder %s101, 0
    %s104 = sadd.s32 %s103, 1
    %s105 = scalar_select %p102, %s103, %s104
    %p108 = pneg %p102
    %p109 = scmp.eq.s32.totalorder %s15, 1
    %p110 = por %p108, %p109
    %p111 = scmp.ne.s32.totalorder %s103, %s106
    %p112 = scmp.eq.s32.totalorder %s15, 0
    %p113 = por %p111, %p112
    %p114 = scmp.ne.s32.totalorder %s103, %s106
    %p115 = scmp.eq.s32.totalorder %s20, 1
    %p116 = por %p114, %p115
    %p117 = scmp.ne.s32.totalorder %s106, %s107
    %p118 = scmp.eq.s32.totalorder %s20, 0
    %p119 = por %p117, %p118
    %p120 = scmp.ne.s32.totalorder %s106, %s107
    %p121 = scmp.eq.s32.totalorder %s21, 1
    %p122 = por %p120, %p121
    %p124 = scmp.ne.s32.totalorder %s107, %s123
    %p125 = scmp.eq.s32.totalorder %s21, 0
    %p126 = por %p124, %p125
    %s127 = ssub.s32 %s15, %s22
    %p128 = scmp.eq.s32.totalorder %s127, 0
    %s130 = sadd.s32 %s129, 1
    %s131 = scalar_select %p128, %s129, %s130
    %p134 = pneg %p128
    %p135 = scmp.eq.s32.totalorder %s15, 1
    %p136 = por %p134, %p135
    %p137 = scmp.ne.s32.totalorder %s129, %s132
    %p138 = scmp.eq.s32.totalorder %s15, 0
    %p139 = por %p137, %p138
    %p140 = scmp.ne.s32.totalorder %s129, %s132
    %p141 = scmp.eq.s32.totalorder %s20, 1
    %p142 = por %p140, %p141
    %p143 = scmp.ne.s32.totalorder %s132, %s133
    %p144 = scmp.eq.s32.totalorder %s20, 0
    %p145 = por %p143, %p144
    %p146 = scmp.ne.s32.totalorder %s132, %s133
    %p147 = scmp.eq.s32.totalorder %s21, 1
    %p148 = por %p146, %p147
    %p150 = scmp.ne.s32.totalorder %s133, %s149
    %p151 = scmp.eq.s32.totalorder %s21, 0
    %p152 = por %p150, %p151
    %s153 = ssub.s32 %s15, %s22
    %p154 = scmp.eq.s32.totalorder %s153, 0
    %s156 = sadd.s32 %s155, 1
    %s157 = scalar_select %p154, %s155, %s156
    %p160 = pneg %p154
    %p161 = scmp.eq.s32.totalorder %s15, 1
    %p162 = por %p160, %p161
    %p163 = scmp.ne.s32.totalorder %s155, %s158
    %p164 = scmp.eq.s32.totalorder %s15, 0
    %p165 = por %p163, %p164
    %p166 = scmp.ne.s32.totalorder %s155, %s158
    %p167 = scmp.eq.s32.totalorder %s20, 1
    %p168 = por %p166, %p167
    %p169 = scmp.ne.s32.totalorder %s158, %s159
    %p170 = scmp.eq.s32.totalorder %s20, 0
    %p171 = por %p169, %p170
    %p172 = scmp.ne.s32.totalorder %s158, %s159
    %p173 = scmp.eq.s32.totalorder %s21, 1
    %p174 = por %p172, %p173
    %p176 = scmp.ne.s32.totalorder %s159, %s175
    %p177 = scmp.eq.s32.totalorder %s21, 0
    %p178 = por %p176, %p177
    %s179 = ssub.s32 %s15, %s22
    %p180 = scmp.eq.s32.totalorder %s179, 0
    %s182 = sadd.s32 %s181, 1
    %s183 = scalar_select %p180, %s181, %s182
    %p186 = pneg %p180
    %p187 = scmp.eq.s32.totalorder %s15, 1
    %p188 = por %p186, %p187
    %p189 = scmp.ne.s32.totalorder %s181, %s184
    %p190 = scmp.eq.s32.totalorder %s15, 0
    %p191 = por %p189, %p190
    %p192 = scmp.ne.s32.totalorder %s181, %s184
    %p193 = scmp.eq.s32.totalorder %s20, 1
    %p194 = por %p192, %p193
    %p195 = scmp.ne.s32.totalorder %s184, %s185
    %p196 = scmp.eq.s32.totalorder %s20, 0
    %p197 = por %p195, %p196
    %p198 = scmp.ne.s32.totalorder %s184, %s185
    %p199 = scmp.eq.s32.totalorder %s21, 1
    %p200 = por %p198, %p199
    %p202 = scmp.ne.s32.totalorder %s185, %s201
    %p203 = scmp.eq.s32.totalorder %s21, 0
    %p204 = por %p202, %p203
    %s205 = ssub.s32 %s15, %s22
    %p206 = scmp.eq.s32.totalorder %s205, 0
    %s208 = sadd.s32 %s207, 1
    %s209 = scalar_select %p206, %s207, %s208
    %p212 = pneg %p206
    %p213 = scmp.eq.s32.totalorder %s15, 1
    %p214 = por %p212, %p213
    %p215 = scmp.ne.s32.totalorder %s207, %s210
    %p216 = scmp.eq.s32.totalorder %s15, 0
    %p217 = por %p215, %p216
    %p218 = scmp.ne.s32.totalorder %s207, %s210
    %p219 = scmp.eq.s32.totalorder %s20, 1
    %p220 = por %p218, %p219
    %p221 = scmp.ne.s32.totalorder %s210, %s211
    %p222 = scmp.eq.s32.totalorder %s20, 0
    %p223 = por %p221, %p222
    %p224 = scmp.ne.s32.totalorder %s210, %s211
    %p225 = scmp.eq.s32.totalorder %s21, 1
    %p226 = por %p224, %p225
    %p228 = scmp.ne.s32.totalorder %s211, %s227
    %p229 = scmp.eq.s32.totalorder %s21, 0
    %p230 = por %p228, %p229
    %s231 = ssub.s32 %s15, %s22
    %p232 = scmp.eq.s32.totalorder %s231, 0
    %s234 = sadd.s32 %s233, 1
    %s235 = scalar_select %p232, %s233, %s234
    %p238 = pneg %p232
    %p239 = scmp.eq.s32.totalorder %s15, 1
    %p240 = por %p238, %p239
    %p241 = scmp.ne.s32.totalorder %s233, %s236
    %p242 = scmp.eq.s32.totalorder %s15, 0
    %p243 = por %p241, %p242
    %p244 = scmp.ne.s32.totalorder %s233, %s236
    %p245 = scmp.eq.s32.totalorder %s20, 1
    %p246 = por %p244, %p245
    %p247 = scmp.ne.s32.totalorder %s236, %s237
    %p248 = scmp.eq.s32.totalorder %s20, 0
    %p249 = por %p247, %p248
    %p250 = scmp.ne.s32.totalorder %s236, %s237
    %p251 = scmp.eq.s32.totalorder %s21, 1
    %p252 = por %p250, %p251
    %p254 = scmp.ne.s32.totalorder %s237, %s253
    %p255 = scmp.eq.s32.totalorder %s21, 0
    %p256 = por %p254, %p255
    %s257 = ssub.s32 %s15, %s22
    %p258 = scmp.eq.s32.totalorder %s257, 0
    %s260 = sadd.s32 %s259, 1
    %s261 = scalar_select %p258, %s259, %s260
    %p264 = pneg %p258
    %p265 = scmp.eq.s32.totalorder %s15, 1
    %p266 = por %p264, %p265
    %p267 = scmp.ne.s32.totalorder %s259, %s262
    %p268 = scmp.eq.s32.totalorder %s15, 0
    %p269 = por %p267, %p268
    %p270 = scmp.ne.s32.totalorder %s259, %s262
    %p271 = scmp.eq.s32.totalorder %s20, 1
    %p272 = por %p270, %p271
    %p273 = scmp.ne.s32.totalorder %s262, %s263
    %p274 = scmp.eq.s32.totalorder %s20, 0
    %p275 = por %p273, %p274
    %p276 = scmp.ne.s32.totalorder %s262, %s263
    %p277 = scmp.eq.s32.totalorder %s21, 1
    %p278 = por %p276, %p277
    %p280 = scmp.ne.s32.totalorder %s263, %s279
    %p281 = scmp.eq.s32.totalorder %s21, 0
    %p282 = por %p280, %p281
    %p283 = scmp.le.s32.totalorder 1, %s15
    %p284 = scmp.lt.s32.totalorder %s15, 3
    %p285 = pnand %p283, %p284
    %p286 = pneg %p285
    // Predicated region
    $region9: #{localizer_alexnet_forward.11} parent=5 // pred_check
      _
    $region10: #{localizer_alexnet_forward.11} parent=5 // pred_check_branch
      %288 = sbr.rel (%p285) target = $region12
    $region11: #{localizer_alexnet_forward.11} parent=5 // pred_region
      %s289 = ssub.s32 %s15, 1
    $region12: #{localizer_alexnet_forward.11} parent=5 // pred_fallthru
      _
    %p290 = scmp.lt.s32.totalorder %s15, 2
    // Predicated region
    $region13: #{localizer_alexnet_forward.11} parent=5 // pred_check
      %p291 = pneg %p290
    $region14: #{localizer_alexnet_forward.11} parent=5 // pred_check_branch
      %293 = sbr.rel (%p291) target = $region16
    $region15: #{localizer_alexnet_forward.11} parent=5 // pred_region
      // Predicated region
      $region17: #{localizer_alexnet_forward.11} parent=15 // pred_check
        %p294 = pneg %p35
      $region18: #{localizer_alexnet_forward.11} parent=15 // pred_check_branch
        %296 = sbr.rel (%p294) target = $region20
      $region19: #{localizer_alexnet_forward.11} parent=15 // pred_region
        %p297 = scmp.lt.s32.totalorder %s15, 1
        %s298 = scalar_select %p297, %s15, 1
        %s299 = smul.addr %s298, 7
        %s300 = smul.addr %s299, 4
        %s301 = scalar_lea.vmem %s0, %s300
      $region20: #{localizer_alexnet_forward.11} parent=15 // pred_fallthru
        _
      // Predicated region
      $region21: #{localizer_alexnet_forward.11} parent=15 // pred_check
        %p302 = pneg %p61
      $region22: #{localizer_alexnet_forward.11} parent=15 // pred_check_branch
        %304 = sbr.rel (%p302) target = $region24
      $region23: #{localizer_alexnet_forward.11} parent=15 // pred_region
        %p305 = scmp.lt.s32.totalorder %s15, 1
        %s306 = scalar_select %p305, %s15, 1
        %s307 = smul.addr %s306, 7
        %s308 = smul.addr %s307, 4
        %s309 = scalar_lea.vmem %s1, %s308
      $region24: #{localizer_alexnet_forward.11} parent=15 // pred_fallthru
        _
      // Predicated region
      $region25: #{localizer_alexnet_forward.11} parent=15 // pred_check
        %p310 = pneg %p87
      $region26: #{localizer_alexnet_forward.11} parent=15 // pred_check_branch
        %312 = sbr.rel (%p310) target = $region28
      $region27: #{localizer_alexnet_forward.11} parent=15 // pred_region
        %p313 = scmp.lt.s32.totalorder %s15, 1
        %s314 = scalar_select %p313, %s15, 1
        %s315 = smul.addr %s314, 7
        %s316 = smul.addr %s315, 4
        %s317 = scalar_lea.vmem %s2, %s316
      $region28: #{localizer_alexnet_forward.11} parent=15 // pred_fallthru
        _
      // Predicated region
      $region29: #{localizer_alexnet_forward.11} parent=15 // pred_check
        %p318 = pneg %p113
      $region30: #{localizer_alexnet_forward.11} parent=15 // pred_check_branch
        %320 = sbr.rel (%p318) target = $region32
      $region31: #{localizer_alexnet_forward.11} parent=15 // pred_region
        %p321 = scmp.lt.s32.totalorder %s15, 1
        %s322 = scalar_select %p321, %s15, 1
        %s323 = smul.addr %s322, 7
        %s324 = smul.addr %s323, 4
        %s325 = scalar_lea.vmem %s3, %s324
      $region32: #{localizer_alexnet_forward.11} parent=15 // pred_fallthru
        _
      // Predicated region
      $region33: #{localizer_alexnet_forward.11} parent=15 // pred_check
        %p326 = pneg %p139
      $region34: #{localizer_alexnet_forward.11} parent=15 // pred_check_branch
        %328 = sbr.rel (%p326) target = $region36
      $region35: #{localizer_alexnet_forward.11} parent=15 // pred_region
        %p329 = scmp.lt.s32.totalorder %s15, 1
        %s330 = scalar_select %p329, %s15, 1
        %s331 = smul.addr %s330, 7
        %s332 = smul.addr %s331, 4
        %s333 = scalar_lea.vmem %s4, %s332
      $region36: #{localizer_alexnet_forward.11} parent=15 // pred_fallthru
        _
      // Predicated region
      $region37: #{localizer_alexnet_forward.11} parent=15 // pred_check
        %p334 = pneg %p165
      $region38: #{localizer_alexnet_forward.11} parent=15 // pred_check_branch
        %336 = sbr.rel (%p334) target = $region40
      $region39: #{localizer_alexnet_forward.11} parent=15 // pred_region
        %p337 = scmp.lt.s32.totalorder %s15, 1
        %s338 = scalar_select %p337, %s15, 1
        %s339 = smul.addr %s338, 7
        %s340 = smul.addr %s339, 4
        %s341 = scalar_lea.vmem %s5, %s340
      $region40: #{localizer_alexnet_forward.11} parent=15 // pred_fallthru
        _
      // Predicated region
      $region41: #{localizer_alexnet_forward.11} parent=15 // pred_check
        %p342 = pneg %p191
      $region42: #{localizer_alexnet_forward.11} parent=15 // pred_check_branch
        %344 = sbr.rel (%p342) target = $region44
      $region43: #{localizer_alexnet_forward.11} parent=15 // pred_region
        %p345 = scmp.lt.s32.totalorder %s15, 1
        %s346 = scalar_select %p345, %s15, 1
        %s347 = smul.addr %s346, 7
        %s348 = smul.addr %s347, 4
        %s349 = scalar_lea.vmem %s6, %s348
      $region44: #{localizer_alexnet_forward.11} parent=15 // pred_fallthru
        _
      // Predicated region
      $region45: #{localizer_alexnet_forward.11} parent=15 // pred_check
        %p350 = pneg %p217
      $region46: #{localizer_alexnet_forward.11} parent=15 // pred_check_branch
        %352 = sbr.rel (%p350) target = $region48
      $region47: #{localizer_alexnet_forward.11} parent=15 // pred_region
        %p353 = scmp.lt.s32.totalorder %s15, 1
        %s354 = scalar_select %p353, %s15, 1
        %s355 = smul.addr %s354, 7
        %s356 = smul.addr %s355, 4
        %s357 = scalar_lea.vmem %s7, %s356
      $region48: #{localizer_alexnet_forward.11} parent=15 // pred_fallthru
        _
      // Predicated region
      $region49: #{localizer_alexnet_forward.11} parent=15 // pred_check
        %p358 = pneg %p243
      $region50: #{localizer_alexnet_forward.11} parent=15 // pred_check_branch
        %360 = sbr.rel (%p358) target = $region52
      $region51: #{localizer_alexnet_forward.11} parent=15 // pred_region
        %p361 = scmp.lt.s32.totalorder %s15, 1
        %s362 = scalar_select %p361, %s15, 1
        %s363 = smul.addr %s362, 7
        %s364 = smul.addr %s363, 4
        %s365 = scalar_lea.vmem %s8, %s364
      $region52: #{localizer_alexnet_forward.11} parent=15 // pred_fallthru
        _
    $region16: #{localizer_alexnet_forward.11} parent=5 // pred_fallthru
      _
    %p366 = scmp.le.s32.totalorder 1, %s15
    %p367 = scmp.lt.s32.totalorder %s15, 3
    %p368 = pnand %p366, %p367
    %p369 = pneg %p368
    // Predicated region
    $region53: #{localizer_alexnet_forward.11} parent=5 // pred_check
      _
    $region54: #{localizer_alexnet_forward.11} parent=5 // pred_check_branch
      %371 = sbr.rel (%p368) target = $region56
    $region55: #{localizer_alexnet_forward.11} parent=5 // pred_region
      %s372 = ssub.s32 %s15, 1
      %p373 = scmp.lt.s32.totalorder %s20, 1
      %s374 = scalar_select %p373, %s20, 1
      %s375 = smul.addr %s374, 7
      %s376 = smul.addr %s375, 4
      %s377 = scalar_lea.vmem %s0, %s376
      %p378 = pneg %p41
      %p379 = pneg %p38
      %p380 = scmp.lt.s32.totalorder %s20, 1
      %s381 = scalar_select %p380, %s20, 1
      %s382 = smul.addr %s381, 7
      %s383 = smul.addr %s382, 4
      %s384 = scalar_lea.vmem %s1, %s383
      %p385 = pneg %p67
      %p386 = pneg %p64
      %p387 = scmp.lt.s32.totalorder %s20, 1
      %s388 = scalar_select %p387, %s20, 1
      %s389 = smul.addr %s388, 7
      %s390 = smul.addr %s389, 4
      %s391 = scalar_lea.vmem %s2, %s390
      %p392 = pneg %p93
      %p393 = pneg %p90
      %p394 = scmp.lt.s32.totalorder %s20, 1
      %s395 = scalar_select %p394, %s20, 1
      %s396 = smul.addr %s395, 7
      %s397 = smul.addr %s396, 4
      %s398 = scalar_lea.vmem %s3, %s397
      %p399 = pneg %p119
      %p400 = pneg %p116
      %p401 = scmp.lt.s32.totalorder %s20, 1
      %s402 = scalar_select %p401, %s20, 1
      %s403 = smul.addr %s402, 7
      %s404 = smul.addr %s403, 4
      %s405 = scalar_lea.vmem %s4, %s404
      %p406 = pneg %p145
      %p407 = pneg %p142
      %p408 = scmp.lt.s32.totalorder %s20, 1
      %s409 = scalar_select %p408, %s20, 1
      %s410 = smul.addr %s409, 7
      %s411 = smul.addr %s410, 4
      %s412 = scalar_lea.vmem %s5, %s411
      %p413 = pneg %p171
      %p414 = pneg %p168
      %p415 = scmp.lt.s32.totalorder %s20, 1
      %s416 = scalar_select %p415, %s20, 1
      %s417 = smul.addr %s416, 7
      %s418 = smul.addr %s417, 4
      %s419 = scalar_lea.vmem %s6, %s418
      %p420 = pneg %p197
      %p421 = pneg %p194
      %p422 = scmp.lt.s32.totalorder %s20, 1
      %s423 = scalar_select %p422, %s20, 1
      %s424 = smul.addr %s423, 7
      %s425 = smul.addr %s424, 4
      %s426 = scalar_lea.vmem %s7, %s425
      %p427 = pneg %p223
      %p428 = pneg %p220
      %p429 = scmp.lt.s32.totalorder %s20, 1
      %s430 = scalar_select %p429, %s20, 1
      %s431 = smul.addr %s430, 7
      %s432 = smul.addr %s431, 4
      %s433 = scalar_lea.vmem %s8, %s432
      %p434 = pneg %p249
      %p435 = pneg %p246
      %p436 = pneg %p275
      %p437 = pneg %p272
      %p438 = scmp.lt.s32.totalorder %s20, 1
      %s439 = scalar_select %p438, %s20, 1
      %s440 = smul.addr %s439, 7
      %s441 = smul.addr %s440, 4
      %s442 = scalar_lea.vmem %s9, %s441
      %p443 = scmp.lt.s32.totalorder %s20, 1
      %s444 = scalar_select %p443, %s20, 1
      %s445 = smul.addr %s444, 7
      %s446 = smul.addr %s445, 4
      %s447 = scalar_lea.vmem %s0, %s446
      %p448 = scmp.lt.s32.totalorder %s20, 1
      %s449 = scalar_select %p448, %s20, 1
      %s450 = smul.addr %s449, 7
      %s451 = smul.addr %s450, 4
      %s452 = scalar_lea.vmem %s1, %s451
      %p453 = scmp.lt.s32.totalorder %s20, 1
      %s454 = scalar_select %p453, %s20, 1
      %s455 = smul.addr %s454, 7
      %s456 = smul.addr %s455, 4
      %s457 = scalar_lea.vmem %s2, %s456
      %p458 = scmp.lt.s32.totalorder %s20, 1
      %s459 = scalar_select %p458, %s20, 1
      %s460 = smul.addr %s459, 7
      %s461 = smul.addr %s460, 4
      %s462 = scalar_lea.vmem %s3, %s461
      %p463 = scmp.lt.s32.totalorder %s20, 1
      %s464 = scalar_select %p463, %s20, 1
      %s465 = smul.addr %s464, 7
      %s466 = smul.addr %s465, 4
      %s467 = scalar_lea.vmem %s4, %s466
      %p468 = scmp.lt.s32.totalorder %s20, 1
      %s469 = scalar_select %p468, %s20, 1
      %s470 = smul.addr %s469, 7
      %s471 = smul.addr %s470, 4
      %s472 = scalar_lea.vmem %s5, %s471
      %p473 = scmp.lt.s32.totalorder %s20, 1
      %s474 = scalar_select %p473, %s20, 1
      %s475 = smul.addr %s474, 7
      %s476 = smul.addr %s475, 4
      %s477 = scalar_lea.vmem %s6, %s476
      %p478 = scmp.lt.s32.totalorder %s20, 1
      %s479 = scalar_select %p478, %s20, 1
      %s480 = smul.addr %s479, 7
      %s481 = smul.addr %s480, 4
      %s482 = scalar_lea.vmem %s7, %s481
      %p483 = scmp.lt.s32.totalorder %s20, 1
      %s484 = scalar_select %p483, %s20, 1
      %s485 = smul.addr %s484, 7
      %s486 = smul.addr %s485, 4
      %s487 = scalar_lea.vmem %s8, %s486
      %p488 = scmp.lt.s32.totalorder %s20, 1
      %s489 = scalar_select %p488, %s20, 1
      %s490 = smul.addr %s489, 7
      %s491 = smul.addr %s490, 4
      %s492 = scalar_lea.vmem %s9, %s491
      %v493 = vld [vmem:[%s447] sm:$0xf]
      %v494 = vld [vmem:[%s447 + $0x4] sm:$0xf]
      %v495 = vld [vmem:[%s447 + $0x8] sm:$0xf]
      %v496 = vld [vmem:[%s447 + $0xc] sm:$0xf]
      %v497 = vld [vmem:[%s447 + $0x10] sm:$0xf]
      %v498 = vld [vmem:[%s447 + $0x14] sm:$0xf]
      %v499 = vld [vmem:[%s447 + $0x18] sm:$0x1]
      %v500 = vld [vmem:[%s452] sm:$0xf]
      %v501 = vld [vmem:[%s452 + $0x4] sm:$0xf]
      %v502 = vld [vmem:[%s452 + $0x8] sm:$0xf]
      %v503 = vld [vmem:[%s452 + $0xc] sm:$0xf]
      %v504 = vld [vmem:[%s452 + $0x10] sm:$0xf]
      %v505 = vld [vmem:[%s452 + $0x14] sm:$0xf]
      %v506 = vld [vmem:[%s452 + $0x18] sm:$0x1]
      %v507 = vmax.bf16 %v493, %v500
      %v508 = vmax.bf16 %v494, %v501
      %v509 = vmax.bf16 %v495, %v502
      %v510 = vmax.bf16 %v496, %v503
      %v511 = vmax.bf16 %v497, %v504
      %v512 = vmax.bf16 %v498, %v505
      %v513 = vmax.bf16 %v499, %v506
      %v514 = vld [vmem:[%s457] sm:$0xf]
      %v515 = vld [vmem:[%s457 + $0x4] sm:$0xf]
      %v516 = vld [vmem:[%s457 + $0x8] sm:$0xf]
      %v517 = vld [vmem:[%s457 + $0xc] sm:$0xf]
      %v518 = vld [vmem:[%s457 + $0x10] sm:$0xf]
      %v519 = vld [vmem:[%s457 + $0x14] sm:$0xf]
      %v520 = vld [vmem:[%s457 + $0x18] sm:$0x1]
      %v521 = vmax.bf16 %v507, %v514
      %v522 = vmax.bf16 %v508, %v515
      %v523 = vmax.bf16 %v509, %v516
      %v524 = vmax.bf16 %v510, %v517
      %v525 = vmax.bf16 %v511, %v518
      %v526 = vmax.bf16 %v512, %v519
      %v527 = vmax.bf16 %v513, %v520
      %v528 = vld [vmem:[%s462] sm:$0xf]
      %v529 = vld [vmem:[%s462 + $0x4] sm:$0xf]
      %v530 = vld [vmem:[%s462 + $0x8] sm:$0xf]
      %v531 = vld [vmem:[%s462 + $0xc] sm:$0xf]
      %v532 = vld [vmem:[%s462 + $0x10] sm:$0xf]
      %v533 = vld [vmem:[%s462 + $0x14] sm:$0xf]
      %v534 = vld [vmem:[%s462 + $0x18] sm:$0x1]
      %v535 = vmax.bf16 %v521, %v528
      %v536 = vmax.bf16 %v522, %v529
      %v537 = vmax.bf16 %v523, %v530
      %v538 = vmax.bf16 %v524, %v531
      %v539 = vmax.bf16 %v525, %v532
      %v540 = vmax.bf16 %v526, %v533
      %v541 = vmax.bf16 %v527, %v534
      %v542 = vld [vmem:[%s467] sm:$0xf]
      %v543 = vld [vmem:[%s467 + $0x4] sm:$0xf]
      %v544 = vld [vmem:[%s467 + $0x8] sm:$0xf]
      %v545 = vld [vmem:[%s467 + $0xc] sm:$0xf]
      %v546 = vld [vmem:[%s467 + $0x10] sm:$0xf]
      %v547 = vld [vmem:[%s467 + $0x14] sm:$0xf]
      %v548 = vld [vmem:[%s467 + $0x18] sm:$0x1]
      %v549 = vmax.bf16 %v535, %v542
      %v550 = vmax.bf16 %v536, %v543
      %v551 = vmax.bf16 %v537, %v544
      %v552 = vmax.bf16 %v538, %v545
      %v553 = vmax.bf16 %v539, %v546
      %v554 = vmax.bf16 %v540, %v547
      %v555 = vmax.bf16 %v541, %v548
      %v556 = vld [vmem:[%s472] sm:$0xf]
      %v557 = vld [vmem:[%s472 + $0x4] sm:$0xf]
      %v558 = vld [vmem:[%s472 + $0x8] sm:$0xf]
      %v559 = vld [vmem:[%s472 + $0xc] sm:$0xf]
      %v560 = vld [vmem:[%s472 + $0x10] sm:$0xf]
      %v561 = vld [vmem:[%s472 + $0x14] sm:$0xf]
      %v562 = vld [vmem:[%s472 + $0x18] sm:$0x1]
      %v563 = vmax.bf16 %v549, %v556
      %v564 = vmax.bf16 %v550, %v557
      %v565 = vmax.bf16 %v551, %v558
      %v566 = vmax.bf16 %v552, %v559
      %v567 = vmax.bf16 %v553, %v560
      %v568 = vmax.bf16 %v554, %v561
      %v569 = vmax.bf16 %v555, %v562
      %v570 = vld [vmem:[%s477] sm:$0xf]
      %v571 = vld [vmem:[%s477 + $0x4] sm:$0xf]
      %v572 = vld [vmem:[%s477 + $0x8] sm:$0xf]
      %v573 = vld [vmem:[%s477 + $0xc] sm:$0xf]
      %v574 = vld [vmem:[%s477 + $0x10] sm:$0xf]
      %v575 = vld [vmem:[%s477 + $0x14] sm:$0xf]
      %v576 = vld [vmem:[%s477 + $0x18] sm:$0x1]
      %v577 = vmax.bf16 %v563, %v570
      %v578 = vmax.bf16 %v564, %v571
      %v579 = vmax.bf16 %v565, %v572
      %v580 = vmax.bf16 %v566, %v573
      %v581 = vmax.bf16 %v567, %v574
      %v582 = vmax.bf16 %v568, %v575
      %v583 = vmax.bf16 %v569, %v576
      %v584 = vld [vmem:[%s482] sm:$0xf]
      %v585 = vld [vmem:[%s482 + $0x4] sm:$0xf]
      %v586 = vld [vmem:[%s482 + $0x8] sm:$0xf]
      %v587 = vld [vmem:[%s482 + $0xc] sm:$0xf]
      %v588 = vld [vmem:[%s482 + $0x10] sm:$0xf]
      %v589 = vld [vmem:[%s482 + $0x14] sm:$0xf]
      %v590 = vld [vmem:[%s482 + $0x18] sm:$0x1]
      %v591 = vmax.bf16 %v577, %v584
      %v592 = vmax.bf16 %v578, %v585
      %v593 = vmax.bf16 %v579, %v586
      %v594 = vmax.bf16 %v580, %v587
      %v595 = vmax.bf16 %v581, %v588
      %v596 = vmax.bf16 %v582, %v589
      %v597 = vmax.bf16 %v583, %v590
      %v598 = vld [vmem:[%s487] sm:$0xf]
      %v599 = vld [vmem:[%s487 + $0x4] sm:$0xf]
      %v600 = vld [vmem:[%s487 + $0x8] sm:$0xf]
      %v601 = vld [vmem:[%s487 + $0xc] sm:$0xf]
      %v602 = vld [vmem:[%s487 + $0x10] sm:$0xf]
      %v603 = vld [vmem:[%s487 + $0x14] sm:$0xf]
      %v604 = vld [vmem:[%s487 + $0x18] sm:$0x1]
      %v605 = vmax.bf16 %v591, %v598
      %v606 = vmax.bf16 %v592, %v599
      %v607 = vmax.bf16 %v593, %v600
      %v608 = vmax.bf16 %v594, %v601
      %v609 = vmax.bf16 %v595, %v602
      %v610 = vmax.bf16 %v596, %v603
      %v611 = vmax.bf16 %v597, %v604
      %612 = vst [vmem:[%s492] sm:$0xf] %v605
      %613 = vst [vmem:[%s492 + $0x4] sm:$0xf] %v606
      %614 = vst [vmem:[%s492 + $0x8] sm:$0xf] %v607
      %615 = vst [vmem:[%s492 + $0xc] sm:$0xf] %v608
      %616 = vst [vmem:[%s492 + $0x10] sm:$0xf] %v609
      %617 = vst [vmem:[%s492 + $0x14] sm:$0xf] %v610
      %vm618 = vcmask 1040384
      %vm619 = vsmask.f32 256
      %vm620 = vmand %vm618, %vm619
      %v621 = vld [vmem:[%s492 + $0x18] sm:$0x1]
      %v622 = vsel %vm620, %v611, %v621
      %623 = vst [vmem:[%s492 + $0x18] sm:$0x1] %v622
      %p624 = scmp.lt.s32.totalorder %s20, 1
      %s625 = scalar_select %p624, %s20, 1
      %s626 = smul.addr %s625, 7
      %s627 = smul.addr %s626, 4
      %s628 = scalar_lea.vmem %s9, %s627
      // Predicated region
      $region57: #{localizer_alexnet_forward.11} parent=55 // pred_check
        %p629 = pneg %p272
      $region58: #{localizer_alexnet_forward.11} parent=55 // pred_check_branch
        %631 = sbr.rel (%p629) target = $region60
      $region59: #{localizer_alexnet_forward.11} parent=55 // pred_region
        _
      $region60: #{localizer_alexnet_forward.11} parent=55 // pred_fallthru
        _
    $region56: #{localizer_alexnet_forward.11} parent=5 // pred_fallthru
      _
    %p632 = scmp.le.s32.totalorder 2, %s15
    // Predicated region
    $region61: #{localizer_alexnet_forward.11} parent=5 // pred_check
      %p633 = pneg %p632
    $region62: #{localizer_alexnet_forward.11} parent=5 // pred_check_branch
      %635 = sbr.rel (%p633) target = $region64
    $region63: #{localizer_alexnet_forward.11} parent=5 // pred_region
      %s636 = ssub.s32 %s15, 2
      // Predicated region
      $region65: #{localizer_alexnet_forward.11} parent=63 // pred_check
        %p637 = pneg %p278
      $region66: #{localizer_alexnet_forward.11} parent=63 // pred_check_branch
        %639 = sbr.rel (%p637) target = $region68
      $region67: #{localizer_alexnet_forward.11} parent=63 // pred_region
        %p640 = scmp.lt.s32.totalorder %s21, 1
        %s641 = scalar_select %p640, %s21, 1
        %s642 = smul.addr %s641, 7
        %s643 = smul.addr %s642, 4
        %s644 = scalar_lea.vmem %s9, %s643
      $region68: #{localizer_alexnet_forward.11} parent=63 // pred_fallthru
        _
    $region64: #{localizer_alexnet_forward.11} parent=5 // pred_fallthru
      _
  $region6: #{localizer_alexnet_forward.11} parent=0 // loop_footer
    %s19 = sadd.s32 1, %s15
  $region7: #{localizer_alexnet_forward.11} parent=0 // loop_footer_branch
    %14 = sbr.rel target = $region3
  $region8: #{localizer_alexnet_forward.11} parent=0 // loop_exit
    _

// kernel: localizer_alexnet_forward.12
$region0: #{localizer_alexnet_forward.12}
  #allocation0 [shape = 'u32[]', space=smem, size = 0x4, offset = 0x4, fixed_abs, tag = 'smem constant byte address 0x4 - core index']
  #allocation1 [shape = 'u32[144,128]{1,0:T(1,128)}', space=vmem, size = 0x12000, scoped, tag = 'internal scratch']
  #allocation2 [shape = 'f32[104,256]{1,0:T(8,128)}', space=vmem, size = 0x1a000, scoped, tag = 'scratch operand']
  %s0 = inlined_call_operand.vmem [shape: bf16[104,3200], index: 0, kind: input, shape index: {}]
  %s1 = inlined_call_operand.vmem [shape: bf16[3200,256], index: 1, kind: input, shape index: {}]
  %s2 = inlined_call_operand.vmem [shape: f32[1,256], index: 2, kind: input, shape index: {}]
  %s3 = inlined_call_operand.vmem [shape: bf16[104,256], index: 3, kind: output, shape index: {}]
  %s4 = sld [smem:[#allocation0]]
  $region79: #{localizer_alexnet_forward.12} parent=0
    _
  %s6 = ssub.s32 1, %s4
  %s7 = scalar_select 0, %s6, %s4
  $region1: #{localizer_alexnet_forward.12} parent=0
    #allocation3 [shape = 'u8[266240]{0}', space=vmem, size = 0x41000, scoped, tag = 'input window, operand 0']
    loop: start=0, step=1, limit=7
    $region2: #{localizer_alexnet_forward.12} parent=1 // loop_pre_header
      _
    $region3: #{localizer_alexnet_forward.12} parent=1 // loop_header
      %s9 = sphi 0, %s13
      %p10 = scmp.ge.s32.totalorder %s9, 7
      %s16 = sphi 0, %s35
      %s17 = sphi 0, %s31
      %s18 = sphi 0, %s27
      %s19 = sphi 0, %s16
      %s20 = sphi 0, %s17
      %s21 = sphi 0, %s18
      %s22 = sphi 0, %s19
      %s23 = sphi 0, %s20
      %s24 = sphi 0, %s21
      %s40 = sphi 0, %s42
      %s43 = sphi 0, %s40
      %s44 = sphi 0, %s43
      %s60 = sphi 0, %s44
      %s68 = sphi 0, %s70
      %s71 = sphi 0, %s68
      %s72 = sphi 0, %s71
      %s88 = sphi 0, %s72
      %s94 = sphi 0, %s96
      %s97 = sphi 0, %s94
      %s98 = sphi 0, %s97
      %s114 = sphi 0, %s98
      %s122 = sphi 0, %s124
      %s125 = sphi 0, %s122
      %s126 = sphi 0, %s125
      %s142 = sphi 0, %s126
    $region4: #{localizer_alexnet_forward.12} parent=1 // loop_header_branch
      %12 = sbr.rel (%p10) target = $region8
    $region5: #{localizer_alexnet_forward.12} parent=1 // loop_body
      %s14 = ssub.s32 %s9, 1
      %s15 = ssub.s32 %s9, 2
      %s25 = sadd.s32 1, %s18
      %p26 = scmp.ge.s32.totalorder %s25, 5
      %s27 = scalar_select %p26, 0, %s25
      %s28 = sadd.s32 1, %s17
      %s29 = scalar_select %p26, %s28, %s17
      %p30 = scmp.ge.s32.totalorder %s29, 1
      %s31 = scalar_select %p30, 0, %s29
      %s32 = sadd.s32 1, %s16
      %s33 = scalar_select %p30, %s32, %s16
      %p34 = scmp.ge.s32.totalorder %s33, 1
      %s35 = scalar_select %p34, 0, %s33
      %s36 = ssub.s32 %s16, %s35
      %s37 = ssub.s32 %s18, %s27
      %s38 = sor.u32 %s36, %s37
      %p39 = scmp.eq.s32.totalorder %s38, 0
      %s41 = sadd.s32 %s40, 1
      %s42 = scalar_select %p39, %s40, %s41
      %p45 = pneg %p39
      %p46 = scmp.eq.s32.totalorder %s9, 4
      %p47 = por %p45, %p46
      %p48 = scmp.ne.s32.totalorder %s40, %s43
      %p49 = scmp.eq.s32.totalorder %s9, 0
      %p50 = por %p48, %p49
      %p51 = scmp.ne.s32.totalorder %s40, %s43
      %p52 = scmp.eq.s32.totalorder %s14, 4
      %p53 = por %p51, %p52
      %p54 = scmp.ne.s32.totalorder %s43, %s44
      %p55 = scmp.eq.s32.totalorder %s14, 0
      %p56 = por %p54, %p55
      %p57 = scmp.ne.s32.totalorder %s43, %s44
      %p58 = scmp.eq.s32.totalorder %s15, 4
      %p59 = por %p57, %p58
      %p61 = scmp.ne.s32.totalorder %s44, %s60
      %p62 = scmp.eq.s32.totalorder %s15, 0
      %p63 = por %p61, %p62
      %s64 = ssub.s32 %s18, %s27
      %s65 = ssub.s32 %s17, %s31
      %s66 = sor.u32 %s64, %s65
      %p67 = scmp.eq.s32.totalorder %s66, 0
      %s69 = sadd.s32 %s68, 1
      %s70 = scalar_select %p67, %s68, %s69
      %p73 = pneg %p67
      %p74 = scmp.eq.s32.totalorder %s9, 4
      %p75 = por %p73, %p74
      %p76 = scmp.ne.s32.totalorder %s68, %s71
      %p77 = scmp.eq.s32.totalorder %s9, 0
      %p78 = por %p76, %p77
      %p79 = scmp.ne.s32.totalorder %s68, %s71
      %p80 = scmp.eq.s32.totalorder %s14, 4
      %p81 = por %p79, %p80
      %p82 = scmp.ne.s32.totalorder %s71, %s72
      %p83 = scmp.eq.s32.totalorder %s14, 0
      %p84 = por %p82, %p83
      %p85 = scmp.ne.s32.totalorder %s71, %s72
      %p86 = scmp.eq.s32.totalorder %s15, 4
      %p87 = por %p85, %p86
      %p89 = scmp.ne.s32.totalorder %s72, %s88
      %p90 = scmp.eq.s32.totalorder %s15, 0
      %p91 = por %p89, %p90
      %s92 = ssub.s32 %s17, %s31
      %p93 = scmp.eq.s32.totalorder %s92, 0
      %s95 = sadd.s32 %s94, 1
      %s96 = scalar_select %p93, %s94, %s95
      %p99 = pneg %p93
      %p100 = scmp.eq.s32.totalorder %s9, 4
      %p101 = por %p99, %p100
      %p102 = scmp.ne.s32.totalorder %s94, %s97
      %p103 = scmp.eq.s32.totalorder %s9, 0
      %p104 = por %p102, %p103
      %p105 = scmp.ne.s32.totalorder %s94, %s97
      %p106 = scmp.eq.s32.totalorder %s14, 4
      %p107 = por %p105, %p106
      %p108 = scmp.ne.s32.totalorder %s97, %s98
      %p109 = scmp.eq.s32.totalorder %s14, 0
      %p110 = por %p108, %p109
      %p111 = scmp.ne.s32.totalorder %s97, %s98
      %p112 = scmp.eq.s32.totalorder %s15, 4
      %p113 = por %p111, %p112
      %p115 = scmp.ne.s32.totalorder %s98, %s114
      %p116 = scmp.eq.s32.totalorder %s15, 0
      %p117 = por %p115, %p116
      %s118 = ssub.s32 %s16, %s35
      %s119 = ssub.s32 %s17, %s31
      %s120 = sor.u32 %s118, %s119
      %p121 = scmp.eq.s32.totalorder %s120, 0
      %s123 = sadd.s32 %s122, 1
      %s124 = scalar_select %p121, %s122, %s123
      %p127 = pneg %p121
      %p128 = scmp.eq.s32.totalorder %s9, 4
      %p129 = por %p127, %p128
      %p130 = scmp.ne.s32.totalorder %s122, %s125
      %p131 = scmp.eq.s32.totalorder %s9, 0
      %p132 = por %p130, %p131
      %p133 = scmp.ne.s32.totalorder %s122, %s125
      %p134 = scmp.eq.s32.totalorder %s14, 4
      %p135 = por %p133, %p134
      %p136 = scmp.ne.s32.totalorder %s125, %s126
      %p137 = scmp.eq.s32.totalorder %s14, 0
      %p138 = por %p136, %p137
      %p139 = scmp.ne.s32.totalorder %s125, %s126
      %p140 = scmp.eq.s32.totalorder %s15, 4
      %p141 = por %p139, %p140
      %p143 = scmp.ne.s32.totalorder %s126, %s142
      %p144 = scmp.eq.s32.totalorder %s15, 0
      %p145 = por %p143, %p144
      %p146 = scmp.le.s32.totalorder 1, %s9
      %p147 = scmp.lt.s32.totalorder %s9, 6
      %p148 = pnand %p146, %p147
      %p149 = pneg %p148
      // Predicated region
      $region9: #{localizer_alexnet_forward.12} parent=5 // pred_check
        _
      $region10: #{localizer_alexnet_forward.12} parent=5 // pred_check_branch
        %151 = sbr.rel (%p148) target = $region12
      $region11: #{localizer_alexnet_forward.12} parent=5 // pred_region
        %s152 = ssub.s32 %s9, 1
        // Predicated region
        $region13: #{localizer_alexnet_forward.12} parent=11 // pred_check
          %p153 = pneg %p110
        $region14: #{localizer_alexnet_forward.12} parent=11 // pred_check_branch
          %155 = sbr.rel (%p153) target = $region16
        $region15: #{localizer_alexnet_forward.12} parent=11 // pred_region
          %s156 = smul.u32 2, %s20
          %p157 = scmp.lt.s32.totalorder %s156, 1
          %s158 = scalar_select %p157, %s156, 1
          %s159 = scalar_lea.vmem %s2, %s158
          %s160 = smul.u32 2, %s20
        $region16: #{localizer_alexnet_forward.12} parent=11 // pred_fallthru
          _
      $region12: #{localizer_alexnet_forward.12} parent=5 // pred_fallthru
        _
      %p161 = scmp.lt.s32.totalorder %s9, 5
      // Predicated region
      $region17: #{localizer_alexnet_forward.12} parent=5 // pred_check
        %p162 = pneg %p161
      $region18: #{localizer_alexnet_forward.12} parent=5 // pred_check_branch
        %164 = sbr.rel (%p162) target = $region20
      $region19: #{localizer_alexnet_forward.12} parent=5 // pred_region
        // Predicated region
        $region21: #{localizer_alexnet_forward.12} parent=19 // pred_check
          %p165 = pneg %p50
        $region22: #{localizer_alexnet_forward.12} parent=19 // pred_check_branch
          %167 = sbr.rel (%p165) target = $region24
        $region23: #{localizer_alexnet_forward.12} parent=19 // pred_region
          %s168 = sand.u32 %s40, 1
          %s169 = sand.u32 %s40, 1
          %s170 = smul.addr %s169, 260
          %s171 = scalar_lea.vmem [#allocation3], %s170
          %s172 = smul.u32 13, %s16
          %s173 = smul.u32 5, %s18
          %s174 = smul.addr %s172, 25
          %s175 = sadd.s32 %s173, %s174
          %s176 = smul.addr %s175, 4
          %s177 = scalar_lea.vmem %s0, %s176
          // Predicated region
          $region25: #{localizer_alexnet_forward.12} parent=23 // pred_check
            _
          $region26: #{localizer_alexnet_forward.12} parent=23 // pred_check_branch
            %179 = sbr.rel (0) target = $region28
          $region27: #{localizer_alexnet_forward.12} parent=23 // pred_region
            // Predicated region
            $region29: #{localizer_alexnet_forward.12} parent=27 // pred_check
              _
            $region30: #{localizer_alexnet_forward.12} parent=27 // pred_check_branch
              %181 = sbr.rel (0) target = $region32
            $region31: #{localizer_alexnet_forward.12} parent=27 // pred_region
              %s182 = scalar_lea.vmem %s177, 16
              %s183 = scalar_lea.vmem %s171, 16 [#allocation3]
              loop: start=0, step=1, limit=1
              $region33: #{localizer_alexnet_forward.12} parent=31 // loop_pre_header
                _
              $region34: #{localizer_alexnet_forward.12} parent=31 // loop_header
                %s185 = sphi 0, %s189
                %p186 = scmp.ge.s32.totalorder %s185, 1
                %s190 = sphi %s177, %s177
                %s191 = sphi %s171, %s171
              $region35: #{localizer_alexnet_forward.12} parent=31 // loop_header_branch
                %188 = sbr.rel (%p186) target = $region39
              $region36: #{localizer_alexnet_forward.12} parent=31 // loop_body
                %v192 = vld [vmem:[%s190] sm:$0xff]
                %193 = vst [vmem:[%s191] sm:$0xff] %v192
                %v194 = vld [vmem:[%s190 + $0x8] sm:$0xff]
                %195 = vst [vmem:[%s191 + $0x8] sm:$0xff] %v194
                %v196 = vld [vmem:[%s190 + $0x64] sm:$0xff]
                %197 = vst [vmem:[%s191 + $0x14] sm:$0xff] %v196
                %v198 = vld [vmem:[%s190 + $0x6c] sm:$0xff]
                %199 = vst [vmem:[%s191 + $0x1c] sm:$0xff] %v198
                %v200 = vld [vmem:[%s190 + $0xc8] sm:$0xff]
                %201 = vst [vmem:[%s191 + $0x28] sm:$0xff] %v200
                %v202 = vld [vmem:[%s190 + $0xd0] sm:$0xff]
                %203 = vst [vmem:[%s191 + $0x30] sm:$0xff] %v202
                %v204 = vld [vmem:[%s190 + $0x12c] sm:$0xff]
                %205 = vst [vmem:[%s191 + $0x3c] sm:$0xff] %v204
                %v206 = vld [vmem:[%s190 + $0x134] sm:$0xff]
                %207 = vst [vmem:[%s191 + $0x44] sm:$0xff] %v206
                %v208 = vld [vmem:[%s190 + $0x190] sm:$0xff]
                %209 = vst [vmem:[%s191 + $0x50] sm:$0xff] %v208
                %v210 = vld [vmem:[%s190 + $0x198] sm:$0xff]
                %211 = vst [vmem:[%s191 + $0x58] sm:$0xff] %v210
                %v212 = vld [vmem:[%s190 + $0x1f4] sm:$0xff]
                %213 = vst [vmem:[%s191 + $0x64] sm:$0xff] %v212
                %v214 = vld [vmem:[%s190 + $0x1fc] sm:$0xff]
                %215 = vst [vmem:[%s191 + $0x6c] sm:$0xff] %v214
                %v216 = vld [vmem:[%s190 + $0x258] sm:$0xff]
                %217 = vst [vmem:[%s191 + $0x78] sm:$0xff] %v216
                %v218 = vld [vmem:[%s190 + $0x260] sm:$0xff]
                %219 = vst [vmem:[%s191 + $0x80] sm:$0xff] %v218
                %v220 = vld [vmem:[%s190 + $0x2bc] sm:$0xff]
                %221 = vst [vmem:[%s191 + $0x8c] sm:$0xff] %v220
                %v222 = vld [vmem:[%s190 + $0x2c4] sm:$0xff]
                %223 = vst [vmem:[%s191 + $0x94] sm:$0xff] %v222
                %v224 = vld [vmem:[%s190 + $0x320] sm:$0xff]
                %225 = vst [vmem:[%s191 + $0xa0] sm:$0xff] %v224
                %v226 = vld [vmem:[%s190 + $0x328] sm:$0xff]
                %227 = vst [vmem:[%s191 + $0xa8] sm:$0xff] %v226
                %v228 = vld [vmem:[%s190 + $0x384] sm:$0xff]
                %229 = vst [vmem:[%s191 + $0xb4] sm:$0xff] %v228
                %v230 = vld [vmem:[%s190 + $0x38c] sm:$0xff]
                %231 = vst [vmem:[%s191 + $0xbc] sm:$0xff] %v230
                %v232 = vld [vmem:[%s190 + $0x3e8] sm:$0xff]
                %233 = vst [vmem:[%s191 + $0xc8] sm:$0xff] %v232
                %v234 = vld [vmem:[%s190 + $0x3f0] sm:$0xff]
                %235 = vst [vmem:[%s191 + $0xd0] sm:$0xff] %v234
                %v236 = vld [vmem:[%s190 + $0x44c] sm:$0xff]
                %237 = vst [vmem:[%s191 + $0xdc] sm:$0xff] %v236
                %v238 = vld [vmem:[%s190 + $0x454] sm:$0xff]
                %239 = vst [vmem:[%s191 + $0xe4] sm:$0xff] %v238
                %v240 = vld [vmem:[%s190 + $0x4b0] sm:$0xff]
                %241 = vst [vmem:[%s191 + $0xf0] sm:$0xff] %v240
                %v242 = vld [vmem:[%s190 + $0x4b8] sm:$0xff]
                %243 = vst [vmem:[%s191 + $0xf8] sm:$0xff] %v242
              $region37: #{localizer_alexnet_forward.12} parent=31 // loop_footer
                %s189 = sadd.s32 1, %s185
              $region38: #{localizer_alexnet_forward.12} parent=31 // loop_footer_branch
                %184 = sbr.rel target = $region34
              $region39: #{localizer_alexnet_forward.12} parent=31 // loop_exit
                _
              %s245 = ssub.s32 16, 1
              loop: start=0, step=1, limit=1
              $region40: #{localizer_alexnet_forward.12} parent=31 // loop_pre_header
                _
              $region41: #{localizer_alexnet_forward.12} parent=31 // loop_header
                %s247 = sphi 0, %s251
                %p248 = scmp.ge.s32.totalorder %s247, 1
                %s252 = sphi %s182, %s182
                %s253 = sphi %s183, %s183
              $region42: #{localizer_alexnet_forward.12} parent=31 // loop_header_branch
                %250 = sbr.rel (%p248) target = $region46
              $region43: #{localizer_alexnet_forward.12} parent=31 // loop_body
                %v254 = vld [vmem:[%s252] sm:%s245]
                %255 = vst [vmem:[%s253] sm:%s245] %v254
                %v256 = vld [vmem:[%s252 + $0x64] sm:%s245]
                %257 = vst [vmem:[%s253 + $0x14] sm:%s245] %v256
                %v258 = vld [vmem:[%s252 + $0xc8] sm:%s245]
                %259 = vst [vmem:[%s253 + $0x28] sm:%s245] %v258
                %v260 = vld [vmem:[%s252 + $0x12c] sm:%s245]
                %261 = vst [vmem:[%s253 + $0x3c] sm:%s245] %v260
                %v262 = vld [vmem:[%s252 + $0x190] sm:%s245]
                %263 = vst [vmem:[%s253 + $0x50] sm:%s245] %v262
                %v264 = vld [vmem:[%s252 + $0x1f4] sm:%s245]
                %265 = vst [vmem:[%s253 + $0x64] sm:%s245] %v264
                %v266 = vld [vmem:[%s252 + $0x258] sm:%s245]
                %267 = vst [vmem:[%s253 + $0x78] sm:%s245] %v266
                %v268 = vld [vmem:[%s252 + $0x2bc] sm:%s245]
                %269 = vst [vmem:[%s253 + $0x8c] sm:%s245] %v268
                %v270 = vld [vmem:[%s252 + $0x320] sm:%s245]
                %271 = vst [vmem:[%s253 + $0xa0] sm:%s245] %v270
                %v272 = vld [vmem:[%s252 + $0x384] sm:%s245]
                %273 = vst [vmem:[%s253 + $0xb4] sm:%s245] %v272
                %v274 = vld [vmem:[%s252 + $0x3e8] sm:%s245]
                %275 = vst [vmem:[%s253 + $0xc8] sm:%s245] %v274
                %v276 = vld [vmem:[%s252 + $0x44c] sm:%s245]
                %277 = vst [vmem:[%s253 + $0xdc] sm:%s245] %v276
                %v278 = vld [vmem:[%s252 + $0x4b0] sm:%s245]
                %279 = vst [vmem:[%s253 + $0xf0] sm:%s245] %v278
              $region44: #{localizer_alexnet_forward.12} parent=31 // loop_footer
                %s251 = sadd.s32 1, %s247
              $region45: #{localizer_alexnet_forward.12} parent=31 // loop_footer_branch
                %246 = sbr.rel target = $region41
              $region46: #{localizer_alexnet_forward.12} parent=31 // loop_exit
                _
            $region32: #{localizer_alexnet_forward.12} parent=27 // pred_fallthru
              _
          $region28: #{localizer_alexnet_forward.12} parent=23 // pred_fallthru
            _
          %280 = vnop
        $region24: #{localizer_alexnet_forward.12} parent=19 // pred_fallthru
          _
        // Predicated region
        $region47: #{localizer_alexnet_forward.12} parent=19 // pred_check
          %p281 = pneg %p78
        $region48: #{localizer_alexnet_forward.12} parent=19 // pred_check_branch
          %283 = sbr.rel (%p281) target = $region50
        $region49: #{localizer_alexnet_forward.12} parent=19 // pred_region
          %s284 = smul.u32 80, %s18
          %s285 = smul.u32 2, %s17
          %p286 = scmp.lt.s32.totalorder %s284, 399
          %s287 = scalar_select %p286, %s284, 399
          %p288 = scmp.lt.s32.totalorder %s285, 1
          %s289 = scalar_select %p288, %s285, 1
          %s290 = smul.addr %s287, 2
          %s291 = sadd.s32 %s289, %s290
          %s292 = smul.addr %s291, 4
          %s293 = scalar_lea.vmem %s1, %s292
          %s294 = smul.u32 80, %s18
          %s295 = smul.u32 2, %s17
        $region50: #{localizer_alexnet_forward.12} parent=19 // pred_fallthru
          _
      $region20: #{localizer_alexnet_forward.12} parent=5 // pred_fallthru
        _
      %p296 = scmp.le.s32.totalorder 1, %s9
      %p297 = scmp.lt.s32.totalorder %s9, 6
      %p298 = pnand %p296, %p297
      %p299 = pneg %p298
      // Predicated region
      $region51: #{localizer_alexnet_forward.12} parent=5 // pred_check
        _
      $region52: #{localizer_alexnet_forward.12} parent=5 // pred_check_branch
        %301 = sbr.rel (%p298) target = $region54
      $region53: #{localizer_alexnet_forward.12} parent=5 // pred_region
        %s302 = ssub.s32 %s9, 1
        %s303 = sand.u32 %s43, 1
        %s304 = sand.u32 %s43, 1
        %s305 = smul.addr %s304, 260
        %s306 = scalar_lea.vmem [#allocation3], %s305
        // Predicated region
        $region55: #{localizer_alexnet_forward.12} parent=53 // pred_check
          %p307 = pneg %p56
        $region56: #{localizer_alexnet_forward.12} parent=53 // pred_check_branch
          %309 = sbr.rel (%p307) target = $region58
        $region57: #{localizer_alexnet_forward.12} parent=53 // pred_region
          _
        $region58: #{localizer_alexnet_forward.12} parent=53 // pred_fallthru
          _
        %s310 = sand.u32 %s43, 1
        %s311 = sand.u32 %s43, 1
        %s312 = smul.addr %s311, 260
        %s313 = scalar_lea.vmem [#allocation3], %s312
        %p314 = pneg %p56
        %p315 = pneg %p53
        %s316 = smul.u32 80, %s21
        %s317 = smul.u32 2, %s20
        %p318 = scmp.lt.s32.totalorder %s316, 399
        %s319 = scalar_select %p318, %s316, 399
        %p320 = scmp.lt.s32.totalorder %s317, 1
        %s321 = scalar_select %p320, %s317, 1
        %s322 = smul.addr %s319, 2
        %s323 = sadd.s32 %s321, %s322
        %s324 = smul.addr %s323, 4
        %s325 = scalar_lea.vmem %s1, %s324
        %p326 = pneg %p84
        %p327 = pneg %p81
        %s328 = smul.u32 2, %s20
        %p329 = scmp.lt.s32.totalorder %s328, 1
        %s330 = scalar_select %p329, %s328, 1
        %s331 = scalar_lea.vmem %s2, %s330
        %p332 = pneg %p110
        %p333 = pneg %p107
        %p334 = pneg %p138
        %p335 = pneg %p135
        %s336 = smul.u32 13, %s19
        %s337 = smul.u32 2, %s20
        %p338 = scmp.lt.s32.totalorder %s336, 12
        %s339 = scalar_select %p338, %s336, 12
        %p340 = scmp.lt.s32.totalorder %s337, 1
        %s341 = scalar_select %p340, %s337, 1
        %s342 = smul.addr %s339, 2
        %s343 = sadd.s32 %s341, %s342
        %s344 = smul.addr %s343, 4
        %s345 = scalar_lea.vmem %s3, %s344
        %s346 = smul.u32 13, %s19
        %s347 = smul.u32 5, %s21
        %s348 = smul.u32 80, %s21
        %s349 = smul.u32 2, %s20
        %p350 = scmp.lt.s32.totalorder %s348, 399
        %s351 = scalar_select %p350, %s348, 399
        %p352 = scmp.lt.s32.totalorder %s349, 1
        %s353 = scalar_select %p352, %s349, 1
        %s354 = smul.addr %s351, 2
        %s355 = sadd.s32 %s353, %s354
        %s356 = smul.addr %s355, 4
        %s357 = scalar_lea.vmem %s1, %s356
        %s358 = smul.u32 80, %s21
        %s359 = smul.u32 2, %s20
        %s360 = smul.u32 2, %s20
        %p361 = scmp.lt.s32.totalorder %s360, 1
        %s362 = scalar_select %p361, %s360, 1
        %s363 = scalar_lea.vmem %s2, %s362
        %s364 = smul.u32 2, %s20
        %s365 = smul.u32 13, %s19
        %s366 = smul.u32 2, %s20
        %p367 = scmp.lt.s32.totalorder %s365, 12
        %s368 = scalar_select %p367, %s365, 12
        %p369 = scmp.lt.s32.totalorder %s366, 1
        %s370 = scalar_select %p369, %s366, 1
        %s371 = smul.addr %s368, 2
        %s372 = sadd.s32 %s370, %s371
        %s373 = smul.addr %s372, 4
        %s374 = scalar_lea.vmem %s3, %s373
        %s375 = smul.u32 13, %s19
        %s376 = smul.u32 2, %s20
        %p378 = scmp.eq.s32.totalorder %s21, 0
        // Predicated region
        $region59: #{localizer_alexnet_forward.12} parent=53 // pred_check
          %p379 = pneg %p378
        $region60: #{localizer_alexnet_forward.12} parent=53 // pred_check_branch
          %381 = sbr.rel (%p379) target = $region62
        $region61: #{localizer_alexnet_forward.12} parent=53 // pred_region
          %382 = vst [vmem:[#allocation2] sm:$0xff] 0.0
          %383 = vst [vmem:[#allocation2 + $0x8] sm:$0xff] 0.0
          %384 = vst [vmem:[#allocation2 + $0x10] sm:$0xff] 0.0
          %385 = vst [vmem:[#allocation2 + $0x18] sm:$0xff] 0.0
          %386 = vst [vmem:[#allocation2 + $0x20] sm:$0xff] 0.0
          %387 = vst [vmem:[#allocation2 + $0x28] sm:$0xff] 0.0
          %388 = vst [vmem:[#allocation2 + $0x30] sm:$0xff] 0.0
          %389 = vst [vmem:[#allocation2 + $0x38] sm:$0xff] 0.0
          %390 = vst [vmem:[#allocation2 + $0x40] sm:$0xff] 0.0
          %391 = vst [vmem:[#allocation2 + $0x48] sm:$0xff] 0.0
          %392 = vst [vmem:[#allocation2 + $0x50] sm:$0xff] 0.0
          %393 = vst [vmem:[#allocation2 + $0x58] sm:$0xff] 0.0
          %394 = vst [vmem:[#allocation2 + $0x60] sm:$0xff] 0.0
          %395 = vst [vmem:[#allocation2 + $0x68] sm:$0xff] 0.0
          %396 = vst [vmem:[#allocation2 + $0x70] sm:$0xff] 0.0
          %397 = vst [vmem:[#allocation2 + $0x78] sm:$0xff] 0.0
          %398 = vst [vmem:[#allocation2 + $0x80] sm:$0xff] 0.0
          %399 = vst [vmem:[#allocation2 + $0x88] sm:$0xff] 0.0
          %400 = vst [vmem:[#allocation2 + $0x90] sm:$0xff] 0.0
          %401 = vst [vmem:[#allocation2 + $0x98] sm:$0xff] 0.0
          %402 = vst [vmem:[#allocation2 + $0xa0] sm:$0xff] 0.0
          %403 = vst [vmem:[#allocation2 + $0xa8] sm:$0xff] 0.0
          %404 = vst [vmem:[#allocation2 + $0xb0] sm:$0xff] 0.0
          %405 = vst [vmem:[#allocation2 + $0xb8] sm:$0xff] 0.0
          %406 = vst [vmem:[#allocation2 + $0xc0] sm:$0xff] 0.0
          %407 = vst [vmem:[#allocation2 + $0xc8] sm:$0xff] 0.0
        $region62: #{localizer_alexnet_forward.12} parent=53 // pred_fallthru
          _
        %v408 = vld [vmem:[#allocation2] sm:$0xff]
        %v409 = vld [vmem:[#allocation2 + $0x8] sm:$0xff]
        %v410 = vld [vmem:[#allocation2 + $0x10] sm:$0xff]
        %v411 = vld [vmem:[#allocation2 + $0x18] sm:$0xff]
        %v412 = vld [vmem:[#allocation2 + $0x20] sm:$0xff]
        %v413 = vld [vmem:[#allocation2 + $0x28] sm:$0xff]
        %v414 = vld [vmem:[#allocation2 + $0x30] sm:$0xff]
        %v415 = vld [vmem:[#allocation2 + $0x38] sm:$0xff]
        %v416 = vld [vmem:[#allocation2 + $0x40] sm:$0xff]
        %v417 = vld [vmem:[#allocation2 + $0x48] sm:$0xff]
        %v418 = vld [vmem:[#allocation2 + $0x50] sm:$0xff]
        %v419 = vld [vmem:[#allocation2 + $0x58] sm:$0xff]
        %v420 = vld [vmem:[#allocation2 + $0x60] sm:$0xff]
        %v421 = vld [vmem:[#allocation2 + $0x68] sm:$0xff]
        %v422 = vld [vmem:[#allocation2 + $0x70] sm:$0xff]
        %v423 = vld [vmem:[#allocation2 + $0x78] sm:$0xff]
        %v424 = vld [vmem:[#allocation2 + $0x80] sm:$0xff]
        %v425 = vld [vmem:[#allocation2 + $0x88] sm:$0xff]
        %v426 = vld [vmem:[#allocation2 + $0x90] sm:$0xff]
        %v427 = vld [vmem:[#allocation2 + $0x98] sm:$0xff]
        %v428 = vld [vmem:[#allocation2 + $0xa0] sm:$0xff]
        %v429 = vld [vmem:[#allocation2 + $0xa8] sm:$0xff]
        %v430 = vld [vmem:[#allocation2 + $0xb0] sm:$0xff]
        %v431 = vld [vmem:[#allocation2 + $0xb8] sm:$0xff]
        %v432 = vld [vmem:[#allocation2 + $0xc0] sm:$0xff]
        %v433 = vld [vmem:[#allocation2 + $0xc8] sm:$0xff]
        %v434 = vld [vmem:[%s306] sm:$0xff]
        %v435 = vld [vmem:[%s306 + $0x8] sm:$0xff]
        %v436 = vld [vmem:[%s306 + $0x10] sm:$0xf]
        %v437 = vld [vmem:[%s306 + $0x14] sm:$0xff]
        %v438 = vld [vmem:[%s306 + $0x1c] sm:$0xff]
        %v439 = vld [vmem:[%s306 + $0x24] sm:$0xf]
        %v440 = vld [vmem:[%s306 + $0x28] sm:$0xff]
        %v441 = vld [vmem:[%s306 + $0x30] sm:$0xff]
        %v442 = vld [vmem:[%s306 + $0x38] sm:$0xf]
        %v443 = vld [vmem:[%s306 + $0x3c] sm:$0xff]
        %v444 = vld [vmem:[%s306 + $0x44] sm:$0xff]
        %v445 = vld [vmem:[%s306 + $0x4c] sm:$0xf]
        %v446 = vld [vmem:[%s306 + $0x50] sm:$0xff]
        %v447 = vld [vmem:[%s306 + $0x58] sm:$0xff]
        %v448 = vld [vmem:[%s306 + $0x60] sm:$0xf]
        %v449 = vld [vmem:[%s306 + $0x64] sm:$0xff]
        %v450 = vld [vmem:[%s306 + $0x6c] sm:$0xff]
        %v451 = vld [vmem:[%s306 + $0x74] sm:$0xf]
        %v452 = vld [vmem:[%s306 + $0x78] sm:$0xff]
        %v453 = vld [vmem:[%s306 + $0x80] sm:$0xff]
        %v454 = vld [vmem:[%s306 + $0x88] sm:$0xf]
        %v455 = vld [vmem:[%s306 + $0x8c] sm:$0xff]
        %v456 = vld [vmem:[%s306 + $0x94] sm:$0xff]
        %v457 = vld [vmem:[%s306 + $0x9c] sm:$0xf]
        %v458 = vld [vmem:[%s306 + $0xa0] sm:$0xff]
        %v459 = vld [vmem:[%s306 + $0xa8] sm:$0xff]
        %v460 = vld [vmem:[%s306 + $0xb0] sm:$0xf]
        %v461 = vld [vmem:[%s306 + $0xb4] sm:$0xff]
        %v462 = vld [vmem:[%s306 + $0xbc] sm:$0xff]
        %v463 = vld [vmem:[%s306 + $0xc4] sm:$0xf]
        %v464 = vld [vmem:[%s306 + $0xc8] sm:$0xff]
        %v465 = vld [vmem:[%s306 + $0xd0] sm:$0xff]
        %v466 = vld [vmem:[%s306 + $0xd8] sm:$0xf]
        %v467 = vld [vmem:[%s306 + $0xdc] sm:$0xff]
        %v468 = vld [vmem:[%s306 + $0xe4] sm:$0xff]
        %v469 = vld [vmem:[%s306 + $0xec] sm:$0xf]
        %v470 = vld [vmem:[%s306 + $0xf0] sm:$0xff]
        %v471 = vld [vmem:[%s306 + $0xf8] sm:$0xff]
        %v472 = vld [vmem:[%s306 + $0x100] sm:$0xf]
        %v473 = vld [vmem:[%s357] sm:$0xff]
        %v474 = vld [vmem:[%s357 + $0x8] sm:$0xff]
        %v475 = vld [vmem:[%s357 + $0x10] sm:$0xff]
        %v476 = vld [vmem:[%s357 + $0x18] sm:$0xff]
        %v477 = vld [vmem:[%s357 + $0x20] sm:$0xff]
        %v478 = vld [vmem:[%s357 + $0x28] sm:$0xff]
        %v479 = vld [vmem:[%s357 + $0x30] sm:$0xff]
        %v480 = vld [vmem:[%s357 + $0x38] sm:$0xff]
        %v481 = vld [vmem:[%s357 + $0x40] sm:$0xff]
        %v482 = vld [vmem:[%s357 + $0x48] sm:$0xff]
        %v483 = vld [vmem:[%s357 + $0x50] sm:$0xff]
        %v484 = vld [vmem:[%s357 + $0x58] sm:$0xff]
        %v485 = vld [vmem:[%s357 + $0x60] sm:$0xff]
        %v486 = vld [vmem:[%s357 + $0x68] sm:$0xff]
        %v487 = vld [vmem:[%s357 + $0x70] sm:$0xff]
        %v488 = vld [vmem:[%s357 + $0x78] sm:$0xff]
        %v489 = vld [vmem:[%s357 + $0x80] sm:$0xff]
        %v490 = vld [vmem:[%s357 + $0x88] sm:$0xff]
        %v491 = vld [vmem:[%s357 + $0x90] sm:$0xff]
        %v492 = vld [vmem:[%s357 + $0x98] sm:$0xff]
        %v493 = vld [vmem:[%s357 + $0xa0] sm:$0xff]
        %v494 = vld [vmem:[%s357 + $0xa8] sm:$0xff]
        %v495 = vld [vmem:[%s357 + $0xb0] sm:$0xff]
        %v496 = vld [vmem:[%s357 + $0xb8] sm:$0xff]
        %v497 = vld [vmem:[%s357 + $0xc0] sm:$0xff]
        %v498 = vld [vmem:[%s357 + $0xc8] sm:$0xff]
        %v499 = vld [vmem:[%s357 + $0xd0] sm:$0xff]
        %v500 = vld [vmem:[%s357 + $0xd8] sm:$0xff]
        %v501 = vld [vmem:[%s357 + $0xe0] sm:$0xff]
        %v502 = vld [vmem:[%s357 + $0xe8] sm:$0xff]
        %v503 = vld [vmem:[%s357 + $0xf0] sm:$0xff]
        %v504 = vld [vmem:[%s357 + $0xf8] sm:$0xff]
        %v505 = vld [vmem:[%s357 + $0x100] sm:$0xff]
        %v506 = vld [vmem:[%s357 + $0x108] sm:$0xff]
        %v507 = vld [vmem:[%s357 + $0x110] sm:$0xff]
        %v508 = vld [vmem:[%s357 + $0x118] sm:$0xff]
        %v509 = vld [vmem:[%s357 + $0x120] sm:$0xff]
        %v510 = vld [vmem:[%s357 + $0x128] sm:$0xff]
        %v511 = vld [vmem:[%s357 + $0x130] sm:$0xff]
        %v512 = vld [vmem:[%s357 + $0x138] sm:$0xff]
        %v513 = vld [vmem:[%s357 + $0x140] sm:$0xff]
        %v514 = vld [vmem:[%s357 + $0x148] sm:$0xff]
        %v515 = vld [vmem:[%s357 + $0x150] sm:$0xff]
        %v516 = vld [vmem:[%s357 + $0x158] sm:$0xff]
        %v517 = vld [vmem:[%s357 + $0x160] sm:$0xff]
        %v518 = vld [vmem:[%s357 + $0x168] sm:$0xff]
        %v519 = vld [vmem:[%s357 + $0x170] sm:$0xff]
        %v520 = vld [vmem:[%s357 + $0x178] sm:$0xff]
        %v521 = vld [vmem:[%s357 + $0x180] sm:$0xff]
        %v522 = vld [vmem:[%s357 + $0x188] sm:$0xff]
        %v523 = vld [vmem:[%s357 + $0x190] sm:$0xff]
        %v524 = vld [vmem:[%s357 + $0x198] sm:$0xff]
        %v525 = vld [vmem:[%s357 + $0x1a0] sm:$0xff]
        %v526 = vld [vmem:[%s357 + $0x1a8] sm:$0xff]
        %v527 = vld [vmem:[%s357 + $0x1b0] sm:$0xff]
        %v528 = vld [vmem:[%s357 + $0x1b8] sm:$0xff]
        %v529 = vld [vmem:[%s357 + $0x1c0] sm:$0xff]
        %v530 = vld [vmem:[%s357 + $0x1c8] sm:$0xff]
        %v531 = vld [vmem:[%s357 + $0x1d0] sm:$0xff]
        %v532 = vld [vmem:[%s357 + $0x1d8] sm:$0xff]
        %v533 = vld [vmem:[%s357 + $0x1e0] sm:$0xff]
        %v534 = vld [vmem:[%s357 + $0x1e8] sm:$0xff]
        %v535 = vld [vmem:[%s357 + $0x1f0] sm:$0xff]
        %v536 = vld [vmem:[%s357 + $0x1f8] sm:$0xff]
        %v537 = vld [vmem:[%s357 + $0x200] sm:$0xff]
        %v538 = vld [vmem:[%s357 + $0x208] sm:$0xff]
        %v539 = vld [vmem:[%s357 + $0x210] sm:$0xff]
        %v540 = vld [vmem:[%s357 + $0x218] sm:$0xff]
        %v541 = vld [vmem:[%s357 + $0x220] sm:$0xff]
        %v542 = vld [vmem:[%s357 + $0x228] sm:$0xff]
        %v543 = vld [vmem:[%s357 + $0x230] sm:$0xff]
        %v544 = vld [vmem:[%s357 + $0x238] sm:$0xff]
        %v545 = vld [vmem:[%s357 + $0x240] sm:$0xff]
        %v546 = vld [vmem:[%s357 + $0x248] sm:$0xff]
        %v547 = vld [vmem:[%s357 + $0x250] sm:$0xff]
        %v548 = vld [vmem:[%s357 + $0x258] sm:$0xff]
        %v549 = vld [vmem:[%s357 + $0x260] sm:$0xff]
        %v550 = vld [vmem:[%s357 + $0x268] sm:$0xff]
        %v551 = vld [vmem:[%s357 + $0x270] sm:$0xff]
        %v552 = vld [vmem:[%s357 + $0x278] sm:$0xff]
        %v592 = vunpack.c.l.b16 %v434
        %v593 = vunpack.c.h.b16 %v434
        %v594 = vunpack.c.l.b16 %v435
        %v595 = vunpack.c.h.b16 %v435
        %v596 = vunpack.c.l.b16 %v436
        %v597 = vunpack.c.l.b16 %v437
        %v598 = vunpack.c.h.b16 %v437
        %v599 = vunpack.c.l.b16 %v438
        %v600 = vunpack.c.h.b16 %v438
        %v601 = vunpack.c.l.b16 %v439
        %v602 = vunpack.c.l.b16 %v440
        %v603 = vunpack.c.h.b16 %v440
        %v604 = vunpack.c.l.b16 %v441
        %v605 = vunpack.c.h.b16 %v441
        %v606 = vunpack.c.l.b16 %v442
        %v607 = vunpack.c.l.b16 %v443
        %v608 = vunpack.c.h.b16 %v443
        %v609 = vunpack.c.l.b16 %v444
        %v610 = vunpack.c.h.b16 %v444
        %v611 = vunpack.c.l.b16 %v445
        %v612 = vunpack.c.l.b16 %v446
        %v613 = vunpack.c.h.b16 %v446
        %v614 = vunpack.c.l.b16 %v447
        %v615 = vunpack.c.h.b16 %v447
        %v616 = vunpack.c.l.b16 %v448
        %v617 = vunpack.c.l.b16 %v449
        %v618 = vunpack.c.h.b16 %v449
        %v619 = vunpack.c.l.b16 %v450
        %v620 = vunpack.c.h.b16 %v450
        %v621 = vunpack.c.l.b16 %v451
        %v622 = vunpack.c.l.b16 %v452
        %v623 = vunpack.c.h.b16 %v452
        %v624 = vunpack.c.l.b16 %v453
        %v625 = vunpack.c.h.b16 %v453
        %v626 = vunpack.c.l.b16 %v454
        %v627 = vunpack.c.l.b16 %v455
        %v628 = vunpack.c.h.b16 %v455
        %v629 = vunpack.c.l.b16 %v456
        %v630 = vunpack.c.h.b16 %v456
        %v631 = vunpack.c.l.b16 %v457
        %v632 = vunpack.c.l.b16 %v458
        %v633 = vunpack.c.h.b16 %v458
        %v634 = vunpack.c.l.b16 %v459
        %v635 = vunpack.c.h.b16 %v459
        %v636 = vunpack.c.l.b16 %v460
        %v637 = vunpack.c.l.b16 %v461
        %v638 = vunpack.c.h.b16 %v461
        %v639 = vunpack.c.l.b16 %v462
        %v640 = vunpack.c.h.b16 %v462
        %v641 = vunpack.c.l.b16 %v463
        %v642 = vunpack.c.l.b16 %v464
        %v643 = vunpack.c.h.b16 %v464
        %v644 = vunpack.c.l.b16 %v465
        %v645 = vunpack.c.h.b16 %v465
        %v646 = vunpack.c.l.b16 %v466
        %v647 = vunpack.c.l.b16 %v467
        %v648 = vunpack.c.h.b16 %v467
        %v649 = vunpack.c.l.b16 %v468
        %v650 = vunpack.c.h.b16 %v468
        %v651 = vunpack.c.l.b16 %v469
        %v652 = vunpack.c.l.b16 %v470
        %v653 = vunpack.c.h.b16 %v470
        %v654 = vunpack.c.l.b16 %v471
        %v655 = vunpack.c.h.b16 %v471
        %v656 = vunpack.c.l.b16 %v472
        %v657 = vpack.c.b16 %v597, %v592
        %v658 = vpack.c.b16 %v598, %v593
        %v659 = vpack.c.b16 %v599, %v594
        %v660 = vpack.c.b16 %v600, %v595
        %v661 = vpack.c.b16 %v601, %v596
        %v662 = vpack.c.b16 %v607, %v602
        %v663 = vpack.c.b16 %v608, %v603
        %v664 = vpack.c.b16 %v609, %v604
        %v665 = vpack.c.b16 %v610, %v605
        %v666 = vpack.c.b16 %v611, %v606
        %v667 = vpack.c.b16 %v617, %v612
        %v668 = vpack.c.b16 %v618, %v613
        %v669 = vpack.c.b16 %v619, %v614
        %v670 = vpack.c.b16 %v620, %v615
        %v671 = vpack.c.b16 %v621, %v616
        %v672 = vpack.c.b16 %v627, %v622
        %v673 = vpack.c.b16 %v628, %v623
        %v674 = vpack.c.b16 %v629, %v624
        %v675 = vpack.c.b16 %v630, %v625
        %v676 = vpack.c.b16 %v631, %v626
        %v677 = vpack.c.b16 %v637, %v632
        %v678 = vpack.c.b16 %v638, %v633
        %v679 = vpack.c.b16 %v639, %v634
        %v680 = vpack.c.b16 %v640, %v635
        %v681 = vpack.c.b16 %v641, %v636
        %v682 = vpack.c.b16 %v647, %v642
        %v683 = vpack.c.b16 %v648, %v643
        %v684 = vpack.c.b16 %v649, %v644
        %v685 = vpack.c.b16 %v650, %v645
        %v686 = vpack.c.b16 %v651, %v646
        %v687 = vpack.c.b16 %v652, %v652
        %v688 = vpack.c.b16 %v653, %v653
        %v689 = vpack.c.b16 %v654, %v654
        %v690 = vpack.c.b16 %v655, %v655
        %v691 = vpack.c.b16 %v656, %v656
        %v807 = vunpack.c.l.b16 %v473
        %v808 = vunpack.c.h.b16 %v473
        %v809 = vunpack.c.l.b16 %v474
        %v810 = vunpack.c.h.b16 %v474
        %v811 = vunpack.c.l.b16 %v475
        %v812 = vunpack.c.h.b16 %v475
        %v813 = vunpack.c.l.b16 %v476
        %v814 = vunpack.c.h.b16 %v476
        %v815 = vunpack.c.l.b16 %v477
        %v816 = vunpack.c.h.b16 %v477
        %v817 = vunpack.c.l.b16 %v478
        %v818 = vunpack.c.h.b16 %v478
        %v819 = vunpack.c.l.b16 %v479
        %v820 = vunpack.c.h.b16 %v479
        %v821 = vunpack.c.l.b16 %v480
        %v822 = vunpack.c.h.b16 %v480
        %v823 = vunpack.c.l.b16 %v481
        %v824 = vunpack.c.h.b16 %v481
        %v825 = vunpack.c.l.b16 %v482
        %v826 = vunpack.c.h.b16 %v482
        %v827 = vunpack.c.l.b16 %v483
        %v828 = vunpack.c.h.b16 %v483
        %v829 = vunpack.c.l.b16 %v484
        %v830 = vunpack.c.h.b16 %v484
        %v831 = vunpack.c.l.b16 %v485
        %v832 = vunpack.c.h.b16 %v485
        %v833 = vunpack.c.l.b16 %v486
        %v834 = vunpack.c.h.b16 %v486
        %v835 = vunpack.c.l.b16 %v487
        %v836 = vunpack.c.h.b16 %v487
        %v837 = vunpack.c.l.b16 %v488
        %v838 = vunpack.c.h.b16 %v488
        %v839 = vunpack.c.l.b16 %v489
        %v840 = vunpack.c.h.b16 %v489
        %v841 = vunpack.c.l.b16 %v490
        %v842 = vunpack.c.h.b16 %v490
        %v843 = vunpack.c.l.b16 %v491
        %v844 = vunpack.c.h.b16 %v491
        %v845 = vunpack.c.l.b16 %v492
        %v846 = vunpack.c.h.b16 %v492
        %v847 = vunpack.c.l.b16 %v493
        %v848 = vunpack.c.h.b16 %v493
        %v849 = vunpack.c.l.b16 %v494
        %v850 = vunpack.c.h.b16 %v494
        %v851 = vunpack.c.l.b16 %v495
        %v852 = vunpack.c.h.b16 %v495
        %v853 = vunpack.c.l.b16 %v496
        %v854 = vunpack.c.h.b16 %v496
        %v855 = vunpack.c.l.b16 %v497
        %v856 = vunpack.c.h.b16 %v497
        %v857 = vunpack.c.l.b16 %v498
        %v858 = vunpack.c.h.b16 %v498
        %v859 = vunpack.c.l.b16 %v499
        %v860 = vunpack.c.h.b16 %v499
        %v861 = vunpack.c.l.b16 %v500
        %v862 = vunpack.c.h.b16 %v500
        %v863 = vunpack.c.l.b16 %v501
        %v864 = vunpack.c.h.b16 %v501
        %v865 = vunpack.c.l.b16 %v502
        %v866 = vunpack.c.h.b16 %v502
        %v867 = vunpack.c.l.b16 %v503
        %v868 = vunpack.c.h.b16 %v503
        %v869 = vunpack.c.l.b16 %v504
        %v870 = vunpack.c.h.b16 %v504
        %v871 = vunpack.c.l.b16 %v505
        %v872 = vunpack.c.h.b16 %v505
        %v873 = vunpack.c.l.b16 %v506
        %v874 = vunpack.c.h.b16 %v506
        %v875 = vunpack.c.l.b16 %v507
        %v876 = vunpack.c.h.b16 %v507
        %v877 = vunpack.c.l.b16 %v508
        %v878 = vunpack.c.h.b16 %v508
        %v879 = vunpack.c.l.b16 %v509
        %v880 = vunpack.c.h.b16 %v509
        %v881 = vunpack.c.l.b16 %v510
        %v882 = vunpack.c.h.b16 %v510
        %v883 = vunpack.c.l.b16 %v511
        %v884 = vunpack.c.h.b16 %v511
        %v885 = vunpack.c.l.b16 %v512
        %v886 = vunpack.c.h.b16 %v512
        %v887 = vunpack.c.l.b16 %v513
        %v888 = vunpack.c.h.b16 %v513
        %v889 = vunpack.c.l.b16 %v514
        %v890 = vunpack.c.h.b16 %v514
        %v891 = vunpack.c.l.b16 %v515
        %v892 = vunpack.c.h.b16 %v515
        %v893 = vunpack.c.l.b16 %v516
        %v894 = vunpack.c.h.b16 %v516
        %v895 = vunpack.c.l.b16 %v517
        %v896 = vunpack.c.h.b16 %v517
        %v897 = vunpack.c.l.b16 %v518
        %v898 = vunpack.c.h.b16 %v518
        %v899 = vunpack.c.l.b16 %v519
        %v900 = vunpack.c.h.b16 %v519
        %v901 = vunpack.c.l.b16 %v520
        %v902 = vunpack.c.h.b16 %v520
        %v903 = vunpack.c.l.b16 %v521
        %v904 = vunpack.c.h.b16 %v521
        %v905 = vunpack.c.l.b16 %v522
        %v906 = vunpack.c.h.b16 %v522
        %v907 = vunpack.c.l.b16 %v523
        %v908 = vunpack.c.h.b16 %v523
        %v909 = vunpack.c.l.b16 %v524
        %v910 = vunpack.c.h.b16 %v524
        %v911 = vunpack.c.l.b16 %v525
        %v912 = vunpack.c.h.b16 %v525
        %v913 = vunpack.c.l.b16 %v526
        %v914 = vunpack.c.h.b16 %v526
        %v915 = vunpack.c.l.b16 %v527
        %v916 = vunpack.c.h.b16 %v527
        %v917 = vunpack.c.l.b16 %v528
        %v918 = vunpack.c.h.b16 %v528
        %v919 = vunpack.c.l.b16 %v529
        %v920 = vunpack.c.h.b16 %v529
        %v921 = vunpack.c.l.b16 %v530
        %v922 = vunpack.c.h.b16 %v530
        %v923 = vunpack.c.l.b16 %v531
        %v924 = vunpack.c.h.b16 %v531
        %v925 = vunpack.c.l.b16 %v532
        %v926 = vunpack.c.h.b16 %v532
        %v927 = vunpack.c.l.b16 %v533
        %v928 = vunpack.c.h.b16 %v533
        %v929 = vunpack.c.l.b16 %v534
        %v930 = vunpack.c.h.b16 %v534
        %v931 = vunpack.c.l.b16 %v535
        %v932 = vunpack.c.h.b16 %v535
        %v933 = vunpack.c.l.b16 %v536
        %v934 = vunpack.c.h.b16 %v536
        %v935 = vunpack.c.l.b16 %v537
        %v936 = vunpack.c.h.b16 %v537
        %v937 = vunpack.c.l.b16 %v538
        %v938 = vunpack.c.h.b16 %v538
        %v939 = vunpack.c.l.b16 %v539
        %v940 = vunpack.c.h.b16 %v539
        %v941 = vunpack.c.l.b16 %v540
        %v942 = vunpack.c.h.b16 %v540
        %v943 = vunpack.c.l.b16 %v541
        %v944 = vunpack.c.h.b16 %v541
        %v945 = vunpack.c.l.b16 %v542
        %v946 = vunpack.c.h.b16 %v542
        %v947 = vunpack.c.l.b16 %v543
        %v948 = vunpack.c.h.b16 %v543
        %v949 = vunpack.c.l.b16 %v544
        %v950 = vunpack.c.h.b16 %v544
        %v951 = vunpack.c.l.b16 %v545
        %v952 = vunpack.c.h.b16 %v545
        %v953 = vunpack.c.l.b16 %v546
        %v954 = vunpack.c.h.b16 %v546
        %v955 = vunpack.c.l.b16 %v547
        %v956 = vunpack.c.h.b16 %v547
        %v957 = vunpack.c.l.b16 %v548
        %v958 = vunpack.c.h.b16 %v548
        %v959 = vunpack.c.l.b16 %v549
        %v960 = vunpack.c.h.b16 %v549
        %v961 = vunpack.c.l.b16 %v550
        %v962 = vunpack.c.h.b16 %v550
        %v963 = vunpack.c.l.b16 %v551
        %v964 = vunpack.c.h.b16 %v551
        %v965 = vunpack.c.l.b16 %v552
        %v966 = vunpack.c.h.b16 %v552
        %v967 = vpack.c.b16 %v809, %v807
        %v968 = vpack.c.b16 %v810, %v808
        %v969 = vpack.c.b16 %v813, %v811
        %v970 = vpack.c.b16 %v814, %v812
        %v971 = vpack.c.b16 %v817, %v815
        %v972 = vpack.c.b16 %v818, %v816
        %v973 = vpack.c.b16 %v821, %v819
        %v974 = vpack.c.b16 %v822, %v820
        %v975 = vpack.c.b16 %v825, %v823
        %v976 = vpack.c.b16 %v826, %v824
        %v977 = vpack.c.b16 %v829, %v827
        %v978 = vpack.c.b16 %v830, %v828
        %v979 = vpack.c.b16 %v833, %v831
        %v980 = vpack.c.b16 %v834, %v832
        %v981 = vpack.c.b16 %v837, %v835
        %v982 = vpack.c.b16 %v838, %v836
        %v983 = vpack.c.b16 %v841, %v839
        %v984 = vpack.c.b16 %v842, %v840
        %v985 = vpack.c.b16 %v845, %v843
        %v986 = vpack.c.b16 %v846, %v844
        %v987 = vpack.c.b16 %v849, %v847
        %v988 = vpack.c.b16 %v850, %v848
        %v989 = vpack.c.b16 %v853, %v851
        %v990 = vpack.c.b16 %v854, %v852
        %v991 = vpack.c.b16 %v857, %v855
        %v992 = vpack.c.b16 %v858, %v856
        %v993 = vpack.c.b16 %v861, %v859
        %v994 = vpack.c.b16 %v862, %v860
        %v995 = vpack.c.b16 %v865, %v863
        %v996 = vpack.c.b16 %v866, %v864
        %v997 = vpack.c.b16 %v869, %v867
        %v998 = vpack.c.b16 %v870, %v868
        %v999 = vpack.c.b16 %v873, %v871
        %v1000 = vpack.c.b16 %v874, %v872
        %v1001 = vpack.c.b16 %v877, %v875
        %v1002 = vpack.c.b16 %v878, %v876
        %v1003 = vpack.c.b16 %v881, %v879
        %v1004 = vpack.c.b16 %v882, %v880
        %v1005 = vpack.c.b16 %v885, %v883
        %v1006 = vpack.c.b16 %v886, %v884
        %v1007 = vpack.c.b16 %v889, %v887
        %v1008 = vpack.c.b16 %v890, %v888
        %v1009 = vpack.c.b16 %v893, %v891
        %v1010 = vpack.c.b16 %v894, %v892
        %v1011 = vpack.c.b16 %v897, %v895
        %v1012 = vpack.c.b16 %v898, %v896
        %v1013 = vpack.c.b16 %v901, %v899
        %v1014 = vpack.c.b16 %v902, %v900
        %v1015 = vpack.c.b16 %v905, %v903
        %v1016 = vpack.c.b16 %v906, %v904
        %v1017 = vpack.c.b16 %v909, %v907
        %v1018 = vpack.c.b16 %v910, %v908
        %v1019 = vpack.c.b16 %v913, %v911
        %v1020 = vpack.c.b16 %v914, %v912
        %v1021 = vpack.c.b16 %v917, %v915
        %v1022 = vpack.c.b16 %v918, %v916
        %v1023 = vpack.c.b16 %v921, %v919
        %v1024 = vpack.c.b16 %v922, %v920
        %v1025 = vpack.c.b16 %v925, %v923
        %v1026 = vpack.c.b16 %v926, %v924
        %v1027 = vpack.c.b16 %v929, %v927
        %v1028 = vpack.c.b16 %v930, %v928
        %v1029 = vpack.c.b16 %v933, %v931
        %v1030 = vpack.c.b16 %v934, %v932
        %v1031 = vpack.c.b16 %v937, %v935
        %v1032 = vpack.c.b16 %v938, %v936
        %v1033 = vpack.c.b16 %v941, %v939
        %v1034 = vpack.c.b16 %v942, %v940
        %v1035 = vpack.c.b16 %v945, %v943
        %v1036 = vpack.c.b16 %v946, %v944
        %v1037 = vpack.c.b16 %v949, %v947
        %v1038 = vpack.c.b16 %v950, %v948
        %v1039 = vpack.c.b16 %v953, %v951
        %v1040 = vpack.c.b16 %v954, %v952
        %v1041 = vpack.c.b16 %v957, %v955
        %v1042 = vpack.c.b16 %v958, %v956
        %v1043 = vpack.c.b16 %v961, %v959
        %v1044 = vpack.c.b16 %v962, %v960
        %v1045 = vpack.c.b16 %v965, %v963
        %v1046 = vpack.c.b16 %v966, %v964
        %1127 = vmatprep.subr.bf16.mxu0 %v982
        %1128 = vmatpush1.bf16.msra.mxu0 %v981
        %1129 = vmatprep.subr.bf16.mxu0 %v980
        %1130 = vmatpush1.bf16.msra.mxu0 %v979
        %1131 = vmatprep.subr.bf16.mxu0 %v978
        %1132 = vmatpush1.bf16.msra.mxu0 %v977
        %1133 = vmatprep.subr.bf16.mxu0 %v976
        %1134 = vmatpush1.bf16.msra.mxu0 %v975
        %1135 = vmatprep.subr.bf16.mxu0 %v974
        %1136 = vmatpush1.bf16.msra.mxu0 %v973
        %1137 = vmatprep.subr.bf16.mxu0 %v972
        %1138 = vmatpush1.bf16.msra.mxu0 %v971
        %1139 = vmatprep.subr.bf16.mxu0 %v970
        %1140 = vmatpush1.bf16.msra.mxu0 %v969
        %1141 = vmatprep.subr.bf16.mxu0 %v968
        %1142 = vmatpush1.bf16.msra.mxu0 %v967
        %1143 = vmatprep.subr.bf16.mxu0 %v998
        %1144 = vmatpush2.bf16.msra.mxu0 %v997
        %1145 = vmatprep.subr.bf16.mxu0 %v996
        %1146 = vmatpush2.bf16.msra.mxu0 %v995
        %1147 = vmatprep.subr.bf16.mxu0 %v994
        %1148 = vmatpush2.bf16.msra.mxu0 %v993
        %1149 = vmatprep.subr.bf16.mxu0 %v992
        %1150 = vmatpush2.bf16.msra.mxu0 %v991
        %1151 = vmatprep.subr.bf16.mxu0 %v990
        %1152 = vmatpush2.bf16.msra.mxu0 %v989
        %1153 = vmatprep.subr.bf16.mxu0 %v988
        %1154 = vmatpush2.bf16.msra.mxu0 %v987
        %1155 = vmatprep.subr.bf16.mxu0 %v986
        %1156 = vmatpush2.bf16.msra.mxu0 %v985
        %1157 = vmatprep.subr.bf16.mxu0 %v984
        %1158 = vmatpush2.bf16.msra.mxu0 %v983
        %1159 = vmatprep.mubr.bf16.mxu0 %v658
        %1160 = vmatmul.mubr.bf16.gmra.mxu0 %v657
        %v1161 = vpop.f32.mrf.mxu0
        %v1162 = vadd.f32 0.0, %v1161
        %v1163 = vpop.f32.mrf.mxu0
        %v1164 = vadd.f32 0.0, %v1163
        %v1165 = vpop.f32.mrf.mxu0
        %v1166 = vadd.f32 0.0, %v1165
        %v1167 = vpop.f32.mrf.mxu0
        %v1168 = vadd.f32 0.0, %v1167
        %1169 = vmatprep.mubr.bf16.mxu0 %v663
        %1170 = vmatmul.mubr.bf16.gmra.mxu0 %v662
        %v1171 = vpop.f32.mrf.mxu0
        %v1172 = vadd.f32 0.0, %v1171
        %v1173 = vpop.f32.mrf.mxu0
        %v1174 = vadd.f32 0.0, %v1173
        %v1175 = vpop.f32.mrf.mxu0
        %v1176 = vadd.f32 0.0, %v1175
        %v1177 = vpop.f32.mrf.mxu0
        %v1178 = vadd.f32 0.0, %v1177
        %1179 = vmatprep.mubr.bf16.mxu0 %v668
        %1180 = vmatmul.mubr.bf16.gmra.mxu0 %v667
        %v1181 = vpop.f32.mrf.mxu0
        %v1182 = vadd.f32 0.0, %v1181
        %v1183 = vpop.f32.mrf.mxu0
        %v1184 = vadd.f32 0.0, %v1183
        %v1185 = vpop.f32.mrf.mxu0
        %v1186 = vadd.f32 0.0, %v1185
        %v1187 = vpop.f32.mrf.mxu0
        %v1188 = vadd.f32 0.0, %v1187
        %1189 = vmatprep.mubr.bf16.mxu0 %v673
        %1190 = vmatmul.mubr.bf16.gmra.mxu0 %v672
        %v1191 = vpop.f32.mrf.mxu0
        %v1192 = vadd.f32 0.0, %v1191
        %v1193 = vpop.f32.mrf.mxu0
        %v1194 = vadd.f32 0.0, %v1193
        %v1195 = vpop.f32.mrf.mxu0
        %v1196 = vadd.f32 0.0, %v1195
        %v1197 = vpop.f32.mrf.mxu0
        %v1198 = vadd.f32 0.0, %v1197
        %1199 = vmatprep.mubr.bf16.mxu0 %v678
        %1200 = vmatmul.mubr.bf16.gmra.mxu0 %v677
        %v1201 = vpop.f32.mrf.mxu0
        %v1202 = vadd.f32 0.0, %v1201
        %v1203 = vpop.f32.mrf.mxu0
        %v1204 = vadd.f32 0.0, %v1203
        %v1205 = vpop.f32.mrf.mxu0
        %v1206 = vadd.f32 0.0, %v1205
        %v1207 = vpop.f32.mrf.mxu0
        %v1208 = vadd.f32 0.0, %v1207
        %1209 = vmatprep.mubr.bf16.mxu0 %v683
        %1210 = vmatmul.mubr.bf16.gmra.mxu0 %v682
        %v1211 = vpop.f32.mrf.mxu0
        %v1212 = vadd.f32 0.0, %v1211
        %v1213 = vpop.f32.mrf.mxu0
        %v1214 = vadd.f32 0.0, %v1213
        %v1215 = vpop.f32.mrf.mxu0
        %v1216 = vadd.f32 0.0, %v1215
        %v1217 = vpop.f32.mrf.mxu0
        %v1218 = vadd.f32 0.0, %v1217
        %1219 = vmatprep.mubr.bf16.mxu0 %v688
        %1220 = vmatmul.mubr.bf16.gmra.mxu0 %v687
        %v1221 = vpop.f32.mrf.mxu0
        %v1222 = vadd.f32 0.0, %v1221
        %v1223 = vpop.f32.mrf.mxu0
        %v1224 = vadd.f32 0.0, %v1223
        %v1225 = vpop.f32.mrf.mxu0
        %v1226 = vpop.f32.mrf.mxu0
        %1227 = vdwg.mxu0
        %1228 = vmatprep.subr.bf16.mxu0 %v1014
        %1229 = vmatpush1.bf16.msra.mxu0 %v1013
        %1230 = vmatprep.subr.bf16.mxu0 %v1012
        %1231 = vmatpush1.bf16.msra.mxu0 %v1011
        %1232 = vmatprep.subr.bf16.mxu0 %v1010
        %1233 = vmatpush1.bf16.msra.mxu0 %v1009
        %1234 = vmatprep.subr.bf16.mxu0 %v1008
        %1235 = vmatpush1.bf16.msra.mxu0 %v1007
        %1236 = vmatprep.subr.bf16.mxu0 %v1006
        %1237 = vmatpush1.bf16.msra.mxu0 %v1005
        %1238 = vmatprep.subr.bf16.mxu0 %v1004
        %1239 = vmatpush1.bf16.msra.mxu0 %v1003
        %1240 = vmatprep.subr.bf16.mxu0 %v1002
        %1241 = vmatpush1.bf16.msra.mxu0 %v1001
        %1242 = vmatprep.subr.bf16.mxu0 %v1000
        %1243 = vmatpush1.bf16.msra.mxu0 %v999
        %1244 = vmatprep.subr.bf16.mxu0 %v1030
        %1245 = vmatpush2.bf16.msra.mxu0 %v1029
        %1246 = vmatprep.subr.bf16.mxu0 %v1028
        %1247 = vmatpush2.bf16.msra.mxu0 %v1027
        %1248 = vmatprep.subr.bf16.mxu0 %v1026
        %1249 = vmatpush2.bf16.msra.mxu0 %v1025
        %1250 = vmatprep.subr.bf16.mxu0 %v1024
        %1251 = vmatpush2.bf16.msra.mxu0 %v1023
        %1252 = vmatprep.subr.bf16.mxu0 %v1022
        %1253 = vmatpush2.bf16.msra.mxu0 %v1021
        %1254 = vmatprep.subr.bf16.mxu0 %v1020
        %1255 = vmatpush2.bf16.msra.mxu0 %v1019
        %1256 = vmatprep.subr.bf16.mxu0 %v1018
        %1257 = vmatpush2.bf16.msra.mxu0 %v1017
        %1258 = vmatprep.subr.bf16.mxu0 %v1016
        %1259 = vmatpush2.bf16.msra.mxu0 %v1015
        %1260 = vmatprep.mubr.bf16.mxu0 %v660
        %1261 = vmatmul.mubr.bf16.gmra.mxu0 %v659
        %v1262 = vpop.f32.mrf.mxu0
        %v1263 = vadd.f32 %v1162, %v1262
        %v1264 = vpop.f32.mrf.mxu0
        %v1265 = vadd.f32 %v1164, %v1264
        %v1266 = vpop.f32.mrf.mxu0
        %v1267 = vadd.f32 %v1166, %v1266
        %v1268 = vpop.f32.mrf.mxu0
        %v1269 = vadd.f32 %v1168, %v1268
        %1270 = vmatprep.mubr.bf16.mxu0 %v665
        %1271 = vmatmul.mubr.bf16.gmra.mxu0 %v664
        %v1272 = vpop.f32.mrf.mxu0
        %v1273 = vadd.f32 %v1172, %v1272
        %v1274 = vpop.f32.mrf.mxu0
        %v1275 = vadd.f32 %v1174, %v1274
        %v1276 = vpop.f32.mrf.mxu0
        %v1277 = vadd.f32 %v1176, %v1276
        %v1278 = vpop.f32.mrf.mxu0
        %v1279 = vadd.f32 %v1178, %v1278
        %1280 = vmatprep.mubr.bf16.mxu0 %v670
        %1281 = vmatmul.mubr.bf16.gmra.mxu0 %v669
        %v1282 = vpop.f32.mrf.mxu0
        %v1283 = vadd.f32 %v1182, %v1282
        %v1284 = vpop.f32.mrf.mxu0
        %v1285 = vadd.f32 %v1184, %v1284
        %v1286 = vpop.f32.mrf.mxu0
        %v1287 = vadd.f32 %v1186, %v1286
        %v1288 = vpop.f32.mrf.mxu0
        %v1289 = vadd.f32 %v1188, %v1288
        %1290 = vmatprep.mubr.bf16.mxu0 %v675
        %1291 = vmatmul.mubr.bf16.gmra.mxu0 %v674
        %v1292 = vpop.f32.mrf.mxu0
        %v1293 = vadd.f32 %v1192, %v1292
        %v1294 = vpop.f32.mrf.mxu0
        %v1295 = vadd.f32 %v1194, %v1294
        %v1296 = vpop.f32.mrf.mxu0
        %v1297 = vadd.f32 %v1196, %v1296
        %v1298 = vpop.f32.mrf.mxu0
        %v1299 = vadd.f32 %v1198, %v1298
        %1300 = vmatprep.mubr.bf16.mxu0 %v680
        %1301 = vmatmul.mubr.bf16.gmra.mxu0 %v679
        %v1302 = vpop.f32.mrf.mxu0
        %v1303 = vadd.f32 %v1202, %v1302
        %v1304 = vpop.f32.mrf.mxu0
        %v1305 = vadd.f32 %v1204, %v1304
        %v1306 = vpop.f32.mrf.mxu0
        %v1307 = vadd.f32 %v1206, %v1306
        %v1308 = vpop.f32.mrf.mxu0
        %v1309 = vadd.f32 %v1208, %v1308
        %1310 = vmatprep.mubr.bf16.mxu0 %v685
        %1311 = vmatmul.mubr.bf16.gmra.mxu0 %v684
        %v1312 = vpop.f32.mrf.mxu0
        %v1313 = vadd.f32 %v1212, %v1312
        %v1314 = vpop.f32.mrf.mxu0
        %v1315 = vadd.f32 %v1214, %v1314
        %v1316 = vpop.f32.mrf.mxu0
        %v1317 = vadd.f32 %v1216, %v1316
        %v1318 = vpop.f32.mrf.mxu0
        %v1319 = vadd.f32 %v1218, %v1318
        %1320 = vmatprep.mubr.bf16.mxu0 %v690
        %1321 = vmatmul.mubr.bf16.gmra.mxu0 %v689
        %v1322 = vpop.f32.mrf.mxu0
        %v1323 = vadd.f32 %v1222, %v1322
        %v1324 = vpop.f32.mrf.mxu0
        %v1325 = vadd.f32 %v1224, %v1324
        %v1326 = vpop.f32.mrf.mxu0
        %v1327 = vpop.f32.mrf.mxu0
        %1328 = vdwg.mxu0
        %1329 = vmatprep.subr.bf16.mxu0 %v1046
        %1330 = vmatpush1.bf16.msra.mxu0 %v1045
        %1331 = vmatprep.subr.bf16.mxu0 %v1044
        %1332 = vmatpush1.bf16.msra.mxu0 %v1043
        %1333 = vmatprep.subr.bf16.mxu0 %v1042
        %1334 = vmatpush1.bf16.msra.mxu0 %v1041
        %1335 = vmatprep.subr.bf16.mxu0 %v1040
        %1336 = vmatpush1.bf16.msra.mxu0 %v1039
        %1337 = vmatprep.subr.bf16.mxu0 %v1038
        %1338 = vmatpush1.bf16.msra.mxu0 %v1037
        %1339 = vmatprep.subr.bf16.mxu0 %v1036
        %1340 = vmatpush1.bf16.msra.mxu0 %v1035
        %1341 = vmatprep.subr.bf16.mxu0 %v1034
        %1342 = vmatpush1.bf16.msra.mxu0 %v1033
        %1343 = vmatprep.subr.bf16.mxu0 %v1032
        %1344 = vmatpush1.bf16.msra.mxu0 %v1031
        %1345 = vmatprep.subr.bf16.mxu0 0
        %1346 = vmatpush2.bf16.msra.mxu0 0
        %1347 = vmatprep.subr.bf16.mxu0 0
        %1348 = vmatpush2.bf16.msra.mxu0 0
        %1349 = vmatprep.subr.bf16.mxu0 0
        %1350 = vmatpush2.bf16.msra.mxu0 0
        %1351 = vmatprep.subr.bf16.mxu0 0
        %1352 = vmatpush2.bf16.msra.mxu0 0
        %1353 = vmatprep.subr.bf16.mxu0 0
        %1354 = vmatpush2.bf16.msra.mxu0 0
        %1355 = vmatprep.subr.bf16.mxu0 0
        %1356 = vmatpush2.bf16.msra.mxu0 0
        %1357 = vmatprep.subr.bf16.mxu0 0
        %1358 = vmatpush2.bf16.msra.mxu0 0
        %1359 = vmatprep.subr.bf16.mxu0 0
        %1360 = vmatpush2.bf16.msra.mxu0 0
        %1361 = vmatprep.mubr.bf16.mxu0 0
        %1362 = vmatmul.mubr.bf16.gmra.mxu0 %v661
        %v1363 = vpop.f32.mrf.mxu0
        %v1364 = vadd.f32 %v1263, %v1363
        %v1365 = vpop.f32.mrf.mxu0
        %v1366 = vadd.f32 %v1265, %v1365
        %v1367 = vpop.f32.mrf.mxu0
        %v1368 = vadd.f32 %v1267, %v1367
        %v1369 = vpop.f32.mrf.mxu0
        %v1370 = vadd.f32 %v1269, %v1369
        %1371 = vmatprep.mubr.bf16.mxu0 0
        %1372 = vmatmul.mubr.bf16.gmra.mxu0 %v666
        %v1373 = vpop.f32.mrf.mxu0
        %v1374 = vadd.f32 %v1273, %v1373
        %v1375 = vpop.f32.mrf.mxu0
        %v1376 = vadd.f32 %v1275, %v1375
        %v1377 = vpop.f32.mrf.mxu0
        %v1378 = vadd.f32 %v1277, %v1377
        %v1379 = vpop.f32.mrf.mxu0
        %v1380 = vadd.f32 %v1279, %v1379
        %1381 = vmatprep.mubr.bf16.mxu0 0
        %1382 = vmatmul.mubr.bf16.gmra.mxu0 %v671
        %v1383 = vpop.f32.mrf.mxu0
        %v1384 = vadd.f32 %v1283, %v1383
        %v1385 = vpop.f32.mrf.mxu0
        %v1386 = vadd.f32 %v1285, %v1385
        %v1387 = vpop.f32.mrf.mxu0
        %v1388 = vadd.f32 %v1287, %v1387
        %v1389 = vpop.f32.mrf.mxu0
        %v1390 = vadd.f32 %v1289, %v1389
        %1391 = vmatprep.mubr.bf16.mxu0 0
        %1392 = vmatmul.mubr.bf16.gmra.mxu0 %v676
        %v1393 = vpop.f32.mrf.mxu0
        %v1394 = vadd.f32 %v1293, %v1393
        %v1395 = vpop.f32.mrf.mxu0
        %v1396 = vadd.f32 %v1295, %v1395
        %v1397 = vpop.f32.mrf.mxu0
        %v1398 = vadd.f32 %v1297, %v1397
        %v1399 = vpop.f32.mrf.mxu0
        %v1400 = vadd.f32 %v1299, %v1399
        %1401 = vmatprep.mubr.bf16.mxu0 0
        %1402 = vmatmul.mubr.bf16.gmra.mxu0 %v681
        %v1403 = vpop.f32.mrf.mxu0
        %v1404 = vadd.f32 %v1303, %v1403
        %v1405 = vpop.f32.mrf.mxu0
        %v1406 = vadd.f32 %v1305, %v1405
        %v1407 = vpop.f32.mrf.mxu0
        %v1408 = vadd.f32 %v1307, %v1407
        %v1409 = vpop.f32.mrf.mxu0
        %v1410 = vadd.f32 %v1309, %v1409
        %1411 = vmatprep.mubr.bf16.mxu0 0
        %1412 = vmatmul.mubr.bf16.gmra.mxu0 %v686
        %v1413 = vpop.f32.mrf.mxu0
        %v1414 = vadd.f32 %v1313, %v1413
        %v1415 = vpop.f32.mrf.mxu0
        %v1416 = vadd.f32 %v1315, %v1415
        %v1417 = vpop.f32.mrf.mxu0
        %v1418 = vadd.f32 %v1317, %v1417
        %v1419 = vpop.f32.mrf.mxu0
        %v1420 = vadd.f32 %v1319, %v1419
        %1421 = vmatprep.mubr.bf16.mxu0 0
        %1422 = vmatmul.mubr.bf16.gmra.mxu0 %v691
        %v1423 = vpop.f32.mrf.mxu0
        %v1424 = vadd.f32 %v1323, %v1423
        %v1425 = vpop.f32.mrf.mxu0
        %v1426 = vadd.f32 %v1325, %v1425
        %v1427 = vpop.f32.mrf.mxu0
        %v1428 = vpop.f32.mrf.mxu0
        %1429 = vdwg.mxu0
        %v1430 = vadd.f32 %v408, %v1364
        %v1431 = vadd.f32 %v409, %v1366
        %v1432 = vadd.f32 %v410, %v1368
        %v1433 = vadd.f32 %v411, %v1370
        %v1434 = vadd.f32 %v412, %v1374
        %v1435 = vadd.f32 %v413, %v1376
        %v1436 = vadd.f32 %v414, %v1378
        %v1437 = vadd.f32 %v415, %v1380
        %v1438 = vadd.f32 %v416, %v1384
        %v1439 = vadd.f32 %v417, %v1386
        %v1440 = vadd.f32 %v418, %v1388
        %v1441 = vadd.f32 %v419, %v1390
        %v1442 = vadd.f32 %v420, %v1394
        %v1443 = vadd.f32 %v421, %v1396
        %v1444 = vadd.f32 %v422, %v1398
        %v1445 = vadd.f32 %v423, %v1400
        %v1446 = vadd.f32 %v424, %v1404
        %v1447 = vadd.f32 %v425, %v1406
        %v1448 = vadd.f32 %v426, %v1408
        %v1449 = vadd.f32 %v427, %v1410
        %v1450 = vadd.f32 %v428, %v1414
        %v1451 = vadd.f32 %v429, %v1416
        %v1452 = vadd.f32 %v430, %v1418
        %v1453 = vadd.f32 %v431, %v1420
        %v1454 = vadd.f32 %v432, %v1424
        %v1455 = vadd.f32 %v433, %v1426
        %1456 = vst [vmem:[#allocation2] sm:$0xff] %v1430
        %1457 = vst [vmem:[#allocation2 + $0x8] sm:$0xff] %v1431
        %1458 = vst [vmem:[#allocation2 + $0x10] sm:$0xff] %v1432
        %1459 = vst [vmem:[#allocation2 + $0x18] sm:$0xff] %v1433
        %1460 = vst [vmem:[#allocation2 + $0x20] sm:$0xff] %v1434
        %1461 = vst [vmem:[#allocation2 + $0x28] sm:$0xff] %v1435
        %1462 = vst [vmem:[#allocation2 + $0x30] sm:$0xff] %v1436
        %1463 = vst [vmem:[#allocation2 + $0x38] sm:$0xff] %v1437
        %1464 = vst [vmem:[#allocation2 + $0x40] sm:$0xff] %v1438
        %1465 = vst [vmem:[#allocation2 + $0x48] sm:$0xff] %v1439
        %1466 = vst [vmem:[#allocation2 + $0x50] sm:$0xff] %v1440
        %1467 = vst [vmem:[#allocation2 + $0x58] sm:$0xff] %v1441
        %1468 = vst [vmem:[#allocation2 + $0x60] sm:$0xff] %v1442
        %1469 = vst [vmem:[#allocation2 + $0x68] sm:$0xff] %v1443
        %1470 = vst [vmem:[#allocation2 + $0x70] sm:$0xff] %v1444
        %1471 = vst [vmem:[#allocation2 + $0x78] sm:$0xff] %v1445
        %1472 = vst [vmem:[#allocation2 + $0x80] sm:$0xff] %v1446
        %1473 = vst [vmem:[#allocation2 + $0x88] sm:$0xff] %v1447
        %1474 = vst [vmem:[#allocation2 + $0x90] sm:$0xff] %v1448
        %1475 = vst [vmem:[#allocation2 + $0x98] sm:$0xff] %v1449
        %1476 = vst [vmem:[#allocation2 + $0xa0] sm:$0xff] %v1450
        %1477 = vst [vmem:[#allocation2 + $0xa8] sm:$0xff] %v1451
        %1478 = vst [vmem:[#allocation2 + $0xb0] sm:$0xff] %v1452
        %1479 = vst [vmem:[#allocation2 + $0xb8] sm:$0xff] %v1453
        %1480 = vst [vmem:[#allocation2 + $0xc0] sm:$0xff] %v1454
        %1481 = vst [vmem:[#allocation2 + $0xc8] sm:$0xff] %v1455
        %p1482 = scmp.eq.s32.totalorder %s21, 4
        // Predicated region
        $region63: #{localizer_alexnet_forward.12} parent=53 // pred_check
          %p1483 = pneg %p1482
        $region64: #{localizer_alexnet_forward.12} parent=53 // pred_check_branch
          %1485 = sbr.rel (%p1483) target = $region66
        $region65: #{localizer_alexnet_forward.12} parent=53 // pred_region
          %v1486 = vld [vmem:[#allocation2] sm:$0xff]
          %v1487 = vld [vmem:[#allocation2 + $0x8] sm:$0xff]
          %v1488 = vld [vmem:[#allocation2 + $0x10] sm:$0xff]
          %v1489 = vld [vmem:[#allocation2 + $0x18] sm:$0xff]
          %v1490 = vld [vmem:[#allocation2 + $0x20] sm:$0xff]
          %v1491 = vld [vmem:[#allocation2 + $0x28] sm:$0xff]
          %v1492 = vld [vmem:[#allocation2 + $0x30] sm:$0xff]
          %v1493 = vld [vmem:[#allocation2 + $0x38] sm:$0xff]
          %v1494 = vld [vmem:[#allocation2 + $0x40] sm:$0xff]
          %v1495 = vld [vmem:[#allocation2 + $0x48] sm:$0xff]
          %v1496 = vld [vmem:[#allocation2 + $0x50] sm:$0xff]
          %v1497 = vld [vmem:[#allocation2 + $0x58] sm:$0xff]
          %v1498 = vld [vmem:[#allocation2 + $0x60] sm:$0xff]
          %v1499 = vld [vmem:[#allocation2 + $0x68] sm:$0xff]
          %v1500 = vld [vmem:[#allocation2 + $0x70] sm:$0xff]
          %v1501 = vld [vmem:[#allocation2 + $0x78] sm:$0xff]
          %v1502 = vld [vmem:[#allocation2 + $0x80] sm:$0xff]
          %v1503 = vld [vmem:[#allocation2 + $0x88] sm:$0xff]
          %v1504 = vld [vmem:[#allocation2 + $0x90] sm:$0xff]
          %v1505 = vld [vmem:[#allocation2 + $0x98] sm:$0xff]
          %v1506 = vld [vmem:[#allocation2 + $0xa0] sm:$0xff]
          %v1507 = vld [vmem:[#allocation2 + $0xa8] sm:$0xff]
          %v1508 = vld [vmem:[#allocation2 + $0xb0] sm:$0xff]
          %v1509 = vld [vmem:[#allocation2 + $0xb8] sm:$0xff]
          %v1510 = vld [vmem:[#allocation2 + $0xc0] sm:$0xff]
          %v1511 = vld [vmem:[#allocation2 + $0xc8] sm:$0xff]
          %v1512 = vld [vmem:[%s363] sm:$0x3]
          %v1514 = vlaneseq
          %v1515 = vshrl.u32 %v1514, 7
          %v1516 = vsub.s32 0, %v1515
          %v1517 = vrot.slane %v1512, %v1516
          %v1518 = vlaneseq
          %v1519 = vshrl.u32 %v1518, 7
          %v1520 = vsub.s32 1, %v1519
          %v1521 = vrot.slane %v1512, %v1520
          %v1524 = vadd.f32 %v1486, %v1517
          %v1525 = vadd.f32 %v1487, %v1521
          %v1526 = vadd.f32 %v1488, %v1517
          %v1527 = vadd.f32 %v1489, %v1521
          %v1528 = vadd.f32 %v1490, %v1517
          %v1529 = vadd.f32 %v1491, %v1521
          %v1530 = vadd.f32 %v1492, %v1517
          %v1531 = vadd.f32 %v1493, %v1521
          %v1532 = vadd.f32 %v1494, %v1517
          %v1533 = vadd.f32 %v1495, %v1521
          %v1534 = vadd.f32 %v1496, %v1517
          %v1535 = vadd.f32 %v1497, %v1521
          %v1536 = vadd.f32 %v1498, %v1517
          %v1537 = vadd.f32 %v1499, %v1521
          %v1538 = vadd.f32 %v1500, %v1517
          %v1539 = vadd.f32 %v1501, %v1521
          %v1540 = vadd.f32 %v1502, %v1517
          %v1541 = vadd.f32 %v1503, %v1521
          %v1542 = vadd.f32 %v1504, %v1517
          %v1543 = vadd.f32 %v1505, %v1521
          %v1544 = vadd.f32 %v1506, %v1517
          %v1545 = vadd.f32 %v1507, %v1521
          %v1546 = vadd.f32 %v1508, %v1517
          %v1547 = vadd.f32 %v1509, %v1521
          %v1548 = vadd.f32 %v1510, %v1517
          %v1549 = vadd.f32 %v1511, %v1521
          %v1550 = vmax.f32 %v1524, 0.0
          %v1551 = vmax.f32 %v1525, 0.0
          %v1552 = vmax.f32 %v1526, 0.0
          %v1553 = vmax.f32 %v1527, 0.0
          %v1554 = vmax.f32 %v1528, 0.0
          %v1555 = vmax.f32 %v1529, 0.0
          %v1556 = vmax.f32 %v1530, 0.0
          %v1557 = vmax.f32 %v1531, 0.0
          %v1558 = vmax.f32 %v1532, 0.0
          %v1559 = vmax.f32 %v1533, 0.0
          %v1560 = vmax.f32 %v1534, 0.0
          %v1561 = vmax.f32 %v1535, 0.0
          %v1562 = vmax.f32 %v1536, 0.0
          %v1563 = vmax.f32 %v1537, 0.0
          %v1564 = vmax.f32 %v1538, 0.0
          %v1565 = vmax.f32 %v1539, 0.0
          %v1566 = vmax.f32 %v1540, 0.0
          %v1567 = vmax.f32 %v1541, 0.0
          %v1568 = vmax.f32 %v1542, 0.0
          %v1569 = vmax.f32 %v1543, 0.0
          %v1570 = vmax.f32 %v1544, 0.0
          %v1571 = vmax.f32 %v1545, 0.0
          %v1572 = vmax.f32 %v1546, 0.0
          %v1573 = vmax.f32 %v1547, 0.0
          %v1574 = vmax.f32 %v1548, 0.0
          %v1575 = vmax.f32 %v1549, 0.0
          %v1576 = vpack.c.bf16 %v1552, %v1550
          %v1577 = vpack.c.bf16 %v1553, %v1551
          %v1578 = vpack.c.bf16 %v1556, %v1554
          %v1579 = vpack.c.bf16 %v1557, %v1555
          %v1580 = vpack.c.bf16 %v1560, %v1558
          %v1581 = vpack.c.bf16 %v1561, %v1559
          %v1582 = vpack.c.bf16 %v1564, %v1562
          %v1583 = vpack.c.bf16 %v1565, %v1563
          %v1584 = vpack.c.bf16 %v1568, %v1566
          %v1585 = vpack.c.bf16 %v1569, %v1567
          %v1586 = vpack.c.bf16 %v1572, %v1570
          %v1587 = vpack.c.bf16 %v1573, %v1571
          %v1588 = vpack.c.bf16 %v1574, %v1574
          %v1589 = vpack.c.bf16 %v1575, %v1575
          %v1604 = vunpack.c.l.b16 %v1576
          %v1605 = vunpack.c.l.b16 %v1577
          %v1606 = vunpack.c.h.b16 %v1576
          %v1607 = vunpack.c.h.b16 %v1577
          %v1608 = vunpack.c.l.b16 %v1578
          %v1609 = vunpack.c.l.b16 %v1579
          %v1610 = vunpack.c.h.b16 %v1578
          %v1611 = vunpack.c.h.b16 %v1579
          %v1612 = vunpack.c.l.b16 %v1580
          %v1613 = vunpack.c.l.b16 %v1581
          %v1614 = vunpack.c.h.b16 %v1580
          %v1615 = vunpack.c.h.b16 %v1581
          %v1616 = vunpack.c.l.b16 %v1582
          %v1617 = vunpack.c.l.b16 %v1583
          %v1618 = vunpack.c.h.b16 %v1582
          %v1619 = vunpack.c.h.b16 %v1583
          %v1620 = vunpack.c.l.b16 %v1584
          %v1621 = vunpack.c.l.b16 %v1585
          %v1622 = vunpack.c.h.b16 %v1584
          %v1623 = vunpack.c.h.b16 %v1585
          %v1624 = vunpack.c.l.b16 %v1586
          %v1625 = vunpack.c.l.b16 %v1587
          %v1626 = vunpack.c.h.b16 %v1586
          %v1627 = vunpack.c.h.b16 %v1587
          %v1628 = vunpack.c.l.b16 %v1588
          %v1629 = vunpack.c.l.b16 %v1589
          %v1630 = vpack.c.b16 %v1605, %v1604
          %v1631 = vpack.c.b16 %v1607, %v1606
          %v1632 = vpack.c.b16 %v1609, %v1608
          %v1633 = vpack.c.b16 %v1611, %v1610
          %v1634 = vpack.c.b16 %v1613, %v1612
          %v1635 = vpack.c.b16 %v1615, %v1614
          %v1636 = vpack.c.b16 %v1617, %v1616
          %v1637 = vpack.c.b16 %v1619, %v1618
          %v1638 = vpack.c.b16 %v1621, %v1620
          %v1639 = vpack.c.b16 %v1623, %v1622
          %v1640 = vpack.c.b16 %v1625, %v1624
          %v1641 = vpack.c.b16 %v1627, %v1626
          %v1642 = vpack.c.b16 %v1629, %v1628
          %1656 = vst [vmem:[%s374] sm:$0xff] %v1630
          %1657 = vst [vmem:[%s374 + $0x8] sm:$0xff] %v1631
          %1658 = vst [vmem:[%s374 + $0x10] sm:$0xff] %v1632
          %1659 = vst [vmem:[%s374 + $0x18] sm:$0xff] %v1633
          %1660 = vst [vmem:[%s374 + $0x20] sm:$0xff] %v1634
          %1661 = vst [vmem:[%s374 + $0x28] sm:$0xff] %v1635
          %1662 = vst [vmem:[%s374 + $0x30] sm:$0xff] %v1636
          %1663 = vst [vmem:[%s374 + $0x38] sm:$0xff] %v1637
          %1664 = vst [vmem:[%s374 + $0x40] sm:$0xff] %v1638
          %1665 = vst [vmem:[%s374 + $0x48] sm:$0xff] %v1639
          %1666 = vst [vmem:[%s374 + $0x50] sm:$0xff] %v1640
          %1667 = vst [vmem:[%s374 + $0x58] sm:$0xff] %v1641
          %1668 = vst [vmem:[%s374 + $0x60] sm:$0xff] %v1642
        $region66: #{localizer_alexnet_forward.12} parent=53 // pred_fallthru
          _
        %s1669 = smul.u32 13, %s19
        %s1670 = smul.u32 2, %s20
        %p1671 = scmp.lt.s32.totalorder %s1669, 12
        %s1672 = scalar_select %p1671, %s1669, 12
        %p1673 = scmp.lt.s32.totalorder %s1670, 1
        %s1674 = scalar_select %p1673, %s1670, 1
        %s1675 = smul.addr %s1672, 2
        %s1676 = sadd.s32 %s1674, %s1675
        %s1677 = smul.addr %s1676, 4
        %s1678 = scalar_lea.vmem %s3, %s1677
        // Predicated region
        $region67: #{localizer_alexnet_forward.12} parent=53 // pred_check
          %p1679 = pneg %p135
        $region68: #{localizer_alexnet_forward.12} parent=53 // pred_check_branch
          %1681 = sbr.rel (%p1679) target = $region70
        $region69: #{localizer_alexnet_forward.12} parent=53 // pred_region
          %s1682 = smul.u32 13, %s19
          %s1683 = smul.u32 2, %s20
        $region70: #{localizer_alexnet_forward.12} parent=53 // pred_fallthru
          _
        // Predicated region
        $region71: #{localizer_alexnet_forward.12} parent=53 // pred_check
          %p1684 = pneg %p135
        $region72: #{localizer_alexnet_forward.12} parent=53 // pred_check_branch
          %1686 = sbr.rel (%p1684) target = $region74
        $region73: #{localizer_alexnet_forward.12} parent=53 // pred_region
          %s1687 = smul.u32 13, %s19
          %s1688 = smul.u32 2, %s20
          %p1689 = scmp.lt.s32.totalorder %s1687, 12
          %s1690 = scalar_select %p1689, %s1687, 12
          %p1691 = scmp.lt.s32.totalorder %s1688, 1
          %s1692 = scalar_select %p1691, %s1688, 1
          %s1693 = smul.addr %s1690, 2
          %s1694 = sadd.s32 %s1692, %s1693
          %s1695 = smul.addr %s1694, 4
          %s1696 = scalar_lea.vmem %s3, %s1695
        $region74: #{localizer_alexnet_forward.12} parent=53 // pred_fallthru
          _
      $region54: #{localizer_alexnet_forward.12} parent=5 // pred_fallthru
        _
      %p1697 = scmp.le.s32.totalorder 2, %s9
      // Predicated region
      $region75: #{localizer_alexnet_forward.12} parent=5 // pred_check
        %p1698 = pneg %p1697
      $region76: #{localizer_alexnet_forward.12} parent=5 // pred_check_branch
        %1700 = sbr.rel (%p1698) target = $region78
      $region77: #{localizer_alexnet_forward.12} parent=5 // pred_region
        %s1701 = ssub.s32 %s9, 2
      $region78: #{localizer_alexnet_forward.12} parent=5 // pred_fallthru
        _
    $region6: #{localizer_alexnet_forward.12} parent=1 // loop_footer
      %s13 = sadd.s32 1, %s9
    $region7: #{localizer_alexnet_forward.12} parent=1 // loop_footer_branch
      %8 = sbr.rel target = $region3
    $region8: #{localizer_alexnet_forward.12} parent=1 // loop_exit
      _

// kernel: localizer_alexnet_forward.13
$region0: #{localizer_alexnet_forward.13}
  #allocation0 [shape = 'u32[]', space=smem, size = 0x4, offset = 0x4, fixed_abs, tag = 'smem constant byte address 0x4 - core index']
  #allocation1 [shape = 'u32[144,128]{1,0:T(1,128)}', space=vmem, size = 0x12000, scoped, tag = 'internal scratch']
  %s0 = inlined_call_operand.vmem [shape: bf16[2,9,256], index: 0, kind: input, shape index: {}]
  %s1 = inlined_call_operand.vmem [shape: bf16[2,9,256], index: 1, kind: input, shape index: {}]
  %s2 = inlined_call_operand.vmem [shape: bf16[2,9,256], index: 2, kind: input, shape index: {}]
  %s3 = inlined_call_operand.vmem [shape: bf16[2,9,256], index: 3, kind: input, shape index: {}]
  %s4 = inlined_call_operand.vmem [shape: bf16[2,9,256], index: 4, kind: input, shape index: {}]
  %s5 = inlined_call_operand.vmem [shape: bf16[2,9,256], index: 5, kind: input, shape index: {}]
  %s6 = inlined_call_operand.vmem [shape: bf16[2,9,256], index: 6, kind: input, shape index: {}]
  %s7 = inlined_call_operand.vmem [shape: bf16[2,9,256], index: 7, kind: input, shape index: {}]
  %s8 = inlined_call_operand.vmem [shape: bf16[2,9,256], index: 8, kind: input, shape index: {}]
  %s9 = inlined_call_operand.vmem [shape: bf16[2,9,256], index: 9, kind: output, shape index: {}]
  %s10 = sld [smem:[#allocation0]]
  $region69: #{localizer_alexnet_forward.13} parent=0
    _
  %s12 = ssub.s32 1, %s10
  %s13 = scalar_select 0, %s12, %s10
  loop: start=0, step=1, limit=4
  $region2: #{localizer_alexnet_forward.13} parent=0 // loop_pre_header
    _
  $region3: #{localizer_alexnet_forward.13} parent=0 // loop_header
    %s15 = sphi 0, %s19
    %p16 = scmp.ge.s32.totalorder %s15, 4
    %s25 = sphi 0, %s27
    %s28 = sphi 0, %s25
    %s29 = sphi 0, %s28
    %s45 = sphi 0, %s29
    %s51 = sphi 0, %s53
    %s54 = sphi 0, %s51
    %s55 = sphi 0, %s54
    %s71 = sphi 0, %s55
    %s77 = sphi 0, %s79
    %s80 = sphi 0, %s77
    %s81 = sphi 0, %s80
    %s97 = sphi 0, %s81
    %s103 = sphi 0, %s105
    %s106 = sphi 0, %s103
    %s107 = sphi 0, %s106
    %s123 = sphi 0, %s107
    %s129 = sphi 0, %s131
    %s132 = sphi 0, %s129
    %s133 = sphi 0, %s132
    %s149 = sphi 0, %s133
    %s155 = sphi 0, %s157
    %s158 = sphi 0, %s155
    %s159 = sphi 0, %s158
    %s175 = sphi 0, %s159
    %s181 = sphi 0, %s183
    %s184 = sphi 0, %s181
    %s185 = sphi 0, %s184
    %s201 = sphi 0, %s185
    %s207 = sphi 0, %s209
    %s210 = sphi 0, %s207
    %s211 = sphi 0, %s210
    %s227 = sphi 0, %s211
    %s233 = sphi 0, %s235
    %s236 = sphi 0, %s233
    %s237 = sphi 0, %s236
    %s253 = sphi 0, %s237
    %s259 = sphi 0, %s261
    %s262 = sphi 0, %s259
    %s263 = sphi 0, %s262
    %s279 = sphi 0, %s263
  $region4: #{localizer_alexnet_forward.13} parent=0 // loop_header_branch
    %18 = sbr.rel (%p16) target = $region8
  $region5: #{localizer_alexnet_forward.13} parent=0 // loop_body
    %s20 = ssub.s32 %s15, 1
    %s21 = ssub.s32 %s15, 2
    %s22 = sadd.s32 %s15, 1
    %s23 = ssub.s32 %s15, %s22
    %p24 = scmp.eq.s32.totalorder %s23, 0
    %s26 = sadd.s32 %s25, 1
    %s27 = scalar_select %p24, %s25, %s26
    %p30 = pneg %p24
    %p31 = scmp.eq.s32.totalorder %s15, 1
    %p32 = por %p30, %p31
    %p33 = scmp.ne.s32.totalorder %s25, %s28
    %p34 = scmp.eq.s32.totalorder %s15, 0
    %p35 = por %p33, %p34
    %p36 = scmp.ne.s32.totalorder %s25, %s28
    %p37 = scmp.eq.s32.totalorder %s20, 1
    %p38 = por %p36, %p37
    %p39 = scmp.ne.s32.totalorder %s28, %s29
    %p40 = scmp.eq.s32.totalorder %s20, 0
    %p41 = por %p39, %p40
    %p42 = scmp.ne.s32.totalorder %s28, %s29
    %p43 = scmp.eq.s32.totalorder %s21, 1
    %p44 = por %p42, %p43
    %p46 = scmp.ne.s32.totalorder %s29, %s45
    %p47 = scmp.eq.s32.totalorder %s21, 0
    %p48 = por %p46, %p47
    %s49 = ssub.s32 %s15, %s22
    %p50 = scmp.eq.s32.totalorder %s49, 0
    %s52 = sadd.s32 %s51, 1
    %s53 = scalar_select %p50, %s51, %s52
    %p56 = pneg %p50
    %p57 = scmp.eq.s32.totalorder %s15, 1
    %p58 = por %p56, %p57
    %p59 = scmp.ne.s32.totalorder %s51, %s54
    %p60 = scmp.eq.s32.totalorder %s15, 0
    %p61 = por %p59, %p60
    %p62 = scmp.ne.s32.totalorder %s51, %s54
    %p63 = scmp.eq.s32.totalorder %s20, 1
    %p64 = por %p62, %p63
    %p65 = scmp.ne.s32.totalorder %s54, %s55
    %p66 = scmp.eq.s32.totalorder %s20, 0
    %p67 = por %p65, %p66
    %p68 = scmp.ne.s32.totalorder %s54, %s55
    %p69 = scmp.eq.s32.totalorder %s21, 1
    %p70 = por %p68, %p69
    %p72 = scmp.ne.s32.totalorder %s55, %s71
    %p73 = scmp.eq.s32.totalorder %s21, 0
    %p74 = por %p72, %p73
    %s75 = ssub.s32 %s15, %s22
    %p76 = scmp.eq.s32.totalorder %s75, 0
    %s78 = sadd.s32 %s77, 1
    %s79 = scalar_select %p76, %s77, %s78
    %p82 = pneg %p76
    %p83 = scmp.eq.s32.totalorder %s15, 1
    %p84 = por %p82, %p83
    %p85 = scmp.ne.s32.totalorder %s77, %s80
    %p86 = scmp.eq.s32.totalorder %s15, 0
    %p87 = por %p85, %p86
    %p88 = scmp.ne.s32.totalorder %s77, %s80
    %p89 = scmp.eq.s32.totalorder %s20, 1
    %p90 = por %p88, %p89
    %p91 = scmp.ne.s32.totalorder %s80, %s81
    %p92 = scmp.eq.s32.totalorder %s20, 0
    %p93 = por %p91, %p92
    %p94 = scmp.ne.s32.totalorder %s80, %s81
    %p95 = scmp.eq.s32.totalorder %s21, 1
    %p96 = por %p94, %p95
    %p98 = scmp.ne.s32.totalorder %s81, %s97
    %p99 = scmp.eq.s32.totalorder %s21, 0
    %p100 = por %p98, %p99
    %s101 = ssub.s32 %s15, %s22
    %p102 = scmp.eq.s32.totalorder %s101, 0
    %s104 = sadd.s32 %s103, 1
    %s105 = scalar_select %p102, %s103, %s104
    %p108 = pneg %p102
    %p109 = scmp.eq.s32.totalorder %s15, 1
    %p110 = por %p108, %p109
    %p111 = scmp.ne.s32.totalorder %s103, %s106
    %p112 = scmp.eq.s32.totalorder %s15, 0
    %p113 = por %p111, %p112
    %p114 = scmp.ne.s32.totalorder %s103, %s106
    %p115 = scmp.eq.s32.totalorder %s20, 1
    %p116 = por %p114, %p115
    %p117 = scmp.ne.s32.totalorder %s106, %s107
    %p118 = scmp.eq.s32.totalorder %s20, 0
    %p119 = por %p117, %p118
    %p120 = scmp.ne.s32.totalorder %s106, %s107
    %p121 = scmp.eq.s32.totalorder %s21, 1
    %p122 = por %p120, %p121
    %p124 = scmp.ne.s32.totalorder %s107, %s123
    %p125 = scmp.eq.s32.totalorder %s21, 0
    %p126 = por %p124, %p125
    %s127 = ssub.s32 %s15, %s22
    %p128 = scmp.eq.s32.totalorder %s127, 0
    %s130 = sadd.s32 %s129, 1
    %s131 = scalar_select %p128, %s129, %s130
    %p134 = pneg %p128
    %p135 = scmp.eq.s32.totalorder %s15, 1
    %p136 = por %p134, %p135
    %p137 = scmp.ne.s32.totalorder %s129, %s132
    %p138 = scmp.eq.s32.totalorder %s15, 0
    %p139 = por %p137, %p138
    %p140 = scmp.ne.s32.totalorder %s129, %s132
    %p141 = scmp.eq.s32.totalorder %s20, 1
    %p142 = por %p140, %p141
    %p143 = scmp.ne.s32.totalorder %s132, %s133
    %p144 = scmp.eq.s32.totalorder %s20, 0
    %p145 = por %p143, %p144
    %p146 = scmp.ne.s32.totalorder %s132, %s133
    %p147 = scmp.eq.s32.totalorder %s21, 1
    %p148 = por %p146, %p147
    %p150 = scmp.ne.s32.totalorder %s133, %s149
    %p151 = scmp.eq.s32.totalorder %s21, 0
    %p152 = por %p150, %p151
    %s153 = ssub.s32 %s15, %s22
    %p154 = scmp.eq.s32.totalorder %s153, 0
    %s156 = sadd.s32 %s155, 1
    %s157 = scalar_select %p154, %s155, %s156
    %p160 = pneg %p154
    %p161 = scmp.eq.s32.totalorder %s15, 1
    %p162 = por %p160, %p161
    %p163 = scmp.ne.s32.totalorder %s155, %s158
    %p164 = scmp.eq.s32.totalorder %s15, 0
    %p165 = por %p163, %p164
    %p166 = scmp.ne.s32.totalorder %s155, %s158
    %p167 = scmp.eq.s32.totalorder %s20, 1
    %p168 = por %p166, %p167
    %p169 = scmp.ne.s32.totalorder %s158, %s159
    %p170 = scmp.eq.s32.totalorder %s20, 0
    %p171 = por %p169, %p170
    %p172 = scmp.ne.s32.totalorder %s158, %s159
    %p173 = scmp.eq.s32.totalorder %s21, 1
    %p174 = por %p172, %p173
    %p176 = scmp.ne.s32.totalorder %s159, %s175
    %p177 = scmp.eq.s32.totalorder %s21, 0
    %p178 = por %p176, %p177
    %s179 = ssub.s32 %s15, %s22
    %p180 = scmp.eq.s32.totalorder %s179, 0
    %s182 = sadd.s32 %s181, 1
    %s183 = scalar_select %p180, %s181, %s182
    %p186 = pneg %p180
    %p187 = scmp.eq.s32.totalorder %s15, 1
    %p188 = por %p186, %p187
    %p189 = scmp.ne.s32.totalorder %s181, %s184
    %p190 = scmp.eq.s32.totalorder %s15, 0
    %p191 = por %p189, %p190
    %p192 = scmp.ne.s32.totalorder %s181, %s184
    %p193 = scmp.eq.s32.totalorder %s20, 1
    %p194 = por %p192, %p193
    %p195 = scmp.ne.s32.totalorder %s184, %s185
    %p196 = scmp.eq.s32.totalorder %s20, 0
    %p197 = por %p195, %p196
    %p198 = scmp.ne.s32.totalorder %s184, %s185
    %p199 = scmp.eq.s32.totalorder %s21, 1
    %p200 = por %p198, %p199
    %p202 = scmp.ne.s32.totalorder %s185, %s201
    %p203 = scmp.eq.s32.totalorder %s21, 0
    %p204 = por %p202, %p203
    %s205 = ssub.s32 %s15, %s22
    %p206 = scmp.eq.s32.totalorder %s205, 0
    %s208 = sadd.s32 %s207, 1
    %s209 = scalar_select %p206, %s207, %s208
    %p212 = pneg %p206
    %p213 = scmp.eq.s32.totalorder %s15, 1
    %p214 = por %p212, %p213
    %p215 = scmp.ne.s32.totalorder %s207, %s210
    %p216 = scmp.eq.s32.totalorder %s15, 0
    %p217 = por %p215, %p216
    %p218 = scmp.ne.s32.totalorder %s207, %s210
    %p219 = scmp.eq.s32.totalorder %s20, 1
    %p220 = por %p218, %p219
    %p221 = scmp.ne.s32.totalorder %s210, %s211
    %p222 = scmp.eq.s32.totalorder %s20, 0
    %p223 = por %p221, %p222
    %p224 = scmp.ne.s32.totalorder %s210, %s211
    %p225 = scmp.eq.s32.totalorder %s21, 1
    %p226 = por %p224, %p225
    %p228 = scmp.ne.s32.totalorder %s211, %s227
    %p229 = scmp.eq.s32.totalorder %s21, 0
    %p230 = por %p228, %p229
    %s231 = ssub.s32 %s15, %s22
    %p232 = scmp.eq.s32.totalorder %s231, 0
    %s234 = sadd.s32 %s233, 1
    %s235 = scalar_select %p232, %s233, %s234
    %p238 = pneg %p232
    %p239 = scmp.eq.s32.totalorder %s15, 1
    %p240 = por %p238, %p239
    %p241 = scmp.ne.s32.totalorder %s233, %s236
    %p242 = scmp.eq.s32.totalorder %s15, 0
    %p243 = por %p241, %p242
    %p244 = scmp.ne.s32.totalorder %s233, %s236
    %p245 = scmp.eq.s32.totalorder %s20, 1
    %p246 = por %p244, %p245
    %p247 = scmp.ne.s32.totalorder %s236, %s237
    %p248 = scmp.eq.s32.totalorder %s20, 0
    %p249 = por %p247, %p248
    %p250 = scmp.ne.s32.totalorder %s236, %s237
    %p251 = scmp.eq.s32.totalorder %s21, 1
    %p252 = por %p250, %p251
    %p254 = scmp.ne.s32.totalorder %s237, %s253
    %p255 = scmp.eq.s32.totalorder %s21, 0
    %p256 = por %p254, %p255
    %s257 = ssub.s32 %s15, %s22
    %p258 = scmp.eq.s32.totalorder %s257, 0
    %s260 = sadd.s32 %s259, 1
    %s261 = scalar_select %p258, %s259, %s260
    %p264 = pneg %p258
    %p265 = scmp.eq.s32.totalorder %s15, 1
    %p266 = por %p264, %p265
    %p267 = scmp.ne.s32.totalorder %s259, %s262
    %p268 = scmp.eq.s32.totalorder %s15, 0
    %p269 = por %p267, %p268
    %p270 = scmp.ne.s32.totalorder %s259, %s262
    %p271 = scmp.eq.s32.totalorder %s20, 1
    %p272 = por %p270, %p271
    %p273 = scmp.ne.s32.totalorder %s262, %s263
    %p274 = scmp.eq.s32.totalorder %s20, 0
    %p275 = por %p273, %p274
    %p276 = scmp.ne.s32.totalorder %s262, %s263
    %p277 = scmp.eq.s32.totalorder %s21, 1
    %p278 = por %p276, %p277
    %p280 = scmp.ne.s32.totalorder %s263, %s279
    %p281 = scmp.eq.s32.totalorder %s21, 0
    %p282 = por %p280, %p281
    %p283 = scmp.le.s32.totalorder 1, %s15
    %p284 = scmp.lt.s32.totalorder %s15, 3
    %p285 = pnand %p283, %p284
    %p286 = pneg %p285
    // Predicated region
    $region9: #{localizer_alexnet_forward.13} parent=5 // pred_check
      _
    $region10: #{localizer_alexnet_forward.13} parent=5 // pred_check_branch
      %288 = sbr.rel (%p285) target = $region12
    $region11: #{localizer_alexnet_forward.13} parent=5 // pred_region
      %s289 = ssub.s32 %s15, 1
    $region12: #{localizer_alexnet_forward.13} parent=5 // pred_fallthru
      _
    %p290 = scmp.lt.s32.totalorder %s15, 2
    // Predicated region
    $region13: #{localizer_alexnet_forward.13} parent=5 // pred_check
      %p291 = pneg %p290
    $region14: #{localizer_alexnet_forward.13} parent=5 // pred_check_branch
      %293 = sbr.rel (%p291) target = $region16
    $region15: #{localizer_alexnet_forward.13} parent=5 // pred_region
      // Predicated region
      $region17: #{localizer_alexnet_forward.13} parent=15 // pred_check
        %p294 = pneg %p35
      $region18: #{localizer_alexnet_forward.13} parent=15 // pred_check_branch
        %296 = sbr.rel (%p294) target = $region20
      $region19: #{localizer_alexnet_forward.13} parent=15 // pred_region
        %p297 = scmp.lt.s32.totalorder %s15, 1
        %s298 = scalar_select %p297, %s15, 1
        %s299 = smul.addr %s298, 4
        %s300 = smul.addr %s299, 4
        %s301 = scalar_lea.vmem %s0, %s300
      $region20: #{localizer_alexnet_forward.13} parent=15 // pred_fallthru
        _
      // Predicated region
      $region21: #{localizer_alexnet_forward.13} parent=15 // pred_check
        %p302 = pneg %p61
      $region22: #{localizer_alexnet_forward.13} parent=15 // pred_check_branch
        %304 = sbr.rel (%p302) target = $region24
      $region23: #{localizer_alexnet_forward.13} parent=15 // pred_region
        %p305 = scmp.lt.s32.totalorder %s15, 1
        %s306 = scalar_select %p305, %s15, 1
        %s307 = smul.addr %s306, 4
        %s308 = smul.addr %s307, 4
        %s309 = scalar_lea.vmem %s1, %s308
      $region24: #{localizer_alexnet_forward.13} parent=15 // pred_fallthru
        _
      // Predicated region
      $region25: #{localizer_alexnet_forward.13} parent=15 // pred_check
        %p310 = pneg %p87
      $region26: #{localizer_alexnet_forward.13} parent=15 // pred_check_branch
        %312 = sbr.rel (%p310) target = $region28
      $region27: #{localizer_alexnet_forward.13} parent=15 // pred_region
        %p313 = scmp.lt.s32.totalorder %s15, 1
        %s314 = scalar_select %p313, %s15, 1
        %s315 = smul.addr %s314, 4
        %s316 = smul.addr %s315, 4
        %s317 = scalar_lea.vmem %s2, %s316
      $region28: #{localizer_alexnet_forward.13} parent=15 // pred_fallthru
        _
      // Predicated region
      $region29: #{localizer_alexnet_forward.13} parent=15 // pred_check
        %p318 = pneg %p113
      $region30: #{localizer_alexnet_forward.13} parent=15 // pred_check_branch
        %320 = sbr.rel (%p318) target = $region32
      $region31: #{localizer_alexnet_forward.13} parent=15 // pred_region
        %p321 = scmp.lt.s32.totalorder %s15, 1
        %s322 = scalar_select %p321, %s15, 1
        %s323 = smul.addr %s322, 4
        %s324 = smul.addr %s323, 4
        %s325 = scalar_lea.vmem %s3, %s324
      $region32: #{localizer_alexnet_forward.13} parent=15 // pred_fallthru
        _
      // Predicated region
      $region33: #{localizer_alexnet_forward.13} parent=15 // pred_check
        %p326 = pneg %p139
      $region34: #{localizer_alexnet_forward.13} parent=15 // pred_check_branch
        %328 = sbr.rel (%p326) target = $region36
      $region35: #{localizer_alexnet_forward.13} parent=15 // pred_region
        %p329 = scmp.lt.s32.totalorder %s15, 1
        %s330 = scalar_select %p329, %s15, 1
        %s331 = smul.addr %s330, 4
        %s332 = smul.addr %s331, 4
        %s333 = scalar_lea.vmem %s4, %s332
      $region36: #{localizer_alexnet_forward.13} parent=15 // pred_fallthru
        _
      // Predicated region
      $region37: #{localizer_alexnet_forward.13} parent=15 // pred_check
        %p334 = pneg %p165
      $region38: #{localizer_alexnet_forward.13} parent=15 // pred_check_branch
        %336 = sbr.rel (%p334) target = $region40
      $region39: #{localizer_alexnet_forward.13} parent=15 // pred_region
        %p337 = scmp.lt.s32.totalorder %s15, 1
        %s338 = scalar_select %p337, %s15, 1
        %s339 = smul.addr %s338, 4
        %s340 = smul.addr %s339, 4
        %s341 = scalar_lea.vmem %s5, %s340
      $region40: #{localizer_alexnet_forward.13} parent=15 // pred_fallthru
        _
      // Predicated region
      $region41: #{localizer_alexnet_forward.13} parent=15 // pred_check
        %p342 = pneg %p191
      $region42: #{localizer_alexnet_forward.13} parent=15 // pred_check_branch
        %344 = sbr.rel (%p342) target = $region44
      $region43: #{localizer_alexnet_forward.13} parent=15 // pred_region
        %p345 = scmp.lt.s32.totalorder %s15, 1
        %s346 = scalar_select %p345, %s15, 1
        %s347 = smul.addr %s346, 4
        %s348 = smul.addr %s347, 4
        %s349 = scalar_lea.vmem %s6, %s348
      $region44: #{localizer_alexnet_forward.13} parent=15 // pred_fallthru
        _
      // Predicated region
      $region45: #{localizer_alexnet_forward.13} parent=15 // pred_check
        %p350 = pneg %p217
      $region46: #{localizer_alexnet_forward.13} parent=15 // pred_check_branch
        %352 = sbr.rel (%p350) target = $region48
      $region47: #{localizer_alexnet_forward.13} parent=15 // pred_region
        %p353 = scmp.lt.s32.totalorder %s15, 1
        %s354 = scalar_select %p353, %s15, 1
        %s355 = smul.addr %s354, 4
        %s356 = smul.addr %s355, 4
        %s357 = scalar_lea.vmem %s7, %s356
      $region48: #{localizer_alexnet_forward.13} parent=15 // pred_fallthru
        _
      // Predicated region
      $region49: #{localizer_alexnet_forward.13} parent=15 // pred_check
        %p358 = pneg %p243
      $region50: #{localizer_alexnet_forward.13} parent=15 // pred_check_branch
        %360 = sbr.rel (%p358) target = $region52
      $region51: #{localizer_alexnet_forward.13} parent=15 // pred_region
        %p361 = scmp.lt.s32.totalorder %s15, 1
        %s362 = scalar_select %p361, %s15, 1
        %s363 = smul.addr %s362, 4
        %s364 = smul.addr %s363, 4
        %s365 = scalar_lea.vmem %s8, %s364
      $region52: #{localizer_alexnet_forward.13} parent=15 // pred_fallthru
        _
    $region16: #{localizer_alexnet_forward.13} parent=5 // pred_fallthru
      _
    %p366 = scmp.le.s32.totalorder 1, %s15
    %p367 = scmp.lt.s32.totalorder %s15, 3
    %p368 = pnand %p366, %p367
    %p369 = pneg %p368
    // Predicated region
    $region53: #{localizer_alexnet_forward.13} parent=5 // pred_check
      _
    $region54: #{localizer_alexnet_forward.13} parent=5 // pred_check_branch
      %371 = sbr.rel (%p368) target = $region56
    $region55: #{localizer_alexnet_forward.13} parent=5 // pred_region
      %s372 = ssub.s32 %s15, 1
      %p373 = scmp.lt.s32.totalorder %s20, 1
      %s374 = scalar_select %p373, %s20, 1
      %s375 = smul.addr %s374, 4
      %s376 = smul.addr %s375, 4
      %s377 = scalar_lea.vmem %s0, %s376
      %p378 = pneg %p41
      %p379 = pneg %p38
      %p380 = scmp.lt.s32.totalorder %s20, 1
      %s381 = scalar_select %p380, %s20, 1
      %s382 = smul.addr %s381, 4
      %s383 = smul.addr %s382, 4
      %s384 = scalar_lea.vmem %s1, %s383
      %p385 = pneg %p67
      %p386 = pneg %p64
      %p387 = scmp.lt.s32.totalorder %s20, 1
      %s388 = scalar_select %p387, %s20, 1
      %s389 = smul.addr %s388, 4
      %s390 = smul.addr %s389, 4
      %s391 = scalar_lea.vmem %s2, %s390
      %p392 = pneg %p93
      %p393 = pneg %p90
      %p394 = scmp.lt.s32.totalorder %s20, 1
      %s395 = scalar_select %p394, %s20, 1
      %s396 = smul.addr %s395, 4
      %s397 = smul.addr %s396, 4
      %s398 = scalar_lea.vmem %s3, %s397
      %p399 = pneg %p119
      %p400 = pneg %p116
      %p401 = scmp.lt.s32.totalorder %s20, 1
      %s402 = scalar_select %p401, %s20, 1
      %s403 = smul.addr %s402, 4
      %s404 = smul.addr %s403, 4
      %s405 = scalar_lea.vmem %s4, %s404
      %p406 = pneg %p145
      %p407 = pneg %p142
      %p408 = scmp.lt.s32.totalorder %s20, 1
      %s409 = scalar_select %p408, %s20, 1
      %s410 = smul.addr %s409, 4
      %s411 = smul.addr %s410, 4
      %s412 = scalar_lea.vmem %s5, %s411
      %p413 = pneg %p171
      %p414 = pneg %p168
      %p415 = scmp.lt.s32.totalorder %s20, 1
      %s416 = scalar_select %p415, %s20, 1
      %s417 = smul.addr %s416, 4
      %s418 = smul.addr %s417, 4
      %s419 = scalar_lea.vmem %s6, %s418
      %p420 = pneg %p197
      %p421 = pneg %p194
      %p422 = scmp.lt.s32.totalorder %s20, 1
      %s423 = scalar_select %p422, %s20, 1
      %s424 = smul.addr %s423, 4
      %s425 = smul.addr %s424, 4
      %s426 = scalar_lea.vmem %s7, %s425
      %p427 = pneg %p223
      %p428 = pneg %p220
      %p429 = scmp.lt.s32.totalorder %s20, 1
      %s430 = scalar_select %p429, %s20, 1
      %s431 = smul.addr %s430, 4
      %s432 = smul.addr %s431, 4
      %s433 = scalar_lea.vmem %s8, %s432
      %p434 = pneg %p249
      %p435 = pneg %p246
      %p436 = pneg %p275
      %p437 = pneg %p272
      %p438 = scmp.lt.s32.totalorder %s20, 1
      %s439 = scalar_select %p438, %s20, 1
      %s440 = smul.addr %s439, 4
      %s441 = smul.addr %s440, 4
      %s442 = scalar_lea.vmem %s9, %s441
      %p443 = scmp.lt.s32.totalorder %s20, 1
      %s444 = scalar_select %p443, %s20, 1
      %s445 = smul.addr %s444, 4
      %s446 = smul.addr %s445, 4
      %s447 = scalar_lea.vmem %s0, %s446
      %p448 = scmp.lt.s32.totalorder %s20, 1
      %s449 = scalar_select %p448, %s20, 1
      %s450 = smul.addr %s449, 4
      %s451 = smul.addr %s450, 4
      %s452 = scalar_lea.vmem %s1, %s451
      %p453 = scmp.lt.s32.totalorder %s20, 1
      %s454 = scalar_select %p453, %s20, 1
      %s455 = smul.addr %s454, 4
      %s456 = smul.addr %s455, 4
      %s457 = scalar_lea.vmem %s2, %s456
      %p458 = scmp.lt.s32.totalorder %s20, 1
      %s459 = scalar_select %p458, %s20, 1
      %s460 = smul.addr %s459, 4
      %s461 = smul.addr %s460, 4
      %s462 = scalar_lea.vmem %s3, %s461
      %p463 = scmp.lt.s32.totalorder %s20, 1
      %s464 = scalar_select %p463, %s20, 1
      %s465 = smul.addr %s464, 4
      %s466 = smul.addr %s465, 4
      %s467 = scalar_lea.vmem %s4, %s466
      %p468 = scmp.lt.s32.totalorder %s20, 1
      %s469 = scalar_select %p468, %s20, 1
      %s470 = smul.addr %s469, 4
      %s471 = smul.addr %s470, 4
      %s472 = scalar_lea.vmem %s5, %s471
      %p473 = scmp.lt.s32.totalorder %s20, 1
      %s474 = scalar_select %p473, %s20, 1
      %s475 = smul.addr %s474, 4
      %s476 = smul.addr %s475, 4
      %s477 = scalar_lea.vmem %s6, %s476
      %p478 = scmp.lt.s32.totalorder %s20, 1
      %s479 = scalar_select %p478, %s20, 1
      %s480 = smul.addr %s479, 4
      %s481 = smul.addr %s480, 4
      %s482 = scalar_lea.vmem %s7, %s481
      %p483 = scmp.lt.s32.totalorder %s20, 1
      %s484 = scalar_select %p483, %s20, 1
      %s485 = smul.addr %s484, 4
      %s486 = smul.addr %s485, 4
      %s487 = scalar_lea.vmem %s8, %s486
      %p488 = scmp.lt.s32.totalorder %s20, 1
      %s489 = scalar_select %p488, %s20, 1
      %s490 = smul.addr %s489, 4
      %s491 = smul.addr %s490, 4
      %s492 = scalar_lea.vmem %s9, %s491
      %v493 = vld [vmem:[%s447] sm:$0xff]
      %v494 = vld [vmem:[%s447 + $0x8] sm:$0x11]
      %v495 = vld [vmem:[%s452] sm:$0xff]
      %v496 = vld [vmem:[%s452 + $0x8] sm:$0x11]
      %v497 = vmax.bf16 %v493, %v495
      %v498 = vmax.bf16 %v494, %v496
      %v499 = vld [vmem:[%s457] sm:$0xff]
      %v500 = vld [vmem:[%s457 + $0x8] sm:$0x11]
      %v501 = vmax.bf16 %v497, %v499
      %v502 = vmax.bf16 %v498, %v500
      %v503 = vld [vmem:[%s462] sm:$0xff]
      %v504 = vld [vmem:[%s462 + $0x8] sm:$0x11]
      %v505 = vmax.bf16 %v501, %v503
      %v506 = vmax.bf16 %v502, %v504
      %v507 = vld [vmem:[%s467] sm:$0xff]
      %v508 = vld [vmem:[%s467 + $0x8] sm:$0x11]
      %v509 = vmax.bf16 %v505, %v507
      %v510 = vmax.bf16 %v506, %v508
      %v511 = vld [vmem:[%s472] sm:$0xff]
      %v512 = vld [vmem:[%s472 + $0x8] sm:$0x11]
      %v513 = vmax.bf16 %v509, %v511
      %v514 = vmax.bf16 %v510, %v512
      %v515 = vld [vmem:[%s477] sm:$0xff]
      %v516 = vld [vmem:[%s477 + $0x8] sm:$0x11]
      %v517 = vmax.bf16 %v513, %v515
      %v518 = vmax.bf16 %v514, %v516
      %v519 = vld [vmem:[%s482] sm:$0xff]
      %v520 = vld [vmem:[%s482 + $0x8] sm:$0x11]
      %v521 = vmax.bf16 %v517, %v519
      %v522 = vmax.bf16 %v518, %v520
      %v523 = vld [vmem:[%s487] sm:$0xff]
      %v524 = vld [vmem:[%s487 + $0x8] sm:$0x11]
      %v525 = vmax.bf16 %v521, %v523
      %v526 = vmax.bf16 %v522, %v524
      %527 = vst [vmem:[%s492] sm:$0xff] %v525
      %vm528 = vcmask 1040384
      %vm529 = vsmask.f32 256
      %vm530 = vmand %vm528, %vm529
      %vm531 = vcmask 1044484
      %vm532 = vsmask.f32 4352
      %vm533 = vmand %vm531, %vm532
      %vm534 = vmor %vm533, %vm530
      %v535 = vld [vmem:[%s492 + $0x8] sm:$0x11]
      %v536 = vsel %vm534, %v526, %v535
      %537 = vst [vmem:[%s492 + $0x8] sm:$0x11] %v536
      %p538 = scmp.lt.s32.totalorder %s20, 1
      %s539 = scalar_select %p538, %s20, 1
      %s540 = smul.addr %s539, 4
      %s541 = smul.addr %s540, 4
      %s542 = scalar_lea.vmem %s9, %s541
      // Predicated region
      $region57: #{localizer_alexnet_forward.13} parent=55 // pred_check
        %p543 = pneg %p272
      $region58: #{localizer_alexnet_forward.13} parent=55 // pred_check_branch
        %545 = sbr.rel (%p543) target = $region60
      $region59: #{localizer_alexnet_forward.13} parent=55 // pred_region
        _
      $region60: #{localizer_alexnet_forward.13} parent=55 // pred_fallthru
        _
    $region56: #{localizer_alexnet_forward.13} parent=5 // pred_fallthru
      _
    %p546 = scmp.le.s32.totalorder 2, %s15
    // Predicated region
    $region61: #{localizer_alexnet_forward.13} parent=5 // pred_check
      %p547 = pneg %p546
    $region62: #{localizer_alexnet_forward.13} parent=5 // pred_check_branch
      %549 = sbr.rel (%p547) target = $region64
    $region63: #{localizer_alexnet_forward.13} parent=5 // pred_region
      %s550 = ssub.s32 %s15, 2
      // Predicated region
      $region65: #{localizer_alexnet_forward.13} parent=63 // pred_check
        %p551 = pneg %p278
      $region66: #{localizer_alexnet_forward.13} parent=63 // pred_check_branch
        %553 = sbr.rel (%p551) target = $region68
      $region67: #{localizer_alexnet_forward.13} parent=63 // pred_region
        %p554 = scmp.lt.s32.totalorder %s21, 1
        %s555 = scalar_select %p554, %s21, 1
        %s556 = smul.addr %s555, 4
        %s557 = smul.addr %s556, 4
        %s558 = scalar_lea.vmem %s9, %s557
      $region68: #{localizer_alexnet_forward.13} parent=63 // pred_fallthru
        _
    $region64: #{localizer_alexnet_forward.13} parent=5 // pred_fallthru
      _
  $region6: #{localizer_alexnet_forward.13} parent=0 // loop_footer
    %s19 = sadd.s32 1, %s15
  $region7: #{localizer_alexnet_forward.13} parent=0 // loop_footer_branch
    %14 = sbr.rel target = $region3
  $region8: #{localizer_alexnet_forward.13} parent=0 // loop_exit
    _

// kernel: localizer_alexnet_forward.14
$region0: #{localizer_alexnet_forward.14}
  #allocation0 [shape = 'u32[]', space=smem, size = 0x4, offset = 0x4, fixed_abs, tag = 'smem constant byte address 0x4 - core index']
  #allocation1 [shape = 'u32[144,128]{1,0:T(1,128)}', space=vmem, size = 0x12000, scoped, tag = 'internal scratch']
  #allocation2 [shape = 'f32[24,128]{1,0:T(8,128)}', space=vmem, size = 0x3000, scoped, tag = 'scratch operand']
  %s0 = inlined_call_operand.vmem [shape: bf16[24,2304], index: 0, kind: input, shape index: {}]
  %s1 = inlined_call_operand.vmem [shape: bf16[2304,384], index: 1, kind: input, shape index: {}]
  %s2 = inlined_call_operand.vmem [shape: f32[1,384], index: 2, kind: input, shape index: {}]
  %s3 = inlined_call_operand.vmem [shape: bf16[24,384], index: 3, kind: output, shape index: {}]
  %s4 = sld [smem:[#allocation0]]
  $region154: #{localizer_alexnet_forward.14} parent=0
    _
  %s6 = ssub.s32 1, %s4
  %s7 = scalar_select 0, %s6, %s4
  $region1: #{localizer_alexnet_forward.14} parent=0
    #allocation3 [shape = 'u8[73728]{0}', space=vmem, size = 0x12000, scoped, tag = 'input window, operand 0']
    #allocation4 [shape = 'u8[393216]{0}', space=vmem, size = 0x60000, scoped, tag = 'input window, operand 1']
    #allocation5 [shape = 'u8[12288]{0}', space=vmem, size = 0x3000, scoped, tag = 'output window, operand 0']
    loop: start=0, step=1, limit=11
    $region2: #{localizer_alexnet_forward.14} parent=1 // loop_pre_header
      _
    $region3: #{localizer_alexnet_forward.14} parent=1 // loop_header
      %s9 = sphi 0, %s13
      %p10 = scmp.ge.s32.totalorder %s9, 11
      %s16 = sphi 0, %s35
      %s17 = sphi 0, %s31
      %s18 = sphi 0, %s27
      %s19 = sphi 0, %s16
      %s20 = sphi 0, %s17
      %s21 = sphi 0, %s18
      %s22 = sphi 0, %s19
      %s23 = sphi 0, %s20
      %s24 = sphi 0, %s21
      %s40 = sphi 0, %s42
      %s43 = sphi 0, %s40
      %s44 = sphi 0, %s43
      %s60 = sphi 0, %s44
      %s68 = sphi 0, %s70
      %s71 = sphi 0, %s68
      %s72 = sphi 0, %s71
      %s88 = sphi 0, %s72
      %s94 = sphi 0, %s96
      %s97 = sphi 0, %s94
      %s98 = sphi 0, %s97
      %s114 = sphi 0, %s98
      %s122 = sphi 0, %s124
      %s125 = sphi 0, %s122
      %s126 = sphi 0, %s125
      %s142 = sphi 0, %s126
    $region4: #{localizer_alexnet_forward.14} parent=1 // loop_header_branch
      %12 = sbr.rel (%p10) target = $region8
    $region5: #{localizer_alexnet_forward.14} parent=1 // loop_body
      %s14 = ssub.s32 %s9, 1
      %s15 = ssub.s32 %s9, 2
      %s25 = sadd.s32 1, %s18
      %p26 = scmp.ge.s32.totalorder %s25, 3
      %s27 = scalar_select %p26, 0, %s25
      %s28 = sadd.s32 1, %s17
      %s29 = scalar_select %p26, %s28, %s17
      %p30 = scmp.ge.s32.totalorder %s29, 3
      %s31 = scalar_select %p30, 0, %s29
      %s32 = sadd.s32 1, %s16
      %s33 = scalar_select %p30, %s32, %s16
      %p34 = scmp.ge.s32.totalorder %s33, 1
      %s35 = scalar_select %p34, 0, %s33
      %s36 = ssub.s32 %s16, %s35
      %s37 = ssub.s32 %s18, %s27
      %s38 = sor.u32 %s36, %s37
      %p39 = scmp.eq.s32.totalorder %s38, 0
      %s41 = sadd.s32 %s40, 1
      %s42 = scalar_select %p39, %s40, %s41
      %p45 = pneg %p39
      %p46 = scmp.eq.s32.totalorder %s9, 8
      %p47 = por %p45, %p46
      %p48 = scmp.ne.s32.totalorder %s40, %s43
      %p49 = scmp.eq.s32.totalorder %s9, 0
      %p50 = por %p48, %p49
      %p51 = scmp.ne.s32.totalorder %s40, %s43
      %p52 = scmp.eq.s32.totalorder %s14, 8
      %p53 = por %p51, %p52
      %p54 = scmp.ne.s32.totalorder %s43, %s44
      %p55 = scmp.eq.s32.totalorder %s14, 0
      %p56 = por %p54, %p55
      %p57 = scmp.ne.s32.totalorder %s43, %s44
      %p58 = scmp.eq.s32.totalorder %s15, 8
      %p59 = por %p57, %p58
      %p61 = scmp.ne.s32.totalorder %s44, %s60
      %p62 = scmp.eq.s32.totalorder %s15, 0
      %p63 = por %p61, %p62
      %s64 = ssub.s32 %s18, %s27
      %s65 = ssub.s32 %s17, %s31
      %s66 = sor.u32 %s64, %s65
      %p67 = scmp.eq.s32.totalorder %s66, 0
      %s69 = sadd.s32 %s68, 1
      %s70 = scalar_select %p67, %s68, %s69
      %p73 = pneg %p67
      %p74 = scmp.eq.s32.totalorder %s9, 8
      %p75 = por %p73, %p74
      %p76 = scmp.ne.s32.totalorder %s68, %s71
      %p77 = scmp.eq.s32.totalorder %s9, 0
      %p78 = por %p76, %p77
      %p79 = scmp.ne.s32.totalorder %s68, %s71
      %p80 = scmp.eq.s32.totalorder %s14, 8
      %p81 = por %p79, %p80
      %p82 = scmp.ne.s32.totalorder %s71, %s72
      %p83 = scmp.eq.s32.totalorder %s14, 0
      %p84 = por %p82, %p83
      %p85 = scmp.ne.s32.totalorder %s71, %s72
      %p86 = scmp.eq.s32.totalorder %s15, 8
      %p87 = por %p85, %p86
      %p89 = scmp.ne.s32.totalorder %s72, %s88
      %p90 = scmp.eq.s32.totalorder %s15, 0
      %p91 = por %p89, %p90
      %s92 = ssub.s32 %s17, %s31
      %p93 = scmp.eq.s32.totalorder %s92, 0
      %s95 = sadd.s32 %s94, 1
      %s96 = scalar_select %p93, %s94, %s95
      %p99 = pneg %p93
      %p100 = scmp.eq.s32.totalorder %s9, 8
      %p101 = por %p99, %p100
      %p102 = scmp.ne.s32.totalorder %s94, %s97
      %p103 = scmp.eq.s32.totalorder %s9, 0
      %p104 = por %p102, %p103
      %p105 = scmp.ne.s32.totalorder %s94, %s97
      %p106 = scmp.eq.s32.totalorder %s14, 8
      %p107 = por %p105, %p106
      %p108 = scmp.ne.s32.totalorder %s97, %s98
      %p109 = scmp.eq.s32.totalorder %s14, 0
      %p110 = por %p108, %p109
      %p111 = scmp.ne.s32.totalorder %s97, %s98
      %p112 = scmp.eq.s32.totalorder %s15, 8
      %p113 = por %p111, %p112
      %p115 = scmp.ne.s32.totalorder %s98, %s114
      %p116 = scmp.eq.s32.totalorder %s15, 0
      %p117 = por %p115, %p116
      %s118 = ssub.s32 %s16, %s35
      %s119 = ssub.s32 %s17, %s31
      %s120 = sor.u32 %s118, %s119
      %p121 = scmp.eq.s32.totalorder %s120, 0
      %s123 = sadd.s32 %s122, 1
      %s124 = scalar_select %p121, %s122, %s123
      %p127 = pneg %p121
      %p128 = scmp.eq.s32.totalorder %s9, 8
      %p129 = por %p127, %p128
      %p130 = scmp.ne.s32.totalorder %s122, %s125
      %p131 = scmp.eq.s32.totalorder %s9, 0
      %p132 = por %p130, %p131
      %p133 = scmp.ne.s32.totalorder %s122, %s125
      %p134 = scmp.eq.s32.totalorder %s14, 8
      %p135 = por %p133, %p134
      %p136 = scmp.ne.s32.totalorder %s125, %s126
      %p137 = scmp.eq.s32.totalorder %s14, 0
      %p138 = por %p136, %p137
      %p139 = scmp.ne.s32.totalorder %s125, %s126
      %p140 = scmp.eq.s32.totalorder %s15, 8
      %p141 = por %p139, %p140
      %p143 = scmp.ne.s32.totalorder %s126, %s142
      %p144 = scmp.eq.s32.totalorder %s15, 0
      %p145 = por %p143, %p144
      %p146 = scmp.le.s32.totalorder 1, %s9
      %p147 = scmp.lt.s32.totalorder %s9, 10
      %p148 = pnand %p146, %p147
      %p149 = pneg %p148
      // Predicated region
      $region9: #{localizer_alexnet_forward.14} parent=5 // pred_check
        _
      $region10: #{localizer_alexnet_forward.14} parent=5 // pred_check_branch
        %151 = sbr.rel (%p148) target = $region12
      $region11: #{localizer_alexnet_forward.14} parent=5 // pred_region
        %s152 = ssub.s32 %s9, 1
      $region12: #{localizer_alexnet_forward.14} parent=5 // pred_fallthru
        _
      %p153 = scmp.lt.s32.totalorder %s9, 9
      // Predicated region
      $region13: #{localizer_alexnet_forward.14} parent=5 // pred_check
        %p154 = pneg %p153
      $region14: #{localizer_alexnet_forward.14} parent=5 // pred_check_branch
        %156 = sbr.rel (%p154) target = $region16
      $region15: #{localizer_alexnet_forward.14} parent=5 // pred_region
        // Predicated region
        $region17: #{localizer_alexnet_forward.14} parent=15 // pred_check
          %p157 = pneg %p50
        $region18: #{localizer_alexnet_forward.14} parent=15 // pred_check_branch
          %159 = sbr.rel (%p157) target = $region20
        $region19: #{localizer_alexnet_forward.14} parent=15 // pred_region
          %s160 = sand.u32 %s40, 1
          %s161 = sand.u32 %s40, 1
          %s162 = smul.addr %s161, 72
          %s163 = scalar_lea.vmem [#allocation3], %s162
          %s164 = smul.u32 3, %s16
          %s165 = smul.u32 6, %s18
          %s166 = smul.addr %s164, 18
          %s167 = sadd.s32 %s165, %s166
          %s168 = smul.addr %s167, 4
          %s169 = scalar_lea.vmem %s0, %s168
          // Predicated region
          $region21: #{localizer_alexnet_forward.14} parent=19 // pred_check
            _
          $region22: #{localizer_alexnet_forward.14} parent=19 // pred_check_branch
            %171 = sbr.rel (0) target = $region24
          $region23: #{localizer_alexnet_forward.14} parent=19 // pred_region
            // Predicated region
            $region25: #{localizer_alexnet_forward.14} parent=23 // pred_check
              _
            $region26: #{localizer_alexnet_forward.14} parent=23 // pred_check_branch
              %173 = sbr.rel (0) target = $region28
            $region27: #{localizer_alexnet_forward.14} parent=23 // pred_region
              loop: start=0, step=1, limit=1
              $region29: #{localizer_alexnet_forward.14} parent=27 // loop_pre_header
                _
              $region30: #{localizer_alexnet_forward.14} parent=27 // loop_header
                %s175 = sphi 0, %s179
                %p176 = scmp.ge.s32.totalorder %s175, 1
                %s180 = sphi %s169, %s169
                %s181 = sphi %s163, %s163
              $region31: #{localizer_alexnet_forward.14} parent=27 // loop_header_branch
                %178 = sbr.rel (%p176) target = $region35
              $region32: #{localizer_alexnet_forward.14} parent=27 // loop_body
                %v182 = vld [vmem:[%s180] sm:$0xff]
                %183 = vst [vmem:[%s181] sm:$0xff] %v182
                %v184 = vld [vmem:[%s180 + $0x8] sm:$0xff]
                %185 = vst [vmem:[%s181 + $0x8] sm:$0xff] %v184
                %v186 = vld [vmem:[%s180 + $0x10] sm:$0xff]
                %187 = vst [vmem:[%s181 + $0x10] sm:$0xff] %v186
                %v188 = vld [vmem:[%s180 + $0x48] sm:$0xff]
                %189 = vst [vmem:[%s181 + $0x18] sm:$0xff] %v188
                %v190 = vld [vmem:[%s180 + $0x50] sm:$0xff]
                %191 = vst [vmem:[%s181 + $0x20] sm:$0xff] %v190
                %v192 = vld [vmem:[%s180 + $0x58] sm:$0xff]
                %193 = vst [vmem:[%s181 + $0x28] sm:$0xff] %v192
                %v194 = vld [vmem:[%s180 + $0x90] sm:$0xff]
                %195 = vst [vmem:[%s181 + $0x30] sm:$0xff] %v194
                %v196 = vld [vmem:[%s180 + $0x98] sm:$0xff]
                %197 = vst [vmem:[%s181 + $0x38] sm:$0xff] %v196
                %v198 = vld [vmem:[%s180 + $0xa0] sm:$0xff]
                %199 = vst [vmem:[%s181 + $0x40] sm:$0xff] %v198
              $region33: #{localizer_alexnet_forward.14} parent=27 // loop_footer
                %s179 = sadd.s32 1, %s175
              $region34: #{localizer_alexnet_forward.14} parent=27 // loop_footer_branch
                %174 = sbr.rel target = $region30
              $region35: #{localizer_alexnet_forward.14} parent=27 // loop_exit
                _
            $region28: #{localizer_alexnet_forward.14} parent=23 // pred_fallthru
              _
            // Predicated region
            $region36: #{localizer_alexnet_forward.14} parent=23 // pred_check
              _
            $region37: #{localizer_alexnet_forward.14} parent=23 // pred_check_branch
              %201 = sbr.rel target = $region39
            $region38: #{localizer_alexnet_forward.14} parent=23 // pred_region
              _
            $region39: #{localizer_alexnet_forward.14} parent=23 // pred_fallthru
              _
          $region24: #{localizer_alexnet_forward.14} parent=19 // pred_fallthru
            _
          %202 = vnop
        $region20: #{localizer_alexnet_forward.14} parent=15 // pred_fallthru
          _
        // Predicated region
        $region40: #{localizer_alexnet_forward.14} parent=15 // pred_check
          %p203 = pneg %p78
        $region41: #{localizer_alexnet_forward.14} parent=15 // pred_check_branch
          %205 = sbr.rel (%p203) target = $region43
        $region42: #{localizer_alexnet_forward.14} parent=15 // pred_region
          %s206 = sand.u32 %s68, 1
          %s207 = sand.u32 %s68, 1
          %s208 = smul.addr %s207, 384
          %s209 = scalar_lea.vmem [#allocation4], %s208
          %s210 = smul.u32 96, %s18
          %s211 = smul.addr %s210, 3
          %s212 = sadd.s32 %s17, %s211
          %s213 = smul.addr %s212, 4
          %s214 = scalar_lea.vmem %s1, %s213
          // Predicated region
          $region44: #{localizer_alexnet_forward.14} parent=42 // pred_check
            _
          $region45: #{localizer_alexnet_forward.14} parent=42 // pred_check_branch
            %216 = sbr.rel (0) target = $region47
          $region46: #{localizer_alexnet_forward.14} parent=42 // pred_region
            // Predicated region
            $region48: #{localizer_alexnet_forward.14} parent=46 // pred_check
              _
            $region49: #{localizer_alexnet_forward.14} parent=46 // pred_check_branch
              %218 = sbr.rel target = $region51
            $region50: #{localizer_alexnet_forward.14} parent=46 // pred_region
              // Predicated region
              $region63: #{localizer_alexnet_forward.14} parent=50 // pred_check
                _
              $region64: #{localizer_alexnet_forward.14} parent=50 // pred_check_branch
                %424 = sbr.rel (0) target = $region66
              $region65: #{localizer_alexnet_forward.14} parent=50 // pred_region
                loop: start=0, step=1, limit=1
                $region67: #{localizer_alexnet_forward.14} parent=65 // loop_pre_header
                  _
                $region68: #{localizer_alexnet_forward.14} parent=65 // loop_header
                  %s426 = sphi 0, %s430
                  %p427 = scmp.ge.s32.totalorder %s426, 1
                  %s431 = sphi %s214, %s214
                  %s432 = sphi %s209, %s209
                $region69: #{localizer_alexnet_forward.14} parent=65 // loop_header_branch
                  %429 = sbr.rel (%p427) target = $region73
                $region70: #{localizer_alexnet_forward.14} parent=65 // loop_body
                  _
                $region71: #{localizer_alexnet_forward.14} parent=65 // loop_footer
                  %s430 = sadd.s32 1, %s426
                $region72: #{localizer_alexnet_forward.14} parent=65 // loop_footer_branch
                  %425 = sbr.rel target = $region68
                $region73: #{localizer_alexnet_forward.14} parent=65 // loop_exit
                  _
                %s434 = ssub.s32 16, 1
                loop: start=0, step=1, limit=1
                $region74: #{localizer_alexnet_forward.14} parent=65 // loop_pre_header
                  _
                $region75: #{localizer_alexnet_forward.14} parent=65 // loop_header
                  %s436 = sphi 0, %s440
                  %p437 = scmp.ge.s32.totalorder %s436, 1
                  %s441 = sphi %s214, %s214
                  %s442 = sphi %s209, %s209
                $region76: #{localizer_alexnet_forward.14} parent=65 // loop_header_branch
                  %439 = sbr.rel (%p437) target = $region80
                $region77: #{localizer_alexnet_forward.14} parent=65 // loop_body
                  %v443 = vld [vmem:[%s441] sm:%s434]
                  %444 = vst [vmem:[%s442] sm:%s434] %v443
                  %v445 = vld [vmem:[%s441 + $0xc] sm:%s434]
                  %446 = vst [vmem:[%s442 + $0x4] sm:%s434] %v445
                  %v447 = vld [vmem:[%s441 + $0x18] sm:%s434]
                  %448 = vst [vmem:[%s442 + $0x8] sm:%s434] %v447
                  %v449 = vld [vmem:[%s441 + $0x24] sm:%s434]
                  %450 = vst [vmem:[%s442 + $0xc] sm:%s434] %v449
                  %v451 = vld [vmem:[%s441 + $0x30] sm:%s434]
                  %452 = vst [vmem:[%s442 + $0x10] sm:%s434] %v451
                  %v453 = vld [vmem:[%s441 + $0x3c] sm:%s434]
                  %454 = vst [vmem:[%s442 + $0x14] sm:%s434] %v453
                  %v455 = vld [vmem:[%s441 + $0x48] sm:%s434]
                  %456 = vst [vmem:[%s442 + $0x18] sm:%s434] %v455
                  %v457 = vld [vmem:[%s441 + $0x54] sm:%s434]
                  %458 = vst [vmem:[%s442 + $0x1c] sm:%s434] %v457
                  %v459 = vld [vmem:[%s441 + $0x60] sm:%s434]
                  %460 = vst [vmem:[%s442 + $0x20] sm:%s434] %v459
                  %v461 = vld [vmem:[%s441 + $0x6c] sm:%s434]
                  %462 = vst [vmem:[%s442 + $0x24] sm:%s434] %v461
                  %v463 = vld [vmem:[%s441 + $0x78] sm:%s434]
                  %464 = vst [vmem:[%s442 + $0x28] sm:%s434] %v463
                  %v465 = vld [vmem:[%s441 + $0x84] sm:%s434]
                  %466 = vst [vmem:[%s442 + $0x2c] sm:%s434] %v465
                  %v467 = vld [vmem:[%s441 + $0x90] sm:%s434]
                  %468 = vst [vmem:[%s442 + $0x30] sm:%s434] %v467
                  %v469 = vld [vmem:[%s441 + $0x9c] sm:%s434]
                  %470 = vst [vmem:[%s442 + $0x34] sm:%s434] %v469
                  %v471 = vld [vmem:[%s441 + $0xa8] sm:%s434]
                  %472 = vst [vmem:[%s442 + $0x38] sm:%s434] %v471
                  %v473 = vld [vmem:[%s441 + $0xb4] sm:%s434]
                  %474 = vst [vmem:[%s442 + $0x3c] sm:%s434] %v473
                  %v475 = vld [vmem:[%s441 + $0xc0] sm:%s434]
                  %476 = vst [vmem:[%s442 + $0x40] sm:%s434] %v475
                  %v477 = vld [vmem:[%s441 + $0xcc] sm:%s434]
                  %478 = vst [vmem:[%s442 + $0x44] sm:%s434] %v477
                  %v479 = vld [vmem:[%s441 + $0xd8] sm:%s434]
                  %480 = vst [vmem:[%s442 + $0x48] sm:%s434] %v479
                  %v481 = vld [vmem:[%s441 + $0xe4] sm:%s434]
                  %482 = vst [vmem:[%s442 + $0x4c] sm:%s434] %v481
                  %v483 = vld [vmem:[%s441 + $0xf0] sm:%s434]
                  %484 = vst [vmem:[%s442 + $0x50] sm:%s434] %v483
                  %v485 = vld [vmem:[%s441 + $0xfc] sm:%s434]
                  %486 = vst [vmem:[%s442 + $0x54] sm:%s434] %v485
                  %v487 = vld [vmem:[%s441 + $0x108] sm:%s434]
                  %488 = vst [vmem:[%s442 + $0x58] sm:%s434] %v487
                  %v489 = vld [vmem:[%s441 + $0x114] sm:%s434]
                  %490 = vst [vmem:[%s442 + $0x5c] sm:%s434] %v489
                  %v491 = vld [vmem:[%s441 + $0x120] sm:%s434]
                  %492 = vst [vmem:[%s442 + $0x60] sm:%s434] %v491
                  %v493 = vld [vmem:[%s441 + $0x12c] sm:%s434]
                  %494 = vst [vmem:[%s442 + $0x64] sm:%s434] %v493
                  %v495 = vld [vmem:[%s441 + $0x138] sm:%s434]
                  %496 = vst [vmem:[%s442 + $0x68] sm:%s434] %v495
                  %v497 = vld [vmem:[%s441 + $0x144] sm:%s434]
                  %498 = vst [vmem:[%s442 + $0x6c] sm:%s434] %v497
                  %v499 = vld [vmem:[%s441 + $0x150] sm:%s434]
                  %500 = vst [vmem:[%s442 + $0x70] sm:%s434] %v499
                  %v501 = vld [vmem:[%s441 + $0x15c] sm:%s434]
                  %502 = vst [vmem:[%s442 + $0x74] sm:%s434] %v501
                  %v503 = vld [vmem:[%s441 + $0x168] sm:%s434]
                  %504 = vst [vmem:[%s442 + $0x78] sm:%s434] %v503
                  %v505 = vld [vmem:[%s441 + $0x174] sm:%s434]
                  %506 = vst [vmem:[%s442 + $0x7c] sm:%s434] %v505
                  %v507 = vld [vmem:[%s441 + $0x180] sm:%s434]
                  %508 = vst [vmem:[%s442 + $0x80] sm:%s434] %v507
                  %v509 = vld [vmem:[%s441 + $0x18c] sm:%s434]
                  %510 = vst [vmem:[%s442 + $0x84] sm:%s434] %v509
                  %v511 = vld [vmem:[%s441 + $0x198] sm:%s434]
                  %512 = vst [vmem:[%s442 + $0x88] sm:%s434] %v511
                  %v513 = vld [vmem:[%s441 + $0x1a4] sm:%s434]
                  %514 = vst [vmem:[%s442 + $0x8c] sm:%s434] %v513
                  %v515 = vld [vmem:[%s441 + $0x1b0] sm:%s434]
                  %516 = vst [vmem:[%s442 + $0x90] sm:%s434] %v515
                  %v517 = vld [vmem:[%s441 + $0x1bc] sm:%s434]
                  %518 = vst [vmem:[%s442 + $0x94] sm:%s434] %v517
                  %v519 = vld [vmem:[%s441 + $0x1c8] sm:%s434]
                  %520 = vst [vmem:[%s442 + $0x98] sm:%s434] %v519
                  %v521 = vld [vmem:[%s441 + $0x1d4] sm:%s434]
                  %522 = vst [vmem:[%s442 + $0x9c] sm:%s434] %v521
                  %v523 = vld [vmem:[%s441 + $0x1e0] sm:%s434]
                  %524 = vst [vmem:[%s442 + $0xa0] sm:%s434] %v523
                  %v525 = vld [vmem:[%s441 + $0x1ec] sm:%s434]
                  %526 = vst [vmem:[%s442 + $0xa4] sm:%s434] %v525
                  %v527 = vld [vmem:[%s441 + $0x1f8] sm:%s434]
                  %528 = vst [vmem:[%s442 + $0xa8] sm:%s434] %v527
                  %v529 = vld [vmem:[%s441 + $0x204] sm:%s434]
                  %530 = vst [vmem:[%s442 + $0xac] sm:%s434] %v529
                  %v531 = vld [vmem:[%s441 + $0x210] sm:%s434]
                  %532 = vst [vmem:[%s442 + $0xb0] sm:%s434] %v531
                  %v533 = vld [vmem:[%s441 + $0x21c] sm:%s434]
                  %534 = vst [vmem:[%s442 + $0xb4] sm:%s434] %v533
                  %v535 = vld [vmem:[%s441 + $0x228] sm:%s434]
                  %536 = vst [vmem:[%s442 + $0xb8] sm:%s434] %v535
                  %v537 = vld [vmem:[%s441 + $0x234] sm:%s434]
                  %538 = vst [vmem:[%s442 + $0xbc] sm:%s434] %v537
                  %v539 = vld [vmem:[%s441 + $0x240] sm:%s434]
                  %540 = vst [vmem:[%s442 + $0xc0] sm:%s434] %v539
                  %v541 = vld [vmem:[%s441 + $0x24c] sm:%s434]
                  %542 = vst [vmem:[%s442 + $0xc4] sm:%s434] %v541
                  %v543 = vld [vmem:[%s441 + $0x258] sm:%s434]
                  %544 = vst [vmem:[%s442 + $0xc8] sm:%s434] %v543
                  %v545 = vld [vmem:[%s441 + $0x264] sm:%s434]
                  %546 = vst [vmem:[%s442 + $0xcc] sm:%s434] %v545
                  %v547 = vld [vmem:[%s441 + $0x270] sm:%s434]
                  %548 = vst [vmem:[%s442 + $0xd0] sm:%s434] %v547
                  %v549 = vld [vmem:[%s441 + $0x27c] sm:%s434]
                  %550 = vst [vmem:[%s442 + $0xd4] sm:%s434] %v549
                  %v551 = vld [vmem:[%s441 + $0x288] sm:%s434]
                  %552 = vst [vmem:[%s442 + $0xd8] sm:%s434] %v551
                  %v553 = vld [vmem:[%s441 + $0x294] sm:%s434]
                  %554 = vst [vmem:[%s442 + $0xdc] sm:%s434] %v553
                  %v555 = vld [vmem:[%s441 + $0x2a0] sm:%s434]
                  %556 = vst [vmem:[%s442 + $0xe0] sm:%s434] %v555
                  %v557 = vld [vmem:[%s441 + $0x2ac] sm:%s434]
                  %558 = vst [vmem:[%s442 + $0xe4] sm:%s434] %v557
                  %v559 = vld [vmem:[%s441 + $0x2b8] sm:%s434]
                  %560 = vst [vmem:[%s442 + $0xe8] sm:%s434] %v559
                  %v561 = vld [vmem:[%s441 + $0x2c4] sm:%s434]
                  %562 = vst [vmem:[%s442 + $0xec] sm:%s434] %v561
                  %v563 = vld [vmem:[%s441 + $0x2d0] sm:%s434]
                  %564 = vst [vmem:[%s442 + $0xf0] sm:%s434] %v563
                  %v565 = vld [vmem:[%s441 + $0x2dc] sm:%s434]
                  %566 = vst [vmem:[%s442 + $0xf4] sm:%s434] %v565
                  %v567 = vld [vmem:[%s441 + $0x2e8] sm:%s434]
                  %568 = vst [vmem:[%s442 + $0xf8] sm:%s434] %v567
                  %v569 = vld [vmem:[%s441 + $0x2f4] sm:%s434]
                  %570 = vst [vmem:[%s442 + $0xfc] sm:%s434] %v569
                  %v571 = vld [vmem:[%s441 + $0x300] sm:%s434]
                  %572 = vst [vmem:[%s442 + $0x100] sm:%s434] %v571
                  %v573 = vld [vmem:[%s441 + $0x30c] sm:%s434]
                  %574 = vst [vmem:[%s442 + $0x104] sm:%s434] %v573
                  %v575 = vld [vmem:[%s441 + $0x318] sm:%s434]
                  %576 = vst [vmem:[%s442 + $0x108] sm:%s434] %v575
                  %v577 = vld [vmem:[%s441 + $0x324] sm:%s434]
                  %578 = vst [vmem:[%s442 + $0x10c] sm:%s434] %v577
                  %v579 = vld [vmem:[%s441 + $0x330] sm:%s434]
                  %580 = vst [vmem:[%s442 + $0x110] sm:%s434] %v579
                  %v581 = vld [vmem:[%s441 + $0x33c] sm:%s434]
                  %582 = vst [vmem:[%s442 + $0x114] sm:%s434] %v581
                  %v583 = vld [vmem:[%s441 + $0x348] sm:%s434]
                  %584 = vst [vmem:[%s442 + $0x118] sm:%s434] %v583
                  %v585 = vld [vmem:[%s441 + $0x354] sm:%s434]
                  %586 = vst [vmem:[%s442 + $0x11c] sm:%s434] %v585
                  %v587 = vld [vmem:[%s441 + $0x360] sm:%s434]
                  %588 = vst [vmem:[%s442 + $0x120] sm:%s434] %v587
                  %v589 = vld [vmem:[%s441 + $0x36c] sm:%s434]
                  %590 = vst [vmem:[%s442 + $0x124] sm:%s434] %v589
                  %v591 = vld [vmem:[%s441 + $0x378] sm:%s434]
                  %592 = vst [vmem:[%s442 + $0x128] sm:%s434] %v591
                  %v593 = vld [vmem:[%s441 + $0x384] sm:%s434]
                  %594 = vst [vmem:[%s442 + $0x12c] sm:%s434] %v593
                  %v595 = vld [vmem:[%s441 + $0x390] sm:%s434]
                  %596 = vst [vmem:[%s442 + $0x130] sm:%s434] %v595
                  %v597 = vld [vmem:[%s441 + $0x39c] sm:%s434]
                  %598 = vst [vmem:[%s442 + $0x134] sm:%s434] %v597
                  %v599 = vld [vmem:[%s441 + $0x3a8] sm:%s434]
                  %600 = vst [vmem:[%s442 + $0x138] sm:%s434] %v599
                  %v601 = vld [vmem:[%s441 + $0x3b4] sm:%s434]
                  %602 = vst [vmem:[%s442 + $0x13c] sm:%s434] %v601
                  %v603 = vld [vmem:[%s441 + $0x3c0] sm:%s434]
                  %604 = vst [vmem:[%s442 + $0x140] sm:%s434] %v603
                  %v605 = vld [vmem:[%s441 + $0x3cc] sm:%s434]
                  %606 = vst [vmem:[%s442 + $0x144] sm:%s434] %v605
                  %v607 = vld [vmem:[%s441 + $0x3d8] sm:%s434]
                  %608 = vst [vmem:[%s442 + $0x148] sm:%s434] %v607
                  %v609 = vld [vmem:[%s441 + $0x3e4] sm:%s434]
                  %610 = vst [vmem:[%s442 + $0x14c] sm:%s434] %v609
                  %v611 = vld [vmem:[%s441 + $0x3f0] sm:%s434]
                  %612 = vst [vmem:[%s442 + $0x150] sm:%s434] %v611
                  %v613 = vld [vmem:[%s441 + $0x3fc] sm:%s434]
                  %614 = vst [vmem:[%s442 + $0x154] sm:%s434] %v613
                  %v615 = vld [vmem:[%s441 + $0x408] sm:%s434]
                  %616 = vst [vmem:[%s442 + $0x158] sm:%s434] %v615
                  %v617 = vld [vmem:[%s441 + $0x414] sm:%s434]
                  %618 = vst [vmem:[%s442 + $0x15c] sm:%s434] %v617
                  %v619 = vld [vmem:[%s441 + $0x420] sm:%s434]
                  %620 = vst [vmem:[%s442 + $0x160] sm:%s434] %v619
                  %v621 = vld [vmem:[%s441 + $0x42c] sm:%s434]
                  %622 = vst [vmem:[%s442 + $0x164] sm:%s434] %v621
                  %v623 = vld [vmem:[%s441 + $0x438] sm:%s434]
                  %624 = vst [vmem:[%s442 + $0x168] sm:%s434] %v623
                  %v625 = vld [vmem:[%s441 + $0x444] sm:%s434]
                  %626 = vst [vmem:[%s442 + $0x16c] sm:%s434] %v625
                  %v627 = vld [vmem:[%s441 + $0x450] sm:%s434]
                  %628 = vst [vmem:[%s442 + $0x170] sm:%s434] %v627
                  %v629 = vld [vmem:[%s441 + $0x45c] sm:%s434]
                  %630 = vst [vmem:[%s442 + $0x174] sm:%s434] %v629
                  %v631 = vld [vmem:[%s441 + $0x468] sm:%s434]
                  %632 = vst [vmem:[%s442 + $0x178] sm:%s434] %v631
                  %v633 = vld [vmem:[%s441 + $0x474] sm:%s434]
                  %634 = vst [vmem:[%s442 + $0x17c] sm:%s434] %v633
                $region78: #{localizer_alexnet_forward.14} parent=65 // loop_footer
                  %s440 = sadd.s32 1, %s436
                $region79: #{localizer_alexnet_forward.14} parent=65 // loop_footer_branch
                  %435 = sbr.rel target = $region75
                $region80: #{localizer_alexnet_forward.14} parent=65 // loop_exit
                  _
              $region66: #{localizer_alexnet_forward.14} parent=50 // pred_fallthru
                _
            $region51: #{localizer_alexnet_forward.14} parent=46 // pred_fallthru
              _
            // Predicated region
            $region52: #{localizer_alexnet_forward.14} parent=46 // pred_check
              _
            $region53: #{localizer_alexnet_forward.14} parent=46 // pred_check_branch
              %220 = sbr.rel (0) target = $region55
            $region54: #{localizer_alexnet_forward.14} parent=46 // pred_region
              %s222 = ssub.s32 16, 1
              loop: start=0, step=1, limit=1
              $region56: #{localizer_alexnet_forward.14} parent=54 // loop_pre_header
                _
              $region57: #{localizer_alexnet_forward.14} parent=54 // loop_header
                %s224 = sphi 0, %s228
                %p225 = scmp.ge.s32.totalorder %s224, 1
                %s229 = sphi %s214, %s214
                %s230 = sphi %s209, %s209
              $region58: #{localizer_alexnet_forward.14} parent=54 // loop_header_branch
                %227 = sbr.rel (%p225) target = $region62
              $region59: #{localizer_alexnet_forward.14} parent=54 // loop_body
                %v231 = vld [vmem:[%s229] sm:%s222]
                %232 = vst [vmem:[%s230] sm:%s222] %v231
                %v233 = vld [vmem:[%s229 + $0xc] sm:%s222]
                %234 = vst [vmem:[%s230 + $0x4] sm:%s222] %v233
                %v235 = vld [vmem:[%s229 + $0x18] sm:%s222]
                %236 = vst [vmem:[%s230 + $0x8] sm:%s222] %v235
                %v237 = vld [vmem:[%s229 + $0x24] sm:%s222]
                %238 = vst [vmem:[%s230 + $0xc] sm:%s222] %v237
                %v239 = vld [vmem:[%s229 + $0x30] sm:%s222]
                %240 = vst [vmem:[%s230 + $0x10] sm:%s222] %v239
                %v241 = vld [vmem:[%s229 + $0x3c] sm:%s222]
                %242 = vst [vmem:[%s230 + $0x14] sm:%s222] %v241
                %v243 = vld [vmem:[%s229 + $0x48] sm:%s222]
                %244 = vst [vmem:[%s230 + $0x18] sm:%s222] %v243
                %v245 = vld [vmem:[%s229 + $0x54] sm:%s222]
                %246 = vst [vmem:[%s230 + $0x1c] sm:%s222] %v245
                %v247 = vld [vmem:[%s229 + $0x60] sm:%s222]
                %248 = vst [vmem:[%s230 + $0x20] sm:%s222] %v247
                %v249 = vld [vmem:[%s229 + $0x6c] sm:%s222]
                %250 = vst [vmem:[%s230 + $0x24] sm:%s222] %v249
                %v251 = vld [vmem:[%s229 + $0x78] sm:%s222]
                %252 = vst [vmem:[%s230 + $0x28] sm:%s222] %v251
                %v253 = vld [vmem:[%s229 + $0x84] sm:%s222]
                %254 = vst [vmem:[%s230 + $0x2c] sm:%s222] %v253
                %v255 = vld [vmem:[%s229 + $0x90] sm:%s222]
                %256 = vst [vmem:[%s230 + $0x30] sm:%s222] %v255
                %v257 = vld [vmem:[%s229 + $0x9c] sm:%s222]
                %258 = vst [vmem:[%s230 + $0x34] sm:%s222] %v257
                %v259 = vld [vmem:[%s229 + $0xa8] sm:%s222]
                %260 = vst [vmem:[%s230 + $0x38] sm:%s222] %v259
                %v261 = vld [vmem:[%s229 + $0xb4] sm:%s222]
                %262 = vst [vmem:[%s230 + $0x3c] sm:%s222] %v261
                %v263 = vld [vmem:[%s229 + $0xc0] sm:%s222]
                %264 = vst [vmem:[%s230 + $0x40] sm:%s222] %v263
                %v265 = vld [vmem:[%s229 + $0xcc] sm:%s222]
                %266 = vst [vmem:[%s230 + $0x44] sm:%s222] %v265
                %v267 = vld [vmem:[%s229 + $0xd8] sm:%s222]
                %268 = vst [vmem:[%s230 + $0x48] sm:%s222] %v267
                %v269 = vld [vmem:[%s229 + $0xe4] sm:%s222]
                %270 = vst [vmem:[%s230 + $0x4c] sm:%s222] %v269
                %v271 = vld [vmem:[%s229 + $0xf0] sm:%s222]
                %272 = vst [vmem:[%s230 + $0x50] sm:%s222] %v271
                %v273 = vld [vmem:[%s229 + $0xfc] sm:%s222]
                %274 = vst [vmem:[%s230 + $0x54] sm:%s222] %v273
                %v275 = vld [vmem:[%s229 + $0x108] sm:%s222]
                %276 = vst [vmem:[%s230 + $0x58] sm:%s222] %v275
                %v277 = vld [vmem:[%s229 + $0x114] sm:%s222]
                %278 = vst [vmem:[%s230 + $0x5c] sm:%s222] %v277
                %v279 = vld [vmem:[%s229 + $0x120] sm:%s222]
                %280 = vst [vmem:[%s230 + $0x60] sm:%s222] %v279
                %v281 = vld [vmem:[%s229 + $0x12c] sm:%s222]
                %282 = vst [vmem:[%s230 + $0x64] sm:%s222] %v281
                %v283 = vld [vmem:[%s229 + $0x138] sm:%s222]
                %284 = vst [vmem:[%s230 + $0x68] sm:%s222] %v283
                %v285 = vld [vmem:[%s229 + $0x144] sm:%s222]
                %286 = vst [vmem:[%s230 + $0x6c] sm:%s222] %v285
                %v287 = vld [vmem:[%s229 + $0x150] sm:%s222]
                %288 = vst [vmem:[%s230 + $0x70] sm:%s222] %v287
                %v289 = vld [vmem:[%s229 + $0x15c] sm:%s222]
                %290 = vst [vmem:[%s230 + $0x74] sm:%s222] %v289
                %v291 = vld [vmem:[%s229 + $0x168] sm:%s222]
                %292 = vst [vmem:[%s230 + $0x78] sm:%s222] %v291
                %v293 = vld [vmem:[%s229 + $0x174] sm:%s222]
                %294 = vst [vmem:[%s230 + $0x7c] sm:%s222] %v293
                %v295 = vld [vmem:[%s229 + $0x180] sm:%s222]
                %296 = vst [vmem:[%s230 + $0x80] sm:%s222] %v295
                %v297 = vld [vmem:[%s229 + $0x18c] sm:%s222]
                %298 = vst [vmem:[%s230 + $0x84] sm:%s222] %v297
                %v299 = vld [vmem:[%s229 + $0x198] sm:%s222]
                %300 = vst [vmem:[%s230 + $0x88] sm:%s222] %v299
                %v301 = vld [vmem:[%s229 + $0x1a4] sm:%s222]
                %302 = vst [vmem:[%s230 + $0x8c] sm:%s222] %v301
                %v303 = vld [vmem:[%s229 + $0x1b0] sm:%s222]
                %304 = vst [vmem:[%s230 + $0x90] sm:%s222] %v303
                %v305 = vld [vmem:[%s229 + $0x1bc] sm:%s222]
                %306 = vst [vmem:[%s230 + $0x94] sm:%s222] %v305
                %v307 = vld [vmem:[%s229 + $0x1c8] sm:%s222]
                %308 = vst [vmem:[%s230 + $0x98] sm:%s222] %v307
                %v309 = vld [vmem:[%s229 + $0x1d4] sm:%s222]
                %310 = vst [vmem:[%s230 + $0x9c] sm:%s222] %v309
                %v311 = vld [vmem:[%s229 + $0x1e0] sm:%s222]
                %312 = vst [vmem:[%s230 + $0xa0] sm:%s222] %v311
                %v313 = vld [vmem:[%s229 + $0x1ec] sm:%s222]
                %314 = vst [vmem:[%s230 + $0xa4] sm:%s222] %v313
                %v315 = vld [vmem:[%s229 + $0x1f8] sm:%s222]
                %316 = vst [vmem:[%s230 + $0xa8] sm:%s222] %v315
                %v317 = vld [vmem:[%s229 + $0x204] sm:%s222]
                %318 = vst [vmem:[%s230 + $0xac] sm:%s222] %v317
                %v319 = vld [vmem:[%s229 + $0x210] sm:%s222]
                %320 = vst [vmem:[%s230 + $0xb0] sm:%s222] %v319
                %v321 = vld [vmem:[%s229 + $0x21c] sm:%s222]
                %322 = vst [vmem:[%s230 + $0xb4] sm:%s222] %v321
                %v323 = vld [vmem:[%s229 + $0x228] sm:%s222]
                %324 = vst [vmem:[%s230 + $0xb8] sm:%s222] %v323
                %v325 = vld [vmem:[%s229 + $0x234] sm:%s222]
                %326 = vst [vmem:[%s230 + $0xbc] sm:%s222] %v325
                %v327 = vld [vmem:[%s229 + $0x240] sm:%s222]
                %328 = vst [vmem:[%s230 + $0xc0] sm:%s222] %v327
                %v329 = vld [vmem:[%s229 + $0x24c] sm:%s222]
                %330 = vst [vmem:[%s230 + $0xc4] sm:%s222] %v329
                %v331 = vld [vmem:[%s229 + $0x258] sm:%s222]
                %332 = vst [vmem:[%s230 + $0xc8] sm:%s222] %v331
                %v333 = vld [vmem:[%s229 + $0x264] sm:%s222]
                %334 = vst [vmem:[%s230 + $0xcc] sm:%s222] %v333
                %v335 = vld [vmem:[%s229 + $0x270] sm:%s222]
                %336 = vst [vmem:[%s230 + $0xd0] sm:%s222] %v335
                %v337 = vld [vmem:[%s229 + $0x27c] sm:%s222]
                %338 = vst [vmem:[%s230 + $0xd4] sm:%s222] %v337
                %v339 = vld [vmem:[%s229 + $0x288] sm:%s222]
                %340 = vst [vmem:[%s230 + $0xd8] sm:%s222] %v339
                %v341 = vld [vmem:[%s229 + $0x294] sm:%s222]
                %342 = vst [vmem:[%s230 + $0xdc] sm:%s222] %v341
                %v343 = vld [vmem:[%s229 + $0x2a0] sm:%s222]
                %344 = vst [vmem:[%s230 + $0xe0] sm:%s222] %v343
                %v345 = vld [vmem:[%s229 + $0x2ac] sm:%s222]
                %346 = vst [vmem:[%s230 + $0xe4] sm:%s222] %v345
                %v347 = vld [vmem:[%s229 + $0x2b8] sm:%s222]
                %348 = vst [vmem:[%s230 + $0xe8] sm:%s222] %v347
                %v349 = vld [vmem:[%s229 + $0x2c4] sm:%s222]
                %350 = vst [vmem:[%s230 + $0xec] sm:%s222] %v349
                %v351 = vld [vmem:[%s229 + $0x2d0] sm:%s222]
                %352 = vst [vmem:[%s230 + $0xf0] sm:%s222] %v351
                %v353 = vld [vmem:[%s229 + $0x2dc] sm:%s222]
                %354 = vst [vmem:[%s230 + $0xf4] sm:%s222] %v353
                %v355 = vld [vmem:[%s229 + $0x2e8] sm:%s222]
                %356 = vst [vmem:[%s230 + $0xf8] sm:%s222] %v355
                %v357 = vld [vmem:[%s229 + $0x2f4] sm:%s222]
                %358 = vst [vmem:[%s230 + $0xfc] sm:%s222] %v357
                %v359 = vld [vmem:[%s229 + $0x300] sm:%s222]
                %360 = vst [vmem:[%s230 + $0x100] sm:%s222] %v359
                %v361 = vld [vmem:[%s229 + $0x30c] sm:%s222]
                %362 = vst [vmem:[%s230 + $0x104] sm:%s222] %v361
                %v363 = vld [vmem:[%s229 + $0x318] sm:%s222]
                %364 = vst [vmem:[%s230 + $0x108] sm:%s222] %v363
                %v365 = vld [vmem:[%s229 + $0x324] sm:%s222]
                %366 = vst [vmem:[%s230 + $0x10c] sm:%s222] %v365
                %v367 = vld [vmem:[%s229 + $0x330] sm:%s222]
                %368 = vst [vmem:[%s230 + $0x110] sm:%s222] %v367
                %v369 = vld [vmem:[%s229 + $0x33c] sm:%s222]
                %370 = vst [vmem:[%s230 + $0x114] sm:%s222] %v369
                %v371 = vld [vmem:[%s229 + $0x348] sm:%s222]
                %372 = vst [vmem:[%s230 + $0x118] sm:%s222] %v371
                %v373 = vld [vmem:[%s229 + $0x354] sm:%s222]
                %374 = vst [vmem:[%s230 + $0x11c] sm:%s222] %v373
                %v375 = vld [vmem:[%s229 + $0x360] sm:%s222]
                %376 = vst [vmem:[%s230 + $0x120] sm:%s222] %v375
                %v377 = vld [vmem:[%s229 + $0x36c] sm:%s222]
                %378 = vst [vmem:[%s230 + $0x124] sm:%s222] %v377
                %v379 = vld [vmem:[%s229 + $0x378] sm:%s222]
                %380 = vst [vmem:[%s230 + $0x128] sm:%s222] %v379
                %v381 = vld [vmem:[%s229 + $0x384] sm:%s222]
                %382 = vst [vmem:[%s230 + $0x12c] sm:%s222] %v381
                %v383 = vld [vmem:[%s229 + $0x390] sm:%s222]
                %384 = vst [vmem:[%s230 + $0x130] sm:%s222] %v383
                %v385 = vld [vmem:[%s229 + $0x39c] sm:%s222]
                %386 = vst [vmem:[%s230 + $0x134] sm:%s222] %v385
                %v387 = vld [vmem:[%s229 + $0x3a8] sm:%s222]
                %388 = vst [vmem:[%s230 + $0x138] sm:%s222] %v387
                %v389 = vld [vmem:[%s229 + $0x3b4] sm:%s222]
                %390 = vst [vmem:[%s230 + $0x13c] sm:%s222] %v389
                %v391 = vld [vmem:[%s229 + $0x3c0] sm:%s222]
                %392 = vst [vmem:[%s230 + $0x140] sm:%s222] %v391
                %v393 = vld [vmem:[%s229 + $0x3cc] sm:%s222]
                %394 = vst [vmem:[%s230 + $0x144] sm:%s222] %v393
                %v395 = vld [vmem:[%s229 + $0x3d8] sm:%s222]
                %396 = vst [vmem:[%s230 + $0x148] sm:%s222] %v395
                %v397 = vld [vmem:[%s229 + $0x3e4] sm:%s222]
                %398 = vst [vmem:[%s230 + $0x14c] sm:%s222] %v397
                %v399 = vld [vmem:[%s229 + $0x3f0] sm:%s222]
                %400 = vst [vmem:[%s230 + $0x150] sm:%s222] %v399
                %v401 = vld [vmem:[%s229 + $0x3fc] sm:%s222]
                %402 = vst [vmem:[%s230 + $0x154] sm:%s222] %v401
                %v403 = vld [vmem:[%s229 + $0x408] sm:%s222]
                %404 = vst [vmem:[%s230 + $0x158] sm:%s222] %v403
                %v405 = vld [vmem:[%s229 + $0x414] sm:%s222]
                %406 = vst [vmem:[%s230 + $0x15c] sm:%s222] %v405
                %v407 = vld [vmem:[%s229 + $0x420] sm:%s222]
                %408 = vst [vmem:[%s230 + $0x160] sm:%s222] %v407
                %v409 = vld [vmem:[%s229 + $0x42c] sm:%s222]
                %410 = vst [vmem:[%s230 + $0x164] sm:%s222] %v409
                %v411 = vld [vmem:[%s229 + $0x438] sm:%s222]
                %412 = vst [vmem:[%s230 + $0x168] sm:%s222] %v411
                %v413 = vld [vmem:[%s229 + $0x444] sm:%s222]
                %414 = vst [vmem:[%s230 + $0x16c] sm:%s222] %v413
                %v415 = vld [vmem:[%s229 + $0x450] sm:%s222]
                %416 = vst [vmem:[%s230 + $0x170] sm:%s222] %v415
                %v417 = vld [vmem:[%s229 + $0x45c] sm:%s222]
                %418 = vst [vmem:[%s230 + $0x174] sm:%s222] %v417
                %v419 = vld [vmem:[%s229 + $0x468] sm:%s222]
                %420 = vst [vmem:[%s230 + $0x178] sm:%s222] %v419
                %v421 = vld [vmem:[%s229 + $0x474] sm:%s222]
                %422 = vst [vmem:[%s230 + $0x17c] sm:%s222] %v421
              $region60: #{localizer_alexnet_forward.14} parent=54 // loop_footer
                %s228 = sadd.s32 1, %s224
              $region61: #{localizer_alexnet_forward.14} parent=54 // loop_footer_branch
                %223 = sbr.rel target = $region57
              $region62: #{localizer_alexnet_forward.14} parent=54 // loop_exit
                _
            $region55: #{localizer_alexnet_forward.14} parent=46 // pred_fallthru
              _
          $region47: #{localizer_alexnet_forward.14} parent=42 // pred_fallthru
            _
          %635 = vnop
        $region43: #{localizer_alexnet_forward.14} parent=15 // pred_fallthru
          _
        // Predicated region
        $region81: #{localizer_alexnet_forward.14} parent=15 // pred_check
          %p636 = pneg %p104
        $region82: #{localizer_alexnet_forward.14} parent=15 // pred_check_branch
          %638 = sbr.rel (%p636) target = $region84
        $region83: #{localizer_alexnet_forward.14} parent=15 // pred_region
          %p639 = scmp.lt.s32.totalorder %s17, 2
          %s640 = scalar_select %p639, %s17, 2
          %s641 = scalar_lea.vmem %s2, %s640
        $region84: #{localizer_alexnet_forward.14} parent=15 // pred_fallthru
          _
      $region16: #{localizer_alexnet_forward.14} parent=5 // pred_fallthru
        _
      %p642 = scmp.le.s32.totalorder 1, %s9
      %p643 = scmp.lt.s32.totalorder %s9, 10
      %p644 = pnand %p642, %p643
      %p645 = pneg %p644
      // Predicated region
      $region85: #{localizer_alexnet_forward.14} parent=5 // pred_check
        _
      $region86: #{localizer_alexnet_forward.14} parent=5 // pred_check_branch
        %647 = sbr.rel (%p644) target = $region88
      $region87: #{localizer_alexnet_forward.14} parent=5 // pred_region
        %s648 = ssub.s32 %s9, 1
        %s649 = sand.u32 %s43, 1
        %s650 = sand.u32 %s43, 1
        %s651 = smul.addr %s650, 72
        %s652 = scalar_lea.vmem [#allocation3], %s651
        // Predicated region
        $region89: #{localizer_alexnet_forward.14} parent=87 // pred_check
          %p653 = pneg %p56
        $region90: #{localizer_alexnet_forward.14} parent=87 // pred_check_branch
          %655 = sbr.rel (%p653) target = $region92
        $region91: #{localizer_alexnet_forward.14} parent=87 // pred_region
          _
        $region92: #{localizer_alexnet_forward.14} parent=87 // pred_fallthru
          _
        %s656 = sand.u32 %s71, 1
        %s657 = sand.u32 %s71, 1
        %s658 = smul.addr %s657, 384
        %s659 = scalar_lea.vmem [#allocation4], %s658
        // Predicated region
        $region93: #{localizer_alexnet_forward.14} parent=87 // pred_check
          %p660 = pneg %p84
        $region94: #{localizer_alexnet_forward.14} parent=87 // pred_check_branch
          %662 = sbr.rel (%p660) target = $region96
        $region95: #{localizer_alexnet_forward.14} parent=87 // pred_region
          _
        $region96: #{localizer_alexnet_forward.14} parent=87 // pred_fallthru
          _
        %s663 = sand.u32 %s43, 1
        %s664 = sand.u32 %s43, 1
        %s665 = smul.addr %s664, 72
        %s666 = scalar_lea.vmem [#allocation3], %s665
        %p667 = pneg %p56
        %p668 = pneg %p53
        %s669 = sand.u32 %s71, 1
        %s670 = sand.u32 %s71, 1
        %s671 = smul.addr %s670, 384
        %s672 = scalar_lea.vmem [#allocation4], %s671
        %p673 = pneg %p84
        %p674 = pneg %p81
        %p675 = scmp.lt.s32.totalorder %s20, 2
        %s676 = scalar_select %p675, %s20, 2
        %s677 = scalar_lea.vmem %s2, %s676
        %p678 = pneg %p110
        %p679 = pneg %p107
        %p680 = pneg %p138
        %p681 = pneg %p135
        %s682 = sand.u32 %s125, 1
        %s683 = sand.u32 %s125, 1
        %s684 = smul.addr %s683, 12
        %s685 = scalar_lea.vmem [#allocation5], %s684
        %s686 = smul.u32 3, %s19
        %s687 = smul.u32 6, %s21
        %s688 = smul.u32 96, %s21
        %p689 = scmp.lt.s32.totalorder %s20, 2
        %s690 = scalar_select %p689, %s20, 2
        %s691 = scalar_lea.vmem %s2, %s690
        %s692 = smul.u32 3, %s19
        %p694 = scmp.eq.s32.totalorder %s21, 0
        // Predicated region
        $region97: #{localizer_alexnet_forward.14} parent=87 // pred_check
          %p695 = pneg %p694
        $region98: #{localizer_alexnet_forward.14} parent=87 // pred_check_branch
          %697 = sbr.rel (%p695) target = $region100
        $region99: #{localizer_alexnet_forward.14} parent=87 // pred_region
          %698 = vst [vmem:[#allocation2] sm:$0xff] 0.0
          %699 = vst [vmem:[#allocation2 + $0x8] sm:$0xff] 0.0
          %700 = vst [vmem:[#allocation2 + $0x10] sm:$0xff] 0.0
        $region100: #{localizer_alexnet_forward.14} parent=87 // pred_fallthru
          _
        %v701 = vld [vmem:[#allocation2] sm:$0xff]
        %v702 = vld [vmem:[#allocation2 + $0x8] sm:$0xff]
        %v703 = vld [vmem:[#allocation2 + $0x10] sm:$0xff]
        %v704 = vld [vmem:[%s652] sm:$0xff]
        %v705 = vld [vmem:[%s652 + $0x8] sm:$0xff]
        %v706 = vld [vmem:[%s652 + $0x10] sm:$0xff]
        %v707 = vld [vmem:[%s652 + $0x18] sm:$0xff]
        %v708 = vld [vmem:[%s652 + $0x20] sm:$0xff]
        %v709 = vld [vmem:[%s652 + $0x28] sm:$0xff]
        %v710 = vld [vmem:[%s652 + $0x30] sm:$0xff]
        %v711 = vld [vmem:[%s652 + $0x38] sm:$0xff]
        %v712 = vld [vmem:[%s652 + $0x40] sm:$0xff]
        %v713 = vld [vmem:[%s659] sm:$0xf]
        %v714 = vld [vmem:[%s659 + $0x4] sm:$0xf]
        %v715 = vld [vmem:[%s659 + $0x8] sm:$0xf]
        %v716 = vld [vmem:[%s659 + $0xc] sm:$0xf]
        %v717 = vld [vmem:[%s659 + $0x10] sm:$0xf]
        %v718 = vld [vmem:[%s659 + $0x14] sm:$0xf]
        %v719 = vld [vmem:[%s659 + $0x18] sm:$0xf]
        %v720 = vld [vmem:[%s659 + $0x1c] sm:$0xf]
        %v721 = vld [vmem:[%s659 + $0x20] sm:$0xf]
        %v722 = vld [vmem:[%s659 + $0x24] sm:$0xf]
        %v723 = vld [vmem:[%s659 + $0x28] sm:$0xf]
        %v724 = vld [vmem:[%s659 + $0x2c] sm:$0xf]
        %v725 = vld [vmem:[%s659 + $0x30] sm:$0xf]
        %v726 = vld [vmem:[%s659 + $0x34] sm:$0xf]
        %v727 = vld [vmem:[%s659 + $0x38] sm:$0xf]
        %v728 = vld [vmem:[%s659 + $0x3c] sm:$0xf]
        %v729 = vld [vmem:[%s659 + $0x40] sm:$0xf]
        %v730 = vld [vmem:[%s659 + $0x44] sm:$0xf]
        %v731 = vld [vmem:[%s659 + $0x48] sm:$0xf]
        %v732 = vld [vmem:[%s659 + $0x4c] sm:$0xf]
        %v733 = vld [vmem:[%s659 + $0x50] sm:$0xf]
        %v734 = vld [vmem:[%s659 + $0x54] sm:$0xf]
        %v735 = vld [vmem:[%s659 + $0x58] sm:$0xf]
        %v736 = vld [vmem:[%s659 + $0x5c] sm:$0xf]
        %v737 = vld [vmem:[%s659 + $0x60] sm:$0xf]
        %v738 = vld [vmem:[%s659 + $0x64] sm:$0xf]
        %v739 = vld [vmem:[%s659 + $0x68] sm:$0xf]
        %v740 = vld [vmem:[%s659 + $0x6c] sm:$0xf]
        %v741 = vld [vmem:[%s659 + $0x70] sm:$0xf]
        %v742 = vld [vmem:[%s659 + $0x74] sm:$0xf]
        %v743 = vld [vmem:[%s659 + $0x78] sm:$0xf]
        %v744 = vld [vmem:[%s659 + $0x7c] sm:$0xf]
        %v745 = vld [vmem:[%s659 + $0x80] sm:$0xf]
        %v746 = vld [vmem:[%s659 + $0x84] sm:$0xf]
        %v747 = vld [vmem:[%s659 + $0x88] sm:$0xf]
        %v748 = vld [vmem:[%s659 + $0x8c] sm:$0xf]
        %v749 = vld [vmem:[%s659 + $0x90] sm:$0xf]
        %v750 = vld [vmem:[%s659 + $0x94] sm:$0xf]
        %v751 = vld [vmem:[%s659 + $0x98] sm:$0xf]
        %v752 = vld [vmem:[%s659 + $0x9c] sm:$0xf]
        %v753 = vld [vmem:[%s659 + $0xa0] sm:$0xf]
        %v754 = vld [vmem:[%s659 + $0xa4] sm:$0xf]
        %v755 = vld [vmem:[%s659 + $0xa8] sm:$0xf]
        %v756 = vld [vmem:[%s659 + $0xac] sm:$0xf]
        %v757 = vld [vmem:[%s659 + $0xb0] sm:$0xf]
        %v758 = vld [vmem:[%s659 + $0xb4] sm:$0xf]
        %v759 = vld [vmem:[%s659 + $0xb8] sm:$0xf]
        %v760 = vld [vmem:[%s659 + $0xbc] sm:$0xf]
        %v761 = vld [vmem:[%s659 + $0xc0] sm:$0xf]
        %v762 = vld [vmem:[%s659 + $0xc4] sm:$0xf]
        %v763 = vld [vmem:[%s659 + $0xc8] sm:$0xf]
        %v764 = vld [vmem:[%s659 + $0xcc] sm:$0xf]
        %v765 = vld [vmem:[%s659 + $0xd0] sm:$0xf]
        %v766 = vld [vmem:[%s659 + $0xd4] sm:$0xf]
        %v767 = vld [vmem:[%s659 + $0xd8] sm:$0xf]
        %v768 = vld [vmem:[%s659 + $0xdc] sm:$0xf]
        %v769 = vld [vmem:[%s659 + $0xe0] sm:$0xf]
        %v770 = vld [vmem:[%s659 + $0xe4] sm:$0xf]
        %v771 = vld [vmem:[%s659 + $0xe8] sm:$0xf]
        %v772 = vld [vmem:[%s659 + $0xec] sm:$0xf]
        %v773 = vld [vmem:[%s659 + $0xf0] sm:$0xf]
        %v774 = vld [vmem:[%s659 + $0xf4] sm:$0xf]
        %v775 = vld [vmem:[%s659 + $0xf8] sm:$0xf]
        %v776 = vld [vmem:[%s659 + $0xfc] sm:$0xf]
        %v777 = vld [vmem:[%s659 + $0x100] sm:$0xf]
        %v778 = vld [vmem:[%s659 + $0x104] sm:$0xf]
        %v779 = vld [vmem:[%s659 + $0x108] sm:$0xf]
        %v780 = vld [vmem:[%s659 + $0x10c] sm:$0xf]
        %v781 = vld [vmem:[%s659 + $0x110] sm:$0xf]
        %v782 = vld [vmem:[%s659 + $0x114] sm:$0xf]
        %v783 = vld [vmem:[%s659 + $0x118] sm:$0xf]
        %v784 = vld [vmem:[%s659 + $0x11c] sm:$0xf]
        %v785 = vld [vmem:[%s659 + $0x120] sm:$0xf]
        %v786 = vld [vmem:[%s659 + $0x124] sm:$0xf]
        %v787 = vld [vmem:[%s659 + $0x128] sm:$0xf]
        %v788 = vld [vmem:[%s659 + $0x12c] sm:$0xf]
        %v789 = vld [vmem:[%s659 + $0x130] sm:$0xf]
        %v790 = vld [vmem:[%s659 + $0x134] sm:$0xf]
        %v791 = vld [vmem:[%s659 + $0x138] sm:$0xf]
        %v792 = vld [vmem:[%s659 + $0x13c] sm:$0xf]
        %v793 = vld [vmem:[%s659 + $0x140] sm:$0xf]
        %v794 = vld [vmem:[%s659 + $0x144] sm:$0xf]
        %v795 = vld [vmem:[%s659 + $0x148] sm:$0xf]
        %v796 = vld [vmem:[%s659 + $0x14c] sm:$0xf]
        %v797 = vld [vmem:[%s659 + $0x150] sm:$0xf]
        %v798 = vld [vmem:[%s659 + $0x154] sm:$0xf]
        %v799 = vld [vmem:[%s659 + $0x158] sm:$0xf]
        %v800 = vld [vmem:[%s659 + $0x15c] sm:$0xf]
        %v801 = vld [vmem:[%s659 + $0x160] sm:$0xf]
        %v802 = vld [vmem:[%s659 + $0x164] sm:$0xf]
        %v803 = vld [vmem:[%s659 + $0x168] sm:$0xf]
        %v804 = vld [vmem:[%s659 + $0x16c] sm:$0xf]
        %v805 = vld [vmem:[%s659 + $0x170] sm:$0xf]
        %v806 = vld [vmem:[%s659 + $0x174] sm:$0xf]
        %v807 = vld [vmem:[%s659 + $0x178] sm:$0xf]
        %v808 = vld [vmem:[%s659 + $0x17c] sm:$0xf]
        %v818 = vunpack.c.l.b16 %v704
        %v819 = vunpack.c.h.b16 %v704
        %v820 = vunpack.c.l.b16 %v705
        %v821 = vunpack.c.h.b16 %v705
        %v822 = vunpack.c.l.b16 %v706
        %v823 = vunpack.c.h.b16 %v706
        %v824 = vunpack.c.l.b16 %v707
        %v825 = vunpack.c.h.b16 %v707
        %v826 = vunpack.c.l.b16 %v708
        %v827 = vunpack.c.h.b16 %v708
        %v828 = vunpack.c.l.b16 %v709
        %v829 = vunpack.c.h.b16 %v709
        %v830 = vunpack.c.l.b16 %v710
        %v831 = vunpack.c.h.b16 %v710
        %v832 = vunpack.c.l.b16 %v711
        %v833 = vunpack.c.h.b16 %v711
        %v834 = vunpack.c.l.b16 %v712
        %v835 = vunpack.c.h.b16 %v712
        %v836 = vpack.c.b16 %v824, %v818
        %v837 = vpack.c.b16 %v825, %v819
        %v838 = vpack.c.b16 %v826, %v820
        %v839 = vpack.c.b16 %v827, %v821
        %v840 = vpack.c.b16 %v828, %v822
        %v841 = vpack.c.b16 %v829, %v823
        %v842 = vpack.c.b16 %v830, %v830
        %v843 = vpack.c.b16 %v831, %v831
        %v844 = vpack.c.b16 %v832, %v832
        %v845 = vpack.c.b16 %v833, %v833
        %v846 = vpack.c.b16 %v834, %v834
        %v847 = vpack.c.b16 %v835, %v835
        %v956 = vunpack.c.l.b16 %v713
        %v957 = vunpack.c.l.b16 %v714
        %v958 = vunpack.c.l.b16 %v715
        %v959 = vunpack.c.l.b16 %v716
        %v960 = vunpack.c.l.b16 %v717
        %v961 = vunpack.c.l.b16 %v718
        %v962 = vunpack.c.l.b16 %v719
        %v963 = vunpack.c.l.b16 %v720
        %v964 = vunpack.c.l.b16 %v721
        %v965 = vunpack.c.l.b16 %v722
        %v966 = vunpack.c.l.b16 %v723
        %v967 = vunpack.c.l.b16 %v724
        %v968 = vunpack.c.l.b16 %v725
        %v969 = vunpack.c.l.b16 %v726
        %v970 = vunpack.c.l.b16 %v727
        %v971 = vunpack.c.l.b16 %v728
        %v972 = vunpack.c.l.b16 %v729
        %v973 = vunpack.c.l.b16 %v730
        %v974 = vunpack.c.l.b16 %v731
        %v975 = vunpack.c.l.b16 %v732
        %v976 = vunpack.c.l.b16 %v733
        %v977 = vunpack.c.l.b16 %v734
        %v978 = vunpack.c.l.b16 %v735
        %v979 = vunpack.c.l.b16 %v736
        %v980 = vunpack.c.l.b16 %v737
        %v981 = vunpack.c.l.b16 %v738
        %v982 = vunpack.c.l.b16 %v739
        %v983 = vunpack.c.l.b16 %v740
        %v984 = vunpack.c.l.b16 %v741
        %v985 = vunpack.c.l.b16 %v742
        %v986 = vunpack.c.l.b16 %v743
        %v987 = vunpack.c.l.b16 %v744
        %v988 = vunpack.c.l.b16 %v745
        %v989 = vunpack.c.l.b16 %v746
        %v990 = vunpack.c.l.b16 %v747
        %v991 = vunpack.c.l.b16 %v748
        %v992 = vunpack.c.l.b16 %v749
        %v993 = vunpack.c.l.b16 %v750
        %v994 = vunpack.c.l.b16 %v751
        %v995 = vunpack.c.l.b16 %v752
        %v996 = vunpack.c.l.b16 %v753
        %v997 = vunpack.c.l.b16 %v754
        %v998 = vunpack.c.l.b16 %v755
        %v999 = vunpack.c.l.b16 %v756
        %v1000 = vunpack.c.l.b16 %v757
        %v1001 = vunpack.c.l.b16 %v758
        %v1002 = vunpack.c.l.b16 %v759
        %v1003 = vunpack.c.l.b16 %v760
        %v1004 = vunpack.c.l.b16 %v761
        %v1005 = vunpack.c.l.b16 %v762
        %v1006 = vunpack.c.l.b16 %v763
        %v1007 = vunpack.c.l.b16 %v764
        %v1008 = vunpack.c.l.b16 %v765
        %v1009 = vunpack.c.l.b16 %v766
        %v1010 = vunpack.c.l.b16 %v767
        %v1011 = vunpack.c.l.b16 %v768
        %v1012 = vunpack.c.l.b16 %v769
        %v1013 = vunpack.c.l.b16 %v770
        %v1014 = vunpack.c.l.b16 %v771
        %v1015 = vunpack.c.l.b16 %v772
        %v1016 = vunpack.c.l.b16 %v773
        %v1017 = vunpack.c.l.b16 %v774
        %v1018 = vunpack.c.l.b16 %v775
        %v1019 = vunpack.c.l.b16 %v776
        %v1020 = vunpack.c.l.b16 %v777
        %v1021 = vunpack.c.l.b16 %v778
        %v1022 = vunpack.c.l.b16 %v779
        %v1023 = vunpack.c.l.b16 %v780
        %v1024 = vunpack.c.l.b16 %v781
        %v1025 = vunpack.c.l.b16 %v782
        %v1026 = vunpack.c.l.b16 %v783
        %v1027 = vunpack.c.l.b16 %v784
        %v1028 = vunpack.c.l.b16 %v785
        %v1029 = vunpack.c.l.b16 %v786
        %v1030 = vunpack.c.l.b16 %v787
        %v1031 = vunpack.c.l.b16 %v788
        %v1032 = vunpack.c.l.b16 %v789
        %v1033 = vunpack.c.l.b16 %v790
        %v1034 = vunpack.c.l.b16 %v791
        %v1035 = vunpack.c.l.b16 %v792
        %v1036 = vunpack.c.l.b16 %v793
        %v1037 = vunpack.c.l.b16 %v794
        %v1038 = vunpack.c.l.b16 %v795
        %v1039 = vunpack.c.l.b16 %v796
        %v1040 = vunpack.c.l.b16 %v797
        %v1041 = vunpack.c.l.b16 %v798
        %v1042 = vunpack.c.l.b16 %v799
        %v1043 = vunpack.c.l.b16 %v800
        %v1044 = vunpack.c.l.b16 %v801
        %v1045 = vunpack.c.l.b16 %v802
        %v1046 = vunpack.c.l.b16 %v803
        %v1047 = vunpack.c.l.b16 %v804
        %v1048 = vunpack.c.l.b16 %v805
        %v1049 = vunpack.c.l.b16 %v806
        %v1050 = vunpack.c.l.b16 %v807
        %v1051 = vunpack.c.l.b16 %v808
        %v1052 = vpack.c.b16 %v957, %v956
        %v1053 = vpack.c.b16 %v959, %v958
        %v1054 = vpack.c.b16 %v961, %v960
        %v1055 = vpack.c.b16 %v963, %v962
        %v1056 = vpack.c.b16 %v965, %v964
        %v1057 = vpack.c.b16 %v967, %v966
        %v1058 = vpack.c.b16 %v969, %v968
        %v1059 = vpack.c.b16 %v971, %v970
        %v1060 = vpack.c.b16 %v973, %v972
        %v1061 = vpack.c.b16 %v975, %v974
        %v1062 = vpack.c.b16 %v977, %v976
        %v1063 = vpack.c.b16 %v979, %v978
        %v1064 = vpack.c.b16 %v981, %v980
        %v1065 = vpack.c.b16 %v983, %v982
        %v1066 = vpack.c.b16 %v985, %v984
        %v1067 = vpack.c.b16 %v987, %v986
        %v1068 = vpack.c.b16 %v989, %v988
        %v1069 = vpack.c.b16 %v991, %v990
        %v1070 = vpack.c.b16 %v993, %v992
        %v1071 = vpack.c.b16 %v995, %v994
        %v1072 = vpack.c.b16 %v997, %v996
        %v1073 = vpack.c.b16 %v999, %v998
        %v1074 = vpack.c.b16 %v1001, %v1000
        %v1075 = vpack.c.b16 %v1003, %v1002
        %v1076 = vpack.c.b16 %v1005, %v1004
        %v1077 = vpack.c.b16 %v1007, %v1006
        %v1078 = vpack.c.b16 %v1009, %v1008
        %v1079 = vpack.c.b16 %v1011, %v1010
        %v1080 = vpack.c.b16 %v1013, %v1012
        %v1081 = vpack.c.b16 %v1015, %v1014
        %v1082 = vpack.c.b16 %v1017, %v1016
        %v1083 = vpack.c.b16 %v1019, %v1018
        %v1084 = vpack.c.b16 %v1021, %v1020
        %v1085 = vpack.c.b16 %v1023, %v1022
        %v1086 = vpack.c.b16 %v1025, %v1024
        %v1087 = vpack.c.b16 %v1027, %v1026
        %v1088 = vpack.c.b16 %v1029, %v1028
        %v1089 = vpack.c.b16 %v1031, %v1030
        %v1090 = vpack.c.b16 %v1033, %v1032
        %v1091 = vpack.c.b16 %v1035, %v1034
        %v1092 = vpack.c.b16 %v1037, %v1036
        %v1093 = vpack.c.b16 %v1039, %v1038
        %v1094 = vpack.c.b16 %v1041, %v1040
        %v1095 = vpack.c.b16 %v1043, %v1042
        %v1096 = vpack.c.b16 %v1045, %v1044
        %v1097 = vpack.c.b16 %v1047, %v1046
        %v1098 = vpack.c.b16 %v1049, %v1048
        %v1099 = vpack.c.b16 %v1051, %v1050
        %1148 = vmatprep.subr.bf16.mxu0 0
        %1149 = vmatpush1.bf16.msra.mxu0 %v1059
        %1150 = vmatprep.subr.bf16.mxu0 0
        %1151 = vmatpush1.bf16.msra.mxu0 %v1058
        %1152 = vmatprep.subr.bf16.mxu0 0
        %1153 = vmatpush1.bf16.msra.mxu0 %v1057
        %1154 = vmatprep.subr.bf16.mxu0 0
        %1155 = vmatpush1.bf16.msra.mxu0 %v1056
        %1156 = vmatprep.subr.bf16.mxu0 0
        %1157 = vmatpush1.bf16.msra.mxu0 %v1055
        %1158 = vmatprep.subr.bf16.mxu0 0
        %1159 = vmatpush1.bf16.msra.mxu0 %v1054
        %1160 = vmatprep.subr.bf16.mxu0 0
        %1161 = vmatpush1.bf16.msra.mxu0 %v1053
        %1162 = vmatprep.subr.bf16.mxu0 0
        %1163 = vmatpush1.bf16.msra.mxu0 %v1052
        %1164 = vmatprep.subr.bf16.mxu0 0
        %1165 = vmatpush2.bf16.msra.mxu0 %v1067
        %1166 = vmatprep.subr.bf16.mxu0 0
        %1167 = vmatpush2.bf16.msra.mxu0 %v1066
        %1168 = vmatprep.subr.bf16.mxu0 0
        %1169 = vmatpush2.bf16.msra.mxu0 %v1065
        %1170 = vmatprep.subr.bf16.mxu0 0
        %1171 = vmatpush2.bf16.msra.mxu0 %v1064
        %1172 = vmatprep.subr.bf16.mxu0 0
        %1173 = vmatpush2.bf16.msra.mxu0 %v1063
        %1174 = vmatprep.subr.bf16.mxu0 0
        %1175 = vmatpush2.bf16.msra.mxu0 %v1062
        %1176 = vmatprep.subr.bf16.mxu0 0
        %1177 = vmatpush2.bf16.msra.mxu0 %v1061
        %1178 = vmatprep.subr.bf16.mxu0 0
        %1179 = vmatpush2.bf16.msra.mxu0 %v1060
        %1180 = vmatprep.mubr.bf16.mxu0 %v837
        %1181 = vmatmul.mubr.bf16.gmra.mxu0 %v836
        %v1182 = vpop.f32.mrf.mxu0
        %v1183 = vadd.f32 0.0, %v1182
        %v1184 = vpop.f32.mrf.mxu0
        %v1185 = vpop.f32.mrf.mxu0
        %v1186 = vadd.f32 0.0, %v1185
        %v1187 = vpop.f32.mrf.mxu0
        %1188 = vmatprep.mubr.bf16.mxu0 %v843
        %1189 = vmatmul.mubr.bf16.gmra.mxu0 %v842
        %v1190 = vpop.f32.mrf.mxu0
        %v1191 = vadd.f32 0.0, %v1190
        %v1192 = vpop.f32.mrf.mxu0
        %v1193 = vpop.f32.mrf.mxu0
        %v1194 = vpop.f32.mrf.mxu0
        %1195 = vdwg.mxu0
        %1196 = vmatprep.subr.bf16.mxu0 0
        %1197 = vmatpush1.bf16.msra.mxu0 %v1075
        %1198 = vmatprep.subr.bf16.mxu0 0
        %1199 = vmatpush1.bf16.msra.mxu0 %v1074
        %1200 = vmatprep.subr.bf16.mxu0 0
        %1201 = vmatpush1.bf16.msra.mxu0 %v1073
        %1202 = vmatprep.subr.bf16.mxu0 0
        %1203 = vmatpush1.bf16.msra.mxu0 %v1072
        %1204 = vmatprep.subr.bf16.mxu0 0
        %1205 = vmatpush1.bf16.msra.mxu0 %v1071
        %1206 = vmatprep.subr.bf16.mxu0 0
        %1207 = vmatpush1.bf16.msra.mxu0 %v1070
        %1208 = vmatprep.subr.bf16.mxu0 0
        %1209 = vmatpush1.bf16.msra.mxu0 %v1069
        %1210 = vmatprep.subr.bf16.mxu0 0
        %1211 = vmatpush1.bf16.msra.mxu0 %v1068
        %1212 = vmatprep.subr.bf16.mxu0 0
        %1213 = vmatpush2.bf16.msra.mxu0 %v1083
        %1214 = vmatprep.subr.bf16.mxu0 0
        %1215 = vmatpush2.bf16.msra.mxu0 %v1082
        %1216 = vmatprep.subr.bf16.mxu0 0
        %1217 = vmatpush2.bf16.msra.mxu0 %v1081
        %1218 = vmatprep.subr.bf16.mxu0 0
        %1219 = vmatpush2.bf16.msra.mxu0 %v1080
        %1220 = vmatprep.subr.bf16.mxu0 0
        %1221 = vmatpush2.bf16.msra.mxu0 %v1079
        %1222 = vmatprep.subr.bf16.mxu0 0
        %1223 = vmatpush2.bf16.msra.mxu0 %v1078
        %1224 = vmatprep.subr.bf16.mxu0 0
        %1225 = vmatpush2.bf16.msra.mxu0 %v1077
        %1226 = vmatprep.subr.bf16.mxu0 0
        %1227 = vmatpush2.bf16.msra.mxu0 %v1076
        %1228 = vmatprep.mubr.bf16.mxu0 %v839
        %1229 = vmatmul.mubr.bf16.gmra.mxu0 %v838
        %v1230 = vpop.f32.mrf.mxu0
        %v1231 = vadd.f32 %v1183, %v1230
        %v1232 = vpop.f32.mrf.mxu0
        %v1233 = vpop.f32.mrf.mxu0
        %v1234 = vadd.f32 %v1186, %v1233
        %v1235 = vpop.f32.mrf.mxu0
        %1236 = vmatprep.mubr.bf16.mxu0 %v845
        %1237 = vmatmul.mubr.bf16.gmra.mxu0 %v844
        %v1238 = vpop.f32.mrf.mxu0
        %v1239 = vadd.f32 %v1191, %v1238
        %v1240 = vpop.f32.mrf.mxu0
        %v1241 = vpop.f32.mrf.mxu0
        %v1242 = vpop.f32.mrf.mxu0
        %1243 = vdwg.mxu0
        %1244 = vmatprep.subr.bf16.mxu0 0
        %1245 = vmatpush1.bf16.msra.mxu0 %v1091
        %1246 = vmatprep.subr.bf16.mxu0 0
        %1247 = vmatpush1.bf16.msra.mxu0 %v1090
        %1248 = vmatprep.subr.bf16.mxu0 0
        %1249 = vmatpush1.bf16.msra.mxu0 %v1089
        %1250 = vmatprep.subr.bf16.mxu0 0
        %1251 = vmatpush1.bf16.msra.mxu0 %v1088
        %1252 = vmatprep.subr.bf16.mxu0 0
        %1253 = vmatpush1.bf16.msra.mxu0 %v1087
        %1254 = vmatprep.subr.bf16.mxu0 0
        %1255 = vmatpush1.bf16.msra.mxu0 %v1086
        %1256 = vmatprep.subr.bf16.mxu0 0
        %1257 = vmatpush1.bf16.msra.mxu0 %v1085
        %1258 = vmatprep.subr.bf16.mxu0 0
        %1259 = vmatpush1.bf16.msra.mxu0 %v1084
        %1260 = vmatprep.subr.bf16.mxu0 0
        %1261 = vmatpush2.bf16.msra.mxu0 %v1099
        %1262 = vmatprep.subr.bf16.mxu0 0
        %1263 = vmatpush2.bf16.msra.mxu0 %v1098
        %1264 = vmatprep.subr.bf16.mxu0 0
        %1265 = vmatpush2.bf16.msra.mxu0 %v1097
        %1266 = vmatprep.subr.bf16.mxu0 0
        %1267 = vmatpush2.bf16.msra.mxu0 %v1096
        %1268 = vmatprep.subr.bf16.mxu0 0
        %1269 = vmatpush2.bf16.msra.mxu0 %v1095
        %1270 = vmatprep.subr.bf16.mxu0 0
        %1271 = vmatpush2.bf16.msra.mxu0 %v1094
        %1272 = vmatprep.subr.bf16.mxu0 0
        %1273 = vmatpush2.bf16.msra.mxu0 %v1093
        %1274 = vmatprep.subr.bf16.mxu0 0
        %1275 = vmatpush2.bf16.msra.mxu0 %v1092
        %1276 = vmatprep.mubr.bf16.mxu0 %v841
        %1277 = vmatmul.mubr.bf16.gmra.mxu0 %v840
        %v1278 = vpop.f32.mrf.mxu0
        %v1279 = vadd.f32 %v1231, %v1278
        %v1280 = vpop.f32.mrf.mxu0
        %v1281 = vpop.f32.mrf.mxu0
        %v1282 = vadd.f32 %v1234, %v1281
        %v1283 = vpop.f32.mrf.mxu0
        %1284 = vmatprep.mubr.bf16.mxu0 %v847
        %1285 = vmatmul.mubr.bf16.gmra.mxu0 %v846
        %v1286 = vpop.f32.mrf.mxu0
        %v1287 = vadd.f32 %v1239, %v1286
        %v1288 = vpop.f32.mrf.mxu0
        %v1289 = vpop.f32.mrf.mxu0
        %v1290 = vpop.f32.mrf.mxu0
        %1291 = vdwg.mxu0
        %v1292 = vadd.f32 %v701, %v1279
        %v1293 = vadd.f32 %v702, %v1282
        %v1294 = vadd.f32 %v703, %v1287
        %1295 = vst [vmem:[#allocation2] sm:$0xff] %v1292
        %1296 = vst [vmem:[#allocation2 + $0x8] sm:$0xff] %v1293
        %1297 = vst [vmem:[#allocation2 + $0x10] sm:$0xff] %v1294
        %p1298 = scmp.eq.s32.totalorder %s21, 2
        // Predicated region
        $region101: #{localizer_alexnet_forward.14} parent=87 // pred_check
          %p1299 = pneg %p1298
        $region102: #{localizer_alexnet_forward.14} parent=87 // pred_check_branch
          %1301 = sbr.rel (%p1299) target = $region104
        $region103: #{localizer_alexnet_forward.14} parent=87 // pred_region
          %v1302 = vld [vmem:[#allocation2] sm:$0xff]
          %v1303 = vld [vmem:[#allocation2 + $0x8] sm:$0xff]
          %v1304 = vld [vmem:[#allocation2 + $0x10] sm:$0xff]
          %v1305 = vld [vmem:[%s691] sm:$0x1]
          %v1307 = vlaneseq
          %v1308 = vshrl.u32 %v1307, 7
          %v1309 = vsub.s32 0, %v1308
          %v1310 = vrot.slane %v1305, %v1309
          %v1312 = vadd.f32 %v1302, %v1310
          %v1313 = vadd.f32 %v1303, %v1310
          %v1314 = vadd.f32 %v1304, %v1310
          %v1315 = vmax.f32 %v1312, 0.0
          %v1316 = vmax.f32 %v1313, 0.0
          %v1317 = vmax.f32 %v1314, 0.0
          %v1318 = vpack.c.bf16 %v1316, %v1315
          %v1319 = vpack.c.bf16 %v1317, %v1317
          %v1322 = vunpack.c.l.b16 %v1318
          %v1323 = vunpack.c.h.b16 %v1318
          %v1324 = vunpack.c.l.b16 %v1319
          %v1325 = vpack.c.b16 %v1322, %v1322
          %v1326 = vpack.c.b16 %v1323, %v1323
          %v1327 = vpack.c.b16 %v1324, %v1324
          %1331 = vst [vmem:[%s685] sm:$0xf] %v1325
          %1332 = vst [vmem:[%s685 + $0x4] sm:$0xf] %v1326
          %1333 = vst [vmem:[%s685 + $0x8] sm:$0xf] %v1327
        $region104: #{localizer_alexnet_forward.14} parent=87 // pred_fallthru
          _
        %s1334 = sand.u32 %s125, 1
        %s1335 = sand.u32 %s125, 1
        %s1336 = smul.addr %s1335, 12
        %s1337 = scalar_lea.vmem [#allocation5], %s1336
        // Predicated region
        $region105: #{localizer_alexnet_forward.14} parent=87 // pred_check
          %p1338 = pneg %p135
        $region106: #{localizer_alexnet_forward.14} parent=87 // pred_check_branch
          %1340 = sbr.rel (%p1338) target = $region108
        $region107: #{localizer_alexnet_forward.14} parent=87 // pred_region
          %s1341 = smul.u32 3, %s19
          %s1342 = smul.addr %s1341, 3
          %s1343 = sadd.s32 %s20, %s1342
          %s1344 = smul.addr %s1343, 4
          %s1345 = scalar_lea.vmem %s3, %s1344
          // Predicated region
          $region109: #{localizer_alexnet_forward.14} parent=107 // pred_check
            _
          $region110: #{localizer_alexnet_forward.14} parent=107 // pred_check_branch
            %1347 = sbr.rel (0) target = $region112
          $region111: #{localizer_alexnet_forward.14} parent=107 // pred_region
            // Predicated region
            $region113: #{localizer_alexnet_forward.14} parent=111 // pred_check
              _
            $region114: #{localizer_alexnet_forward.14} parent=111 // pred_check_branch
              %1349 = sbr.rel target = $region116
            $region115: #{localizer_alexnet_forward.14} parent=111 // pred_region
              // Predicated region
              $region128: #{localizer_alexnet_forward.14} parent=115 // pred_check
                _
              $region129: #{localizer_alexnet_forward.14} parent=115 // pred_check_branch
                %1369 = sbr.rel (0) target = $region131
              $region130: #{localizer_alexnet_forward.14} parent=115 // pred_region
                loop: start=0, step=1, limit=1
                $region132: #{localizer_alexnet_forward.14} parent=130 // loop_pre_header
                  _
                $region133: #{localizer_alexnet_forward.14} parent=130 // loop_header
                  %s1371 = sphi 0, %s1375
                  %p1372 = scmp.ge.s32.totalorder %s1371, 1
                  %s1376 = sphi %s1337, %s1337
                  %s1377 = sphi %s1345, %s1345
                $region134: #{localizer_alexnet_forward.14} parent=130 // loop_header_branch
                  %1374 = sbr.rel (%p1372) target = $region138
                $region135: #{localizer_alexnet_forward.14} parent=130 // loop_body
                  _
                $region136: #{localizer_alexnet_forward.14} parent=130 // loop_footer
                  %s1375 = sadd.s32 1, %s1371
                $region137: #{localizer_alexnet_forward.14} parent=130 // loop_footer_branch
                  %1370 = sbr.rel target = $region133
                $region138: #{localizer_alexnet_forward.14} parent=130 // loop_exit
                  _
                %s1379 = ssub.s32 16, 1
                loop: start=0, step=1, limit=1
                $region139: #{localizer_alexnet_forward.14} parent=130 // loop_pre_header
                  _
                $region140: #{localizer_alexnet_forward.14} parent=130 // loop_header
                  %s1381 = sphi 0, %s1385
                  %p1382 = scmp.ge.s32.totalorder %s1381, 1
                  %s1386 = sphi %s1337, %s1337
                  %s1387 = sphi %s1345, %s1345
                $region141: #{localizer_alexnet_forward.14} parent=130 // loop_header_branch
                  %1384 = sbr.rel (%p1382) target = $region145
                $region142: #{localizer_alexnet_forward.14} parent=130 // loop_body
                  %v1388 = vld [vmem:[%s1386] sm:%s1379]
                  %1389 = vst [vmem:[%s1387] sm:%s1379] %v1388
                  %v1390 = vld [vmem:[%s1386 + $0x4] sm:%s1379]
                  %1391 = vst [vmem:[%s1387 + $0xc] sm:%s1379] %v1390
                  %v1392 = vld [vmem:[%s1386 + $0x8] sm:%s1379]
                  %1393 = vst [vmem:[%s1387 + $0x18] sm:%s1379] %v1392
                $region143: #{localizer_alexnet_forward.14} parent=130 // loop_footer
                  %s1385 = sadd.s32 1, %s1381
                $region144: #{localizer_alexnet_forward.14} parent=130 // loop_footer_branch
                  %1380 = sbr.rel target = $region140
                $region145: #{localizer_alexnet_forward.14} parent=130 // loop_exit
                  _
              $region131: #{localizer_alexnet_forward.14} parent=115 // pred_fallthru
                _
            $region116: #{localizer_alexnet_forward.14} parent=111 // pred_fallthru
              _
            // Predicated region
            $region117: #{localizer_alexnet_forward.14} parent=111 // pred_check
              _
            $region118: #{localizer_alexnet_forward.14} parent=111 // pred_check_branch
              %1351 = sbr.rel (0) target = $region120
            $region119: #{localizer_alexnet_forward.14} parent=111 // pred_region
              %s1353 = ssub.s32 16, 1
              loop: start=0, step=1, limit=1
              $region121: #{localizer_alexnet_forward.14} parent=119 // loop_pre_header
                _
              $region122: #{localizer_alexnet_forward.14} parent=119 // loop_header
                %s1355 = sphi 0, %s1359
                %p1356 = scmp.ge.s32.totalorder %s1355, 1
                %s1360 = sphi %s1337, %s1337
                %s1361 = sphi %s1345, %s1345
              $region123: #{localizer_alexnet_forward.14} parent=119 // loop_header_branch
                %1358 = sbr.rel (%p1356) target = $region127
              $region124: #{localizer_alexnet_forward.14} parent=119 // loop_body
                %v1362 = vld [vmem:[%s1360] sm:%s1353]
                %1363 = vst [vmem:[%s1361] sm:%s1353] %v1362
                %v1364 = vld [vmem:[%s1360 + $0x4] sm:%s1353]
                %1365 = vst [vmem:[%s1361 + $0xc] sm:%s1353] %v1364
                %v1366 = vld [vmem:[%s1360 + $0x8] sm:%s1353]
                %1367 = vst [vmem:[%s1361 + $0x18] sm:%s1353] %v1366
              $region125: #{localizer_alexnet_forward.14} parent=119 // loop_footer
                %s1359 = sadd.s32 1, %s1355
              $region126: #{localizer_alexnet_forward.14} parent=119 // loop_footer_branch
                %1354 = sbr.rel target = $region122
              $region127: #{localizer_alexnet_forward.14} parent=119 // loop_exit
                _
            $region120: #{localizer_alexnet_forward.14} parent=111 // pred_fallthru
              _
          $region112: #{localizer_alexnet_forward.14} parent=107 // pred_fallthru
            _
          %1394 = vnop
        $region108: #{localizer_alexnet_forward.14} parent=87 // pred_fallthru
          _
      $region88: #{localizer_alexnet_forward.14} parent=5 // pred_fallthru
        _
      %p1395 = scmp.le.s32.totalorder 2, %s9
      // Predicated region
      $region146: #{localizer_alexnet_forward.14} parent=5 // pred_check
        %p1396 = pneg %p1395
      $region147: #{localizer_alexnet_forward.14} parent=5 // pred_check_branch
        %1398 = sbr.rel (%p1396) target = $region149
      $region148: #{localizer_alexnet_forward.14} parent=5 // pred_region
        %s1399 = ssub.s32 %s9, 2
        // Predicated region
        $region150: #{localizer_alexnet_forward.14} parent=148 // pred_check
          %p1400 = pneg %p141
        $region151: #{localizer_alexnet_forward.14} parent=148 // pred_check_branch
          %1402 = sbr.rel (%p1400) target = $region153
        $region152: #{localizer_alexnet_forward.14} parent=148 // pred_region
          %s1403 = sand.u32 %s126, 1
          %s1404 = sand.u32 %s126, 1
          %s1405 = smul.addr %s1404, 12
          %s1406 = scalar_lea.vmem [#allocation5], %s1405
        $region153: #{localizer_alexnet_forward.14} parent=148 // pred_fallthru
          _
      $region149: #{localizer_alexnet_forward.14} parent=5 // pred_fallthru
        _
    $region6: #{localizer_alexnet_forward.14} parent=1 // loop_footer
      %s13 = sadd.s32 1, %s9
    $region7: #{localizer_alexnet_forward.14} parent=1 // loop_footer_branch
      %8 = sbr.rel target = $region3
    $region8: #{localizer_alexnet_forward.14} parent=1 // loop_exit
      _

// kernel: localizer_alexnet_forward.15
$region0: #{localizer_alexnet_forward.15}
  #allocation0 [shape = 'u32[]', space=smem, size = 0x4, offset = 0x4, fixed_abs, tag = 'smem constant byte address 0x4 - core index']
  #allocation1 [shape = 'u32[144,128]{1,0:T(1,128)}', space=vmem, size = 0x12000, scoped, tag = 'internal scratch']
  #allocation2 [shape = 'f32[24,256]{1,0:T(8,128)}', space=vmem, size = 0x6000, scoped, tag = 'scratch operand']
  %s0 = inlined_call_operand.vmem [shape: bf16[24,3456], index: 0, kind: input, shape index: {}]
  %s1 = inlined_call_operand.vmem [shape: bf16[3456,256], index: 1, kind: input, shape index: {}]
  %s2 = inlined_call_operand.vmem [shape: f32[1,256], index: 2, kind: input, shape index: {}]
  %s3 = inlined_call_operand.vmem [shape: bf16[24,256], index: 3, kind: output, shape index: {}]
  %s4 = sld [smem:[#allocation0]]
  $region79: #{localizer_alexnet_forward.15} parent=0
    _
  %s6 = ssub.s32 1, %s4
  %s7 = scalar_select 0, %s6, %s4
  $region1: #{localizer_alexnet_forward.15} parent=0
    #allocation3 [shape = 'u8[36864]{0}', space=vmem, size = 0x9000, scoped, tag = 'input window, operand 0']
    loop: start=0, step=1, limit=11
    $region2: #{localizer_alexnet_forward.15} parent=1 // loop_pre_header
      _
    $region3: #{localizer_alexnet_forward.15} parent=1 // loop_header
      %s9 = sphi 0, %s13
      %p10 = scmp.ge.s32.totalorder %s9, 11
      %s16 = sphi 0, %s35
      %s17 = sphi 0, %s31
      %s18 = sphi 0, %s27
      %s19 = sphi 0, %s16
      %s20 = sphi 0, %s17
      %s21 = sphi 0, %s18
      %s22 = sphi 0, %s19
      %s23 = sphi 0, %s20
      %s24 = sphi 0, %s21
      %s40 = sphi 0, %s42
      %s43 = sphi 0, %s40
      %s44 = sphi 0, %s43
      %s60 = sphi 0, %s44
      %s68 = sphi 0, %s70
      %s71 = sphi 0, %s68
      %s72 = sphi 0, %s71
      %s88 = sphi 0, %s72
      %s94 = sphi 0, %s96
      %s97 = sphi 0, %s94
      %s98 = sphi 0, %s97
      %s114 = sphi 0, %s98
      %s122 = sphi 0, %s124
      %s125 = sphi 0, %s122
      %s126 = sphi 0, %s125
      %s142 = sphi 0, %s126
    $region4: #{localizer_alexnet_forward.15} parent=1 // loop_header_branch
      %12 = sbr.rel (%p10) target = $region8
    $region5: #{localizer_alexnet_forward.15} parent=1 // loop_body
      %s14 = ssub.s32 %s9, 1
      %s15 = ssub.s32 %s9, 2
      %s25 = sadd.s32 1, %s18
      %p26 = scmp.ge.s32.totalorder %s25, 9
      %s27 = scalar_select %p26, 0, %s25
      %s28 = sadd.s32 1, %s17
      %s29 = scalar_select %p26, %s28, %s17
      %p30 = scmp.ge.s32.totalorder %s29, 1
      %s31 = scalar_select %p30, 0, %s29
      %s32 = sadd.s32 1, %s16
      %s33 = scalar_select %p30, %s32, %s16
      %p34 = scmp.ge.s32.totalorder %s33, 1
      %s35 = scalar_select %p34, 0, %s33
      %s36 = ssub.s32 %s16, %s35
      %s37 = ssub.s32 %s18, %s27
      %s38 = sor.u32 %s36, %s37
      %p39 = scmp.eq.s32.totalorder %s38, 0
      %s41 = sadd.s32 %s40, 1
      %s42 = scalar_select %p39, %s40, %s41
      %p45 = pneg %p39
      %p46 = scmp.eq.s32.totalorder %s9, 8
      %p47 = por %p45, %p46
      %p48 = scmp.ne.s32.totalorder %s40, %s43
      %p49 = scmp.eq.s32.totalorder %s9, 0
      %p50 = por %p48, %p49
      %p51 = scmp.ne.s32.totalorder %s40, %s43
      %p52 = scmp.eq.s32.totalorder %s14, 8
      %p53 = por %p51, %p52
      %p54 = scmp.ne.s32.totalorder %s43, %s44
      %p55 = scmp.eq.s32.totalorder %s14, 0
      %p56 = por %p54, %p55
      %p57 = scmp.ne.s32.totalorder %s43, %s44
      %p58 = scmp.eq.s32.totalorder %s15, 8
      %p59 = por %p57, %p58
      %p61 = scmp.ne.s32.totalorder %s44, %s60
      %p62 = scmp.eq.s32.totalorder %s15, 0
      %p63 = por %p61, %p62
      %s64 = ssub.s32 %s18, %s27
      %s65 = ssub.s32 %s17, %s31
      %s66 = sor.u32 %s64, %s65
      %p67 = scmp.eq.s32.totalorder %s66, 0
      %s69 = sadd.s32 %s68, 1
      %s70 = scalar_select %p67, %s68, %s69
      %p73 = pneg %p67
      %p74 = scmp.eq.s32.totalorder %s9, 8
      %p75 = por %p73, %p74
      %p76 = scmp.ne.s32.totalorder %s68, %s71
      %p77 = scmp.eq.s32.totalorder %s9, 0
      %p78 = por %p76, %p77
      %p79 = scmp.ne.s32.totalorder %s68, %s71
      %p80 = scmp.eq.s32.totalorder %s14, 8
      %p81 = por %p79, %p80
      %p82 = scmp.ne.s32.totalorder %s71, %s72
      %p83 = scmp.eq.s32.totalorder %s14, 0
      %p84 = por %p82, %p83
      %p85 = scmp.ne.s32.totalorder %s71, %s72
      %p86 = scmp.eq.s32.totalorder %s15, 8
      %p87 = por %p85, %p86
      %p89 = scmp.ne.s32.totalorder %s72, %s88
      %p90 = scmp.eq.s32.totalorder %s15, 0
      %p91 = por %p89, %p90
      %s92 = ssub.s32 %s17, %s31
      %p93 = scmp.eq.s32.totalorder %s92, 0
      %s95 = sadd.s32 %s94, 1
      %s96 = scalar_select %p93, %s94, %s95
      %p99 = pneg %p93
      %p100 = scmp.eq.s32.totalorder %s9, 8
      %p101 = por %p99, %p100
      %p102 = scmp.ne.s32.totalorder %s94, %s97
      %p103 = scmp.eq.s32.totalorder %s9, 0
      %p104 = por %p102, %p103
      %p105 = scmp.ne.s32.totalorder %s94, %s97
      %p106 = scmp.eq.s32.totalorder %s14, 8
      %p107 = por %p105, %p106
      %p108 = scmp.ne.s32.totalorder %s97, %s98
      %p109 = scmp.eq.s32.totalorder %s14, 0
      %p110 = por %p108, %p109
      %p111 = scmp.ne.s32.totalorder %s97, %s98
      %p112 = scmp.eq.s32.totalorder %s15, 8
      %p113 = por %p111, %p112
      %p115 = scmp.ne.s32.totalorder %s98, %s114
      %p116 = scmp.eq.s32.totalorder %s15, 0
      %p117 = por %p115, %p116
      %s118 = ssub.s32 %s16, %s35
      %s119 = ssub.s32 %s17, %s31
      %s120 = sor.u32 %s118, %s119
      %p121 = scmp.eq.s32.totalorder %s120, 0
      %s123 = sadd.s32 %s122, 1
      %s124 = scalar_select %p121, %s122, %s123
      %p127 = pneg %p121
      %p128 = scmp.eq.s32.totalorder %s9, 8
      %p129 = por %p127, %p128
      %p130 = scmp.ne.s32.totalorder %s122, %s125
      %p131 = scmp.eq.s32.totalorder %s9, 0
      %p132 = por %p130, %p131
      %p133 = scmp.ne.s32.totalorder %s122, %s125
      %p134 = scmp.eq.s32.totalorder %s14, 8
      %p135 = por %p133, %p134
      %p136 = scmp.ne.s32.totalorder %s125, %s126
      %p137 = scmp.eq.s32.totalorder %s14, 0
      %p138 = por %p136, %p137
      %p139 = scmp.ne.s32.totalorder %s125, %s126
      %p140 = scmp.eq.s32.totalorder %s15, 8
      %p141 = por %p139, %p140
      %p143 = scmp.ne.s32.totalorder %s126, %s142
      %p144 = scmp.eq.s32.totalorder %s15, 0
      %p145 = por %p143, %p144
      %p146 = scmp.le.s32.totalorder 1, %s9
      %p147 = scmp.lt.s32.totalorder %s9, 10
      %p148 = pnand %p146, %p147
      %p149 = pneg %p148
      // Predicated region
      $region9: #{localizer_alexnet_forward.15} parent=5 // pred_check
        _
      $region10: #{localizer_alexnet_forward.15} parent=5 // pred_check_branch
        %151 = sbr.rel (%p148) target = $region12
      $region11: #{localizer_alexnet_forward.15} parent=5 // pred_region
        %s152 = ssub.s32 %s9, 1
        // Predicated region
        $region13: #{localizer_alexnet_forward.15} parent=11 // pred_check
          %p153 = pneg %p110
        $region14: #{localizer_alexnet_forward.15} parent=11 // pred_check_branch
          %155 = sbr.rel (%p153) target = $region16
        $region15: #{localizer_alexnet_forward.15} parent=11 // pred_region
          %s156 = smul.u32 2, %s20
          %p157 = scmp.lt.s32.totalorder %s156, 1
          %s158 = scalar_select %p157, %s156, 1
          %s159 = scalar_lea.vmem %s2, %s158
          %s160 = smul.u32 2, %s20
        $region16: #{localizer_alexnet_forward.15} parent=11 // pred_fallthru
          _
      $region12: #{localizer_alexnet_forward.15} parent=5 // pred_fallthru
        _
      %p161 = scmp.lt.s32.totalorder %s9, 9
      // Predicated region
      $region17: #{localizer_alexnet_forward.15} parent=5 // pred_check
        %p162 = pneg %p161
      $region18: #{localizer_alexnet_forward.15} parent=5 // pred_check_branch
        %164 = sbr.rel (%p162) target = $region20
      $region19: #{localizer_alexnet_forward.15} parent=5 // pred_region
        // Predicated region
        $region21: #{localizer_alexnet_forward.15} parent=19 // pred_check
          %p165 = pneg %p50
        $region22: #{localizer_alexnet_forward.15} parent=19 // pred_check_branch
          %167 = sbr.rel (%p165) target = $region24
        $region23: #{localizer_alexnet_forward.15} parent=19 // pred_region
          %s168 = sand.u32 %s40, 1
          %s169 = sand.u32 %s40, 1
          %s170 = smul.addr %s169, 36
          %s171 = scalar_lea.vmem [#allocation3], %s170
          %s172 = smul.u32 3, %s16
          %s173 = smul.u32 3, %s18
          %s174 = smul.addr %s172, 27
          %s175 = sadd.s32 %s173, %s174
          %s176 = smul.addr %s175, 4
          %s177 = scalar_lea.vmem %s0, %s176
          // Predicated region
          $region25: #{localizer_alexnet_forward.15} parent=23 // pred_check
            _
          $region26: #{localizer_alexnet_forward.15} parent=23 // pred_check_branch
            %179 = sbr.rel (0) target = $region28
          $region27: #{localizer_alexnet_forward.15} parent=23 // pred_region
            // Predicated region
            $region29: #{localizer_alexnet_forward.15} parent=27 // pred_check
              _
            $region30: #{localizer_alexnet_forward.15} parent=27 // pred_check_branch
              %181 = sbr.rel (0) target = $region32
            $region31: #{localizer_alexnet_forward.15} parent=27 // pred_region
              %s182 = scalar_lea.vmem %s177, 8
              %s183 = scalar_lea.vmem %s171, 8 [#allocation3]
              loop: start=0, step=1, limit=1
              $region33: #{localizer_alexnet_forward.15} parent=31 // loop_pre_header
                _
              $region34: #{localizer_alexnet_forward.15} parent=31 // loop_header
                %s185 = sphi 0, %s189
                %p186 = scmp.ge.s32.totalorder %s185, 1
                %s190 = sphi %s177, %s177
                %s191 = sphi %s171, %s171
              $region35: #{localizer_alexnet_forward.15} parent=31 // loop_header_branch
                %188 = sbr.rel (%p186) target = $region39
              $region36: #{localizer_alexnet_forward.15} parent=31 // loop_body
                %v192 = vld [vmem:[%s190] sm:$0xff]
                %193 = vst [vmem:[%s191] sm:$0xff] %v192
                %v194 = vld [vmem:[%s190 + $0x6c] sm:$0xff]
                %195 = vst [vmem:[%s191 + $0xc] sm:$0xff] %v194
                %v196 = vld [vmem:[%s190 + $0xd8] sm:$0xff]
                %197 = vst [vmem:[%s191 + $0x18] sm:$0xff] %v196
              $region37: #{localizer_alexnet_forward.15} parent=31 // loop_footer
                %s189 = sadd.s32 1, %s185
              $region38: #{localizer_alexnet_forward.15} parent=31 // loop_footer_branch
                %184 = sbr.rel target = $region34
              $region39: #{localizer_alexnet_forward.15} parent=31 // loop_exit
                _
              %s199 = ssub.s32 16, 1
              loop: start=0, step=1, limit=1
              $region40: #{localizer_alexnet_forward.15} parent=31 // loop_pre_header
                _
              $region41: #{localizer_alexnet_forward.15} parent=31 // loop_header
                %s201 = sphi 0, %s205
                %p202 = scmp.ge.s32.totalorder %s201, 1
                %s206 = sphi %s182, %s182
                %s207 = sphi %s183, %s183
              $region42: #{localizer_alexnet_forward.15} parent=31 // loop_header_branch
                %204 = sbr.rel (%p202) target = $region46
              $region43: #{localizer_alexnet_forward.15} parent=31 // loop_body
                %v208 = vld [vmem:[%s206] sm:%s199]
                %209 = vst [vmem:[%s207] sm:%s199] %v208
                %v210 = vld [vmem:[%s206 + $0x6c] sm:%s199]
                %211 = vst [vmem:[%s207 + $0xc] sm:%s199] %v210
                %v212 = vld [vmem:[%s206 + $0xd8] sm:%s199]
                %213 = vst [vmem:[%s207 + $0x18] sm:%s199] %v212
              $region44: #{localizer_alexnet_forward.15} parent=31 // loop_footer
                %s205 = sadd.s32 1, %s201
              $region45: #{localizer_alexnet_forward.15} parent=31 // loop_footer_branch
                %200 = sbr.rel target = $region41
              $region46: #{localizer_alexnet_forward.15} parent=31 // loop_exit
                _
            $region32: #{localizer_alexnet_forward.15} parent=27 // pred_fallthru
              _
          $region28: #{localizer_alexnet_forward.15} parent=23 // pred_fallthru
            _
          %214 = vnop
        $region24: #{localizer_alexnet_forward.15} parent=19 // pred_fallthru
          _
        // Predicated region
        $region47: #{localizer_alexnet_forward.15} parent=19 // pred_check
          %p215 = pneg %p78
        $region48: #{localizer_alexnet_forward.15} parent=19 // pred_check_branch
          %217 = sbr.rel (%p215) target = $region50
        $region49: #{localizer_alexnet_forward.15} parent=19 // pred_region
          %s218 = smul.u32 48, %s18
          %s219 = smul.u32 2, %s17
          %p220 = scmp.lt.s32.totalorder %s218, 431
          %s221 = scalar_select %p220, %s218, 431
          %p222 = scmp.lt.s32.totalorder %s219, 1
          %s223 = scalar_select %p222, %s219, 1
          %s224 = smul.addr %s221, 2
          %s225 = sadd.s32 %s223, %s224
          %s226 = smul.addr %s225, 4
          %s227 = scalar_lea.vmem %s1, %s226
          %s228 = smul.u32 48, %s18
          %s229 = smul.u32 2, %s17
        $region50: #{localizer_alexnet_forward.15} parent=19 // pred_fallthru
          _
      $region20: #{localizer_alexnet_forward.15} parent=5 // pred_fallthru
        _
      %p230 = scmp.le.s32.totalorder 1, %s9
      %p231 = scmp.lt.s32.totalorder %s9, 10
      %p232 = pnand %p230, %p231
      %p233 = pneg %p232
      // Predicated region
      $region51: #{localizer_alexnet_forward.15} parent=5 // pred_check
        _
      $region52: #{localizer_alexnet_forward.15} parent=5 // pred_check_branch
        %235 = sbr.rel (%p232) target = $region54
      $region53: #{localizer_alexnet_forward.15} parent=5 // pred_region
        %s236 = ssub.s32 %s9, 1
        %s237 = sand.u32 %s43, 1
        %s238 = sand.u32 %s43, 1
        %s239 = smul.addr %s238, 36
        %s240 = scalar_lea.vmem [#allocation3], %s239
        // Predicated region
        $region55: #{localizer_alexnet_forward.15} parent=53 // pred_check
          %p241 = pneg %p56
        $region56: #{localizer_alexnet_forward.15} parent=53 // pred_check_branch
          %243 = sbr.rel (%p241) target = $region58
        $region57: #{localizer_alexnet_forward.15} parent=53 // pred_region
          _
        $region58: #{localizer_alexnet_forward.15} parent=53 // pred_fallthru
          _
        %s244 = sand.u32 %s43, 1
        %s245 = sand.u32 %s43, 1
        %s246 = smul.addr %s245, 36
        %s247 = scalar_lea.vmem [#allocation3], %s246
        %p248 = pneg %p56
        %p249 = pneg %p53
        %s250 = smul.u32 48, %s21
        %s251 = smul.u32 2, %s20
        %p252 = scmp.lt.s32.totalorder %s250, 431
        %s253 = scalar_select %p252, %s250, 431
        %p254 = scmp.lt.s32.totalorder %s251, 1
        %s255 = scalar_select %p254, %s251, 1
        %s256 = smul.addr %s253, 2
        %s257 = sadd.s32 %s255, %s256
        %s258 = smul.addr %s257, 4
        %s259 = scalar_lea.vmem %s1, %s258
        %p260 = pneg %p84
        %p261 = pneg %p81
        %s262 = smul.u32 2, %s20
        %p263 = scmp.lt.s32.totalorder %s262, 1
        %s264 = scalar_select %p263, %s262, 1
        %s265 = scalar_lea.vmem %s2, %s264
        %p266 = pneg %p110
        %p267 = pneg %p107
        %p268 = pneg %p138
        %p269 = pneg %p135
        %s270 = smul.u32 3, %s19
        %s271 = smul.u32 2, %s20
        %p272 = scmp.lt.s32.totalorder %s270, 2
        %s273 = scalar_select %p272, %s270, 2
        %p274 = scmp.lt.s32.totalorder %s271, 1
        %s275 = scalar_select %p274, %s271, 1
        %s276 = smul.addr %s273, 2
        %s277 = sadd.s32 %s275, %s276
        %s278 = smul.addr %s277, 4
        %s279 = scalar_lea.vmem %s3, %s278
        %s280 = smul.u32 3, %s19
        %s281 = smul.u32 3, %s21
        %s282 = smul.u32 48, %s21
        %s283 = smul.u32 2, %s20
        %p284 = scmp.lt.s32.totalorder %s282, 431
        %s285 = scalar_select %p284, %s282, 431
        %p286 = scmp.lt.s32.totalorder %s283, 1
        %s287 = scalar_select %p286, %s283, 1
        %s288 = smul.addr %s285, 2
        %s289 = sadd.s32 %s287, %s288
        %s290 = smul.addr %s289, 4
        %s291 = scalar_lea.vmem %s1, %s290
        %s292 = smul.u32 48, %s21
        %s293 = smul.u32 2, %s20
        %s294 = smul.u32 2, %s20
        %p295 = scmp.lt.s32.totalorder %s294, 1
        %s296 = scalar_select %p295, %s294, 1
        %s297 = scalar_lea.vmem %s2, %s296
        %s298 = smul.u32 2, %s20
        %s299 = smul.u32 3, %s19
        %s300 = smul.u32 2, %s20
        %p301 = scmp.lt.s32.totalorder %s299, 2
        %s302 = scalar_select %p301, %s299, 2
        %p303 = scmp.lt.s32.totalorder %s300, 1
        %s304 = scalar_select %p303, %s300, 1
        %s305 = smul.addr %s302, 2
        %s306 = sadd.s32 %s304, %s305
        %s307 = smul.addr %s306, 4
        %s308 = scalar_lea.vmem %s3, %s307
        %s309 = smul.u32 3, %s19
        %s310 = smul.u32 2, %s20
        %p312 = scmp.eq.s32.totalorder %s21, 0
        // Predicated region
        $region59: #{localizer_alexnet_forward.15} parent=53 // pred_check
          %p313 = pneg %p312
        $region60: #{localizer_alexnet_forward.15} parent=53 // pred_check_branch
          %315 = sbr.rel (%p313) target = $region62
        $region61: #{localizer_alexnet_forward.15} parent=53 // pred_region
          %316 = vst [vmem:[#allocation2] sm:$0xff] 0.0
          %317 = vst [vmem:[#allocation2 + $0x8] sm:$0xff] 0.0
          %318 = vst [vmem:[#allocation2 + $0x10] sm:$0xff] 0.0
          %319 = vst [vmem:[#allocation2 + $0x18] sm:$0xff] 0.0
          %320 = vst [vmem:[#allocation2 + $0x20] sm:$0xff] 0.0
          %321 = vst [vmem:[#allocation2 + $0x28] sm:$0xff] 0.0
        $region62: #{localizer_alexnet_forward.15} parent=53 // pred_fallthru
          _
        %v322 = vld [vmem:[#allocation2] sm:$0xff]
        %v323 = vld [vmem:[#allocation2 + $0x8] sm:$0xff]
        %v324 = vld [vmem:[#allocation2 + $0x10] sm:$0xff]
        %v325 = vld [vmem:[#allocation2 + $0x18] sm:$0xff]
        %v326 = vld [vmem:[#allocation2 + $0x20] sm:$0xff]
        %v327 = vld [vmem:[#allocation2 + $0x28] sm:$0xff]
        %v328 = vld [vmem:[%s240] sm:$0xff]
        %v329 = vld [vmem:[%s240 + $0x8] sm:$0xf]
        %v330 = vld [vmem:[%s240 + $0xc] sm:$0xff]
        %v331 = vld [vmem:[%s240 + $0x14] sm:$0xf]
        %v332 = vld [vmem:[%s240 + $0x18] sm:$0xff]
        %v333 = vld [vmem:[%s240 + $0x20] sm:$0xf]
        %v334 = vld [vmem:[%s291] sm:$0xff]
        %v335 = vld [vmem:[%s291 + $0x8] sm:$0xff]
        %v336 = vld [vmem:[%s291 + $0x10] sm:$0xff]
        %v337 = vld [vmem:[%s291 + $0x18] sm:$0xff]
        %v338 = vld [vmem:[%s291 + $0x20] sm:$0xff]
        %v339 = vld [vmem:[%s291 + $0x28] sm:$0xff]
        %v340 = vld [vmem:[%s291 + $0x30] sm:$0xff]
        %v341 = vld [vmem:[%s291 + $0x38] sm:$0xff]
        %v342 = vld [vmem:[%s291 + $0x40] sm:$0xff]
        %v343 = vld [vmem:[%s291 + $0x48] sm:$0xff]
        %v344 = vld [vmem:[%s291 + $0x50] sm:$0xff]
        %v345 = vld [vmem:[%s291 + $0x58] sm:$0xff]
        %v346 = vld [vmem:[%s291 + $0x60] sm:$0xff]
        %v347 = vld [vmem:[%s291 + $0x68] sm:$0xff]
        %v348 = vld [vmem:[%s291 + $0x70] sm:$0xff]
        %v349 = vld [vmem:[%s291 + $0x78] sm:$0xff]
        %v350 = vld [vmem:[%s291 + $0x80] sm:$0xff]
        %v351 = vld [vmem:[%s291 + $0x88] sm:$0xff]
        %v352 = vld [vmem:[%s291 + $0x90] sm:$0xff]
        %v353 = vld [vmem:[%s291 + $0x98] sm:$0xff]
        %v354 = vld [vmem:[%s291 + $0xa0] sm:$0xff]
        %v355 = vld [vmem:[%s291 + $0xa8] sm:$0xff]
        %v356 = vld [vmem:[%s291 + $0xb0] sm:$0xff]
        %v357 = vld [vmem:[%s291 + $0xb8] sm:$0xff]
        %v358 = vld [vmem:[%s291 + $0xc0] sm:$0xff]
        %v359 = vld [vmem:[%s291 + $0xc8] sm:$0xff]
        %v360 = vld [vmem:[%s291 + $0xd0] sm:$0xff]
        %v361 = vld [vmem:[%s291 + $0xd8] sm:$0xff]
        %v362 = vld [vmem:[%s291 + $0xe0] sm:$0xff]
        %v363 = vld [vmem:[%s291 + $0xe8] sm:$0xff]
        %v364 = vld [vmem:[%s291 + $0xf0] sm:$0xff]
        %v365 = vld [vmem:[%s291 + $0xf8] sm:$0xff]
        %v366 = vld [vmem:[%s291 + $0x100] sm:$0xff]
        %v367 = vld [vmem:[%s291 + $0x108] sm:$0xff]
        %v368 = vld [vmem:[%s291 + $0x110] sm:$0xff]
        %v369 = vld [vmem:[%s291 + $0x118] sm:$0xff]
        %v370 = vld [vmem:[%s291 + $0x120] sm:$0xff]
        %v371 = vld [vmem:[%s291 + $0x128] sm:$0xff]
        %v372 = vld [vmem:[%s291 + $0x130] sm:$0xff]
        %v373 = vld [vmem:[%s291 + $0x138] sm:$0xff]
        %v374 = vld [vmem:[%s291 + $0x140] sm:$0xff]
        %v375 = vld [vmem:[%s291 + $0x148] sm:$0xff]
        %v376 = vld [vmem:[%s291 + $0x150] sm:$0xff]
        %v377 = vld [vmem:[%s291 + $0x158] sm:$0xff]
        %v378 = vld [vmem:[%s291 + $0x160] sm:$0xff]
        %v379 = vld [vmem:[%s291 + $0x168] sm:$0xff]
        %v380 = vld [vmem:[%s291 + $0x170] sm:$0xff]
        %v381 = vld [vmem:[%s291 + $0x178] sm:$0xff]
        %v388 = vunpack.c.l.b16 %v328
        %v389 = vunpack.c.h.b16 %v328
        %v390 = vunpack.c.l.b16 %v329
        %v391 = vunpack.c.l.b16 %v330
        %v392 = vunpack.c.h.b16 %v330
        %v393 = vunpack.c.l.b16 %v331
        %v394 = vunpack.c.l.b16 %v332
        %v395 = vunpack.c.h.b16 %v332
        %v396 = vunpack.c.l.b16 %v333
        %v397 = vpack.c.b16 %v391, %v388
        %v398 = vpack.c.b16 %v392, %v389
        %v399 = vpack.c.b16 %v393, %v390
        %v400 = vpack.c.b16 %v394, %v394
        %v401 = vpack.c.b16 %v395, %v395
        %v402 = vpack.c.b16 %v396, %v396
        %v457 = vunpack.c.l.b16 %v334
        %v458 = vunpack.c.h.b16 %v334
        %v459 = vunpack.c.l.b16 %v335
        %v460 = vunpack.c.h.b16 %v335
        %v461 = vunpack.c.l.b16 %v336
        %v462 = vunpack.c.h.b16 %v336
        %v463 = vunpack.c.l.b16 %v337
        %v464 = vunpack.c.h.b16 %v337
        %v465 = vunpack.c.l.b16 %v338
        %v466 = vunpack.c.h.b16 %v338
        %v467 = vunpack.c.l.b16 %v339
        %v468 = vunpack.c.h.b16 %v339
        %v469 = vunpack.c.l.b16 %v340
        %v470 = vunpack.c.h.b16 %v340
        %v471 = vunpack.c.l.b16 %v341
        %v472 = vunpack.c.h.b16 %v341
        %v473 = vunpack.c.l.b16 %v342
        %v474 = vunpack.c.h.b16 %v342
        %v475 = vunpack.c.l.b16 %v343
        %v476 = vunpack.c.h.b16 %v343
        %v477 = vunpack.c.l.b16 %v344
        %v478 = vunpack.c.h.b16 %v344
        %v479 = vunpack.c.l.b16 %v345
        %v480 = vunpack.c.h.b16 %v345
        %v481 = vunpack.c.l.b16 %v346
        %v482 = vunpack.c.h.b16 %v346
        %v483 = vunpack.c.l.b16 %v347
        %v484 = vunpack.c.h.b16 %v347
        %v485 = vunpack.c.l.b16 %v348
        %v486 = vunpack.c.h.b16 %v348
        %v487 = vunpack.c.l.b16 %v349
        %v488 = vunpack.c.h.b16 %v349
        %v489 = vunpack.c.l.b16 %v350
        %v490 = vunpack.c.h.b16 %v350
        %v491 = vunpack.c.l.b16 %v351
        %v492 = vunpack.c.h.b16 %v351
        %v493 = vunpack.c.l.b16 %v352
        %v494 = vunpack.c.h.b16 %v352
        %v495 = vunpack.c.l.b16 %v353
        %v496 = vunpack.c.h.b16 %v353
        %v497 = vunpack.c.l.b16 %v354
        %v498 = vunpack.c.h.b16 %v354
        %v499 = vunpack.c.l.b16 %v355
        %v500 = vunpack.c.h.b16 %v355
        %v501 = vunpack.c.l.b16 %v356
        %v502 = vunpack.c.h.b16 %v356
        %v503 = vunpack.c.l.b16 %v357
        %v504 = vunpack.c.h.b16 %v357
        %v505 = vunpack.c.l.b16 %v358
        %v506 = vunpack.c.h.b16 %v358
        %v507 = vunpack.c.l.b16 %v359
        %v508 = vunpack.c.h.b16 %v359
        %v509 = vunpack.c.l.b16 %v360
        %v510 = vunpack.c.h.b16 %v360
        %v511 = vunpack.c.l.b16 %v361
        %v512 = vunpack.c.h.b16 %v361
        %v513 = vunpack.c.l.b16 %v362
        %v514 = vunpack.c.h.b16 %v362
        %v515 = vunpack.c.l.b16 %v363
        %v516 = vunpack.c.h.b16 %v363
        %v517 = vunpack.c.l.b16 %v364
        %v518 = vunpack.c.h.b16 %v364
        %v519 = vunpack.c.l.b16 %v365
        %v520 = vunpack.c.h.b16 %v365
        %v521 = vunpack.c.l.b16 %v366
        %v522 = vunpack.c.h.b16 %v366
        %v523 = vunpack.c.l.b16 %v367
        %v524 = vunpack.c.h.b16 %v367
        %v525 = vunpack.c.l.b16 %v368
        %v526 = vunpack.c.h.b16 %v368
        %v527 = vunpack.c.l.b16 %v369
        %v528 = vunpack.c.h.b16 %v369
        %v529 = vunpack.c.l.b16 %v370
        %v530 = vunpack.c.h.b16 %v370
        %v531 = vunpack.c.l.b16 %v371
        %v532 = vunpack.c.h.b16 %v371
        %v533 = vunpack.c.l.b16 %v372
        %v534 = vunpack.c.h.b16 %v372
        %v535 = vunpack.c.l.b16 %v373
        %v536 = vunpack.c.h.b16 %v373
        %v537 = vunpack.c.l.b16 %v374
        %v538 = vunpack.c.h.b16 %v374
        %v539 = vunpack.c.l.b16 %v375
        %v540 = vunpack.c.h.b16 %v375
        %v541 = vunpack.c.l.b16 %v376
        %v542 = vunpack.c.h.b16 %v376
        %v543 = vunpack.c.l.b16 %v377
        %v544 = vunpack.c.h.b16 %v377
        %v545 = vunpack.c.l.b16 %v378
        %v546 = vunpack.c.h.b16 %v378
        %v547 = vunpack.c.l.b16 %v379
        %v548 = vunpack.c.h.b16 %v379
        %v549 = vunpack.c.l.b16 %v380
        %v550 = vunpack.c.h.b16 %v380
        %v551 = vunpack.c.l.b16 %v381
        %v552 = vunpack.c.h.b16 %v381
        %v553 = vpack.c.b16 %v459, %v457
        %v554 = vpack.c.b16 %v460, %v458
        %v555 = vpack.c.b16 %v463, %v461
        %v556 = vpack.c.b16 %v464, %v462
        %v557 = vpack.c.b16 %v467, %v465
        %v558 = vpack.c.b16 %v468, %v466
        %v559 = vpack.c.b16 %v471, %v469
        %v560 = vpack.c.b16 %v472, %v470
        %v561 = vpack.c.b16 %v475, %v473
        %v562 = vpack.c.b16 %v476, %v474
        %v563 = vpack.c.b16 %v479, %v477
        %v564 = vpack.c.b16 %v480, %v478
        %v565 = vpack.c.b16 %v483, %v481
        %v566 = vpack.c.b16 %v484, %v482
        %v567 = vpack.c.b16 %v487, %v485
        %v568 = vpack.c.b16 %v488, %v486
        %v569 = vpack.c.b16 %v491, %v489
        %v570 = vpack.c.b16 %v492, %v490
        %v571 = vpack.c.b16 %v495, %v493
        %v572 = vpack.c.b16 %v496, %v494
        %v573 = vpack.c.b16 %v499, %v497
        %v574 = vpack.c.b16 %v500, %v498
        %v575 = vpack.c.b16 %v503, %v501
        %v576 = vpack.c.b16 %v504, %v502
        %v577 = vpack.c.b16 %v507, %v505
        %v578 = vpack.c.b16 %v508, %v506
        %v579 = vpack.c.b16 %v511, %v509
        %v580 = vpack.c.b16 %v512, %v510
        %v581 = vpack.c.b16 %v515, %v513
        %v582 = vpack.c.b16 %v516, %v514
        %v583 = vpack.c.b16 %v519, %v517
        %v584 = vpack.c.b16 %v520, %v518
        %v585 = vpack.c.b16 %v523, %v521
        %v586 = vpack.c.b16 %v524, %v522
        %v587 = vpack.c.b16 %v527, %v525
        %v588 = vpack.c.b16 %v528, %v526
        %v589 = vpack.c.b16 %v531, %v529
        %v590 = vpack.c.b16 %v532, %v530
        %v591 = vpack.c.b16 %v535, %v533
        %v592 = vpack.c.b16 %v536, %v534
        %v593 = vpack.c.b16 %v539, %v537
        %v594 = vpack.c.b16 %v540, %v538
        %v595 = vpack.c.b16 %v543, %v541
        %v596 = vpack.c.b16 %v544, %v542
        %v597 = vpack.c.b16 %v547, %v545
        %v598 = vpack.c.b16 %v548, %v546
        %v599 = vpack.c.b16 %v551, %v549
        %v600 = vpack.c.b16 %v552, %v550
        %649 = vmatprep.subr.bf16.mxu0 %v568
        %650 = vmatpush1.bf16.msra.mxu0 %v567
        %651 = vmatprep.subr.bf16.mxu0 %v566
        %652 = vmatpush1.bf16.msra.mxu0 %v565
        %653 = vmatprep.subr.bf16.mxu0 %v564
        %654 = vmatpush1.bf16.msra.mxu0 %v563
        %655 = vmatprep.subr.bf16.mxu0 %v562
        %656 = vmatpush1.bf16.msra.mxu0 %v561
        %657 = vmatprep.subr.bf16.mxu0 %v560
        %658 = vmatpush1.bf16.msra.mxu0 %v559
        %659 = vmatprep.subr.bf16.mxu0 %v558
        %660 = vmatpush1.bf16.msra.mxu0 %v557
        %661 = vmatprep.subr.bf16.mxu0 %v556
        %662 = vmatpush1.bf16.msra.mxu0 %v555
        %663 = vmatprep.subr.bf16.mxu0 %v554
        %664 = vmatpush1.bf16.msra.mxu0 %v553
        %665 = vmatprep.subr.bf16.mxu0 %v584
        %666 = vmatpush2.bf16.msra.mxu0 %v583
        %667 = vmatprep.subr.bf16.mxu0 %v582
        %668 = vmatpush2.bf16.msra.mxu0 %v581
        %669 = vmatprep.subr.bf16.mxu0 %v580
        %670 = vmatpush2.bf16.msra.mxu0 %v579
        %671 = vmatprep.subr.bf16.mxu0 %v578
        %672 = vmatpush2.bf16.msra.mxu0 %v577
        %673 = vmatprep.subr.bf16.mxu0 %v576
        %674 = vmatpush2.bf16.msra.mxu0 %v575
        %675 = vmatprep.subr.bf16.mxu0 %v574
        %676 = vmatpush2.bf16.msra.mxu0 %v573
        %677 = vmatprep.subr.bf16.mxu0 %v572
        %678 = vmatpush2.bf16.msra.mxu0 %v571
        %679 = vmatprep.subr.bf16.mxu0 %v570
        %680 = vmatpush2.bf16.msra.mxu0 %v569
        %681 = vmatprep.mubr.bf16.mxu0 %v398
        %682 = vmatmul.mubr.bf16.gmra.mxu0 %v397
        %v683 = vpop.f32.mrf.mxu0
        %v684 = vadd.f32 0.0, %v683
        %v685 = vpop.f32.mrf.mxu0
        %v686 = vadd.f32 0.0, %v685
        %v687 = vpop.f32.mrf.mxu0
        %v688 = vadd.f32 0.0, %v687
        %v689 = vpop.f32.mrf.mxu0
        %v690 = vadd.f32 0.0, %v689
        %691 = vmatprep.mubr.bf16.mxu0 %v401
        %692 = vmatmul.mubr.bf16.gmra.mxu0 %v400
        %v693 = vpop.f32.mrf.mxu0
        %v694 = vadd.f32 0.0, %v693
        %v695 = vpop.f32.mrf.mxu0
        %v696 = vadd.f32 0.0, %v695
        %v697 = vpop.f32.mrf.mxu0
        %v698 = vpop.f32.mrf.mxu0
        %699 = vdwg.mxu0
        %700 = vmatprep.subr.bf16.mxu0 %v600
        %701 = vmatpush1.bf16.msra.mxu0 %v599
        %702 = vmatprep.subr.bf16.mxu0 %v598
        %703 = vmatpush1.bf16.msra.mxu0 %v597
        %704 = vmatprep.subr.bf16.mxu0 %v596
        %705 = vmatpush1.bf16.msra.mxu0 %v595
        %706 = vmatprep.subr.bf16.mxu0 %v594
        %707 = vmatpush1.bf16.msra.mxu0 %v593
        %708 = vmatprep.subr.bf16.mxu0 %v592
        %709 = vmatpush1.bf16.msra.mxu0 %v591
        %710 = vmatprep.subr.bf16.mxu0 %v590
        %711 = vmatpush1.bf16.msra.mxu0 %v589
        %712 = vmatprep.subr.bf16.mxu0 %v588
        %713 = vmatpush1.bf16.msra.mxu0 %v587
        %714 = vmatprep.subr.bf16.mxu0 %v586
        %715 = vmatpush1.bf16.msra.mxu0 %v585
        %716 = vmatprep.subr.bf16.mxu0 0
        %717 = vmatpush2.bf16.msra.mxu0 0
        %718 = vmatprep.subr.bf16.mxu0 0
        %719 = vmatpush2.bf16.msra.mxu0 0
        %720 = vmatprep.subr.bf16.mxu0 0
        %721 = vmatpush2.bf16.msra.mxu0 0
        %722 = vmatprep.subr.bf16.mxu0 0
        %723 = vmatpush2.bf16.msra.mxu0 0
        %724 = vmatprep.subr.bf16.mxu0 0
        %725 = vmatpush2.bf16.msra.mxu0 0
        %726 = vmatprep.subr.bf16.mxu0 0
        %727 = vmatpush2.bf16.msra.mxu0 0
        %728 = vmatprep.subr.bf16.mxu0 0
        %729 = vmatpush2.bf16.msra.mxu0 0
        %730 = vmatprep.subr.bf16.mxu0 0
        %731 = vmatpush2.bf16.msra.mxu0 0
        %732 = vmatprep.mubr.bf16.mxu0 0
        %733 = vmatmul.mubr.bf16.gmra.mxu0 %v399
        %v734 = vpop.f32.mrf.mxu0
        %v735 = vadd.f32 %v684, %v734
        %v736 = vpop.f32.mrf.mxu0
        %v737 = vadd.f32 %v686, %v736
        %v738 = vpop.f32.mrf.mxu0
        %v739 = vadd.f32 %v688, %v738
        %v740 = vpop.f32.mrf.mxu0
        %v741 = vadd.f32 %v690, %v740
        %742 = vmatprep.mubr.bf16.mxu0 0
        %743 = vmatmul.mubr.bf16.gmra.mxu0 %v402
        %v744 = vpop.f32.mrf.mxu0
        %v745 = vadd.f32 %v694, %v744
        %v746 = vpop.f32.mrf.mxu0
        %v747 = vadd.f32 %v696, %v746
        %v748 = vpop.f32.mrf.mxu0
        %v749 = vpop.f32.mrf.mxu0
        %750 = vdwg.mxu0
        %v751 = vadd.f32 %v322, %v735
        %v752 = vadd.f32 %v323, %v737
        %v753 = vadd.f32 %v324, %v739
        %v754 = vadd.f32 %v325, %v741
        %v755 = vadd.f32 %v326, %v745
        %v756 = vadd.f32 %v327, %v747
        %757 = vst [vmem:[#allocation2] sm:$0xff] %v751
        %758 = vst [vmem:[#allocation2 + $0x8] sm:$0xff] %v752
        %759 = vst [vmem:[#allocation2 + $0x10] sm:$0xff] %v753
        %760 = vst [vmem:[#allocation2 + $0x18] sm:$0xff] %v754
        %761 = vst [vmem:[#allocation2 + $0x20] sm:$0xff] %v755
        %762 = vst [vmem:[#allocation2 + $0x28] sm:$0xff] %v756
        %p763 = scmp.eq.s32.totalorder %s21, 8
        // Predicated region
        $region63: #{localizer_alexnet_forward.15} parent=53 // pred_check
          %p764 = pneg %p763
        $region64: #{localizer_alexnet_forward.15} parent=53 // pred_check_branch
          %766 = sbr.rel (%p764) target = $region66
        $region65: #{localizer_alexnet_forward.15} parent=53 // pred_region
          %v767 = vld [vmem:[#allocation2] sm:$0xff]
          %v768 = vld [vmem:[#allocation2 + $0x8] sm:$0xff]
          %v769 = vld [vmem:[#allocation2 + $0x10] sm:$0xff]
          %v770 = vld [vmem:[#allocation2 + $0x18] sm:$0xff]
          %v771 = vld [vmem:[#allocation2 + $0x20] sm:$0xff]
          %v772 = vld [vmem:[#allocation2 + $0x28] sm:$0xff]
          %v773 = vld [vmem:[%s297] sm:$0x3]
          %v775 = vlaneseq
          %v776 = vshrl.u32 %v775, 7
          %v777 = vsub.s32 0, %v776
          %v778 = vrot.slane %v773, %v777
          %v779 = vlaneseq
          %v780 = vshrl.u32 %v779, 7
          %v781 = vsub.s32 1, %v780
          %v782 = vrot.slane %v773, %v781
          %v785 = vadd.f32 %v767, %v778
          %v786 = vadd.f32 %v768, %v782
          %v787 = vadd.f32 %v769, %v778
          %v788 = vadd.f32 %v770, %v782
          %v789 = vadd.f32 %v771, %v778
          %v790 = vadd.f32 %v772, %v782
          %v791 = vmax.f32 %v785, 0.0
          %v792 = vmax.f32 %v786, 0.0
          %v793 = vmax.f32 %v787, 0.0
          %v794 = vmax.f32 %v788, 0.0
          %v795 = vmax.f32 %v789, 0.0
          %v796 = vmax.f32 %v790, 0.0
          %v797 = vpack.c.bf16 %v793, %v791
          %v798 = vpack.c.bf16 %v794, %v792
          %v799 = vpack.c.bf16 %v795, %v795
          %v800 = vpack.c.bf16 %v796, %v796
          %v805 = vunpack.c.l.b16 %v797
          %v806 = vunpack.c.l.b16 %v798
          %v807 = vunpack.c.h.b16 %v797
          %v808 = vunpack.c.h.b16 %v798
          %v809 = vunpack.c.l.b16 %v799
          %v810 = vunpack.c.l.b16 %v800
          %v811 = vpack.c.b16 %v806, %v805
          %v812 = vpack.c.b16 %v808, %v807
          %v813 = vpack.c.b16 %v810, %v809
          %817 = vst [vmem:[%s308] sm:$0xff] %v811
          %818 = vst [vmem:[%s308 + $0x8] sm:$0xff] %v812
          %819 = vst [vmem:[%s308 + $0x10] sm:$0xff] %v813
        $region66: #{localizer_alexnet_forward.15} parent=53 // pred_fallthru
          _
        %s820 = smul.u32 3, %s19
        %s821 = smul.u32 2, %s20
        %p822 = scmp.lt.s32.totalorder %s820, 2
        %s823 = scalar_select %p822, %s820, 2
        %p824 = scmp.lt.s32.totalorder %s821, 1
        %s825 = scalar_select %p824, %s821, 1
        %s826 = smul.addr %s823, 2
        %s827 = sadd.s32 %s825, %s826
        %s828 = smul.addr %s827, 4
        %s829 = scalar_lea.vmem %s3, %s828
        // Predicated region
        $region67: #{localizer_alexnet_forward.15} parent=53 // pred_check
          %p830 = pneg %p135
        $region68: #{localizer_alexnet_forward.15} parent=53 // pred_check_branch
          %832 = sbr.rel (%p830) target = $region70
        $region69: #{localizer_alexnet_forward.15} parent=53 // pred_region
          %s833 = smul.u32 3, %s19
          %s834 = smul.u32 2, %s20
        $region70: #{localizer_alexnet_forward.15} parent=53 // pred_fallthru
          _
        // Predicated region
        $region71: #{localizer_alexnet_forward.15} parent=53 // pred_check
          %p835 = pneg %p135
        $region72: #{localizer_alexnet_forward.15} parent=53 // pred_check_branch
          %837 = sbr.rel (%p835) target = $region74
        $region73: #{localizer_alexnet_forward.15} parent=53 // pred_region
          %s838 = smul.u32 3, %s19
          %s839 = smul.u32 2, %s20
          %p840 = scmp.lt.s32.totalorder %s838, 2
          %s841 = scalar_select %p840, %s838, 2
          %p842 = scmp.lt.s32.totalorder %s839, 1
          %s843 = scalar_select %p842, %s839, 1
          %s844 = smul.addr %s841, 2
          %s845 = sadd.s32 %s843, %s844
          %s846 = smul.addr %s845, 4
          %s847 = scalar_lea.vmem %s3, %s846
        $region74: #{localizer_alexnet_forward.15} parent=53 // pred_fallthru
          _
      $region54: #{localizer_alexnet_forward.15} parent=5 // pred_fallthru
        _
      %p848 = scmp.le.s32.totalorder 2, %s9
      // Predicated region
      $region75: #{localizer_alexnet_forward.15} parent=5 // pred_check
        %p849 = pneg %p848
      $region76: #{localizer_alexnet_forward.15} parent=5 // pred_check_branch
        %851 = sbr.rel (%p849) target = $region78
      $region77: #{localizer_alexnet_forward.15} parent=5 // pred_region
        %s852 = ssub.s32 %s9, 2
      $region78: #{localizer_alexnet_forward.15} parent=5 // pred_fallthru
        _
    $region6: #{localizer_alexnet_forward.15} parent=1 // loop_footer
      %s13 = sadd.s32 1, %s9
    $region7: #{localizer_alexnet_forward.15} parent=1 // loop_footer_branch
      %8 = sbr.rel target = $region3
    $region8: #{localizer_alexnet_forward.15} parent=1 // loop_exit
      _

// kernel: localizer_alexnet_forward.16
$region0: #{localizer_alexnet_forward.16}
  #allocation0 [shape = 'u32[]', space=smem, size = 0x4, offset = 0x4, fixed_abs, tag = 'smem constant byte address 0x4 - core index']
  #allocation1 [shape = 'u32[144,128]{1,0:T(1,128)}', space=vmem, size = 0x12000, scoped, tag = 'internal scratch']
  #allocation2 [shape = 'f32[24,256]{1,0:T(8,128)}', space=vmem, size = 0x6000, scoped, tag = 'scratch operand']
  %s0 = inlined_call_operand.vmem [shape: bf16[24,2304], index: 0, kind: input, shape index: {}]
  %s1 = inlined_call_operand.vmem [shape: bf16[2304,256], index: 1, kind: input, shape index: {}]
  %s2 = inlined_call_operand.vmem [shape: f32[1,256], index: 2, kind: input, shape index: {}]
  %s3 = inlined_call_operand.vmem [shape: bf16[24,256], index: 3, kind: output, shape index: {}]
  %s4 = sld [smem:[#allocation0]]
  $region76: #{localizer_alexnet_forward.16} parent=0
    _
  %s6 = ssub.s32 1, %s4
  %s7 = scalar_select 0, %s6, %s4
  $region1: #{localizer_alexnet_forward.16} parent=0
    #allocation3 [shape = 'u8[73728]{0}', space=vmem, size = 0x12000, scoped, tag = 'input window, operand 0']
    loop: start=0, step=1, limit=5
    $region2: #{localizer_alexnet_forward.16} parent=1 // loop_pre_header
      _
    $region3: #{localizer_alexnet_forward.16} parent=1 // loop_header
      %s9 = sphi 0, %s13
      %p10 = scmp.ge.s32.totalorder %s9, 5
      %s16 = sphi 0, %s35
      %s17 = sphi 0, %s31
      %s18 = sphi 0, %s27
      %s19 = sphi 0, %s16
      %s20 = sphi 0, %s17
      %s21 = sphi 0, %s18
      %s22 = sphi 0, %s19
      %s23 = sphi 0, %s20
      %s24 = sphi 0, %s21
      %s40 = sphi 0, %s42
      %s43 = sphi 0, %s40
      %s44 = sphi 0, %s43
      %s60 = sphi 0, %s44
      %s68 = sphi 0, %s70
      %s71 = sphi 0, %s68
      %s72 = sphi 0, %s71
      %s88 = sphi 0, %s72
      %s94 = sphi 0, %s96
      %s97 = sphi 0, %s94
      %s98 = sphi 0, %s97
      %s114 = sphi 0, %s98
      %s122 = sphi 0, %s124
      %s125 = sphi 0, %s122
      %s126 = sphi 0, %s125
      %s142 = sphi 0, %s126
    $region4: #{localizer_alexnet_forward.16} parent=1 // loop_header_branch
      %12 = sbr.rel (%p10) target = $region8
    $region5: #{localizer_alexnet_forward.16} parent=1 // loop_body
      %s14 = ssub.s32 %s9, 1
      %s15 = ssub.s32 %s9, 2
      %s25 = sadd.s32 1, %s18
      %p26 = scmp.ge.s32.totalorder %s25, 3
      %s27 = scalar_select %p26, 0, %s25
      %s28 = sadd.s32 1, %s17
      %s29 = scalar_select %p26, %s28, %s17
      %p30 = scmp.ge.s32.totalorder %s29, 1
      %s31 = scalar_select %p30, 0, %s29
      %s32 = sadd.s32 1, %s16
      %s33 = scalar_select %p30, %s32, %s16
      %p34 = scmp.ge.s32.totalorder %s33, 1
      %s35 = scalar_select %p34, 0, %s33
      %s36 = ssub.s32 %s16, %s35
      %s37 = ssub.s32 %s18, %s27
      %s38 = sor.u32 %s36, %s37
      %p39 = scmp.eq.s32.totalorder %s38, 0
      %s41 = sadd.s32 %s40, 1
      %s42 = scalar_select %p39, %s40, %s41
      %p45 = pneg %p39
      %p46 = scmp.eq.s32.totalorder %s9, 2
      %p47 = por %p45, %p46
      %p48 = scmp.ne.s32.totalorder %s40, %s43
      %p49 = scmp.eq.s32.totalorder %s9, 0
      %p50 = por %p48, %p49
      %p51 = scmp.ne.s32.totalorder %s40, %s43
      %p52 = scmp.eq.s32.totalorder %s14, 2
      %p53 = por %p51, %p52
      %p54 = scmp.ne.s32.totalorder %s43, %s44
      %p55 = scmp.eq.s32.totalorder %s14, 0
      %p56 = por %p54, %p55
      %p57 = scmp.ne.s32.totalorder %s43, %s44
      %p58 = scmp.eq.s32.totalorder %s15, 2
      %p59 = por %p57, %p58
      %p61 = scmp.ne.s32.totalorder %s44, %s60
      %p62 = scmp.eq.s32.totalorder %s15, 0
      %p63 = por %p61, %p62
      %s64 = ssub.s32 %s18, %s27
      %s65 = ssub.s32 %s17, %s31
      %s66 = sor.u32 %s64, %s65
      %p67 = scmp.eq.s32.totalorder %s66, 0
      %s69 = sadd.s32 %s68, 1
      %s70 = scalar_select %p67, %s68, %s69
      %p73 = pneg %p67
      %p74 = scmp.eq.s32.totalorder %s9, 2
      %p75 = por %p73, %p74
      %p76 = scmp.ne.s32.totalorder %s68, %s71
      %p77 = scmp.eq.s32.totalorder %s9, 0
      %p78 = por %p76, %p77
      %p79 = scmp.ne.s32.totalorder %s68, %s71
      %p80 = scmp.eq.s32.totalorder %s14, 2
      %p81 = por %p79, %p80
      %p82 = scmp.ne.s32.totalorder %s71, %s72
      %p83 = scmp.eq.s32.totalorder %s14, 0
      %p84 = por %p82, %p83
      %p85 = scmp.ne.s32.totalorder %s71, %s72
      %p86 = scmp.eq.s32.totalorder %s15, 2
      %p87 = por %p85, %p86
      %p89 = scmp.ne.s32.totalorder %s72, %s88
      %p90 = scmp.eq.s32.totalorder %s15, 0
      %p91 = por %p89, %p90
      %s92 = ssub.s32 %s17, %s31
      %p93 = scmp.eq.s32.totalorder %s92, 0
      %s95 = sadd.s32 %s94, 1
      %s96 = scalar_select %p93, %s94, %s95
      %p99 = pneg %p93
      %p100 = scmp.eq.s32.totalorder %s9, 2
      %p101 = por %p99, %p100
      %p102 = scmp.ne.s32.totalorder %s94, %s97
      %p103 = scmp.eq.s32.totalorder %s9, 0
      %p104 = por %p102, %p103
      %p105 = scmp.ne.s32.totalorder %s94, %s97
      %p106 = scmp.eq.s32.totalorder %s14, 2
      %p107 = por %p105, %p106
      %p108 = scmp.ne.s32.totalorder %s97, %s98
      %p109 = scmp.eq.s32.totalorder %s14, 0
      %p110 = por %p108, %p109
      %p111 = scmp.ne.s32.totalorder %s97, %s98
      %p112 = scmp.eq.s32.totalorder %s15, 2
      %p113 = por %p111, %p112
      %p115 = scmp.ne.s32.totalorder %s98, %s114
      %p116 = scmp.eq.s32.totalorder %s15, 0
      %p117 = por %p115, %p116
      %s118 = ssub.s32 %s16, %s35
      %s119 = ssub.s32 %s17, %s31
      %s120 = sor.u32 %s118, %s119
      %p121 = scmp.eq.s32.totalorder %s120, 0
      %s123 = sadd.s32 %s122, 1
      %s124 = scalar_select %p121, %s122, %s123
      %p127 = pneg %p121
      %p128 = scmp.eq.s32.totalorder %s9, 2
      %p129 = por %p127, %p128
      %p130 = scmp.ne.s32.totalorder %s122, %s125
      %p131 = scmp.eq.s32.totalorder %s9, 0
      %p132 = por %p130, %p131
      %p133 = scmp.ne.s32.totalorder %s122, %s125
      %p134 = scmp.eq.s32.totalorder %s14, 2
      %p135 = por %p133, %p134
      %p136 = scmp.ne.s32.totalorder %s125, %s126
      %p137 = scmp.eq.s32.totalorder %s14, 0
      %p138 = por %p136, %p137
      %p139 = scmp.ne.s32.totalorder %s125, %s126
      %p140 = scmp.eq.s32.totalorder %s15, 2
      %p141 = por %p139, %p140
      %p143 = scmp.ne.s32.totalorder %s126, %s142
      %p144 = scmp.eq.s32.totalorder %s15, 0
      %p145 = por %p143, %p144
      %p146 = scmp.le.s32.totalorder 1, %s9
      %p147 = scmp.lt.s32.totalorder %s9, 4
      %p148 = pnand %p146, %p147
      %p149 = pneg %p148
      // Predicated region
      $region9: #{localizer_alexnet_forward.16} parent=5 // pred_check
        _
      $region10: #{localizer_alexnet_forward.16} parent=5 // pred_check_branch
        %151 = sbr.rel (%p148) target = $region12
      $region11: #{localizer_alexnet_forward.16} parent=5 // pred_region
        %s152 = ssub.s32 %s9, 1
        // Predicated region
        $region13: #{localizer_alexnet_forward.16} parent=11 // pred_check
          %p153 = pneg %p110
        $region14: #{localizer_alexnet_forward.16} parent=11 // pred_check_branch
          %155 = sbr.rel (%p153) target = $region16
        $region15: #{localizer_alexnet_forward.16} parent=11 // pred_region
          %s156 = smul.u32 2, %s20
          %p157 = scmp.lt.s32.totalorder %s156, 1
          %s158 = scalar_select %p157, %s156, 1
          %s159 = scalar_lea.vmem %s2, %s158
          %s160 = smul.u32 2, %s20
        $region16: #{localizer_alexnet_forward.16} parent=11 // pred_fallthru
          _
      $region12: #{localizer_alexnet_forward.16} parent=5 // pred_fallthru
        _
      %p161 = scmp.lt.s32.totalorder %s9, 3
      // Predicated region
      $region17: #{localizer_alexnet_forward.16} parent=5 // pred_check
        %p162 = pneg %p161
      $region18: #{localizer_alexnet_forward.16} parent=5 // pred_check_branch
        %164 = sbr.rel (%p162) target = $region20
      $region19: #{localizer_alexnet_forward.16} parent=5 // pred_region
        // Predicated region
        $region21: #{localizer_alexnet_forward.16} parent=19 // pred_check
          %p165 = pneg %p50
        $region22: #{localizer_alexnet_forward.16} parent=19 // pred_check_branch
          %167 = sbr.rel (%p165) target = $region24
        $region23: #{localizer_alexnet_forward.16} parent=19 // pred_region
          %s168 = sand.u32 %s40, 1
          %s169 = sand.u32 %s40, 1
          %s170 = smul.addr %s169, 72
          %s171 = scalar_lea.vmem [#allocation3], %s170
          %s172 = smul.u32 3, %s16
          %s173 = smul.u32 6, %s18
          %s174 = smul.addr %s172, 18
          %s175 = sadd.s32 %s173, %s174
          %s176 = smul.addr %s175, 4
          %s177 = scalar_lea.vmem %s0, %s176
          // Predicated region
          $region25: #{localizer_alexnet_forward.16} parent=23 // pred_check
            _
          $region26: #{localizer_alexnet_forward.16} parent=23 // pred_check_branch
            %179 = sbr.rel (0) target = $region28
          $region27: #{localizer_alexnet_forward.16} parent=23 // pred_region
            // Predicated region
            $region29: #{localizer_alexnet_forward.16} parent=27 // pred_check
              _
            $region30: #{localizer_alexnet_forward.16} parent=27 // pred_check_branch
              %181 = sbr.rel (0) target = $region32
            $region31: #{localizer_alexnet_forward.16} parent=27 // pred_region
              loop: start=0, step=1, limit=1
              $region33: #{localizer_alexnet_forward.16} parent=31 // loop_pre_header
                _
              $region34: #{localizer_alexnet_forward.16} parent=31 // loop_header
                %s183 = sphi 0, %s187
                %p184 = scmp.ge.s32.totalorder %s183, 1
                %s188 = sphi %s177, %s177
                %s189 = sphi %s171, %s171
              $region35: #{localizer_alexnet_forward.16} parent=31 // loop_header_branch
                %186 = sbr.rel (%p184) target = $region39
              $region36: #{localizer_alexnet_forward.16} parent=31 // loop_body
                %v190 = vld [vmem:[%s188] sm:$0xff]
                %191 = vst [vmem:[%s189] sm:$0xff] %v190
                %v192 = vld [vmem:[%s188 + $0x8] sm:$0xff]
                %193 = vst [vmem:[%s189 + $0x8] sm:$0xff] %v192
                %v194 = vld [vmem:[%s188 + $0x10] sm:$0xff]
                %195 = vst [vmem:[%s189 + $0x10] sm:$0xff] %v194
                %v196 = vld [vmem:[%s188 + $0x48] sm:$0xff]
                %197 = vst [vmem:[%s189 + $0x18] sm:$0xff] %v196
                %v198 = vld [vmem:[%s188 + $0x50] sm:$0xff]
                %199 = vst [vmem:[%s189 + $0x20] sm:$0xff] %v198
                %v200 = vld [vmem:[%s188 + $0x58] sm:$0xff]
                %201 = vst [vmem:[%s189 + $0x28] sm:$0xff] %v200
                %v202 = vld [vmem:[%s188 + $0x90] sm:$0xff]
                %203 = vst [vmem:[%s189 + $0x30] sm:$0xff] %v202
                %v204 = vld [vmem:[%s188 + $0x98] sm:$0xff]
                %205 = vst [vmem:[%s189 + $0x38] sm:$0xff] %v204
                %v206 = vld [vmem:[%s188 + $0xa0] sm:$0xff]
                %207 = vst [vmem:[%s189 + $0x40] sm:$0xff] %v206
              $region37: #{localizer_alexnet_forward.16} parent=31 // loop_footer
                %s187 = sadd.s32 1, %s183
              $region38: #{localizer_alexnet_forward.16} parent=31 // loop_footer_branch
                %182 = sbr.rel target = $region34
              $region39: #{localizer_alexnet_forward.16} parent=31 // loop_exit
                _
            $region32: #{localizer_alexnet_forward.16} parent=27 // pred_fallthru
              _
            // Predicated region
            $region40: #{localizer_alexnet_forward.16} parent=27 // pred_check
              _
            $region41: #{localizer_alexnet_forward.16} parent=27 // pred_check_branch
              %209 = sbr.rel target = $region43
            $region42: #{localizer_alexnet_forward.16} parent=27 // pred_region
              _
            $region43: #{localizer_alexnet_forward.16} parent=27 // pred_fallthru
              _
          $region28: #{localizer_alexnet_forward.16} parent=23 // pred_fallthru
            _
          %210 = vnop
        $region24: #{localizer_alexnet_forward.16} parent=19 // pred_fallthru
          _
        // Predicated region
        $region44: #{localizer_alexnet_forward.16} parent=19 // pred_check
          %p211 = pneg %p78
        $region45: #{localizer_alexnet_forward.16} parent=19 // pred_check_branch
          %213 = sbr.rel (%p211) target = $region47
        $region46: #{localizer_alexnet_forward.16} parent=19 // pred_region
          %s214 = smul.u32 96, %s18
          %s215 = smul.u32 2, %s17
          %p216 = scmp.lt.s32.totalorder %s214, 287
          %s217 = scalar_select %p216, %s214, 287
          %p218 = scmp.lt.s32.totalorder %s215, 1
          %s219 = scalar_select %p218, %s215, 1
          %s220 = smul.addr %s217, 2
          %s221 = sadd.s32 %s219, %s220
          %s222 = smul.addr %s221, 4
          %s223 = scalar_lea.vmem %s1, %s222
          %s224 = smul.u32 96, %s18
          %s225 = smul.u32 2, %s17
        $region47: #{localizer_alexnet_forward.16} parent=19 // pred_fallthru
          _
      $region20: #{localizer_alexnet_forward.16} parent=5 // pred_fallthru
        _
      %p226 = scmp.le.s32.totalorder 1, %s9
      %p227 = scmp.lt.s32.totalorder %s9, 4
      %p228 = pnand %p226, %p227
      %p229 = pneg %p228
      // Predicated region
      $region48: #{localizer_alexnet_forward.16} parent=5 // pred_check
        _
      $region49: #{localizer_alexnet_forward.16} parent=5 // pred_check_branch
        %231 = sbr.rel (%p228) target = $region51
      $region50: #{localizer_alexnet_forward.16} parent=5 // pred_region
        %s232 = ssub.s32 %s9, 1
        %s233 = sand.u32 %s43, 1
        %s234 = sand.u32 %s43, 1
        %s235 = smul.addr %s234, 72
        %s236 = scalar_lea.vmem [#allocation3], %s235
        // Predicated region
        $region52: #{localizer_alexnet_forward.16} parent=50 // pred_check
          %p237 = pneg %p56
        $region53: #{localizer_alexnet_forward.16} parent=50 // pred_check_branch
          %239 = sbr.rel (%p237) target = $region55
        $region54: #{localizer_alexnet_forward.16} parent=50 // pred_region
          _
        $region55: #{localizer_alexnet_forward.16} parent=50 // pred_fallthru
          _
        %s240 = sand.u32 %s43, 1
        %s241 = sand.u32 %s43, 1
        %s242 = smul.addr %s241, 72
        %s243 = scalar_lea.vmem [#allocation3], %s242
        %p244 = pneg %p56
        %p245 = pneg %p53
        %s246 = smul.u32 96, %s21
        %s247 = smul.u32 2, %s20
        %p248 = scmp.lt.s32.totalorder %s246, 287
        %s249 = scalar_select %p248, %s246, 287
        %p250 = scmp.lt.s32.totalorder %s247, 1
        %s251 = scalar_select %p250, %s247, 1
        %s252 = smul.addr %s249, 2
        %s253 = sadd.s32 %s251, %s252
        %s254 = smul.addr %s253, 4
        %s255 = scalar_lea.vmem %s1, %s254
        %p256 = pneg %p84
        %p257 = pneg %p81
        %s258 = smul.u32 2, %s20
        %p259 = scmp.lt.s32.totalorder %s258, 1
        %s260 = scalar_select %p259, %s258, 1
        %s261 = scalar_lea.vmem %s2, %s260
        %p262 = pneg %p110
        %p263 = pneg %p107
        %p264 = pneg %p138
        %p265 = pneg %p135
        %s266 = smul.u32 3, %s19
        %s267 = smul.u32 2, %s20
        %p268 = scmp.lt.s32.totalorder %s266, 2
        %s269 = scalar_select %p268, %s266, 2
        %p270 = scmp.lt.s32.totalorder %s267, 1
        %s271 = scalar_select %p270, %s267, 1
        %s272 = smul.addr %s269, 2
        %s273 = sadd.s32 %s271, %s272
        %s274 = smul.addr %s273, 4
        %s275 = scalar_lea.vmem %s3, %s274
        %s276 = smul.u32 3, %s19
        %s277 = smul.u32 6, %s21
        %s278 = smul.u32 96, %s21
        %s279 = smul.u32 2, %s20
        %p280 = scmp.lt.s32.totalorder %s278, 287
        %s281 = scalar_select %p280, %s278, 287
        %p282 = scmp.lt.s32.totalorder %s279, 1
        %s283 = scalar_select %p282, %s279, 1
        %s284 = smul.addr %s281, 2
        %s285 = sadd.s32 %s283, %s284
        %s286 = smul.addr %s285, 4
        %s287 = scalar_lea.vmem %s1, %s286
        %s288 = smul.u32 96, %s21
        %s289 = smul.u32 2, %s20
        %s290 = smul.u32 2, %s20
        %p291 = scmp.lt.s32.totalorder %s290, 1
        %s292 = scalar_select %p291, %s290, 1
        %s293 = scalar_lea.vmem %s2, %s292
        %s294 = smul.u32 2, %s20
        %s295 = smul.u32 3, %s19
        %s296 = smul.u32 2, %s20
        %p297 = scmp.lt.s32.totalorder %s295, 2
        %s298 = scalar_select %p297, %s295, 2
        %p299 = scmp.lt.s32.totalorder %s296, 1
        %s300 = scalar_select %p299, %s296, 1
        %s301 = smul.addr %s298, 2
        %s302 = sadd.s32 %s300, %s301
        %s303 = smul.addr %s302, 4
        %s304 = scalar_lea.vmem %s3, %s303
        %s305 = smul.u32 3, %s19
        %s306 = smul.u32 2, %s20
        %p307 = scmp.eq.s32.totalorder %s21, 0
        // Predicated region
        $region56: #{localizer_alexnet_forward.16} parent=50 // pred_check
          %p308 = pneg %p307
        $region57: #{localizer_alexnet_forward.16} parent=50 // pred_check_branch
          %310 = sbr.rel (%p308) target = $region59
        $region58: #{localizer_alexnet_forward.16} parent=50 // pred_region
          %311 = vst [vmem:[#allocation2] sm:$0xff] 0.0
          %312 = vst [vmem:[#allocation2 + $0x8] sm:$0xff] 0.0
          %313 = vst [vmem:[#allocation2 + $0x10] sm:$0xff] 0.0
          %314 = vst [vmem:[#allocation2 + $0x18] sm:$0xff] 0.0
          %315 = vst [vmem:[#allocation2 + $0x20] sm:$0xff] 0.0
          %316 = vst [vmem:[#allocation2 + $0x28] sm:$0xff] 0.0
        $region59: #{localizer_alexnet_forward.16} parent=50 // pred_fallthru
          _
        %v317 = vld [vmem:[#allocation2] sm:$0xff]
        %v318 = vld [vmem:[#allocation2 + $0x8] sm:$0xff]
        %v319 = vld [vmem:[#allocation2 + $0x10] sm:$0xff]
        %v320 = vld [vmem:[#allocation2 + $0x18] sm:$0xff]
        %v321 = vld [vmem:[#allocation2 + $0x20] sm:$0xff]
        %v322 = vld [vmem:[#allocation2 + $0x28] sm:$0xff]
        %v323 = vld [vmem:[%s236] sm:$0xff]
        %v324 = vld [vmem:[%s236 + $0x8] sm:$0xff]
        %v325 = vld [vmem:[%s236 + $0x10] sm:$0xff]
        %v326 = vld [vmem:[%s236 + $0x18] sm:$0xff]
        %v327 = vld [vmem:[%s236 + $0x20] sm:$0xff]
        %v328 = vld [vmem:[%s236 + $0x28] sm:$0xff]
        %v329 = vld [vmem:[%s236 + $0x30] sm:$0xff]
        %v330 = vld [vmem:[%s236 + $0x38] sm:$0xff]
        %v331 = vld [vmem:[%s236 + $0x40] sm:$0xff]
        %v332 = vld [vmem:[%s287] sm:$0xff]
        %v333 = vld [vmem:[%s287 + $0x8] sm:$0xff]
        %v334 = vld [vmem:[%s287 + $0x10] sm:$0xff]
        %v335 = vld [vmem:[%s287 + $0x18] sm:$0xff]
        %v336 = vld [vmem:[%s287 + $0x20] sm:$0xff]
        %v337 = vld [vmem:[%s287 + $0x28] sm:$0xff]
        %v338 = vld [vmem:[%s287 + $0x30] sm:$0xff]
        %v339 = vld [vmem:[%s287 + $0x38] sm:$0xff]
        %v340 = vld [vmem:[%s287 + $0x40] sm:$0xff]
        %v341 = vld [vmem:[%s287 + $0x48] sm:$0xff]
        %v342 = vld [vmem:[%s287 + $0x50] sm:$0xff]
        %v343 = vld [vmem:[%s287 + $0x58] sm:$0xff]
        %v344 = vld [vmem:[%s287 + $0x60] sm:$0xff]
        %v345 = vld [vmem:[%s287 + $0x68] sm:$0xff]
        %v346 = vld [vmem:[%s287 + $0x70] sm:$0xff]
        %v347 = vld [vmem:[%s287 + $0x78] sm:$0xff]
        %v348 = vld [vmem:[%s287 + $0x80] sm:$0xff]
        %v349 = vld [vmem:[%s287 + $0x88] sm:$0xff]
        %v350 = vld [vmem:[%s287 + $0x90] sm:$0xff]
        %v351 = vld [vmem:[%s287 + $0x98] sm:$0xff]
        %v352 = vld [vmem:[%s287 + $0xa0] sm:$0xff]
        %v353 = vld [vmem:[%s287 + $0xa8] sm:$0xff]
        %v354 = vld [vmem:[%s287 + $0xb0] sm:$0xff]
        %v355 = vld [vmem:[%s287 + $0xb8] sm:$0xff]
        %v356 = vld [vmem:[%s287 + $0xc0] sm:$0xff]
        %v357 = vld [vmem:[%s287 + $0xc8] sm:$0xff]
        %v358 = vld [vmem:[%s287 + $0xd0] sm:$0xff]
        %v359 = vld [vmem:[%s287 + $0xd8] sm:$0xff]
        %v360 = vld [vmem:[%s287 + $0xe0] sm:$0xff]
        %v361 = vld [vmem:[%s287 + $0xe8] sm:$0xff]
        %v362 = vld [vmem:[%s287 + $0xf0] sm:$0xff]
        %v363 = vld [vmem:[%s287 + $0xf8] sm:$0xff]
        %v364 = vld [vmem:[%s287 + $0x100] sm:$0xff]
        %v365 = vld [vmem:[%s287 + $0x108] sm:$0xff]
        %v366 = vld [vmem:[%s287 + $0x110] sm:$0xff]
        %v367 = vld [vmem:[%s287 + $0x118] sm:$0xff]
        %v368 = vld [vmem:[%s287 + $0x120] sm:$0xff]
        %v369 = vld [vmem:[%s287 + $0x128] sm:$0xff]
        %v370 = vld [vmem:[%s287 + $0x130] sm:$0xff]
        %v371 = vld [vmem:[%s287 + $0x138] sm:$0xff]
        %v372 = vld [vmem:[%s287 + $0x140] sm:$0xff]
        %v373 = vld [vmem:[%s287 + $0x148] sm:$0xff]
        %v374 = vld [vmem:[%s287 + $0x150] sm:$0xff]
        %v375 = vld [vmem:[%s287 + $0x158] sm:$0xff]
        %v376 = vld [vmem:[%s287 + $0x160] sm:$0xff]
        %v377 = vld [vmem:[%s287 + $0x168] sm:$0xff]
        %v378 = vld [vmem:[%s287 + $0x170] sm:$0xff]
        %v379 = vld [vmem:[%s287 + $0x178] sm:$0xff]
        %v380 = vld [vmem:[%s287 + $0x180] sm:$0xff]
        %v381 = vld [vmem:[%s287 + $0x188] sm:$0xff]
        %v382 = vld [vmem:[%s287 + $0x190] sm:$0xff]
        %v383 = vld [vmem:[%s287 + $0x198] sm:$0xff]
        %v384 = vld [vmem:[%s287 + $0x1a0] sm:$0xff]
        %v385 = vld [vmem:[%s287 + $0x1a8] sm:$0xff]
        %v386 = vld [vmem:[%s287 + $0x1b0] sm:$0xff]
        %v387 = vld [vmem:[%s287 + $0x1b8] sm:$0xff]
        %v388 = vld [vmem:[%s287 + $0x1c0] sm:$0xff]
        %v389 = vld [vmem:[%s287 + $0x1c8] sm:$0xff]
        %v390 = vld [vmem:[%s287 + $0x1d0] sm:$0xff]
        %v391 = vld [vmem:[%s287 + $0x1d8] sm:$0xff]
        %v392 = vld [vmem:[%s287 + $0x1e0] sm:$0xff]
        %v393 = vld [vmem:[%s287 + $0x1e8] sm:$0xff]
        %v394 = vld [vmem:[%s287 + $0x1f0] sm:$0xff]
        %v395 = vld [vmem:[%s287 + $0x1f8] sm:$0xff]
        %v396 = vld [vmem:[%s287 + $0x200] sm:$0xff]
        %v397 = vld [vmem:[%s287 + $0x208] sm:$0xff]
        %v398 = vld [vmem:[%s287 + $0x210] sm:$0xff]
        %v399 = vld [vmem:[%s287 + $0x218] sm:$0xff]
        %v400 = vld [vmem:[%s287 + $0x220] sm:$0xff]
        %v401 = vld [vmem:[%s287 + $0x228] sm:$0xff]
        %v402 = vld [vmem:[%s287 + $0x230] sm:$0xff]
        %v403 = vld [vmem:[%s287 + $0x238] sm:$0xff]
        %v404 = vld [vmem:[%s287 + $0x240] sm:$0xff]
        %v405 = vld [vmem:[%s287 + $0x248] sm:$0xff]
        %v406 = vld [vmem:[%s287 + $0x250] sm:$0xff]
        %v407 = vld [vmem:[%s287 + $0x258] sm:$0xff]
        %v408 = vld [vmem:[%s287 + $0x260] sm:$0xff]
        %v409 = vld [vmem:[%s287 + $0x268] sm:$0xff]
        %v410 = vld [vmem:[%s287 + $0x270] sm:$0xff]
        %v411 = vld [vmem:[%s287 + $0x278] sm:$0xff]
        %v412 = vld [vmem:[%s287 + $0x280] sm:$0xff]
        %v413 = vld [vmem:[%s287 + $0x288] sm:$0xff]
        %v414 = vld [vmem:[%s287 + $0x290] sm:$0xff]
        %v415 = vld [vmem:[%s287 + $0x298] sm:$0xff]
        %v416 = vld [vmem:[%s287 + $0x2a0] sm:$0xff]
        %v417 = vld [vmem:[%s287 + $0x2a8] sm:$0xff]
        %v418 = vld [vmem:[%s287 + $0x2b0] sm:$0xff]
        %v419 = vld [vmem:[%s287 + $0x2b8] sm:$0xff]
        %v420 = vld [vmem:[%s287 + $0x2c0] sm:$0xff]
        %v421 = vld [vmem:[%s287 + $0x2c8] sm:$0xff]
        %v422 = vld [vmem:[%s287 + $0x2d0] sm:$0xff]
        %v423 = vld [vmem:[%s287 + $0x2d8] sm:$0xff]
        %v424 = vld [vmem:[%s287 + $0x2e0] sm:$0xff]
        %v425 = vld [vmem:[%s287 + $0x2e8] sm:$0xff]
        %v426 = vld [vmem:[%s287 + $0x2f0] sm:$0xff]
        %v427 = vld [vmem:[%s287 + $0x2f8] sm:$0xff]
        %v437 = vunpack.c.l.b16 %v323
        %v438 = vunpack.c.h.b16 %v323
        %v439 = vunpack.c.l.b16 %v324
        %v440 = vunpack.c.h.b16 %v324
        %v441 = vunpack.c.l.b16 %v325
        %v442 = vunpack.c.h.b16 %v325
        %v443 = vunpack.c.l.b16 %v326
        %v444 = vunpack.c.h.b16 %v326
        %v445 = vunpack.c.l.b16 %v327
        %v446 = vunpack.c.h.b16 %v327
        %v447 = vunpack.c.l.b16 %v328
        %v448 = vunpack.c.h.b16 %v328
        %v449 = vunpack.c.l.b16 %v329
        %v450 = vunpack.c.h.b16 %v329
        %v451 = vunpack.c.l.b16 %v330
        %v452 = vunpack.c.h.b16 %v330
        %v453 = vunpack.c.l.b16 %v331
        %v454 = vunpack.c.h.b16 %v331
        %v455 = vpack.c.b16 %v443, %v437
        %v456 = vpack.c.b16 %v444, %v438
        %v457 = vpack.c.b16 %v445, %v439
        %v458 = vpack.c.b16 %v446, %v440
        %v459 = vpack.c.b16 %v447, %v441
        %v460 = vpack.c.b16 %v448, %v442
        %v461 = vpack.c.b16 %v449, %v449
        %v462 = vpack.c.b16 %v450, %v450
        %v463 = vpack.c.b16 %v451, %v451
        %v464 = vpack.c.b16 %v452, %v452
        %v465 = vpack.c.b16 %v453, %v453
        %v466 = vpack.c.b16 %v454, %v454
        %v575 = vunpack.c.l.b16 %v332
        %v576 = vunpack.c.h.b16 %v332
        %v577 = vunpack.c.l.b16 %v333
        %v578 = vunpack.c.h.b16 %v333
        %v579 = vunpack.c.l.b16 %v334
        %v580 = vunpack.c.h.b16 %v334
        %v581 = vunpack.c.l.b16 %v335
        %v582 = vunpack.c.h.b16 %v335
        %v583 = vunpack.c.l.b16 %v336
        %v584 = vunpack.c.h.b16 %v336
        %v585 = vunpack.c.l.b16 %v337
        %v586 = vunpack.c.h.b16 %v337
        %v587 = vunpack.c.l.b16 %v338
        %v588 = vunpack.c.h.b16 %v338
        %v589 = vunpack.c.l.b16 %v339
        %v590 = vunpack.c.h.b16 %v339
        %v591 = vunpack.c.l.b16 %v340
        %v592 = vunpack.c.h.b16 %v340
        %v593 = vunpack.c.l.b16 %v341
        %v594 = vunpack.c.h.b16 %v341
        %v595 = vunpack.c.l.b16 %v342
        %v596 = vunpack.c.h.b16 %v342
        %v597 = vunpack.c.l.b16 %v343
        %v598 = vunpack.c.h.b16 %v343
        %v599 = vunpack.c.l.b16 %v344
        %v600 = vunpack.c.h.b16 %v344
        %v601 = vunpack.c.l.b16 %v345
        %v602 = vunpack.c.h.b16 %v345
        %v603 = vunpack.c.l.b16 %v346
        %v604 = vunpack.c.h.b16 %v346
        %v605 = vunpack.c.l.b16 %v347
        %v606 = vunpack.c.h.b16 %v347
        %v607 = vunpack.c.l.b16 %v348
        %v608 = vunpack.c.h.b16 %v348
        %v609 = vunpack.c.l.b16 %v349
        %v610 = vunpack.c.h.b16 %v349
        %v611 = vunpack.c.l.b16 %v350
        %v612 = vunpack.c.h.b16 %v350
        %v613 = vunpack.c.l.b16 %v351
        %v614 = vunpack.c.h.b16 %v351
        %v615 = vunpack.c.l.b16 %v352
        %v616 = vunpack.c.h.b16 %v352
        %v617 = vunpack.c.l.b16 %v353
        %v618 = vunpack.c.h.b16 %v353
        %v619 = vunpack.c.l.b16 %v354
        %v620 = vunpack.c.h.b16 %v354
        %v621 = vunpack.c.l.b16 %v355
        %v622 = vunpack.c.h.b16 %v355
        %v623 = vunpack.c.l.b16 %v356
        %v624 = vunpack.c.h.b16 %v356
        %v625 = vunpack.c.l.b16 %v357
        %v626 = vunpack.c.h.b16 %v357
        %v627 = vunpack.c.l.b16 %v358
        %v628 = vunpack.c.h.b16 %v358
        %v629 = vunpack.c.l.b16 %v359
        %v630 = vunpack.c.h.b16 %v359
        %v631 = vunpack.c.l.b16 %v360
        %v632 = vunpack.c.h.b16 %v360
        %v633 = vunpack.c.l.b16 %v361
        %v634 = vunpack.c.h.b16 %v361
        %v635 = vunpack.c.l.b16 %v362
        %v636 = vunpack.c.h.b16 %v362
        %v637 = vunpack.c.l.b16 %v363
        %v638 = vunpack.c.h.b16 %v363
        %v639 = vunpack.c.l.b16 %v364
        %v640 = vunpack.c.h.b16 %v364
        %v641 = vunpack.c.l.b16 %v365
        %v642 = vunpack.c.h.b16 %v365
        %v643 = vunpack.c.l.b16 %v366
        %v644 = vunpack.c.h.b16 %v366
        %v645 = vunpack.c.l.b16 %v367
        %v646 = vunpack.c.h.b16 %v367
        %v647 = vunpack.c.l.b16 %v368
        %v648 = vunpack.c.h.b16 %v368
        %v649 = vunpack.c.l.b16 %v369
        %v650 = vunpack.c.h.b16 %v369
        %v651 = vunpack.c.l.b16 %v370
        %v652 = vunpack.c.h.b16 %v370
        %v653 = vunpack.c.l.b16 %v371
        %v654 = vunpack.c.h.b16 %v371
        %v655 = vunpack.c.l.b16 %v372
        %v656 = vunpack.c.h.b16 %v372
        %v657 = vunpack.c.l.b16 %v373
        %v658 = vunpack.c.h.b16 %v373
        %v659 = vunpack.c.l.b16 %v374
        %v660 = vunpack.c.h.b16 %v374
        %v661 = vunpack.c.l.b16 %v375
        %v662 = vunpack.c.h.b16 %v375
        %v663 = vunpack.c.l.b16 %v376
        %v664 = vunpack.c.h.b16 %v376
        %v665 = vunpack.c.l.b16 %v377
        %v666 = vunpack.c.h.b16 %v377
        %v667 = vunpack.c.l.b16 %v378
        %v668 = vunpack.c.h.b16 %v378
        %v669 = vunpack.c.l.b16 %v379
        %v670 = vunpack.c.h.b16 %v379
        %v671 = vunpack.c.l.b16 %v380
        %v672 = vunpack.c.h.b16 %v380
        %v673 = vunpack.c.l.b16 %v381
        %v674 = vunpack.c.h.b16 %v381
        %v675 = vunpack.c.l.b16 %v382
        %v676 = vunpack.c.h.b16 %v382
        %v677 = vunpack.c.l.b16 %v383
        %v678 = vunpack.c.h.b16 %v383
        %v679 = vunpack.c.l.b16 %v384
        %v680 = vunpack.c.h.b16 %v384
        %v681 = vunpack.c.l.b16 %v385
        %v682 = vunpack.c.h.b16 %v385
        %v683 = vunpack.c.l.b16 %v386
        %v684 = vunpack.c.h.b16 %v386
        %v685 = vunpack.c.l.b16 %v387
        %v686 = vunpack.c.h.b16 %v387
        %v687 = vunpack.c.l.b16 %v388
        %v688 = vunpack.c.h.b16 %v388
        %v689 = vunpack.c.l.b16 %v389
        %v690 = vunpack.c.h.b16 %v389
        %v691 = vunpack.c.l.b16 %v390
        %v692 = vunpack.c.h.b16 %v390
        %v693 = vunpack.c.l.b16 %v391
        %v694 = vunpack.c.h.b16 %v391
        %v695 = vunpack.c.l.b16 %v392
        %v696 = vunpack.c.h.b16 %v392
        %v697 = vunpack.c.l.b16 %v393
        %v698 = vunpack.c.h.b16 %v393
        %v699 = vunpack.c.l.b16 %v394
        %v700 = vunpack.c.h.b16 %v394
        %v701 = vunpack.c.l.b16 %v395
        %v702 = vunpack.c.h.b16 %v395
        %v703 = vunpack.c.l.b16 %v396
        %v704 = vunpack.c.h.b16 %v396
        %v705 = vunpack.c.l.b16 %v397
        %v706 = vunpack.c.h.b16 %v397
        %v707 = vunpack.c.l.b16 %v398
        %v708 = vunpack.c.h.b16 %v398
        %v709 = vunpack.c.l.b16 %v399
        %v710 = vunpack.c.h.b16 %v399
        %v711 = vunpack.c.l.b16 %v400
        %v712 = vunpack.c.h.b16 %v400
        %v713 = vunpack.c.l.b16 %v401
        %v714 = vunpack.c.h.b16 %v401
        %v715 = vunpack.c.l.b16 %v402
        %v716 = vunpack.c.h.b16 %v402
        %v717 = vunpack.c.l.b16 %v403
        %v718 = vunpack.c.h.b16 %v403
        %v719 = vunpack.c.l.b16 %v404
        %v720 = vunpack.c.h.b16 %v404
        %v721 = vunpack.c.l.b16 %v405
        %v722 = vunpack.c.h.b16 %v405
        %v723 = vunpack.c.l.b16 %v406
        %v724 = vunpack.c.h.b16 %v406
        %v725 = vunpack.c.l.b16 %v407
        %v726 = vunpack.c.h.b16 %v407
        %v727 = vunpack.c.l.b16 %v408
        %v728 = vunpack.c.h.b16 %v408
        %v729 = vunpack.c.l.b16 %v409
        %v730 = vunpack.c.h.b16 %v409
        %v731 = vunpack.c.l.b16 %v410
        %v732 = vunpack.c.h.b16 %v410
        %v733 = vunpack.c.l.b16 %v411
        %v734 = vunpack.c.h.b16 %v411
        %v735 = vunpack.c.l.b16 %v412
        %v736 = vunpack.c.h.b16 %v412
        %v737 = vunpack.c.l.b16 %v413
        %v738 = vunpack.c.h.b16 %v413
        %v739 = vunpack.c.l.b16 %v414
        %v740 = vunpack.c.h.b16 %v414
        %v741 = vunpack.c.l.b16 %v415
        %v742 = vunpack.c.h.b16 %v415
        %v743 = vunpack.c.l.b16 %v416
        %v744 = vunpack.c.h.b16 %v416
        %v745 = vunpack.c.l.b16 %v417
        %v746 = vunpack.c.h.b16 %v417
        %v747 = vunpack.c.l.b16 %v418
        %v748 = vunpack.c.h.b16 %v418
        %v749 = vunpack.c.l.b16 %v419
        %v750 = vunpack.c.h.b16 %v419
        %v751 = vunpack.c.l.b16 %v420
        %v752 = vunpack.c.h.b16 %v420
        %v753 = vunpack.c.l.b16 %v421
        %v754 = vunpack.c.h.b16 %v421
        %v755 = vunpack.c.l.b16 %v422
        %v756 = vunpack.c.h.b16 %v422
        %v757 = vunpack.c.l.b16 %v423
        %v758 = vunpack.c.h.b16 %v423
        %v759 = vunpack.c.l.b16 %v424
        %v760 = vunpack.c.h.b16 %v424
        %v761 = vunpack.c.l.b16 %v425
        %v762 = vunpack.c.h.b16 %v425
        %v763 = vunpack.c.l.b16 %v426
        %v764 = vunpack.c.h.b16 %v426
        %v765 = vunpack.c.l.b16 %v427
        %v766 = vunpack.c.h.b16 %v427
        %v767 = vpack.c.b16 %v577, %v575
        %v768 = vpack.c.b16 %v578, %v576
        %v769 = vpack.c.b16 %v581, %v579
        %v770 = vpack.c.b16 %v582, %v580
        %v771 = vpack.c.b16 %v585, %v583
        %v772 = vpack.c.b16 %v586, %v584
        %v773 = vpack.c.b16 %v589, %v587
        %v774 = vpack.c.b16 %v590, %v588
        %v775 = vpack.c.b16 %v593, %v591
        %v776 = vpack.c.b16 %v594, %v592
        %v777 = vpack.c.b16 %v597, %v595
        %v778 = vpack.c.b16 %v598, %v596
        %v779 = vpack.c.b16 %v601, %v599
        %v780 = vpack.c.b16 %v602, %v600
        %v781 = vpack.c.b16 %v605, %v603
        %v782 = vpack.c.b16 %v606, %v604
        %v783 = vpack.c.b16 %v609, %v607
        %v784 = vpack.c.b16 %v610, %v608
        %v785 = vpack.c.b16 %v613, %v611
        %v786 = vpack.c.b16 %v614, %v612
        %v787 = vpack.c.b16 %v617, %v615
        %v788 = vpack.c.b16 %v618, %v616
        %v789 = vpack.c.b16 %v621, %v619
        %v790 = vpack.c.b16 %v622, %v620
        %v791 = vpack.c.b16 %v625, %v623
        %v792 = vpack.c.b16 %v626, %v624
        %v793 = vpack.c.b16 %v629, %v627
        %v794 = vpack.c.b16 %v630, %v628
        %v795 = vpack.c.b16 %v633, %v631
        %v796 = vpack.c.b16 %v634, %v632
        %v797 = vpack.c.b16 %v637, %v635
        %v798 = vpack.c.b16 %v638, %v636
        %v799 = vpack.c.b16 %v641, %v639
        %v800 = vpack.c.b16 %v642, %v640
        %v801 = vpack.c.b16 %v645, %v643
        %v802 = vpack.c.b16 %v646, %v644
        %v803 = vpack.c.b16 %v649, %v647
        %v804 = vpack.c.b16 %v650, %v648
        %v805 = vpack.c.b16 %v653, %v651
        %v806 = vpack.c.b16 %v654, %v652
        %v807 = vpack.c.b16 %v657, %v655
        %v808 = vpack.c.b16 %v658, %v656
        %v809 = vpack.c.b16 %v661, %v659
        %v810 = vpack.c.b16 %v662, %v660
        %v811 = vpack.c.b16 %v665, %v663
        %v812 = vpack.c.b16 %v666, %v664
        %v813 = vpack.c.b16 %v669, %v667
        %v814 = vpack.c.b16 %v670, %v668
        %v815 = vpack.c.b16 %v673, %v671
        %v816 = vpack.c.b16 %v674, %v672
        %v817 = vpack.c.b16 %v677, %v675
        %v818 = vpack.c.b16 %v678, %v676
        %v819 = vpack.c.b16 %v681, %v679
        %v820 = vpack.c.b16 %v682, %v680
        %v821 = vpack.c.b16 %v685, %v683
        %v822 = vpack.c.b16 %v686, %v684
        %v823 = vpack.c.b16 %v689, %v687
        %v824 = vpack.c.b16 %v690, %v688
        %v825 = vpack.c.b16 %v693, %v691
        %v826 = vpack.c.b16 %v694, %v692
        %v827 = vpack.c.b16 %v697, %v695
        %v828 = vpack.c.b16 %v698, %v696
        %v829 = vpack.c.b16 %v701, %v699
        %v830 = vpack.c.b16 %v702, %v700
        %v831 = vpack.c.b16 %v705, %v703
        %v832 = vpack.c.b16 %v706, %v704
        %v833 = vpack.c.b16 %v709, %v707
        %v834 = vpack.c.b16 %v710, %v708
        %v835 = vpack.c.b16 %v713, %v711
        %v836 = vpack.c.b16 %v714, %v712
        %v837 = vpack.c.b16 %v717, %v715
        %v838 = vpack.c.b16 %v718, %v716
        %v839 = vpack.c.b16 %v721, %v719
        %v840 = vpack.c.b16 %v722, %v720
        %v841 = vpack.c.b16 %v725, %v723
        %v842 = vpack.c.b16 %v726, %v724
        %v843 = vpack.c.b16 %v729, %v727
        %v844 = vpack.c.b16 %v730, %v728
        %v845 = vpack.c.b16 %v733, %v731
        %v846 = vpack.c.b16 %v734, %v732
        %v847 = vpack.c.b16 %v737, %v735
        %v848 = vpack.c.b16 %v738, %v736
        %v849 = vpack.c.b16 %v741, %v739
        %v850 = vpack.c.b16 %v742, %v740
        %v851 = vpack.c.b16 %v745, %v743
        %v852 = vpack.c.b16 %v746, %v744
        %v853 = vpack.c.b16 %v749, %v747
        %v854 = vpack.c.b16 %v750, %v748
        %v855 = vpack.c.b16 %v753, %v751
        %v856 = vpack.c.b16 %v754, %v752
        %v857 = vpack.c.b16 %v757, %v755
        %v858 = vpack.c.b16 %v758, %v756
        %v859 = vpack.c.b16 %v761, %v759
        %v860 = vpack.c.b16 %v762, %v760
        %v861 = vpack.c.b16 %v765, %v763
        %v862 = vpack.c.b16 %v766, %v764
        %959 = vmatprep.subr.bf16.mxu0 %v782
        %960 = vmatpush1.bf16.msra.mxu0 %v781
        %961 = vmatprep.subr.bf16.mxu0 %v780
        %962 = vmatpush1.bf16.msra.mxu0 %v779
        %963 = vmatprep.subr.bf16.mxu0 %v778
        %964 = vmatpush1.bf16.msra.mxu0 %v777
        %965 = vmatprep.subr.bf16.mxu0 %v776
        %966 = vmatpush1.bf16.msra.mxu0 %v775
        %967 = vmatprep.subr.bf16.mxu0 %v774
        %968 = vmatpush1.bf16.msra.mxu0 %v773
        %969 = vmatprep.subr.bf16.mxu0 %v772
        %970 = vmatpush1.bf16.msra.mxu0 %v771
        %971 = vmatprep.subr.bf16.mxu0 %v770
        %972 = vmatpush1.bf16.msra.mxu0 %v769
        %973 = vmatprep.subr.bf16.mxu0 %v768
        %974 = vmatpush1.bf16.msra.mxu0 %v767
        %975 = vmatprep.subr.bf16.mxu0 %v798
        %976 = vmatpush2.bf16.msra.mxu0 %v797
        %977 = vmatprep.subr.bf16.mxu0 %v796
        %978 = vmatpush2.bf16.msra.mxu0 %v795
        %979 = vmatprep.subr.bf16.mxu0 %v794
        %980 = vmatpush2.bf16.msra.mxu0 %v793
        %981 = vmatprep.subr.bf16.mxu0 %v792
        %982 = vmatpush2.bf16.msra.mxu0 %v791
        %983 = vmatprep.subr.bf16.mxu0 %v790
        %984 = vmatpush2.bf16.msra.mxu0 %v789
        %985 = vmatprep.subr.bf16.mxu0 %v788
        %986 = vmatpush2.bf16.msra.mxu0 %v787
        %987 = vmatprep.subr.bf16.mxu0 %v786
        %988 = vmatpush2.bf16.msra.mxu0 %v785
        %989 = vmatprep.subr.bf16.mxu0 %v784
        %990 = vmatpush2.bf16.msra.mxu0 %v783
        %991 = vmatprep.mubr.bf16.mxu0 %v456
        %992 = vmatmul.mubr.bf16.gmra.mxu0 %v455
        %v993 = vpop.f32.mrf.mxu0
        %v994 = vadd.f32 0.0, %v993
        %v995 = vpop.f32.mrf.mxu0
        %v996 = vadd.f32 0.0, %v995
        %v997 = vpop.f32.mrf.mxu0
        %v998 = vadd.f32 0.0, %v997
        %v999 = vpop.f32.mrf.mxu0
        %v1000 = vadd.f32 0.0, %v999
        %1001 = vmatprep.mubr.bf16.mxu0 %v462
        %1002 = vmatmul.mubr.bf16.gmra.mxu0 %v461
        %v1003 = vpop.f32.mrf.mxu0
        %v1004 = vadd.f32 0.0, %v1003
        %v1005 = vpop.f32.mrf.mxu0
        %v1006 = vadd.f32 0.0, %v1005
        %v1007 = vpop.f32.mrf.mxu0
        %v1008 = vpop.f32.mrf.mxu0
        %1009 = vdwg.mxu0
        %1010 = vmatprep.subr.bf16.mxu0 %v814
        %1011 = vmatpush1.bf16.msra.mxu0 %v813
        %1012 = vmatprep.subr.bf16.mxu0 %v812
        %1013 = vmatpush1.bf16.msra.mxu0 %v811
        %1014 = vmatprep.subr.bf16.mxu0 %v810
        %1015 = vmatpush1.bf16.msra.mxu0 %v809
        %1016 = vmatprep.subr.bf16.mxu0 %v808
        %1017 = vmatpush1.bf16.msra.mxu0 %v807
        %1018 = vmatprep.subr.bf16.mxu0 %v806
        %1019 = vmatpush1.bf16.msra.mxu0 %v805
        %1020 = vmatprep.subr.bf16.mxu0 %v804
        %1021 = vmatpush1.bf16.msra.mxu0 %v803
        %1022 = vmatprep.subr.bf16.mxu0 %v802
        %1023 = vmatpush1.bf16.msra.mxu0 %v801
        %1024 = vmatprep.subr.bf16.mxu0 %v800
        %1025 = vmatpush1.bf16.msra.mxu0 %v799
        %1026 = vmatprep.subr.bf16.mxu0 %v830
        %1027 = vmatpush2.bf16.msra.mxu0 %v829
        %1028 = vmatprep.subr.bf16.mxu0 %v828
        %1029 = vmatpush2.bf16.msra.mxu0 %v827
        %1030 = vmatprep.subr.bf16.mxu0 %v826
        %1031 = vmatpush2.bf16.msra.mxu0 %v825
        %1032 = vmatprep.subr.bf16.mxu0 %v824
        %1033 = vmatpush2.bf16.msra.mxu0 %v823
        %1034 = vmatprep.subr.bf16.mxu0 %v822
        %1035 = vmatpush2.bf16.msra.mxu0 %v821
        %1036 = vmatprep.subr.bf16.mxu0 %v820
        %1037 = vmatpush2.bf16.msra.mxu0 %v819
        %1038 = vmatprep.subr.bf16.mxu0 %v818
        %1039 = vmatpush2.bf16.msra.mxu0 %v817
        %1040 = vmatprep.subr.bf16.mxu0 %v816
        %1041 = vmatpush2.bf16.msra.mxu0 %v815
        %1042 = vmatprep.mubr.bf16.mxu0 %v458
        %1043 = vmatmul.mubr.bf16.gmra.mxu0 %v457
        %v1044 = vpop.f32.mrf.mxu0
        %v1045 = vadd.f32 %v994, %v1044
        %v1046 = vpop.f32.mrf.mxu0
        %v1047 = vadd.f32 %v996, %v1046
        %v1048 = vpop.f32.mrf.mxu0
        %v1049 = vadd.f32 %v998, %v1048
        %v1050 = vpop.f32.mrf.mxu0
        %v1051 = vadd.f32 %v1000, %v1050
        %1052 = vmatprep.mubr.bf16.mxu0 %v464
        %1053 = vmatmul.mubr.bf16.gmra.mxu0 %v463
        %v1054 = vpop.f32.mrf.mxu0
        %v1055 = vadd.f32 %v1004, %v1054
        %v1056 = vpop.f32.mrf.mxu0
        %v1057 = vadd.f32 %v1006, %v1056
        %v1058 = vpop.f32.mrf.mxu0
        %v1059 = vpop.f32.mrf.mxu0
        %1060 = vdwg.mxu0
        %1061 = vmatprep.subr.bf16.mxu0 %v846
        %1062 = vmatpush1.bf16.msra.mxu0 %v845
        %1063 = vmatprep.subr.bf16.mxu0 %v844
        %1064 = vmatpush1.bf16.msra.mxu0 %v843
        %1065 = vmatprep.subr.bf16.mxu0 %v842
        %1066 = vmatpush1.bf16.msra.mxu0 %v841
        %1067 = vmatprep.subr.bf16.mxu0 %v840
        %1068 = vmatpush1.bf16.msra.mxu0 %v839
        %1069 = vmatprep.subr.bf16.mxu0 %v838
        %1070 = vmatpush1.bf16.msra.mxu0 %v837
        %1071 = vmatprep.subr.bf16.mxu0 %v836
        %1072 = vmatpush1.bf16.msra.mxu0 %v835
        %1073 = vmatprep.subr.bf16.mxu0 %v834
        %1074 = vmatpush1.bf16.msra.mxu0 %v833
        %1075 = vmatprep.subr.bf16.mxu0 %v832
        %1076 = vmatpush1.bf16.msra.mxu0 %v831
        %1077 = vmatprep.subr.bf16.mxu0 %v862
        %1078 = vmatpush2.bf16.msra.mxu0 %v861
        %1079 = vmatprep.subr.bf16.mxu0 %v860
        %1080 = vmatpush2.bf16.msra.mxu0 %v859
        %1081 = vmatprep.subr.bf16.mxu0 %v858
        %1082 = vmatpush2.bf16.msra.mxu0 %v857
        %1083 = vmatprep.subr.bf16.mxu0 %v856
        %1084 = vmatpush2.bf16.msra.mxu0 %v855
        %1085 = vmatprep.subr.bf16.mxu0 %v854
        %1086 = vmatpush2.bf16.msra.mxu0 %v853
        %1087 = vmatprep.subr.bf16.mxu0 %v852
        %1088 = vmatpush2.bf16.msra.mxu0 %v851
        %1089 = vmatprep.subr.bf16.mxu0 %v850
        %1090 = vmatpush2.bf16.msra.mxu0 %v849
        %1091 = vmatprep.subr.bf16.mxu0 %v848
        %1092 = vmatpush2.bf16.msra.mxu0 %v847
        %1093 = vmatprep.mubr.bf16.mxu0 %v460
        %1094 = vmatmul.mubr.bf16.gmra.mxu0 %v459
        %v1095 = vpop.f32.mrf.mxu0
        %v1096 = vadd.f32 %v1045, %v1095
        %v1097 = vpop.f32.mrf.mxu0
        %v1098 = vadd.f32 %v1047, %v1097
        %v1099 = vpop.f32.mrf.mxu0
        %v1100 = vadd.f32 %v1049, %v1099
        %v1101 = vpop.f32.mrf.mxu0
        %v1102 = vadd.f32 %v1051, %v1101
        %1103 = vmatprep.mubr.bf16.mxu0 %v466
        %1104 = vmatmul.mubr.bf16.gmra.mxu0 %v465
        %v1105 = vpop.f32.mrf.mxu0
        %v1106 = vadd.f32 %v1055, %v1105
        %v1107 = vpop.f32.mrf.mxu0
        %v1108 = vadd.f32 %v1057, %v1107
        %v1109 = vpop.f32.mrf.mxu0
        %v1110 = vpop.f32.mrf.mxu0
        %1111 = vdwg.mxu0
        %v1112 = vadd.f32 %v317, %v1096
        %v1113 = vadd.f32 %v318, %v1098
        %v1114 = vadd.f32 %v319, %v1100
        %v1115 = vadd.f32 %v320, %v1102
        %v1116 = vadd.f32 %v321, %v1106
        %v1117 = vadd.f32 %v322, %v1108
        %1118 = vst [vmem:[#allocation2] sm:$0xff] %v1112
        %1119 = vst [vmem:[#allocation2 + $0x8] sm:$0xff] %v1113
        %1120 = vst [vmem:[#allocation2 + $0x10] sm:$0xff] %v1114
        %1121 = vst [vmem:[#allocation2 + $0x18] sm:$0xff] %v1115
        %1122 = vst [vmem:[#allocation2 + $0x20] sm:$0xff] %v1116
        %1123 = vst [vmem:[#allocation2 + $0x28] sm:$0xff] %v1117
        %p1124 = scmp.eq.s32.totalorder %s21, 2
        // Predicated region
        $region60: #{localizer_alexnet_forward.16} parent=50 // pred_check
          %p1125 = pneg %p1124
        $region61: #{localizer_alexnet_forward.16} parent=50 // pred_check_branch
          %1127 = sbr.rel (%p1125) target = $region63
        $region62: #{localizer_alexnet_forward.16} parent=50 // pred_region
          %v1128 = vld [vmem:[#allocation2] sm:$0xff]
          %v1129 = vld [vmem:[#allocation2 + $0x8] sm:$0xff]
          %v1130 = vld [vmem:[#allocation2 + $0x10] sm:$0xff]
          %v1131 = vld [vmem:[#allocation2 + $0x18] sm:$0xff]
          %v1132 = vld [vmem:[#allocation2 + $0x20] sm:$0xff]
          %v1133 = vld [vmem:[#allocation2 + $0x28] sm:$0xff]
          %v1134 = vld [vmem:[%s293] sm:$0x3]
          %v1136 = vlaneseq
          %v1137 = vshrl.u32 %v1136, 7
          %v1138 = vsub.s32 0, %v1137
          %v1139 = vrot.slane %v1134, %v1138
          %v1140 = vlaneseq
          %v1141 = vshrl.u32 %v1140, 7
          %v1142 = vsub.s32 1, %v1141
          %v1143 = vrot.slane %v1134, %v1142
          %v1146 = vadd.f32 %v1128, %v1139
          %v1147 = vadd.f32 %v1129, %v1143
          %v1148 = vadd.f32 %v1130, %v1139
          %v1149 = vadd.f32 %v1131, %v1143
          %v1150 = vadd.f32 %v1132, %v1139
          %v1151 = vadd.f32 %v1133, %v1143
          %v1152 = vmax.f32 %v1146, 0.0
          %v1153 = vmax.f32 %v1147, 0.0
          %v1154 = vmax.f32 %v1148, 0.0
          %v1155 = vmax.f32 %v1149, 0.0
          %v1156 = vmax.f32 %v1150, 0.0
          %v1157 = vmax.f32 %v1151, 0.0
          %v1158 = vpack.c.bf16 %v1154, %v1152
          %v1159 = vpack.c.bf16 %v1155, %v1153
          %v1160 = vpack.c.bf16 %v1156, %v1156
          %v1161 = vpack.c.bf16 %v1157, %v1157
          %v1166 = vunpack.c.l.b16 %v1158
          %v1167 = vunpack.c.l.b16 %v1159
          %v1168 = vunpack.c.h.b16 %v1158
          %v1169 = vunpack.c.h.b16 %v1159
          %v1170 = vunpack.c.l.b16 %v1160
          %v1171 = vunpack.c.l.b16 %v1161
          %v1172 = vpack.c.b16 %v1167, %v1166
          %v1173 = vpack.c.b16 %v1169, %v1168
          %v1174 = vpack.c.b16 %v1171, %v1170
          %1178 = vst [vmem:[%s304] sm:$0xff] %v1172
          %1179 = vst [vmem:[%s304 + $0x8] sm:$0xff] %v1173
          %1180 = vst [vmem:[%s304 + $0x10] sm:$0xff] %v1174
        $region63: #{localizer_alexnet_forward.16} parent=50 // pred_fallthru
          _
        %s1181 = smul.u32 3, %s19
        %s1182 = smul.u32 2, %s20
        %p1183 = scmp.lt.s32.totalorder %s1181, 2
        %s1184 = scalar_select %p1183, %s1181, 2
        %p1185 = scmp.lt.s32.totalorder %s1182, 1
        %s1186 = scalar_select %p1185, %s1182, 1
        %s1187 = smul.addr %s1184, 2
        %s1188 = sadd.s32 %s1186, %s1187
        %s1189 = smul.addr %s1188, 4
        %s1190 = scalar_lea.vmem %s3, %s1189
        // Predicated region
        $region64: #{localizer_alexnet_forward.16} parent=50 // pred_check
          %p1191 = pneg %p135
        $region65: #{localizer_alexnet_forward.16} parent=50 // pred_check_branch
          %1193 = sbr.rel (%p1191) target = $region67
        $region66: #{localizer_alexnet_forward.16} parent=50 // pred_region
          %s1194 = smul.u32 3, %s19
          %s1195 = smul.u32 2, %s20
        $region67: #{localizer_alexnet_forward.16} parent=50 // pred_fallthru
          _
        // Predicated region
        $region68: #{localizer_alexnet_forward.16} parent=50 // pred_check
          %p1196 = pneg %p135
        $region69: #{localizer_alexnet_forward.16} parent=50 // pred_check_branch
          %1198 = sbr.rel (%p1196) target = $region71
        $region70: #{localizer_alexnet_forward.16} parent=50 // pred_region
          %s1199 = smul.u32 3, %s19
          %s1200 = smul.u32 2, %s20
          %p1201 = scmp.lt.s32.totalorder %s1199, 2
          %s1202 = scalar_select %p1201, %s1199, 2
          %p1203 = scmp.lt.s32.totalorder %s1200, 1
          %s1204 = scalar_select %p1203, %s1200, 1
          %s1205 = smul.addr %s1202, 2
          %s1206 = sadd.s32 %s1204, %s1205
          %s1207 = smul.addr %s1206, 4
          %s1208 = scalar_lea.vmem %s3, %s1207
        $region71: #{localizer_alexnet_forward.16} parent=50 // pred_fallthru
          _
      $region51: #{localizer_alexnet_forward.16} parent=5 // pred_fallthru
        _
      %p1209 = scmp.le.s32.totalorder 2, %s9
      // Predicated region
      $region72: #{localizer_alexnet_forward.16} parent=5 // pred_check
        %p1210 = pneg %p1209
      $region73: #{localizer_alexnet_forward.16} parent=5 // pred_check_branch
        %1212 = sbr.rel (%p1210) target = $region75
      $region74: #{localizer_alexnet_forward.16} parent=5 // pred_region
        %s1213 = ssub.s32 %s9, 2
      $region75: #{localizer_alexnet_forward.16} parent=5 // pred_fallthru
        _
    $region6: #{localizer_alexnet_forward.16} parent=1 // loop_footer
      %s13 = sadd.s32 1, %s9
    $region7: #{localizer_alexnet_forward.16} parent=1 // loop_footer_branch
      %8 = sbr.rel target = $region3
    $region8: #{localizer_alexnet_forward.16} parent=1 // loop_exit
      _

// kernel: localizer_alexnet_forward.19
$region0: #{localizer_alexnet_forward.19}
  #allocation0 [shape = 'u32[]', space=smem, size = 0x4, offset = 0x4, fixed_abs, tag = 'smem constant byte address 0x4 - core index']
  #allocation1 [shape = 'u32[144,128]{1,0:T(1,128)}', space=vmem, size = 0x12000, scoped, tag = 'internal scratch']
  #allocation2 [shape = 'f32[8,128]{1,0:T(8,128)}', space=vmem, size = 0x1000, scoped, tag = 'scratch operand']
  %s0 = inlined_call_operand.vmem [shape: bf16[8,256], index: 0, kind: input, shape index: {}]
  %s1 = inlined_call_operand.vmem [shape: bf16[256,128], index: 1, kind: input, shape index: {}]
  %s2 = inlined_call_operand.vmem [shape: f32[1,128], index: 2, kind: input, shape index: {}]
  %s3 = inlined_call_operand.vmem [shape: bf16[8,128], index: 3, kind: output, shape index: {}]
  %s4 = sld [smem:[#allocation0]]
  $region30: #{localizer_alexnet_forward.19} parent=0
    _
  %s6 = ssub.s32 1, %s4
  %s7 = scalar_select 0, %s6, %s4
  // Predicated region
  $region2: #{localizer_alexnet_forward.19} parent=0 // pred_check
    _
  $region3: #{localizer_alexnet_forward.19} parent=0 // pred_check_branch
    %9 = sbr.rel (0) target = $region5
  $region4: #{localizer_alexnet_forward.19} parent=0 // pred_region
    _
  $region5: #{localizer_alexnet_forward.19} parent=0 // pred_fallthru
    _
  // Predicated region
  $region6: #{localizer_alexnet_forward.19} parent=0 // pred_check
    _
  $region7: #{localizer_alexnet_forward.19} parent=0 // pred_check_branch
    %11 = sbr.rel (0) target = $region9
  $region8: #{localizer_alexnet_forward.19} parent=0 // pred_region
    _
  $region9: #{localizer_alexnet_forward.19} parent=0 // pred_fallthru
    _
  // Predicated region
  $region10: #{localizer_alexnet_forward.19} parent=0 // pred_check
    _
  $region11: #{localizer_alexnet_forward.19} parent=0 // pred_check_branch
    %13 = sbr.rel (0) target = $region13
  $region12: #{localizer_alexnet_forward.19} parent=0 // pred_region
    _
  $region13: #{localizer_alexnet_forward.19} parent=0 // pred_fallthru
    _
  %p15 = scmp.eq.s32.totalorder 0, 0
  // Predicated region
  $region14: #{localizer_alexnet_forward.19} parent=0 // pred_check
    %p16 = pneg %p15
  $region15: #{localizer_alexnet_forward.19} parent=0 // pred_check_branch
    %18 = sbr.rel (%p16) target = $region17
  $region16: #{localizer_alexnet_forward.19} parent=0 // pred_region
    %19 = vst [vmem:[#allocation2] sm:$0xff] 0.0
  $region17: #{localizer_alexnet_forward.19} parent=0 // pred_fallthru
    _
  %v20 = vld [vmem:[#allocation2] sm:$0xff]
  %v21 = vld [vmem:[%s0] sm:$0xff]
  %v22 = vld [vmem:[%s1] sm:$0xf]
  %v23 = vld [vmem:[%s1 + $0x4] sm:$0xf]
  %v24 = vld [vmem:[%s1 + $0x8] sm:$0xf]
  %v25 = vld [vmem:[%s1 + $0xc] sm:$0xf]
  %v26 = vld [vmem:[%s1 + $0x10] sm:$0xf]
  %v27 = vld [vmem:[%s1 + $0x14] sm:$0xf]
  %v28 = vld [vmem:[%s1 + $0x18] sm:$0xf]
  %v29 = vld [vmem:[%s1 + $0x1c] sm:$0xf]
  %v30 = vld [vmem:[%s1 + $0x20] sm:$0xf]
  %v31 = vld [vmem:[%s1 + $0x24] sm:$0xf]
  %v32 = vld [vmem:[%s1 + $0x28] sm:$0xf]
  %v33 = vld [vmem:[%s1 + $0x2c] sm:$0xf]
  %v34 = vld [vmem:[%s1 + $0x30] sm:$0xf]
  %v35 = vld [vmem:[%s1 + $0x34] sm:$0xf]
  %v36 = vld [vmem:[%s1 + $0x38] sm:$0xf]
  %v37 = vld [vmem:[%s1 + $0x3c] sm:$0xf]
  %v38 = vld [vmem:[%s1 + $0x40] sm:$0xf]
  %v39 = vld [vmem:[%s1 + $0x44] sm:$0xf]
  %v40 = vld [vmem:[%s1 + $0x48] sm:$0xf]
  %v41 = vld [vmem:[%s1 + $0x4c] sm:$0xf]
  %v42 = vld [vmem:[%s1 + $0x50] sm:$0xf]
  %v43 = vld [vmem:[%s1 + $0x54] sm:$0xf]
  %v44 = vld [vmem:[%s1 + $0x58] sm:$0xf]
  %v45 = vld [vmem:[%s1 + $0x5c] sm:$0xf]
  %v46 = vld [vmem:[%s1 + $0x60] sm:$0xf]
  %v47 = vld [vmem:[%s1 + $0x64] sm:$0xf]
  %v48 = vld [vmem:[%s1 + $0x68] sm:$0xf]
  %v49 = vld [vmem:[%s1 + $0x6c] sm:$0xf]
  %v50 = vld [vmem:[%s1 + $0x70] sm:$0xf]
  %v51 = vld [vmem:[%s1 + $0x74] sm:$0xf]
  %v52 = vld [vmem:[%s1 + $0x78] sm:$0xf]
  %v53 = vld [vmem:[%s1 + $0x7c] sm:$0xf]
  %v55 = vunpack.c.l.b16 %v21
  %v56 = vunpack.c.h.b16 %v21
  %v57 = vpack.c.b16 %v55, %v55
  %v58 = vpack.c.b16 %v56, %v56
  %v93 = vunpack.c.l.b16 %v22
  %v94 = vunpack.c.l.b16 %v23
  %v95 = vunpack.c.l.b16 %v24
  %v96 = vunpack.c.l.b16 %v25
  %v97 = vunpack.c.l.b16 %v26
  %v98 = vunpack.c.l.b16 %v27
  %v99 = vunpack.c.l.b16 %v28
  %v100 = vunpack.c.l.b16 %v29
  %v101 = vunpack.c.l.b16 %v30
  %v102 = vunpack.c.l.b16 %v31
  %v103 = vunpack.c.l.b16 %v32
  %v104 = vunpack.c.l.b16 %v33
  %v105 = vunpack.c.l.b16 %v34
  %v106 = vunpack.c.l.b16 %v35
  %v107 = vunpack.c.l.b16 %v36
  %v108 = vunpack.c.l.b16 %v37
  %v109 = vunpack.c.l.b16 %v38
  %v110 = vunpack.c.l.b16 %v39
  %v111 = vunpack.c.l.b16 %v40
  %v112 = vunpack.c.l.b16 %v41
  %v113 = vunpack.c.l.b16 %v42
  %v114 = vunpack.c.l.b16 %v43
  %v115 = vunpack.c.l.b16 %v44
  %v116 = vunpack.c.l.b16 %v45
  %v117 = vunpack.c.l.b16 %v46
  %v118 = vunpack.c.l.b16 %v47
  %v119 = vunpack.c.l.b16 %v48
  %v120 = vunpack.c.l.b16 %v49
  %v121 = vunpack.c.l.b16 %v50
  %v122 = vunpack.c.l.b16 %v51
  %v123 = vunpack.c.l.b16 %v52
  %v124 = vunpack.c.l.b16 %v53
  %v125 = vpack.c.b16 %v94, %v93
  %v126 = vpack.c.b16 %v96, %v95
  %v127 = vpack.c.b16 %v98, %v97
  %v128 = vpack.c.b16 %v100, %v99
  %v129 = vpack.c.b16 %v102, %v101
  %v130 = vpack.c.b16 %v104, %v103
  %v131 = vpack.c.b16 %v106, %v105
  %v132 = vpack.c.b16 %v108, %v107
  %v133 = vpack.c.b16 %v110, %v109
  %v134 = vpack.c.b16 %v112, %v111
  %v135 = vpack.c.b16 %v114, %v113
  %v136 = vpack.c.b16 %v116, %v115
  %v137 = vpack.c.b16 %v118, %v117
  %v138 = vpack.c.b16 %v120, %v119
  %v139 = vpack.c.b16 %v122, %v121
  %v140 = vpack.c.b16 %v124, %v123
  %157 = vmatprep.subr.bf16.mxu0 0
  %158 = vmatpush1.bf16.msra.mxu0 %v132
  %159 = vmatprep.subr.bf16.mxu0 0
  %160 = vmatpush1.bf16.msra.mxu0 %v131
  %161 = vmatprep.subr.bf16.mxu0 0
  %162 = vmatpush1.bf16.msra.mxu0 %v130
  %163 = vmatprep.subr.bf16.mxu0 0
  %164 = vmatpush1.bf16.msra.mxu0 %v129
  %165 = vmatprep.subr.bf16.mxu0 0
  %166 = vmatpush1.bf16.msra.mxu0 %v128
  %167 = vmatprep.subr.bf16.mxu0 0
  %168 = vmatpush1.bf16.msra.mxu0 %v127
  %169 = vmatprep.subr.bf16.mxu0 0
  %170 = vmatpush1.bf16.msra.mxu0 %v126
  %171 = vmatprep.subr.bf16.mxu0 0
  %172 = vmatpush1.bf16.msra.mxu0 %v125
  %173 = vmatprep.subr.bf16.mxu0 0
  %174 = vmatpush2.bf16.msra.mxu0 %v140
  %175 = vmatprep.subr.bf16.mxu0 0
  %176 = vmatpush2.bf16.msra.mxu0 %v139
  %177 = vmatprep.subr.bf16.mxu0 0
  %178 = vmatpush2.bf16.msra.mxu0 %v138
  %179 = vmatprep.subr.bf16.mxu0 0
  %180 = vmatpush2.bf16.msra.mxu0 %v137
  %181 = vmatprep.subr.bf16.mxu0 0
  %182 = vmatpush2.bf16.msra.mxu0 %v136
  %183 = vmatprep.subr.bf16.mxu0 0
  %184 = vmatpush2.bf16.msra.mxu0 %v135
  %185 = vmatprep.subr.bf16.mxu0 0
  %186 = vmatpush2.bf16.msra.mxu0 %v134
  %187 = vmatprep.subr.bf16.mxu0 0
  %188 = vmatpush2.bf16.msra.mxu0 %v133
  %189 = vmatprep.mubr.bf16.mxu0 %v58
  %190 = vmatmul.mubr.bf16.gmra.mxu0 %v57
  %v191 = vpop.f32.mrf.mxu0
  %v192 = vadd.f32 0.0, %v191
  %v193 = vpop.f32.mrf.mxu0
  %v194 = vpop.f32.mrf.mxu0
  %v195 = vpop.f32.mrf.mxu0
  %196 = vdwg.mxu0
  %v197 = vadd.f32 %v20, %v192
  %198 = vst [vmem:[#allocation2] sm:$0xff] %v197
  // Predicated region
  $region18: #{localizer_alexnet_forward.19} parent=0 // pred_check
    %p199 = pneg %p15
  $region19: #{localizer_alexnet_forward.19} parent=0 // pred_check_branch
    %201 = sbr.rel (%p199) target = $region21
  $region20: #{localizer_alexnet_forward.19} parent=0 // pred_region
    %v202 = vld [vmem:[#allocation2] sm:$0xff]
    %v203 = vld [vmem:[%s2] sm:$0x1]
    %v205 = vlaneseq
    %v206 = vshrl.u32 %v205, 7
    %v207 = vsub.s32 0, %v206
    %v208 = vrot.slane %v203, %v207
    %v210 = vadd.f32 %v202, %v208
    %v211 = vpack.c.bf16 %v210, %v210
    %212 = vst [vmem:[%s3] sm:$0xf] %v211
  $region21: #{localizer_alexnet_forward.19} parent=0 // pred_fallthru
    _
  // Predicated region
  $region22: #{localizer_alexnet_forward.19} parent=0 // pred_check
    _
  $region23: #{localizer_alexnet_forward.19} parent=0 // pred_check_branch
    %214 = sbr.rel (0) target = $region25
  $region24: #{localizer_alexnet_forward.19} parent=0 // pred_region
    _
  $region25: #{localizer_alexnet_forward.19} parent=0 // pred_fallthru
    _
  // Predicated region
  $region26: #{localizer_alexnet_forward.19} parent=0 // pred_check
    _
  $region27: #{localizer_alexnet_forward.19} parent=0 // pred_check_branch
    %216 = sbr.rel (0) target = $region29
  $region28: #{localizer_alexnet_forward.19} parent=0 // pred_region
    _
  $region29: #{localizer_alexnet_forward.19} parent=0 // pred_fallthru
    _

// kernel: localizer_alexnet_forward.18
$region0: #{localizer_alexnet_forward.18}
  #allocation0 [shape = 'u32[]', space=smem, size = 0x4, offset = 0x4, fixed_abs, tag = 'smem constant byte address 0x4 - core index']
  #allocation1 [shape = 'u32[144,128]{1,0:T(1,128)}', space=vmem, size = 0x12000, scoped, tag = 'internal scratch']
  #allocation2 [shape = 'f32[8,256]{1,0:T(8,128)}', space=vmem, size = 0x2000, scoped, tag = 'scratch operand']
  %s0 = inlined_call_operand.vmem [shape: bf16[8,256], index: 0, kind: input, shape index: {}]
  %s1 = inlined_call_operand.vmem [shape: bf16[256,256], index: 1, kind: input, shape index: {}]
  %s2 = inlined_call_operand.vmem [shape: f32[1,256], index: 2, kind: input, shape index: {}]
  %s3 = inlined_call_operand.vmem [shape: bf16[8,256], index: 3, kind: output, shape index: {}]
  %s4 = sld [smem:[#allocation0]]
  $region30: #{localizer_alexnet_forward.18} parent=0
    _
  %s6 = ssub.s32 1, %s4
  %s7 = scalar_select 0, %s6, %s4
  // Predicated region
  $region2: #{localizer_alexnet_forward.18} parent=0 // pred_check
    _
  $region3: #{localizer_alexnet_forward.18} parent=0 // pred_check_branch
    %9 = sbr.rel (0) target = $region5
  $region4: #{localizer_alexnet_forward.18} parent=0 // pred_region
    _
  $region5: #{localizer_alexnet_forward.18} parent=0 // pred_fallthru
    _
  // Predicated region
  $region6: #{localizer_alexnet_forward.18} parent=0 // pred_check
    _
  $region7: #{localizer_alexnet_forward.18} parent=0 // pred_check_branch
    %11 = sbr.rel (0) target = $region9
  $region8: #{localizer_alexnet_forward.18} parent=0 // pred_region
    _
  $region9: #{localizer_alexnet_forward.18} parent=0 // pred_fallthru
    _
  // Predicated region
  $region10: #{localizer_alexnet_forward.18} parent=0 // pred_check
    _
  $region11: #{localizer_alexnet_forward.18} parent=0 // pred_check_branch
    %13 = sbr.rel (0) target = $region13
  $region12: #{localizer_alexnet_forward.18} parent=0 // pred_region
    _
  $region13: #{localizer_alexnet_forward.18} parent=0 // pred_fallthru
    _
  %p14 = scmp.eq.s32.totalorder 0, 0
  // Predicated region
  $region14: #{localizer_alexnet_forward.18} parent=0 // pred_check
    %p15 = pneg %p14
  $region15: #{localizer_alexnet_forward.18} parent=0 // pred_check_branch
    %17 = sbr.rel (%p15) target = $region17
  $region16: #{localizer_alexnet_forward.18} parent=0 // pred_region
    %18 = vst [vmem:[#allocation2] sm:$0xff] 0.0
    %19 = vst [vmem:[#allocation2 + $0x8] sm:$0xff] 0.0
  $region17: #{localizer_alexnet_forward.18} parent=0 // pred_fallthru
    _
  %v20 = vld [vmem:[#allocation2] sm:$0xff]
  %v21 = vld [vmem:[#allocation2 + $0x8] sm:$0xff]
  %v22 = vld [vmem:[%s0] sm:$0xff]
  %v23 = vld [vmem:[%s1] sm:$0xff]
  %v24 = vld [vmem:[%s1 + $0x8] sm:$0xff]
  %v25 = vld [vmem:[%s1 + $0x10] sm:$0xff]
  %v26 = vld [vmem:[%s1 + $0x18] sm:$0xff]
  %v27 = vld [vmem:[%s1 + $0x20] sm:$0xff]
  %v28 = vld [vmem:[%s1 + $0x28] sm:$0xff]
  %v29 = vld [vmem:[%s1 + $0x30] sm:$0xff]
  %v30 = vld [vmem:[%s1 + $0x38] sm:$0xff]
  %v31 = vld [vmem:[%s1 + $0x40] sm:$0xff]
  %v32 = vld [vmem:[%s1 + $0x48] sm:$0xff]
  %v33 = vld [vmem:[%s1 + $0x50] sm:$0xff]
  %v34 = vld [vmem:[%s1 + $0x58] sm:$0xff]
  %v35 = vld [vmem:[%s1 + $0x60] sm:$0xff]
  %v36 = vld [vmem:[%s1 + $0x68] sm:$0xff]
  %v37 = vld [vmem:[%s1 + $0x70] sm:$0xff]
  %v38 = vld [vmem:[%s1 + $0x78] sm:$0xff]
  %v39 = vld [vmem:[%s1 + $0x80] sm:$0xff]
  %v40 = vld [vmem:[%s1 + $0x88] sm:$0xff]
  %v41 = vld [vmem:[%s1 + $0x90] sm:$0xff]
  %v42 = vld [vmem:[%s1 + $0x98] sm:$0xff]
  %v43 = vld [vmem:[%s1 + $0xa0] sm:$0xff]
  %v44 = vld [vmem:[%s1 + $0xa8] sm:$0xff]
  %v45 = vld [vmem:[%s1 + $0xb0] sm:$0xff]
  %v46 = vld [vmem:[%s1 + $0xb8] sm:$0xff]
  %v47 = vld [vmem:[%s1 + $0xc0] sm:$0xff]
  %v48 = vld [vmem:[%s1 + $0xc8] sm:$0xff]
  %v49 = vld [vmem:[%s1 + $0xd0] sm:$0xff]
  %v50 = vld [vmem:[%s1 + $0xd8] sm:$0xff]
  %v51 = vld [vmem:[%s1 + $0xe0] sm:$0xff]
  %v52 = vld [vmem:[%s1 + $0xe8] sm:$0xff]
  %v53 = vld [vmem:[%s1 + $0xf0] sm:$0xff]
  %v54 = vld [vmem:[%s1 + $0xf8] sm:$0xff]
  %v56 = vunpack.c.l.b16 %v22
  %v57 = vunpack.c.h.b16 %v22
  %v58 = vpack.c.b16 %v56, %v56
  %v59 = vpack.c.b16 %v57, %v57
  %v94 = vunpack.c.l.b16 %v23
  %v95 = vunpack.c.h.b16 %v23
  %v96 = vunpack.c.l.b16 %v24
  %v97 = vunpack.c.h.b16 %v24
  %v98 = vunpack.c.l.b16 %v25
  %v99 = vunpack.c.h.b16 %v25
  %v100 = vunpack.c.l.b16 %v26
  %v101 = vunpack.c.h.b16 %v26
  %v102 = vunpack.c.l.b16 %v27
  %v103 = vunpack.c.h.b16 %v27
  %v104 = vunpack.c.l.b16 %v28
  %v105 = vunpack.c.h.b16 %v28
  %v106 = vunpack.c.l.b16 %v29
  %v107 = vunpack.c.h.b16 %v29
  %v108 = vunpack.c.l.b16 %v30
  %v109 = vunpack.c.h.b16 %v30
  %v110 = vunpack.c.l.b16 %v31
  %v111 = vunpack.c.h.b16 %v31
  %v112 = vunpack.c.l.b16 %v32
  %v113 = vunpack.c.h.b16 %v32
  %v114 = vunpack.c.l.b16 %v33
  %v115 = vunpack.c.h.b16 %v33
  %v116 = vunpack.c.l.b16 %v34
  %v117 = vunpack.c.h.b16 %v34
  %v118 = vunpack.c.l.b16 %v35
  %v119 = vunpack.c.h.b16 %v35
  %v120 = vunpack.c.l.b16 %v36
  %v121 = vunpack.c.h.b16 %v36
  %v122 = vunpack.c.l.b16 %v37
  %v123 = vunpack.c.h.b16 %v37
  %v124 = vunpack.c.l.b16 %v38
  %v125 = vunpack.c.h.b16 %v38
  %v126 = vunpack.c.l.b16 %v39
  %v127 = vunpack.c.h.b16 %v39
  %v128 = vunpack.c.l.b16 %v40
  %v129 = vunpack.c.h.b16 %v40
  %v130 = vunpack.c.l.b16 %v41
  %v131 = vunpack.c.h.b16 %v41
  %v132 = vunpack.c.l.b16 %v42
  %v133 = vunpack.c.h.b16 %v42
  %v134 = vunpack.c.l.b16 %v43
  %v135 = vunpack.c.h.b16 %v43
  %v136 = vunpack.c.l.b16 %v44
  %v137 = vunpack.c.h.b16 %v44
  %v138 = vunpack.c.l.b16 %v45
  %v139 = vunpack.c.h.b16 %v45
  %v140 = vunpack.c.l.b16 %v46
  %v141 = vunpack.c.h.b16 %v46
  %v142 = vunpack.c.l.b16 %v47
  %v143 = vunpack.c.h.b16 %v47
  %v144 = vunpack.c.l.b16 %v48
  %v145 = vunpack.c.h.b16 %v48
  %v146 = vunpack.c.l.b16 %v49
  %v147 = vunpack.c.h.b16 %v49
  %v148 = vunpack.c.l.b16 %v50
  %v149 = vunpack.c.h.b16 %v50
  %v150 = vunpack.c.l.b16 %v51
  %v151 = vunpack.c.h.b16 %v51
  %v152 = vunpack.c.l.b16 %v52
  %v153 = vunpack.c.h.b16 %v52
  %v154 = vunpack.c.l.b16 %v53
  %v155 = vunpack.c.h.b16 %v53
  %v156 = vunpack.c.l.b16 %v54
  %v157 = vunpack.c.h.b16 %v54
  %v158 = vpack.c.b16 %v96, %v94
  %v159 = vpack.c.b16 %v97, %v95
  %v160 = vpack.c.b16 %v100, %v98
  %v161 = vpack.c.b16 %v101, %v99
  %v162 = vpack.c.b16 %v104, %v102
  %v163 = vpack.c.b16 %v105, %v103
  %v164 = vpack.c.b16 %v108, %v106
  %v165 = vpack.c.b16 %v109, %v107
  %v166 = vpack.c.b16 %v112, %v110
  %v167 = vpack.c.b16 %v113, %v111
  %v168 = vpack.c.b16 %v116, %v114
  %v169 = vpack.c.b16 %v117, %v115
  %v170 = vpack.c.b16 %v120, %v118
  %v171 = vpack.c.b16 %v121, %v119
  %v172 = vpack.c.b16 %v124, %v122
  %v173 = vpack.c.b16 %v125, %v123
  %v174 = vpack.c.b16 %v128, %v126
  %v175 = vpack.c.b16 %v129, %v127
  %v176 = vpack.c.b16 %v132, %v130
  %v177 = vpack.c.b16 %v133, %v131
  %v178 = vpack.c.b16 %v136, %v134
  %v179 = vpack.c.b16 %v137, %v135
  %v180 = vpack.c.b16 %v140, %v138
  %v181 = vpack.c.b16 %v141, %v139
  %v182 = vpack.c.b16 %v144, %v142
  %v183 = vpack.c.b16 %v145, %v143
  %v184 = vpack.c.b16 %v148, %v146
  %v185 = vpack.c.b16 %v149, %v147
  %v186 = vpack.c.b16 %v152, %v150
  %v187 = vpack.c.b16 %v153, %v151
  %v188 = vpack.c.b16 %v156, %v154
  %v189 = vpack.c.b16 %v157, %v155
  %222 = vmatprep.subr.bf16.mxu0 %v173
  %223 = vmatpush1.bf16.msra.mxu0 %v172
  %224 = vmatprep.subr.bf16.mxu0 %v171
  %225 = vmatpush1.bf16.msra.mxu0 %v170
  %226 = vmatprep.subr.bf16.mxu0 %v169
  %227 = vmatpush1.bf16.msra.mxu0 %v168
  %228 = vmatprep.subr.bf16.mxu0 %v167
  %229 = vmatpush1.bf16.msra.mxu0 %v166
  %230 = vmatprep.subr.bf16.mxu0 %v165
  %231 = vmatpush1.bf16.msra.mxu0 %v164
  %232 = vmatprep.subr.bf16.mxu0 %v163
  %233 = vmatpush1.bf16.msra.mxu0 %v162
  %234 = vmatprep.subr.bf16.mxu0 %v161
  %235 = vmatpush1.bf16.msra.mxu0 %v160
  %236 = vmatprep.subr.bf16.mxu0 %v159
  %237 = vmatpush1.bf16.msra.mxu0 %v158
  %238 = vmatprep.subr.bf16.mxu0 %v189
  %239 = vmatpush2.bf16.msra.mxu0 %v188
  %240 = vmatprep.subr.bf16.mxu0 %v187
  %241 = vmatpush2.bf16.msra.mxu0 %v186
  %242 = vmatprep.subr.bf16.mxu0 %v185
  %243 = vmatpush2.bf16.msra.mxu0 %v184
  %244 = vmatprep.subr.bf16.mxu0 %v183
  %245 = vmatpush2.bf16.msra.mxu0 %v182
  %246 = vmatprep.subr.bf16.mxu0 %v181
  %247 = vmatpush2.bf16.msra.mxu0 %v180
  %248 = vmatprep.subr.bf16.mxu0 %v179
  %249 = vmatpush2.bf16.msra.mxu0 %v178
  %250 = vmatprep.subr.bf16.mxu0 %v177
  %251 = vmatpush2.bf16.msra.mxu0 %v176
  %252 = vmatprep.subr.bf16.mxu0 %v175
  %253 = vmatpush2.bf16.msra.mxu0 %v174
  %254 = vmatprep.mubr.bf16.mxu0 %v59
  %255 = vmatmul.mubr.bf16.gmra.mxu0 %v58
  %v256 = vpop.f32.mrf.mxu0
  %v257 = vadd.f32 0.0, %v256
  %v258 = vpop.f32.mrf.mxu0
  %v259 = vadd.f32 0.0, %v258
  %v260 = vpop.f32.mrf.mxu0
  %v261 = vpop.f32.mrf.mxu0
  %262 = vdwg.mxu0
  %v263 = vadd.f32 %v20, %v257
  %v264 = vadd.f32 %v21, %v259
  %265 = vst [vmem:[#allocation2] sm:$0xff] %v263
  %266 = vst [vmem:[#allocation2 + $0x8] sm:$0xff] %v264
  // Predicated region
  $region18: #{localizer_alexnet_forward.18} parent=0 // pred_check
    %p267 = pneg %p14
  $region19: #{localizer_alexnet_forward.18} parent=0 // pred_check_branch
    %269 = sbr.rel (%p267) target = $region21
  $region20: #{localizer_alexnet_forward.18} parent=0 // pred_region
    %v270 = vld [vmem:[#allocation2] sm:$0xff]
    %v271 = vld [vmem:[#allocation2 + $0x8] sm:$0xff]
    %v272 = vld [vmem:[%s2] sm:$0x3]
    %v274 = vlaneseq
    %v275 = vshrl.u32 %v274, 7
    %v276 = vsub.s32 0, %v275
    %v277 = vrot.slane %v272, %v276
    %v278 = vlaneseq
    %v279 = vshrl.u32 %v278, 7
    %v280 = vsub.s32 1, %v279
    %v281 = vrot.slane %v272, %v280
    %v284 = vadd.f32 %v270, %v277
    %v285 = vadd.f32 %v271, %v281
    %v286 = vmax.f32 %v284, 0.0
    %v287 = vmax.f32 %v285, 0.0
    %v288 = vpack.c.bf16 %v286, %v286
    %v289 = vpack.c.bf16 %v287, %v287
    %v292 = vunpack.c.l.b16 %v288
    %v293 = vunpack.c.l.b16 %v289
    %v294 = vpack.c.b16 %v293, %v292
    %296 = vst [vmem:[%s3] sm:$0xff] %v294
  $region21: #{localizer_alexnet_forward.18} parent=0 // pred_fallthru
    _
  // Predicated region
  $region22: #{localizer_alexnet_forward.18} parent=0 // pred_check
    _
  $region23: #{localizer_alexnet_forward.18} parent=0 // pred_check_branch
    %298 = sbr.rel (0) target = $region25
  $region24: #{localizer_alexnet_forward.18} parent=0 // pred_region
    _
  $region25: #{localizer_alexnet_forward.18} parent=0 // pred_fallthru
    _
  // Predicated region
  $region26: #{localizer_alexnet_forward.18} parent=0 // pred_check
    _
  $region27: #{localizer_alexnet_forward.18} parent=0 // pred_check_branch
    %300 = sbr.rel (0) target = $region29
  $region28: #{localizer_alexnet_forward.18} parent=0 // pred_region
    _
  $region29: #{localizer_alexnet_forward.18} parent=0 // pred_fallthru
    _

// kernel: localizer_alexnet_forward.17
$region0: #{localizer_alexnet_forward.17}
  #allocation0 [shape = 'u32[]', space=smem, size = 0x4, offset = 0x4, fixed_abs, tag = 'smem constant byte address 0x4 - core index']
  #allocation1 [shape = 'u32[144,128]{1,0:T(1,128)}', space=vmem, size = 0x12000, scoped, tag = 'internal scratch']
  #allocation2 [shape = 'f32[8,256]{1,0:T(8,128)}', space=vmem, size = 0x2000, scoped, tag = 'scratch operand']
  %s0 = inlined_call_operand.vmem [shape: bf16[8,2304], index: 0, kind: input, shape index: {}]
  %s1 = inlined_call_operand.vmem [shape: bf16[2304,256], index: 1, kind: input, shape index: {}]
  %s2 = inlined_call_operand.vmem [shape: f32[1,256], index: 2, kind: input, shape index: {}]
  %s3 = inlined_call_operand.vmem [shape: bf16[8,256], index: 3, kind: output, shape index: {}]
  %s4 = sld [smem:[#allocation0]]
  $region53: #{localizer_alexnet_forward.17} parent=0
    _
  %s6 = ssub.s32 1, %s4
  %s7 = scalar_select 0, %s6, %s4
  loop: start=0, step=1, limit=5
  $region2: #{localizer_alexnet_forward.17} parent=0 // loop_pre_header
    _
  $region3: #{localizer_alexnet_forward.17} parent=0 // loop_header
    %s9 = sphi 0, %s13
    %p10 = scmp.ge.s32.totalorder %s9, 5
    %s16 = sphi 0, %s35
    %s17 = sphi 0, %s31
    %s18 = sphi 0, %s27
    %s19 = sphi 0, %s16
    %s20 = sphi 0, %s17
    %s21 = sphi 0, %s18
    %s22 = sphi 0, %s19
    %s23 = sphi 0, %s20
    %s24 = sphi 0, %s21
    %s40 = sphi 0, %s42
    %s43 = sphi 0, %s40
    %s44 = sphi 0, %s43
    %s60 = sphi 0, %s44
    %s68 = sphi 0, %s70
    %s71 = sphi 0, %s68
    %s72 = sphi 0, %s71
    %s88 = sphi 0, %s72
    %s94 = sphi 0, %s96
    %s97 = sphi 0, %s94
    %s98 = sphi 0, %s97
    %s114 = sphi 0, %s98
    %s122 = sphi 0, %s124
    %s125 = sphi 0, %s122
    %s126 = sphi 0, %s125
    %s142 = sphi 0, %s126
  $region4: #{localizer_alexnet_forward.17} parent=0 // loop_header_branch
    %12 = sbr.rel (%p10) target = $region8
  $region5: #{localizer_alexnet_forward.17} parent=0 // loop_body
    %s14 = ssub.s32 %s9, 1
    %s15 = ssub.s32 %s9, 2
    %s25 = sadd.s32 1, %s18
    %p26 = scmp.ge.s32.totalorder %s25, 3
    %s27 = scalar_select %p26, 0, %s25
    %s28 = sadd.s32 1, %s17
    %s29 = scalar_select %p26, %s28, %s17
    %p30 = scmp.ge.s32.totalorder %s29, 1
    %s31 = scalar_select %p30, 0, %s29
    %s32 = sadd.s32 1, %s16
    %s33 = scalar_select %p30, %s32, %s16
    %p34 = scmp.ge.s32.totalorder %s33, 1
    %s35 = scalar_select %p34, 0, %s33
    %s36 = ssub.s32 %s16, %s35
    %s37 = ssub.s32 %s18, %s27
    %s38 = sor.u32 %s36, %s37
    %p39 = scmp.eq.s32.totalorder %s38, 0
    %s41 = sadd.s32 %s40, 1
    %s42 = scalar_select %p39, %s40, %s41
    %p45 = pneg %p39
    %p46 = scmp.eq.s32.totalorder %s9, 2
    %p47 = por %p45, %p46
    %p48 = scmp.ne.s32.totalorder %s40, %s43
    %p49 = scmp.eq.s32.totalorder %s9, 0
    %p50 = por %p48, %p49
    %p51 = scmp.ne.s32.totalorder %s40, %s43
    %p52 = scmp.eq.s32.totalorder %s14, 2
    %p53 = por %p51, %p52
    %p54 = scmp.ne.s32.totalorder %s43, %s44
    %p55 = scmp.eq.s32.totalorder %s14, 0
    %p56 = por %p54, %p55
    %p57 = scmp.ne.s32.totalorder %s43, %s44
    %p58 = scmp.eq.s32.totalorder %s15, 2
    %p59 = por %p57, %p58
    %p61 = scmp.ne.s32.totalorder %s44, %s60
    %p62 = scmp.eq.s32.totalorder %s15, 0
    %p63 = por %p61, %p62
    %s64 = ssub.s32 %s18, %s27
    %s65 = ssub.s32 %s17, %s31
    %s66 = sor.u32 %s64, %s65
    %p67 = scmp.eq.s32.totalorder %s66, 0
    %s69 = sadd.s32 %s68, 1
    %s70 = scalar_select %p67, %s68, %s69
    %p73 = pneg %p67
    %p74 = scmp.eq.s32.totalorder %s9, 2
    %p75 = por %p73, %p74
    %p76 = scmp.ne.s32.totalorder %s68, %s71
    %p77 = scmp.eq.s32.totalorder %s9, 0
    %p78 = por %p76, %p77
    %p79 = scmp.ne.s32.totalorder %s68, %s71
    %p80 = scmp.eq.s32.totalorder %s14, 2
    %p81 = por %p79, %p80
    %p82 = scmp.ne.s32.totalorder %s71, %s72
    %p83 = scmp.eq.s32.totalorder %s14, 0
    %p84 = por %p82, %p83
    %p85 = scmp.ne.s32.totalorder %s71, %s72
    %p86 = scmp.eq.s32.totalorder %s15, 2
    %p87 = por %p85, %p86
    %p89 = scmp.ne.s32.totalorder %s72, %s88
    %p90 = scmp.eq.s32.totalorder %s15, 0
    %p91 = por %p89, %p90
    %s92 = ssub.s32 %s17, %s31
    %p93 = scmp.eq.s32.totalorder %s92, 0
    %s95 = sadd.s32 %s94, 1
    %s96 = scalar_select %p93, %s94, %s95
    %p99 = pneg %p93
    %p100 = scmp.eq.s32.totalorder %s9, 2
    %p101 = por %p99, %p100
    %p102 = scmp.ne.s32.totalorder %s94, %s97
    %p103 = scmp.eq.s32.totalorder %s9, 0
    %p104 = por %p102, %p103
    %p105 = scmp.ne.s32.totalorder %s94, %s97
    %p106 = scmp.eq.s32.totalorder %s14, 2
    %p107 = por %p105, %p106
    %p108 = scmp.ne.s32.totalorder %s97, %s98
    %p109 = scmp.eq.s32.totalorder %s14, 0
    %p110 = por %p108, %p109
    %p111 = scmp.ne.s32.totalorder %s97, %s98
    %p112 = scmp.eq.s32.totalorder %s15, 2
    %p113 = por %p111, %p112
    %p115 = scmp.ne.s32.totalorder %s98, %s114
    %p116 = scmp.eq.s32.totalorder %s15, 0
    %p117 = por %p115, %p116
    %s118 = ssub.s32 %s16, %s35
    %s119 = ssub.s32 %s17, %s31
    %s120 = sor.u32 %s118, %s119
    %p121 = scmp.eq.s32.totalorder %s120, 0
    %s123 = sadd.s32 %s122, 1
    %s124 = scalar_select %p121, %s122, %s123
    %p127 = pneg %p121
    %p128 = scmp.eq.s32.totalorder %s9, 2
    %p129 = por %p127, %p128
    %p130 = scmp.ne.s32.totalorder %s122, %s125
    %p131 = scmp.eq.s32.totalorder %s9, 0
    %p132 = por %p130, %p131
    %p133 = scmp.ne.s32.totalorder %s122, %s125
    %p134 = scmp.eq.s32.totalorder %s14, 2
    %p135 = por %p133, %p134
    %p136 = scmp.ne.s32.totalorder %s125, %s126
    %p137 = scmp.eq.s32.totalorder %s14, 0
    %p138 = por %p136, %p137
    %p139 = scmp.ne.s32.totalorder %s125, %s126
    %p140 = scmp.eq.s32.totalorder %s15, 2
    %p141 = por %p139, %p140
    %p143 = scmp.ne.s32.totalorder %s126, %s142
    %p144 = scmp.eq.s32.totalorder %s15, 0
    %p145 = por %p143, %p144
    %p146 = scmp.le.s32.totalorder 1, %s9
    %p147 = scmp.lt.s32.totalorder %s9, 4
    %p148 = pnand %p146, %p147
    %p149 = pneg %p148
    // Predicated region
    $region9: #{localizer_alexnet_forward.17} parent=5 // pred_check
      _
    $region10: #{localizer_alexnet_forward.17} parent=5 // pred_check_branch
      %151 = sbr.rel (%p148) target = $region12
    $region11: #{localizer_alexnet_forward.17} parent=5 // pred_region
      %s152 = ssub.s32 %s9, 1
      // Predicated region
      $region13: #{localizer_alexnet_forward.17} parent=11 // pred_check
        %p153 = pneg %p110
      $region14: #{localizer_alexnet_forward.17} parent=11 // pred_check_branch
        %155 = sbr.rel (%p153) target = $region16
      $region15: #{localizer_alexnet_forward.17} parent=11 // pred_region
        %s156 = smul.u32 2, %s20
        %p157 = scmp.lt.s32.totalorder %s156, 1
        %s158 = scalar_select %p157, %s156, 1
        %s159 = scalar_lea.vmem %s2, %s158
        %s160 = smul.u32 2, %s20
      $region16: #{localizer_alexnet_forward.17} parent=11 // pred_fallthru
        _
    $region12: #{localizer_alexnet_forward.17} parent=5 // pred_fallthru
      _
    %p161 = scmp.lt.s32.totalorder %s9, 3
    // Predicated region
    $region17: #{localizer_alexnet_forward.17} parent=5 // pred_check
      %p162 = pneg %p161
    $region18: #{localizer_alexnet_forward.17} parent=5 // pred_check_branch
      %164 = sbr.rel (%p162) target = $region20
    $region19: #{localizer_alexnet_forward.17} parent=5 // pred_region
      // Predicated region
      $region21: #{localizer_alexnet_forward.17} parent=19 // pred_check
        %p165 = pneg %p50
      $region22: #{localizer_alexnet_forward.17} parent=19 // pred_check_branch
        %167 = sbr.rel (%p165) target = $region24
      $region23: #{localizer_alexnet_forward.17} parent=19 // pred_region
        %s168 = smul.u32 6, %s18
        %p169 = scmp.lt.s32.totalorder %s16, 0
        %s170 = scalar_select %p169, %s16, 0
        %p171 = scmp.lt.s32.totalorder %s168, 17
        %s172 = scalar_select %p171, %s168, 17
        %s173 = smul.addr %s170, 18
        %s174 = sadd.s32 %s172, %s173
        %s175 = smul.addr %s174, 4
        %s176 = scalar_lea.vmem %s0, %s175
        %s177 = smul.u32 6, %s18
      $region24: #{localizer_alexnet_forward.17} parent=19 // pred_fallthru
        _
      // Predicated region
      $region25: #{localizer_alexnet_forward.17} parent=19 // pred_check
        %p178 = pneg %p78
      $region26: #{localizer_alexnet_forward.17} parent=19 // pred_check_branch
        %180 = sbr.rel (%p178) target = $region28
      $region27: #{localizer_alexnet_forward.17} parent=19 // pred_region
        %s181 = smul.u32 96, %s18
        %s182 = smul.u32 2, %s17
        %p183 = scmp.lt.s32.totalorder %s181, 287
        %s184 = scalar_select %p183, %s181, 287
        %p185 = scmp.lt.s32.totalorder %s182, 1
        %s186 = scalar_select %p185, %s182, 1
        %s187 = smul.addr %s184, 2
        %s188 = sadd.s32 %s186, %s187
        %s189 = smul.addr %s188, 4
        %s190 = scalar_lea.vmem %s1, %s189
        %s191 = smul.u32 96, %s18
        %s192 = smul.u32 2, %s17
      $region28: #{localizer_alexnet_forward.17} parent=19 // pred_fallthru
        _
    $region20: #{localizer_alexnet_forward.17} parent=5 // pred_fallthru
      _
    %p193 = scmp.le.s32.totalorder 1, %s9
    %p194 = scmp.lt.s32.totalorder %s9, 4
    %p195 = pnand %p193, %p194
    %p196 = pneg %p195
    // Predicated region
    $region29: #{localizer_alexnet_forward.17} parent=5 // pred_check
      _
    $region30: #{localizer_alexnet_forward.17} parent=5 // pred_check_branch
      %198 = sbr.rel (%p195) target = $region32
    $region31: #{localizer_alexnet_forward.17} parent=5 // pred_region
      %s199 = ssub.s32 %s9, 1
      %s200 = smul.u32 6, %s21
      %p201 = scmp.lt.s32.totalorder %s19, 0
      %s202 = scalar_select %p201, %s19, 0
      %p203 = scmp.lt.s32.totalorder %s200, 17
      %s204 = scalar_select %p203, %s200, 17
      %s205 = smul.addr %s202, 18
      %s206 = sadd.s32 %s204, %s205
      %s207 = smul.addr %s206, 4
      %s208 = scalar_lea.vmem %s0, %s207
      %p209 = pneg %p56
      %p210 = pneg %p53
      %s211 = smul.u32 96, %s21
      %s212 = smul.u32 2, %s20
      %p213 = scmp.lt.s32.totalorder %s211, 287
      %s214 = scalar_select %p213, %s211, 287
      %p215 = scmp.lt.s32.totalorder %s212, 1
      %s216 = scalar_select %p215, %s212, 1
      %s217 = smul.addr %s214, 2
      %s218 = sadd.s32 %s216, %s217
      %s219 = smul.addr %s218, 4
      %s220 = scalar_lea.vmem %s1, %s219
      %p221 = pneg %p84
      %p222 = pneg %p81
      %s223 = smul.u32 2, %s20
      %p224 = scmp.lt.s32.totalorder %s223, 1
      %s225 = scalar_select %p224, %s223, 1
      %s226 = scalar_lea.vmem %s2, %s225
      %p227 = pneg %p110
      %p228 = pneg %p107
      %p229 = pneg %p138
      %p230 = pneg %p135
      %s231 = smul.u32 2, %s20
      %p232 = scmp.lt.s32.totalorder %s19, 0
      %s233 = scalar_select %p232, %s19, 0
      %p234 = scmp.lt.s32.totalorder %s231, 1
      %s235 = scalar_select %p234, %s231, 1
      %s236 = smul.addr %s233, 2
      %s237 = sadd.s32 %s235, %s236
      %s238 = smul.addr %s237, 4
      %s239 = scalar_lea.vmem %s3, %s238
      %s240 = smul.u32 6, %s21
      %p241 = scmp.lt.s32.totalorder %s19, 0
      %s242 = scalar_select %p241, %s19, 0
      %p243 = scmp.lt.s32.totalorder %s240, 17
      %s244 = scalar_select %p243, %s240, 17
      %s245 = smul.addr %s242, 18
      %s246 = sadd.s32 %s244, %s245
      %s247 = smul.addr %s246, 4
      %s248 = scalar_lea.vmem %s0, %s247
      %s249 = smul.u32 6, %s21
      %s250 = smul.u32 96, %s21
      %s251 = smul.u32 2, %s20
      %p252 = scmp.lt.s32.totalorder %s250, 287
      %s253 = scalar_select %p252, %s250, 287
      %p254 = scmp.lt.s32.totalorder %s251, 1
      %s255 = scalar_select %p254, %s251, 1
      %s256 = smul.addr %s253, 2
      %s257 = sadd.s32 %s255, %s256
      %s258 = smul.addr %s257, 4
      %s259 = scalar_lea.vmem %s1, %s258
      %s260 = smul.u32 96, %s21
      %s261 = smul.u32 2, %s20
      %s262 = smul.u32 2, %s20
      %p263 = scmp.lt.s32.totalorder %s262, 1
      %s264 = scalar_select %p263, %s262, 1
      %s265 = scalar_lea.vmem %s2, %s264
      %s266 = smul.u32 2, %s20
      %s267 = smul.u32 2, %s20
      %p268 = scmp.lt.s32.totalorder %s19, 0
      %s269 = scalar_select %p268, %s19, 0
      %p270 = scmp.lt.s32.totalorder %s267, 1
      %s271 = scalar_select %p270, %s267, 1
      %s272 = smul.addr %s269, 2
      %s273 = sadd.s32 %s271, %s272
      %s274 = smul.addr %s273, 4
      %s275 = scalar_lea.vmem %s3, %s274
      %s276 = smul.u32 2, %s20
      %p277 = scmp.eq.s32.totalorder %s21, 0
      // Predicated region
      $region33: #{localizer_alexnet_forward.17} parent=31 // pred_check
        %p278 = pneg %p277
      $region34: #{localizer_alexnet_forward.17} parent=31 // pred_check_branch
        %280 = sbr.rel (%p278) target = $region36
      $region35: #{localizer_alexnet_forward.17} parent=31 // pred_region
        %281 = vst [vmem:[#allocation2] sm:$0xff] 0.0
        %282 = vst [vmem:[#allocation2 + $0x8] sm:$0xff] 0.0
      $region36: #{localizer_alexnet_forward.17} parent=31 // pred_fallthru
        _
      %v283 = vld [vmem:[#allocation2] sm:$0xff]
      %v284 = vld [vmem:[#allocation2 + $0x8] sm:$0xff]
      %v285 = vld [vmem:[%s248] sm:$0xff]
      %v286 = vld [vmem:[%s248 + $0x8] sm:$0xff]
      %v287 = vld [vmem:[%s248 + $0x10] sm:$0xff]
      %v288 = vld [vmem:[%s259] sm:$0xff]
      %v289 = vld [vmem:[%s259 + $0x8] sm:$0xff]
      %v290 = vld [vmem:[%s259 + $0x10] sm:$0xff]
      %v291 = vld [vmem:[%s259 + $0x18] sm:$0xff]
      %v292 = vld [vmem:[%s259 + $0x20] sm:$0xff]
      %v293 = vld [vmem:[%s259 + $0x28] sm:$0xff]
      %v294 = vld [vmem:[%s259 + $0x30] sm:$0xff]
      %v295 = vld [vmem:[%s259 + $0x38] sm:$0xff]
      %v296 = vld [vmem:[%s259 + $0x40] sm:$0xff]
      %v297 = vld [vmem:[%s259 + $0x48] sm:$0xff]
      %v298 = vld [vmem:[%s259 + $0x50] sm:$0xff]
      %v299 = vld [vmem:[%s259 + $0x58] sm:$0xff]
      %v300 = vld [vmem:[%s259 + $0x60] sm:$0xff]
      %v301 = vld [vmem:[%s259 + $0x68] sm:$0xff]
      %v302 = vld [vmem:[%s259 + $0x70] sm:$0xff]
      %v303 = vld [vmem:[%s259 + $0x78] sm:$0xff]
      %v304 = vld [vmem:[%s259 + $0x80] sm:$0xff]
      %v305 = vld [vmem:[%s259 + $0x88] sm:$0xff]
      %v306 = vld [vmem:[%s259 + $0x90] sm:$0xff]
      %v307 = vld [vmem:[%s259 + $0x98] sm:$0xff]
      %v308 = vld [vmem:[%s259 + $0xa0] sm:$0xff]
      %v309 = vld [vmem:[%s259 + $0xa8] sm:$0xff]
      %v310 = vld [vmem:[%s259 + $0xb0] sm:$0xff]
      %v311 = vld [vmem:[%s259 + $0xb8] sm:$0xff]
      %v312 = vld [vmem:[%s259 + $0xc0] sm:$0xff]
      %v313 = vld [vmem:[%s259 + $0xc8] sm:$0xff]
      %v314 = vld [vmem:[%s259 + $0xd0] sm:$0xff]
      %v315 = vld [vmem:[%s259 + $0xd8] sm:$0xff]
      %v316 = vld [vmem:[%s259 + $0xe0] sm:$0xff]
      %v317 = vld [vmem:[%s259 + $0xe8] sm:$0xff]
      %v318 = vld [vmem:[%s259 + $0xf0] sm:$0xff]
      %v319 = vld [vmem:[%s259 + $0xf8] sm:$0xff]
      %v320 = vld [vmem:[%s259 + $0x100] sm:$0xff]
      %v321 = vld [vmem:[%s259 + $0x108] sm:$0xff]
      %v322 = vld [vmem:[%s259 + $0x110] sm:$0xff]
      %v323 = vld [vmem:[%s259 + $0x118] sm:$0xff]
      %v324 = vld [vmem:[%s259 + $0x120] sm:$0xff]
      %v325 = vld [vmem:[%s259 + $0x128] sm:$0xff]
      %v326 = vld [vmem:[%s259 + $0x130] sm:$0xff]
      %v327 = vld [vmem:[%s259 + $0x138] sm:$0xff]
      %v328 = vld [vmem:[%s259 + $0x140] sm:$0xff]
      %v329 = vld [vmem:[%s259 + $0x148] sm:$0xff]
      %v330 = vld [vmem:[%s259 + $0x150] sm:$0xff]
      %v331 = vld [vmem:[%s259 + $0x158] sm:$0xff]
      %v332 = vld [vmem:[%s259 + $0x160] sm:$0xff]
      %v333 = vld [vmem:[%s259 + $0x168] sm:$0xff]
      %v334 = vld [vmem:[%s259 + $0x170] sm:$0xff]
      %v335 = vld [vmem:[%s259 + $0x178] sm:$0xff]
      %v336 = vld [vmem:[%s259 + $0x180] sm:$0xff]
      %v337 = vld [vmem:[%s259 + $0x188] sm:$0xff]
      %v338 = vld [vmem:[%s259 + $0x190] sm:$0xff]
      %v339 = vld [vmem:[%s259 + $0x198] sm:$0xff]
      %v340 = vld [vmem:[%s259 + $0x1a0] sm:$0xff]
      %v341 = vld [vmem:[%s259 + $0x1a8] sm:$0xff]
      %v342 = vld [vmem:[%s259 + $0x1b0] sm:$0xff]
      %v343 = vld [vmem:[%s259 + $0x1b8] sm:$0xff]
      %v344 = vld [vmem:[%s259 + $0x1c0] sm:$0xff]
      %v345 = vld [vmem:[%s259 + $0x1c8] sm:$0xff]
      %v346 = vld [vmem:[%s259 + $0x1d0] sm:$0xff]
      %v347 = vld [vmem:[%s259 + $0x1d8] sm:$0xff]
      %v348 = vld [vmem:[%s259 + $0x1e0] sm:$0xff]
      %v349 = vld [vmem:[%s259 + $0x1e8] sm:$0xff]
      %v350 = vld [vmem:[%s259 + $0x1f0] sm:$0xff]
      %v351 = vld [vmem:[%s259 + $0x1f8] sm:$0xff]
      %v352 = vld [vmem:[%s259 + $0x200] sm:$0xff]
      %v353 = vld [vmem:[%s259 + $0x208] sm:$0xff]
      %v354 = vld [vmem:[%s259 + $0x210] sm:$0xff]
      %v355 = vld [vmem:[%s259 + $0x218] sm:$0xff]
      %v356 = vld [vmem:[%s259 + $0x220] sm:$0xff]
      %v357 = vld [vmem:[%s259 + $0x228] sm:$0xff]
      %v358 = vld [vmem:[%s259 + $0x230] sm:$0xff]
      %v359 = vld [vmem:[%s259 + $0x238] sm:$0xff]
      %v360 = vld [vmem:[%s259 + $0x240] sm:$0xff]
      %v361 = vld [vmem:[%s259 + $0x248] sm:$0xff]
      %v362 = vld [vmem:[%s259 + $0x250] sm:$0xff]
      %v363 = vld [vmem:[%s259 + $0x258] sm:$0xff]
      %v364 = vld [vmem:[%s259 + $0x260] sm:$0xff]
      %v365 = vld [vmem:[%s259 + $0x268] sm:$0xff]
      %v366 = vld [vmem:[%s259 + $0x270] sm:$0xff]
      %v367 = vld [vmem:[%s259 + $0x278] sm:$0xff]
      %v368 = vld [vmem:[%s259 + $0x280] sm:$0xff]
      %v369 = vld [vmem:[%s259 + $0x288] sm:$0xff]
      %v370 = vld [vmem:[%s259 + $0x290] sm:$0xff]
      %v371 = vld [vmem:[%s259 + $0x298] sm:$0xff]
      %v372 = vld [vmem:[%s259 + $0x2a0] sm:$0xff]
      %v373 = vld [vmem:[%s259 + $0x2a8] sm:$0xff]
      %v374 = vld [vmem:[%s259 + $0x2b0] sm:$0xff]
      %v375 = vld [vmem:[%s259 + $0x2b8] sm:$0xff]
      %v376 = vld [vmem:[%s259 + $0x2c0] sm:$0xff]
      %v377 = vld [vmem:[%s259 + $0x2c8] sm:$0xff]
      %v378 = vld [vmem:[%s259 + $0x2d0] sm:$0xff]
      %v379 = vld [vmem:[%s259 + $0x2d8] sm:$0xff]
      %v380 = vld [vmem:[%s259 + $0x2e0] sm:$0xff]
      %v381 = vld [vmem:[%s259 + $0x2e8] sm:$0xff]
      %v382 = vld [vmem:[%s259 + $0x2f0] sm:$0xff]
      %v383 = vld [vmem:[%s259 + $0x2f8] sm:$0xff]
      %v387 = vunpack.c.l.b16 %v285
      %v388 = vunpack.c.h.b16 %v285
      %v389 = vunpack.c.l.b16 %v286
      %v390 = vunpack.c.h.b16 %v286
      %v391 = vunpack.c.l.b16 %v287
      %v392 = vunpack.c.h.b16 %v287
      %v393 = vpack.c.b16 %v387, %v387
      %v394 = vpack.c.b16 %v388, %v388
      %v395 = vpack.c.b16 %v389, %v389
      %v396 = vpack.c.b16 %v390, %v390
      %v397 = vpack.c.b16 %v391, %v391
      %v398 = vpack.c.b16 %v392, %v392
      %v501 = vunpack.c.l.b16 %v288
      %v502 = vunpack.c.h.b16 %v288
      %v503 = vunpack.c.l.b16 %v289
      %v504 = vunpack.c.h.b16 %v289
      %v505 = vunpack.c.l.b16 %v290
      %v506 = vunpack.c.h.b16 %v290
      %v507 = vunpack.c.l.b16 %v291
      %v508 = vunpack.c.h.b16 %v291
      %v509 = vunpack.c.l.b16 %v292
      %v510 = vunpack.c.h.b16 %v292
      %v511 = vunpack.c.l.b16 %v293
      %v512 = vunpack.c.h.b16 %v293
      %v513 = vunpack.c.l.b16 %v294
      %v514 = vunpack.c.h.b16 %v294
      %v515 = vunpack.c.l.b16 %v295
      %v516 = vunpack.c.h.b16 %v295
      %v517 = vunpack.c.l.b16 %v296
      %v518 = vunpack.c.h.b16 %v296
      %v519 = vunpack.c.l.b16 %v297
      %v520 = vunpack.c.h.b16 %v297
      %v521 = vunpack.c.l.b16 %v298
      %v522 = vunpack.c.h.b16 %v298
      %v523 = vunpack.c.l.b16 %v299
      %v524 = vunpack.c.h.b16 %v299
      %v525 = vunpack.c.l.b16 %v300
      %v526 = vunpack.c.h.b16 %v300
      %v527 = vunpack.c.l.b16 %v301
      %v528 = vunpack.c.h.b16 %v301
      %v529 = vunpack.c.l.b16 %v302
      %v530 = vunpack.c.h.b16 %v302
      %v531 = vunpack.c.l.b16 %v303
      %v532 = vunpack.c.h.b16 %v303
      %v533 = vunpack.c.l.b16 %v304
      %v534 = vunpack.c.h.b16 %v304
      %v535 = vunpack.c.l.b16 %v305
      %v536 = vunpack.c.h.b16 %v305
      %v537 = vunpack.c.l.b16 %v306
      %v538 = vunpack.c.h.b16 %v306
      %v539 = vunpack.c.l.b16 %v307
      %v540 = vunpack.c.h.b16 %v307
      %v541 = vunpack.c.l.b16 %v308
      %v542 = vunpack.c.h.b16 %v308
      %v543 = vunpack.c.l.b16 %v309
      %v544 = vunpack.c.h.b16 %v309
      %v545 = vunpack.c.l.b16 %v310
      %v546 = vunpack.c.h.b16 %v310
      %v547 = vunpack.c.l.b16 %v311
      %v548 = vunpack.c.h.b16 %v311
      %v549 = vunpack.c.l.b16 %v312
      %v550 = vunpack.c.h.b16 %v312
      %v551 = vunpack.c.l.b16 %v313
      %v552 = vunpack.c.h.b16 %v313
      %v553 = vunpack.c.l.b16 %v314
      %v554 = vunpack.c.h.b16 %v314
      %v555 = vunpack.c.l.b16 %v315
      %v556 = vunpack.c.h.b16 %v315
      %v557 = vunpack.c.l.b16 %v316
      %v558 = vunpack.c.h.b16 %v316
      %v559 = vunpack.c.l.b16 %v317
      %v560 = vunpack.c.h.b16 %v317
      %v561 = vunpack.c.l.b16 %v318
      %v562 = vunpack.c.h.b16 %v318
      %v563 = vunpack.c.l.b16 %v319
      %v564 = vunpack.c.h.b16 %v319
      %v565 = vunpack.c.l.b16 %v320
      %v566 = vunpack.c.h.b16 %v320
      %v567 = vunpack.c.l.b16 %v321
      %v568 = vunpack.c.h.b16 %v321
      %v569 = vunpack.c.l.b16 %v322
      %v570 = vunpack.c.h.b16 %v322
      %v571 = vunpack.c.l.b16 %v323
      %v572 = vunpack.c.h.b16 %v323
      %v573 = vunpack.c.l.b16 %v324
      %v574 = vunpack.c.h.b16 %v324
      %v575 = vunpack.c.l.b16 %v325
      %v576 = vunpack.c.h.b16 %v325
      %v577 = vunpack.c.l.b16 %v326
      %v578 = vunpack.c.h.b16 %v326
      %v579 = vunpack.c.l.b16 %v327
      %v580 = vunpack.c.h.b16 %v327
      %v581 = vunpack.c.l.b16 %v328
      %v582 = vunpack.c.h.b16 %v328
      %v583 = vunpack.c.l.b16 %v329
      %v584 = vunpack.c.h.b16 %v329
      %v585 = vunpack.c.l.b16 %v330
      %v586 = vunpack.c.h.b16 %v330
      %v587 = vunpack.c.l.b16 %v331
      %v588 = vunpack.c.h.b16 %v331
      %v589 = vunpack.c.l.b16 %v332
      %v590 = vunpack.c.h.b16 %v332
      %v591 = vunpack.c.l.b16 %v333
      %v592 = vunpack.c.h.b16 %v333
      %v593 = vunpack.c.l.b16 %v334
      %v594 = vunpack.c.h.b16 %v334
      %v595 = vunpack.c.l.b16 %v335
      %v596 = vunpack.c.h.b16 %v335
      %v597 = vunpack.c.l.b16 %v336
      %v598 = vunpack.c.h.b16 %v336
      %v599 = vunpack.c.l.b16 %v337
      %v600 = vunpack.c.h.b16 %v337
      %v601 = vunpack.c.l.b16 %v338
      %v602 = vunpack.c.h.b16 %v338
      %v603 = vunpack.c.l.b16 %v339
      %v604 = vunpack.c.h.b16 %v339
      %v605 = vunpack.c.l.b16 %v340
      %v606 = vunpack.c.h.b16 %v340
      %v607 = vunpack.c.l.b16 %v341
      %v608 = vunpack.c.h.b16 %v341
      %v609 = vunpack.c.l.b16 %v342
      %v610 = vunpack.c.h.b16 %v342
      %v611 = vunpack.c.l.b16 %v343
      %v612 = vunpack.c.h.b16 %v343
      %v613 = vunpack.c.l.b16 %v344
      %v614 = vunpack.c.h.b16 %v344
      %v615 = vunpack.c.l.b16 %v345
      %v616 = vunpack.c.h.b16 %v345
      %v617 = vunpack.c.l.b16 %v346
      %v618 = vunpack.c.h.b16 %v346
      %v619 = vunpack.c.l.b16 %v347
      %v620 = vunpack.c.h.b16 %v347
      %v621 = vunpack.c.l.b16 %v348
      %v622 = vunpack.c.h.b16 %v348
      %v623 = vunpack.c.l.b16 %v349
      %v624 = vunpack.c.h.b16 %v349
      %v625 = vunpack.c.l.b16 %v350
      %v626 = vunpack.c.h.b16 %v350
      %v627 = vunpack.c.l.b16 %v351
      %v628 = vunpack.c.h.b16 %v351
      %v629 = vunpack.c.l.b16 %v352
      %v630 = vunpack.c.h.b16 %v352
      %v631 = vunpack.c.l.b16 %v353
      %v632 = vunpack.c.h.b16 %v353
      %v633 = vunpack.c.l.b16 %v354
      %v634 = vunpack.c.h.b16 %v354
      %v635 = vunpack.c.l.b16 %v355
      %v636 = vunpack.c.h.b16 %v355
      %v637 = vunpack.c.l.b16 %v356
      %v638 = vunpack.c.h.b16 %v356
      %v639 = vunpack.c.l.b16 %v357
      %v640 = vunpack.c.h.b16 %v357
      %v641 = vunpack.c.l.b16 %v358
      %v642 = vunpack.c.h.b16 %v358
      %v643 = vunpack.c.l.b16 %v359
      %v644 = vunpack.c.h.b16 %v359
      %v645 = vunpack.c.l.b16 %v360
      %v646 = vunpack.c.h.b16 %v360
      %v647 = vunpack.c.l.b16 %v361
      %v648 = vunpack.c.h.b16 %v361
      %v649 = vunpack.c.l.b16 %v362
      %v650 = vunpack.c.h.b16 %v362
      %v651 = vunpack.c.l.b16 %v363
      %v652 = vunpack.c.h.b16 %v363
      %v653 = vunpack.c.l.b16 %v364
      %v654 = vunpack.c.h.b16 %v364
      %v655 = vunpack.c.l.b16 %v365
      %v656 = vunpack.c.h.b16 %v365
      %v657 = vunpack.c.l.b16 %v366
      %v658 = vunpack.c.h.b16 %v366
      %v659 = vunpack.c.l.b16 %v367
      %v660 = vunpack.c.h.b16 %v367
      %v661 = vunpack.c.l.b16 %v368
      %v662 = vunpack.c.h.b16 %v368
      %v663 = vunpack.c.l.b16 %v369
      %v664 = vunpack.c.h.b16 %v369
      %v665 = vunpack.c.l.b16 %v370
      %v666 = vunpack.c.h.b16 %v370
      %v667 = vunpack.c.l.b16 %v371
      %v668 = vunpack.c.h.b16 %v371
      %v669 = vunpack.c.l.b16 %v372
      %v670 = vunpack.c.h.b16 %v372
      %v671 = vunpack.c.l.b16 %v373
      %v672 = vunpack.c.h.b16 %v373
      %v673 = vunpack.c.l.b16 %v374
      %v674 = vunpack.c.h.b16 %v374
      %v675 = vunpack.c.l.b16 %v375
      %v676 = vunpack.c.h.b16 %v375
      %v677 = vunpack.c.l.b16 %v376
      %v678 = vunpack.c.h.b16 %v376
      %v679 = vunpack.c.l.b16 %v377
      %v680 = vunpack.c.h.b16 %v377
      %v681 = vunpack.c.l.b16 %v378
      %v682 = vunpack.c.h.b16 %v378
      %v683 = vunpack.c.l.b16 %v379
      %v684 = vunpack.c.h.b16 %v379
      %v685 = vunpack.c.l.b16 %v380
      %v686 = vunpack.c.h.b16 %v380
      %v687 = vunpack.c.l.b16 %v381
      %v688 = vunpack.c.h.b16 %v381
      %v689 = vunpack.c.l.b16 %v382
      %v690 = vunpack.c.h.b16 %v382
      %v691 = vunpack.c.l.b16 %v383
      %v692 = vunpack.c.h.b16 %v383
      %v693 = vpack.c.b16 %v503, %v501
      %v694 = vpack.c.b16 %v504, %v502
      %v695 = vpack.c.b16 %v507, %v505
      %v696 = vpack.c.b16 %v508, %v506
      %v697 = vpack.c.b16 %v511, %v509
      %v698 = vpack.c.b16 %v512, %v510
      %v699 = vpack.c.b16 %v515, %v513
      %v700 = vpack.c.b16 %v516, %v514
      %v701 = vpack.c.b16 %v519, %v517
      %v702 = vpack.c.b16 %v520, %v518
      %v703 = vpack.c.b16 %v523, %v521
      %v704 = vpack.c.b16 %v524, %v522
      %v705 = vpack.c.b16 %v527, %v525
      %v706 = vpack.c.b16 %v528, %v526
      %v707 = vpack.c.b16 %v531, %v529
      %v708 = vpack.c.b16 %v532, %v530
      %v709 = vpack.c.b16 %v535, %v533
      %v710 = vpack.c.b16 %v536, %v534
      %v711 = vpack.c.b16 %v539, %v537
      %v712 = vpack.c.b16 %v540, %v538
      %v713 = vpack.c.b16 %v543, %v541
      %v714 = vpack.c.b16 %v544, %v542
      %v715 = vpack.c.b16 %v547, %v545
      %v716 = vpack.c.b16 %v548, %v546
      %v717 = vpack.c.b16 %v551, %v549
      %v718 = vpack.c.b16 %v552, %v550
      %v719 = vpack.c.b16 %v555, %v553
      %v720 = vpack.c.b16 %v556, %v554
      %v721 = vpack.c.b16 %v559, %v557
      %v722 = vpack.c.b16 %v560, %v558
      %v723 = vpack.c.b16 %v563, %v561
      %v724 = vpack.c.b16 %v564, %v562
      %v725 = vpack.c.b16 %v567, %v565
      %v726 = vpack.c.b16 %v568, %v566
      %v727 = vpack.c.b16 %v571, %v569
      %v728 = vpack.c.b16 %v572, %v570
      %v729 = vpack.c.b16 %v575, %v573
      %v730 = vpack.c.b16 %v576, %v574
      %v731 = vpack.c.b16 %v579, %v577
      %v732 = vpack.c.b16 %v580, %v578
      %v733 = vpack.c.b16 %v583, %v581
      %v734 = vpack.c.b16 %v584, %v582
      %v735 = vpack.c.b16 %v587, %v585
      %v736 = vpack.c.b16 %v588, %v586
      %v737 = vpack.c.b16 %v591, %v589
      %v738 = vpack.c.b16 %v592, %v590
      %v739 = vpack.c.b16 %v595, %v593
      %v740 = vpack.c.b16 %v596, %v594
      %v741 = vpack.c.b16 %v599, %v597
      %v742 = vpack.c.b16 %v600, %v598
      %v743 = vpack.c.b16 %v603, %v601
      %v744 = vpack.c.b16 %v604, %v602
      %v745 = vpack.c.b16 %v607, %v605
      %v746 = vpack.c.b16 %v608, %v606
      %v747 = vpack.c.b16 %v611, %v609
      %v748 = vpack.c.b16 %v612, %v610
      %v749 = vpack.c.b16 %v615, %v613
      %v750 = vpack.c.b16 %v616, %v614
      %v751 = vpack.c.b16 %v619, %v617
      %v752 = vpack.c.b16 %v620, %v618
      %v753 = vpack.c.b16 %v623, %v621
      %v754 = vpack.c.b16 %v624, %v622
      %v755 = vpack.c.b16 %v627, %v625
      %v756 = vpack.c.b16 %v628, %v626
      %v757 = vpack.c.b16 %v631, %v629
      %v758 = vpack.c.b16 %v632, %v630
      %v759 = vpack.c.b16 %v635, %v633
      %v760 = vpack.c.b16 %v636, %v634
      %v761 = vpack.c.b16 %v639, %v637
      %v762 = vpack.c.b16 %v640, %v638
      %v763 = vpack.c.b16 %v643, %v641
      %v764 = vpack.c.b16 %v644, %v642
      %v765 = vpack.c.b16 %v647, %v645
      %v766 = vpack.c.b16 %v648, %v646
      %v767 = vpack.c.b16 %v651, %v649
      %v768 = vpack.c.b16 %v652, %v650
      %v769 = vpack.c.b16 %v655, %v653
      %v770 = vpack.c.b16 %v656, %v654
      %v771 = vpack.c.b16 %v659, %v657
      %v772 = vpack.c.b16 %v660, %v658
      %v773 = vpack.c.b16 %v663, %v661
      %v774 = vpack.c.b16 %v664, %v662
      %v775 = vpack.c.b16 %v667, %v665
      %v776 = vpack.c.b16 %v668, %v666
      %v777 = vpack.c.b16 %v671, %v669
      %v778 = vpack.c.b16 %v672, %v670
      %v779 = vpack.c.b16 %v675, %v673
      %v780 = vpack.c.b16 %v676, %v674
      %v781 = vpack.c.b16 %v679, %v677
      %v782 = vpack.c.b16 %v680, %v678
      %v783 = vpack.c.b16 %v683, %v681
      %v784 = vpack.c.b16 %v684, %v682
      %v785 = vpack.c.b16 %v687, %v685
      %v786 = vpack.c.b16 %v688, %v686
      %v787 = vpack.c.b16 %v691, %v689
      %v788 = vpack.c.b16 %v692, %v690
      %885 = vmatprep.subr.bf16.mxu0 %v708
      %886 = vmatpush1.bf16.msra.mxu0 %v707
      %887 = vmatprep.subr.bf16.mxu0 %v706
      %888 = vmatpush1.bf16.msra.mxu0 %v705
      %889 = vmatprep.subr.bf16.mxu0 %v704
      %890 = vmatpush1.bf16.msra.mxu0 %v703
      %891 = vmatprep.subr.bf16.mxu0 %v702
      %892 = vmatpush1.bf16.msra.mxu0 %v701
      %893 = vmatprep.subr.bf16.mxu0 %v700
      %894 = vmatpush1.bf16.msra.mxu0 %v699
      %895 = vmatprep.subr.bf16.mxu0 %v698
      %896 = vmatpush1.bf16.msra.mxu0 %v697
      %897 = vmatprep.subr.bf16.mxu0 %v696
      %898 = vmatpush1.bf16.msra.mxu0 %v695
      %899 = vmatprep.subr.bf16.mxu0 %v694
      %900 = vmatpush1.bf16.msra.mxu0 %v693
      %901 = vmatprep.subr.bf16.mxu0 %v724
      %902 = vmatpush2.bf16.msra.mxu0 %v723
      %903 = vmatprep.subr.bf16.mxu0 %v722
      %904 = vmatpush2.bf16.msra.mxu0 %v721
      %905 = vmatprep.subr.bf16.mxu0 %v720
      %906 = vmatpush2.bf16.msra.mxu0 %v719
      %907 = vmatprep.subr.bf16.mxu0 %v718
      %908 = vmatpush2.bf16.msra.mxu0 %v717
      %909 = vmatprep.subr.bf16.mxu0 %v716
      %910 = vmatpush2.bf16.msra.mxu0 %v715
      %911 = vmatprep.subr.bf16.mxu0 %v714
      %912 = vmatpush2.bf16.msra.mxu0 %v713
      %913 = vmatprep.subr.bf16.mxu0 %v712
      %914 = vmatpush2.bf16.msra.mxu0 %v711
      %915 = vmatprep.subr.bf16.mxu0 %v710
      %916 = vmatpush2.bf16.msra.mxu0 %v709
      %917 = vmatprep.mubr.bf16.mxu0 %v394
      %918 = vmatmul.mubr.bf16.gmra.mxu0 %v393
      %v919 = vpop.f32.mrf.mxu0
      %v920 = vadd.f32 0.0, %v919
      %v921 = vpop.f32.mrf.mxu0
      %v922 = vadd.f32 0.0, %v921
      %v923 = vpop.f32.mrf.mxu0
      %v924 = vpop.f32.mrf.mxu0
      %925 = vdwg.mxu0
      %926 = vmatprep.subr.bf16.mxu0 %v740
      %927 = vmatpush1.bf16.msra.mxu0 %v739
      %928 = vmatprep.subr.bf16.mxu0 %v738
      %929 = vmatpush1.bf16.msra.mxu0 %v737
      %930 = vmatprep.subr.bf16.mxu0 %v736
      %931 = vmatpush1.bf16.msra.mxu0 %v735
      %932 = vmatprep.subr.bf16.mxu0 %v734
      %933 = vmatpush1.bf16.msra.mxu0 %v733
      %934 = vmatprep.subr.bf16.mxu0 %v732
      %935 = vmatpush1.bf16.msra.mxu0 %v731
      %936 = vmatprep.subr.bf16.mxu0 %v730
      %937 = vmatpush1.bf16.msra.mxu0 %v729
      %938 = vmatprep.subr.bf16.mxu0 %v728
      %939 = vmatpush1.bf16.msra.mxu0 %v727
      %940 = vmatprep.subr.bf16.mxu0 %v726
      %941 = vmatpush1.bf16.msra.mxu0 %v725
      %942 = vmatprep.subr.bf16.mxu0 %v756
      %943 = vmatpush2.bf16.msra.mxu0 %v755
      %944 = vmatprep.subr.bf16.mxu0 %v754
      %945 = vmatpush2.bf16.msra.mxu0 %v753
      %946 = vmatprep.subr.bf16.mxu0 %v752
      %947 = vmatpush2.bf16.msra.mxu0 %v751
      %948 = vmatprep.subr.bf16.mxu0 %v750
      %949 = vmatpush2.bf16.msra.mxu0 %v749
      %950 = vmatprep.subr.bf16.mxu0 %v748
      %951 = vmatpush2.bf16.msra.mxu0 %v747
      %952 = vmatprep.subr.bf16.mxu0 %v746
      %953 = vmatpush2.bf16.msra.mxu0 %v745
      %954 = vmatprep.subr.bf16.mxu0 %v744
      %955 = vmatpush2.bf16.msra.mxu0 %v743
      %956 = vmatprep.subr.bf16.mxu0 %v742
      %957 = vmatpush2.bf16.msra.mxu0 %v741
      %958 = vmatprep.mubr.bf16.mxu0 %v396
      %959 = vmatmul.mubr.bf16.gmra.mxu0 %v395
      %v960 = vpop.f32.mrf.mxu0
      %v961 = vadd.f32 %v920, %v960
      %v962 = vpop.f32.mrf.mxu0
      %v963 = vadd.f32 %v922, %v962
      %v964 = vpop.f32.mrf.mxu0
      %v965 = vpop.f32.mrf.mxu0
      %966 = vdwg.mxu0
      %967 = vmatprep.subr.bf16.mxu0 %v772
      %968 = vmatpush1.bf16.msra.mxu0 %v771
      %969 = vmatprep.subr.bf16.mxu0 %v770
      %970 = vmatpush1.bf16.msra.mxu0 %v769
      %971 = vmatprep.subr.bf16.mxu0 %v768
      %972 = vmatpush1.bf16.msra.mxu0 %v767
      %973 = vmatprep.subr.bf16.mxu0 %v766
      %974 = vmatpush1.bf16.msra.mxu0 %v765
      %975 = vmatprep.subr.bf16.mxu0 %v764
      %976 = vmatpush1.bf16.msra.mxu0 %v763
      %977 = vmatprep.subr.bf16.mxu0 %v762
      %978 = vmatpush1.bf16.msra.mxu0 %v761
      %979 = vmatprep.subr.bf16.mxu0 %v760
      %980 = vmatpush1.bf16.msra.mxu0 %v759
      %981 = vmatprep.subr.bf16.mxu0 %v758
      %982 = vmatpush1.bf16.msra.mxu0 %v757
      %983 = vmatprep.subr.bf16.mxu0 %v788
      %984 = vmatpush2.bf16.msra.mxu0 %v787
      %985 = vmatprep.subr.bf16.mxu0 %v786
      %986 = vmatpush2.bf16.msra.mxu0 %v785
      %987 = vmatprep.subr.bf16.mxu0 %v784
      %988 = vmatpush2.bf16.msra.mxu0 %v783
      %989 = vmatprep.subr.bf16.mxu0 %v782
      %990 = vmatpush2.bf16.msra.mxu0 %v781
      %991 = vmatprep.subr.bf16.mxu0 %v780
      %992 = vmatpush2.bf16.msra.mxu0 %v779
      %993 = vmatprep.subr.bf16.mxu0 %v778
      %994 = vmatpush2.bf16.msra.mxu0 %v777
      %995 = vmatprep.subr.bf16.mxu0 %v776
      %996 = vmatpush2.bf16.msra.mxu0 %v775
      %997 = vmatprep.subr.bf16.mxu0 %v774
      %998 = vmatpush2.bf16.msra.mxu0 %v773
      %999 = vmatprep.mubr.bf16.mxu0 %v398
      %1000 = vmatmul.mubr.bf16.gmra.mxu0 %v397
      %v1001 = vpop.f32.mrf.mxu0
      %v1002 = vadd.f32 %v961, %v1001
      %v1003 = vpop.f32.mrf.mxu0
      %v1004 = vadd.f32 %v963, %v1003
      %v1005 = vpop.f32.mrf.mxu0
      %v1006 = vpop.f32.mrf.mxu0
      %1007 = vdwg.mxu0
      %v1008 = vadd.f32 %v283, %v1002
      %v1009 = vadd.f32 %v284, %v1004
      %1010 = vst [vmem:[#allocation2] sm:$0xff] %v1008
      %1011 = vst [vmem:[#allocation2 + $0x8] sm:$0xff] %v1009
      %p1012 = scmp.eq.s32.totalorder %s21, 2
      // Predicated region
      $region37: #{localizer_alexnet_forward.17} parent=31 // pred_check
        %p1013 = pneg %p1012
      $region38: #{localizer_alexnet_forward.17} parent=31 // pred_check_branch
        %1015 = sbr.rel (%p1013) target = $region40
      $region39: #{localizer_alexnet_forward.17} parent=31 // pred_region
        %v1016 = vld [vmem:[#allocation2] sm:$0xff]
        %v1017 = vld [vmem:[#allocation2 + $0x8] sm:$0xff]
        %v1018 = vld [vmem:[%s265] sm:$0x3]
        %v1020 = vlaneseq
        %v1021 = vshrl.u32 %v1020, 7
        %v1022 = vsub.s32 0, %v1021
        %v1023 = vrot.slane %v1018, %v1022
        %v1024 = vlaneseq
        %v1025 = vshrl.u32 %v1024, 7
        %v1026 = vsub.s32 1, %v1025
        %v1027 = vrot.slane %v1018, %v1026
        %v1030 = vadd.f32 %v1016, %v1023
        %v1031 = vadd.f32 %v1017, %v1027
        %v1032 = vmax.f32 %v1030, 0.0
        %v1033 = vmax.f32 %v1031, 0.0
        %v1034 = vpack.c.bf16 %v1032, %v1032
        %v1035 = vpack.c.bf16 %v1033, %v1033
        %v1038 = vunpack.c.l.b16 %v1034
        %v1039 = vunpack.c.l.b16 %v1035
        %v1040 = vpack.c.b16 %v1039, %v1038
        %1042 = vst [vmem:[%s275] sm:$0xff] %v1040
      $region40: #{localizer_alexnet_forward.17} parent=31 // pred_fallthru
        _
      %s1043 = smul.u32 2, %s20
      %p1044 = scmp.lt.s32.totalorder %s19, 0
      %s1045 = scalar_select %p1044, %s19, 0
      %p1046 = scmp.lt.s32.totalorder %s1043, 1
      %s1047 = scalar_select %p1046, %s1043, 1
      %s1048 = smul.addr %s1045, 2
      %s1049 = sadd.s32 %s1047, %s1048
      %s1050 = smul.addr %s1049, 4
      %s1051 = scalar_lea.vmem %s3, %s1050
      // Predicated region
      $region41: #{localizer_alexnet_forward.17} parent=31 // pred_check
        %p1052 = pneg %p135
      $region42: #{localizer_alexnet_forward.17} parent=31 // pred_check_branch
        %1054 = sbr.rel (%p1052) target = $region44
      $region43: #{localizer_alexnet_forward.17} parent=31 // pred_region
        %s1055 = smul.u32 2, %s20
      $region44: #{localizer_alexnet_forward.17} parent=31 // pred_fallthru
        _
      // Predicated region
      $region45: #{localizer_alexnet_forward.17} parent=31 // pred_check
        %p1056 = pneg %p135
      $region46: #{localizer_alexnet_forward.17} parent=31 // pred_check_branch
        %1058 = sbr.rel (%p1056) target = $region48
      $region47: #{localizer_alexnet_forward.17} parent=31 // pred_region
        %s1059 = smul.u32 2, %s20
        %p1060 = scmp.lt.s32.totalorder %s19, 0
        %s1061 = scalar_select %p1060, %s19, 0
        %p1062 = scmp.lt.s32.totalorder %s1059, 1
        %s1063 = scalar_select %p1062, %s1059, 1
        %s1064 = smul.addr %s1061, 2
        %s1065 = sadd.s32 %s1063, %s1064
        %s1066 = smul.addr %s1065, 4
        %s1067 = scalar_lea.vmem %s3, %s1066
      $region48: #{localizer_alexnet_forward.17} parent=31 // pred_fallthru
        _
    $region32: #{localizer_alexnet_forward.17} parent=5 // pred_fallthru
      _
    %p1068 = scmp.le.s32.totalorder 2, %s9
    // Predicated region
    $region49: #{localizer_alexnet_forward.17} parent=5 // pred_check
      %p1069 = pneg %p1068
    $region50: #{localizer_alexnet_forward.17} parent=5 // pred_check_branch
      %1071 = sbr.rel (%p1069) target = $region52
    $region51: #{localizer_alexnet_forward.17} parent=5 // pred_region
      %s1072 = ssub.s32 %s9, 2
    $region52: #{localizer_alexnet_forward.17} parent=5 // pred_fallthru
      _
  $region6: #{localizer_alexnet_forward.17} parent=0 // loop_footer
    %s13 = sadd.s32 1, %s9
  $region7: #{localizer_alexnet_forward.17} parent=0 // loop_footer_branch
    %8 = sbr.rel target = $region3
  $region8: #{localizer_alexnet_forward.17} parent=0 // loop_exit
    _

</llo_original>
